<compile_context>
chip_gen: v7x
topology: tpu7x:2x2x1
jax: 0.10.0
libtpu: 0.0.40
codegen_flags: <defaults>
</compile_context>

<pallas_src>
import jax
import jax.numpy as jnp
from jax.experimental import pallas as pl
from jax.experimental.pallas import tpu as pltpu

EPS = 1e-5  # BatchNorm1d default eps


def _bn(x, gamma, beta):
    # BatchNorm1d with track_running_stats=False: batch stats, biased variance.
    mu = jnp.mean(x, axis=0, keepdims=True)
    var = jnp.mean((x - mu) ** 2, axis=0, keepdims=True)
    return (x - mu) * jax.lax.rsqrt(var + EPS) * gamma + beta


def _prelu(x, alpha):
    return jnp.where(x >= 0, x, alpha * x)


def gcn_kernel(a_ref, x_ref, w_ref, vec_ref, mask_ref, alpha_ref, out_ref):
    f32 = jnp.float32
    bf16 = jnp.bfloat16

    a_hat = a_ref[...]                 # [N, N] bf16
    x = x_ref[...]                     # [N, F] bf16
    vec = vec_ref[...]                 # [16, H] f32 packed bias/gamma/beta rows
    F = x_ref.shape[1]
    H = vec_ref.shape[1]
    C = out_ref.shape[1]

    # Packed per-channel params (rows of vec_slab).
    b1, g1, be1 = vec[0:1, :], vec[1:2, :], vec[2:3, :]
    b2, g2, be2 = vec[3:4, :], vec[4:5, :], vec[5:6, :]
    bl1, g3, be3 = vec[6:7, :], vec[7:8, :], vec[8:9, :]
    bl2, g4, be4 = vec[9:10, 0:C], vec[10:11, 0:C], vec[11:12, 0:C]
    # PReLU alphas live in SMEM -> cheap scalar loads.
    al1, al2, al3, al4 = alpha_ref[0], alpha_ref[1], alpha_ref[2], alpha_ref[3]

    # --- GCNConv 1: (A_hat @ X) @ W1 + b1  (F < H, cheaper association) ---
    ax = jnp.dot(a_hat, x, preferred_element_type=f32)                      # [N, F]
    h = jnp.dot(ax.astype(bf16), w_ref[0:F, :], preferred_element_type=f32) + b1
    h = _prelu(_bn(h, g1, be1), al1)

    # --- GCNConv 2: A_hat @ (H @ W2) + b2 ---
    hw = jnp.dot(h.astype(bf16), w_ref[H:2 * H, :], preferred_element_type=f32)
    h = jnp.dot(a_hat, hw.astype(bf16), preferred_element_type=f32) + b2
    h = _prelu(_bn(h, g2, be2), al2)

    # --- global_max_pool: additive mask + single reduction over nodes ---
    mask = mask_ref[...]                                                    # [N, B]
    hm = h[:, None, :] + (mask[:, :, None] - 1.0) * 1e30                    # [N, B, H]
    p = jnp.max(hm, axis=0)                                                 # [B, H]

    # --- Linear 1 + BN3 + PReLU ---
    y = jnp.dot(p.astype(bf16), w_ref[2 * H:3 * H, :],
                preferred_element_type=f32) + bl1
    y = _prelu(_bn(y, g3, be3), al3)

    # --- Linear 2 (W padded to H cols with zeros; keep first C) + BN4 + PReLU ---
    y2 = jnp.dot(y.astype(bf16), w_ref[3 * H:4 * H, :], preferred_element_type=f32)
    y2 = y2[:, 0:C] + bl2
    y2 = _prelu(_bn(y2, g4, be4), al4)

    out_ref[...] = y2.astype(out_ref.dtype)


def pack_params(params, num_features, hidden, num_classes):
    """Pack the 21 tiny parameter arrays into 3 slabs (cuts DMA count)."""
    F, H, C = num_features, hidden, num_classes

    w_slab = jnp.zeros((4 * H, H), jnp.float32)
    w_slab = w_slab.at[0:F, :].set(params["w1"])
    w_slab = w_slab.at[H:2 * H, :].set(params["w2"])
    w_slab = w_slab.at[2 * H:3 * H, :].set(params["wl1"])
    w_slab = w_slab.at[3 * H:4 * H, 0:C].set(params["wl2"])
    w_slab = w_slab.astype(jnp.bfloat16)

    vec_slab = jnp.zeros((16, H), jnp.float32)
    vec_slab = vec_slab.at[0:9, :].set(jnp.concatenate(
        [params["b1"], params["g1"], params["be1"],
         params["b2"], params["g2"], params["be2"],
         params["bl1"], params["g3"], params["be3"]], axis=0))
    vec_slab = vec_slab.at[9, 0:C].set(params["bl2"][0])
    vec_slab = vec_slab.at[10, 0:C].set(params["g4"][0])
    vec_slab = vec_slab.at[11, 0:C].set(params["be4"][0])

    alphas = jnp.concatenate([params["al1"].ravel(), params["al2"].ravel(),
                              params["al3"].ravel(), params["al4"].ravel()])
    return w_slab, vec_slab, alphas


def gcn_forward_pallas(a_hat, x, params, pool_mask):
    N, F = x.shape
    B = pool_mask.shape[1]
    H = params["w1"].shape[1]
    C = params["wl2"].shape[1]

    w_slab, vec_slab, alphas = pack_params(params, F, H, C)
    a_bf = a_hat.astype(jnp.bfloat16)   # halves bytes of the largest buffer
    x_bf = x.astype(jnp.bfloat16)

    vmem = pl.BlockSpec(memory_space=pltpu.MemorySpace.VMEM)
    smem = pl.BlockSpec(memory_space=pltpu.MemorySpace.SMEM)

    flops = 2 * (N * N * F + N * F * H + N * H * H + N * N * H
                 + B * H * H + B * H * H)
    bytes_accessed = (2 * N * N + 2 * N * F + 2 * 4 * H * H
                      + 4 * 16 * H + 4 * N * B + 4 * 4 + 4 * B * C)

    # TODO(synk): for large N (dense A_hat approaching the v7x 64 MiB VMEM
    # ceiling), grid-tile A_hat over node-row blocks with a "parallel" axis and
    # accumulate BN statistics (count/sum/sumsq) across blocks.
    return pl.pallas_call(
        gcn_kernel,
        out_shape=jax.ShapeDtypeStruct((B, C), jnp.float32),
        in_specs=[vmem, vmem, vmem, vmem, vmem, smem],
        out_specs=vmem,
        compiler_params=pltpu.CompilerParams(vmem_limit_bytes=32 << 20),
        cost_estimate=pl.CostEstimate(flops=flops, transcendentals=0,
                                      bytes_accessed=bytes_accessed),
    )(a_bf, x_bf, w_slab, vec_slab, pool_mask, alphas)


def gcn_forward_ref(a_hat, x, params, pool_mask):
    """Pure-JAX reference mirroring the kernel's math and mixed precision
    (bf16 MXU operands, f32 accumulation, f32 BN/PReLU)."""
    bf16, f32 = jnp.bfloat16, jnp.float32

    def bn(v, g, b):
        mu = v.mean(axis=0, keepdims=True)
        var = ((v - mu) ** 2).mean(axis=0, keepdims=True)
        return (v - mu) * jax.lax.rsqrt(var + EPS) * g + b

    def prelu(v, a):
        return jnp.where(v >= 0, v, a * v)

    a_bf = a_hat.astype(bf16)
    ax = jnp.dot(a_bf, x.astype(bf16), preferred_element_type=f32)
    h = jnp.dot(ax.astype(bf16), params["w1"].astype(bf16),
                preferred_element_type=f32) + params["b1"]
    h = prelu(bn(h, params["g1"], params["be1"]), params["al1"])

    hw = jnp.dot(h.astype(bf16), params["w2"].astype(bf16),
                 preferred_element_type=f32)
    h = jnp.dot(a_bf, hw.astype(bf16), preferred_element_type=f32) + params["b2"]
    h = prelu(bn(h, params["g2"], params["be2"]), params["al2"])

    masked = jnp.where(pool_mask.T[:, :, None] > 0.5, h[None, :, :], -1e30)
    p = masked.max(axis=1)

    y = jnp.dot(p.astype(bf16), params["wl1"].astype(bf16),
                preferred_element_type=f32) + params["bl1"]
    y = prelu(bn(y, params["g3"], params["be3"]), params["al3"])
    y = jnp.dot(y.astype(bf16), params["wl2"].astype(bf16),
                preferred_element_type=f32) + params["bl2"]
    y = prelu(bn(y, params["g4"], params["be4"]), params["al4"])
    return y


def build_dense_gcn_adjacency(edge_index, num_nodes):
    # A_hat = D^{-1/2} (A + I) D^{-1/2}  (PyG GCNConv normalization; edges are
    # provided symmetrically so row/col degrees coincide)
    src, dst = edge_index[0], edge_index[1]
    a = jnp.zeros((num_nodes, num_nodes), jnp.float32).at[dst, src].set(1.0)
    a = a + jnp.eye(num_nodes, dtype=jnp.float32)
    deg = a.sum(axis=1)
    dinv = 1.0 / jnp.sqrt(deg)
    return dinv[:, None] * a * dinv[None, :]


def init_params(key, num_features=16, hidden=64, num_classes=1):
    ks = jax.random.split(key, 6)

    def glorot(k, shape):
        lim = (6.0 / (shape[0] + shape[1])) ** 0.5
        return jax.random.uniform(k, shape, jnp.float32, -lim, lim)

    ones_h = jnp.ones((1, hidden), jnp.float32)
    zeros_h = jnp.zeros((1, hidden), jnp.float32)
    alpha = jnp.full((1, 1), 0.25, jnp.float32)   # PReLU default init
    return {
        "w1": glorot(ks[0], (num_features, hidden)),
        "b1": jnp.zeros((1, hidden), jnp.float32),
        "g1": ones_h, "be1": zeros_h, "al1": alpha,
        "w2": glorot(ks[1], (hidden, hidden)),
        "b2": jnp.zeros((1, hidden), jnp.float32),
        "g2": ones_h, "be2": zeros_h, "al2": alpha,
        "wl1": glorot(ks[2], (hidden, hidden)),
        "bl1": 0.01 * jax.random.normal(ks[3], (1, hidden), jnp.float32),
        "g3": ones_h, "be3": zeros_h, "al3": alpha,
        "wl2": glorot(ks[4], (hidden, num_classes)),
        "bl2": 0.01 * jax.random.normal(ks[5], (1, num_classes), jnp.float32),
        "g4": jnp.ones((1, num_classes), jnp.float32),
        "be4": jnp.zeros((1, num_classes), jnp.float32),
        "al4": alpha,
    }


if __name__ == "__main__":
    key = jax.random.PRNGKey(0)
    k_feat, k_param = jax.random.split(key)

    # Batch many graphs into one call so the node dimension reaches 256
    # (bigger M for the MXU, amortizes launch/DMA cost).
    num_graphs = 16
    nodes_per_graph = 16
    num_nodes = num_graphs * nodes_per_graph      # 256
    num_features = 16
    hidden = 64
    num_classes = 1

    x = jax.random.normal(k_feat, (num_nodes, num_features), jnp.float32)
    batch = jnp.repeat(jnp.arange(num_graphs, dtype=jnp.int32), nodes_per_graph)
    src, dst = [], []
    for g in range(num_graphs):
        base = g * nodes_per_graph
        for i in range(nodes_per_graph - 1):
            src += [base + i, base + i + 1]
            dst += [base + i + 1, base + i]
    edge_index = jnp.array([src, dst], dtype=jnp.int32)   # symmetric chain edges

    a_hat = build_dense_gcn_adjacency(edge_index, num_nodes)          # [N, N]
    pool_mask = jax.nn.one_hot(batch, num_graphs, dtype=jnp.float32)  # [N, B]
    params = init_params(k_param, num_features, hidden, num_classes)

    fwd = jax.jit(gcn_forward_pallas)
    out = jax.block_until_ready(fwd(a_hat, x, params, pool_mask))

    ref = gcn_forward_ref(a_hat, x, params, pool_mask)
    assert out.shape == (num_graphs, num_classes)
    # Tolerance accounts for bf16 rounding of matmul operands (accumulation is
    # f32 in both kernel and reference); real bugs show up as O(0.1-1) errors.
    max_err = float(jnp.max(jnp.abs(out - ref)))
    assert jnp.allclose(out, ref, atol=5e-3, rtol=5e-3), max_err

    print("KERNEL_OK")
</pallas_src>

<mosaic_0001>
module attributes {stable_mosaic.version = 11 : i64} {
  func.func @gcn_kernel(%arg0: memref<256x256xbf16, #tpu.memory_space<vmem>>, %arg1: memref<256x16xbf16, #tpu.memory_space<vmem>>, %arg2: memref<256x64xbf16, #tpu.memory_space<vmem>>, %arg3: memref<16x64xf32, #tpu.memory_space<vmem>>, %arg4: memref<256x16xf32, #tpu.memory_space<vmem>>, %arg5: memref<4xf32, #tpu.memory_space<smem>>, %arg6: memref<16x1xf32, #tpu.memory_space<vmem>>) attributes {dimension_semantics = [], scalar_prefetch = 0 : i64, scratch_operands = 0 : i64, tpu.core_type = #tpu.core_type<tc>} {
    %c0 = arith.constant 0 : index
    %c0_0 = arith.constant 0 : index
    %0 = vector.load %arg0[%c0, %c0_0] : memref<256x256xbf16, #tpu.memory_space<vmem>>, vector<256x256xbf16>
    %c0_1 = arith.constant 0 : index
    %c0_2 = arith.constant 0 : index
    %1 = vector.load %arg1[%c0_1, %c0_2] : memref<256x16xbf16, #tpu.memory_space<vmem>>, vector<256x16xbf16>
    %c0_3 = arith.constant 0 : index
    %c0_4 = arith.constant 0 : index
    %2 = vector.load %arg3[%c0_3, %c0_4] : memref<16x64xf32, #tpu.memory_space<vmem>>, vector<16x64xf32>
    %3 = vector.extract_strided_slice %2 {offsets = [0, 0], sizes = [1, 64], strides = [1, 1]} : vector<16x64xf32> to vector<1x64xf32>
    %4 = vector.extract_strided_slice %2 {offsets = [1, 0], sizes = [1, 64], strides = [1, 1]} : vector<16x64xf32> to vector<1x64xf32>
    %5 = vector.extract_strided_slice %2 {offsets = [2, 0], sizes = [1, 64], strides = [1, 1]} : vector<16x64xf32> to vector<1x64xf32>
    %6 = vector.extract_strided_slice %2 {offsets = [3, 0], sizes = [1, 64], strides = [1, 1]} : vector<16x64xf32> to vector<1x64xf32>
    %7 = vector.extract_strided_slice %2 {offsets = [4, 0], sizes = [1, 64], strides = [1, 1]} : vector<16x64xf32> to vector<1x64xf32>
    %8 = vector.extract_strided_slice %2 {offsets = [5, 0], sizes = [1, 64], strides = [1, 1]} : vector<16x64xf32> to vector<1x64xf32>
    %9 = vector.extract_strided_slice %2 {offsets = [6, 0], sizes = [1, 64], strides = [1, 1]} : vector<16x64xf32> to vector<1x64xf32>
    %10 = vector.extract_strided_slice %2 {offsets = [7, 0], sizes = [1, 64], strides = [1, 1]} : vector<16x64xf32> to vector<1x64xf32>
    %11 = vector.extract_strided_slice %2 {offsets = [8, 0], sizes = [1, 64], strides = [1, 1]} : vector<16x64xf32> to vector<1x64xf32>
    %12 = vector.extract_strided_slice %2 {offsets = [9, 0], sizes = [1, 1], strides = [1, 1]} : vector<16x64xf32> to vector<1x1xf32>
    %13 = vector.extract_strided_slice %2 {offsets = [10, 0], sizes = [1, 1], strides = [1, 1]} : vector<16x64xf32> to vector<1x1xf32>
    %14 = vector.extract_strided_slice %2 {offsets = [11, 0], sizes = [1, 1], strides = [1, 1]} : vector<16x64xf32> to vector<1x1xf32>
    %c0_5 = arith.constant 0 : index
    %15 = memref.load %arg5[%c0_5] : memref<4xf32, #tpu.memory_space<smem>>
    %c1 = arith.constant 1 : index
    %16 = memref.load %arg5[%c1] : memref<4xf32, #tpu.memory_space<smem>>
    %c2 = arith.constant 2 : index
    %17 = memref.load %arg5[%c2] : memref<4xf32, #tpu.memory_space<smem>>
    %c3 = arith.constant 3 : index
    %18 = memref.load %arg5[%c3] : memref<4xf32, #tpu.memory_space<smem>>
    %cst = arith.constant dense<0.000000e+00> : vector<256x16xf32>
    %19 = tpu.matmul %0, %1, %cst {dimension_numbers = #tpu.dot_dimension_numbers<[1], [0], [0], [1], [0, 0, 1, 1], [], []>} : vector<256x256xbf16>, vector<256x16xbf16>, vector<256x16xf32> -> vector<256x16xf32>
    %20 = arith.truncf %19 : vector<256x16xf32> to vector<256x16xbf16>
    %c0_6 = arith.constant 0 : index
    %c0_7 = arith.constant 0 : index
    %21 = vector.load %arg2[%c0_6, %c0_7] : memref<256x64xbf16, #tpu.memory_space<vmem>>, vector<16x64xbf16>
    %cst_8 = arith.constant dense<0.000000e+00> : vector<256x64xf32>
    %22 = tpu.matmul %20, %21, %cst_8 {dimension_numbers = #tpu.dot_dimension_numbers<[1], [0], [0], [1], [0, 0, 1, 1], [], []>} : vector<256x16xbf16>, vector<16x64xbf16>, vector<256x64xf32> -> vector<256x64xf32>
    %23 = vector.broadcast %3 : vector<1x64xf32> to vector<256x64xf32>
    %24 = arith.addf %22, %23 : vector<256x64xf32>
    %cst_9 = arith.constant dense<0.000000e+00> : vector<64xf32>
    %25 = vector.multi_reduction <add>, %24, %cst_9 [0] : vector<256x64xf32> to vector<64xf32>
    %26 = vector.shape_cast %25 : vector<64xf32> to vector<1x64xf32>
    %cst_10 = arith.constant 2.560000e+02 : f32
    %27 = vector.broadcast %cst_10 : f32 to vector<1x64xf32>
    %28 = arith.divf %26, %27 : vector<1x64xf32>
    %29 = vector.broadcast %28 : vector<1x64xf32> to vector<256x64xf32>
    %30 = arith.subf %24, %29 : vector<256x64xf32>
    %31 = arith.mulf %30, %30 : vector<256x64xf32>
    %cst_11 = arith.constant dense<0.000000e+00> : vector<64xf32>
    %32 = vector.multi_reduction <add>, %31, %cst_11 [0] : vector<256x64xf32> to vector<64xf32>
    %33 = vector.shape_cast %32 : vector<64xf32> to vector<1x64xf32>
    %cst_12 = arith.constant 2.560000e+02 : f32
    %34 = vector.broadcast %cst_12 : f32 to vector<1x64xf32>
    %35 = arith.divf %33, %34 : vector<1x64xf32>
    %36 = vector.broadcast %28 : vector<1x64xf32> to vector<256x64xf32>
    %37 = arith.subf %24, %36 : vector<256x64xf32>
    %cst_13 = arith.constant 9.99999974E-6 : f32
    %38 = vector.broadcast %cst_13 : f32 to vector<1x64xf32>
    %39 = arith.addf %35, %38 : vector<1x64xf32>
    %40 = math.rsqrt %39 : vector<1x64xf32>
    %41 = vector.broadcast %40 : vector<1x64xf32> to vector<256x64xf32>
    %42 = arith.mulf %37, %41 : vector<256x64xf32>
    %43 = vector.broadcast %4 : vector<1x64xf32> to vector<256x64xf32>
    %44 = arith.mulf %42, %43 : vector<256x64xf32>
    %45 = vector.broadcast %5 : vector<1x64xf32> to vector<256x64xf32>
    %46 = arith.addf %44, %45 : vector<256x64xf32>
    %cst_14 = arith.constant 0.000000e+00 : f32
    %47 = vector.broadcast %cst_14 : f32 to vector<256x64xf32>
    %48 = arith.cmpf oge, %46, %47 : vector<256x64xf32>
    %49 = vector.broadcast %15 : f32 to vector<256x64xf32>
    %50 = arith.mulf %49, %46 : vector<256x64xf32>
    %51 = arith.select %48, %46, %50 : vector<256x64xi1>, vector<256x64xf32>
    %52 = arith.truncf %51 : vector<256x64xf32> to vector<256x64xbf16>
    %c64 = arith.constant 64 : index
    %c0_15 = arith.constant 0 : index
    %53 = vector.load %arg2[%c64, %c0_15] : memref<256x64xbf16, #tpu.memory_space<vmem>>, vector<64x64xbf16>
    %cst_16 = arith.constant dense<0.000000e+00> : vector<256x64xf32>
    %54 = tpu.matmul %52, %53, %cst_16 {dimension_numbers = #tpu.dot_dimension_numbers<[1], [0], [0], [1], [0, 0, 1, 1], [], []>} : vector<256x64xbf16>, vector<64x64xbf16>, vector<256x64xf32> -> vector<256x64xf32>
    %55 = arith.truncf %54 : vector<256x64xf32> to vector<256x64xbf16>
    %cst_17 = arith.constant dense<0.000000e+00> : vector<256x64xf32>
    %56 = tpu.matmul %0, %55, %cst_17 {dimension_numbers = #tpu.dot_dimension_numbers<[1], [0], [0], [1], [0, 0, 1, 1], [], []>} : vector<256x256xbf16>, vector<256x64xbf16>, vector<256x64xf32> -> vector<256x64xf32>
    %57 = vector.broadcast %6 : vector<1x64xf32> to vector<256x64xf32>
    %58 = arith.addf %56, %57 : vector<256x64xf32>
    %cst_18 = arith.constant dense<0.000000e+00> : vector<64xf32>
    %59 = vector.multi_reduction <add>, %58, %cst_18 [0] : vector<256x64xf32> to vector<64xf32>
    %60 = vector.shape_cast %59 : vector<64xf32> to vector<1x64xf32>
    %cst_19 = arith.constant 2.560000e+02 : f32
    %61 = vector.broadcast %cst_19 : f32 to vector<1x64xf32>
    %62 = arith.divf %60, %61 : vector<1x64xf32>
    %63 = vector.broadcast %62 : vector<1x64xf32> to vector<256x64xf32>
    %64 = arith.subf %58, %63 : vector<256x64xf32>
    %65 = arith.mulf %64, %64 : vector<256x64xf32>
    %cst_20 = arith.constant dense<0.000000e+00> : vector<64xf32>
    %66 = vector.multi_reduction <add>, %65, %cst_20 [0] : vector<256x64xf32> to vector<64xf32>
    %67 = vector.shape_cast %66 : vector<64xf32> to vector<1x64xf32>
    %cst_21 = arith.constant 2.560000e+02 : f32
    %68 = vector.broadcast %cst_21 : f32 to vector<1x64xf32>
    %69 = arith.divf %67, %68 : vector<1x64xf32>
    %70 = vector.broadcast %62 : vector<1x64xf32> to vector<256x64xf32>
    %71 = arith.subf %58, %70 : vector<256x64xf32>
    %cst_22 = arith.constant 9.99999974E-6 : f32
    %72 = vector.broadcast %cst_22 : f32 to vector<1x64xf32>
    %73 = arith.addf %69, %72 : vector<1x64xf32>
    %74 = math.rsqrt %73 : vector<1x64xf32>
    %75 = vector.broadcast %74 : vector<1x64xf32> to vector<256x64xf32>
    %76 = arith.mulf %71, %75 : vector<256x64xf32>
    %77 = vector.broadcast %7 : vector<1x64xf32> to vector<256x64xf32>
    %78 = arith.mulf %76, %77 : vector<256x64xf32>
    %79 = vector.broadcast %8 : vector<1x64xf32> to vector<256x64xf32>
    %80 = arith.addf %78, %79 : vector<256x64xf32>
    %cst_23 = arith.constant 0.000000e+00 : f32
    %81 = vector.broadcast %cst_23 : f32 to vector<256x64xf32>
    %82 = arith.cmpf oge, %80, %81 : vector<256x64xf32>
    %83 = vector.broadcast %16 : f32 to vector<256x64xf32>
    %84 = arith.mulf %83, %80 : vector<256x64xf32>
    %85 = arith.select %82, %80, %84 : vector<256x64xi1>, vector<256x64xf32>
    %c0_24 = arith.constant 0 : index
    %c0_25 = arith.constant 0 : index
    %86 = vector.load %arg4[%c0_24, %c0_25] : memref<256x16xf32, #tpu.memory_space<vmem>>, vector<256x16xf32>
    %87 = vector.shape_cast %85 : vector<256x64xf32> to vector<256x1x64xf32>
    %88 = vector.shape_cast %86 : vector<256x16xf32> to vector<256x16x1xf32>
    %cst_26 = arith.constant 1.000000e+00 : f32
    %89 = vector.broadcast %cst_26 : f32 to vector<256x16x1xf32>
    %90 = arith.subf %88, %89 : vector<256x16x1xf32>
    %cst_27 = arith.constant 1.000000e+30 : f32
    %91 = vector.broadcast %cst_27 : f32 to vector<256x16x1xf32>
    %92 = arith.mulf %90, %91 : vector<256x16x1xf32>
    %93 = vector.broadcast %87 : vector<256x1x64xf32> to vector<256x16x64xf32>
    %94 = vector.broadcast %92 : vector<256x16x1xf32> to vector<256x16x64xf32>
    %95 = arith.addf %93, %94 : vector<256x16x64xf32>
    %cst_28 = arith.constant dense<0xFF800000> : vector<16x64xf32>
    %96 = vector.multi_reduction <maximumf>, %95, %cst_28 [0] : vector<256x16x64xf32> to vector<16x64xf32>
    %97 = arith.truncf %96 : vector<16x64xf32> to vector<16x64xbf16>
    %c128 = arith.constant 128 : index
    %c0_29 = arith.constant 0 : index
    %98 = vector.load %arg2[%c128, %c0_29] : memref<256x64xbf16, #tpu.memory_space<vmem>>, vector<64x64xbf16>
    %cst_30 = arith.constant dense<0.000000e+00> : vector<16x64xf32>
    %99 = tpu.matmul %97, %98, %cst_30 {dimension_numbers = #tpu.dot_dimension_numbers<[1], [0], [0], [1], [0, 0, 1, 1], [], []>} : vector<16x64xbf16>, vector<64x64xbf16>, vector<16x64xf32> -> vector<16x64xf32>
    %100 = vector.broadcast %9 : vector<1x64xf32> to vector<16x64xf32>
    %101 = arith.addf %99, %100 : vector<16x64xf32>
    %cst_31 = arith.constant dense<0.000000e+00> : vector<64xf32>
    %102 = vector.multi_reduction <add>, %101, %cst_31 [0] : vector<16x64xf32> to vector<64xf32>
    %103 = vector.shape_cast %102 : vector<64xf32> to vector<1x64xf32>
    %cst_32 = arith.constant 1.600000e+01 : f32
    %104 = vector.broadcast %cst_32 : f32 to vector<1x64xf32>
    %105 = arith.divf %103, %104 : vector<1x64xf32>
    %106 = vector.broadcast %105 : vector<1x64xf32> to vector<16x64xf32>
    %107 = arith.subf %101, %106 : vector<16x64xf32>
    %108 = arith.mulf %107, %107 : vector<16x64xf32>
    %cst_33 = arith.constant dense<0.000000e+00> : vector<64xf32>
    %109 = vector.multi_reduction <add>, %108, %cst_33 [0] : vector<16x64xf32> to vector<64xf32>
    %110 = vector.shape_cast %109 : vector<64xf32> to vector<1x64xf32>
    %cst_34 = arith.constant 1.600000e+01 : f32
    %111 = vector.broadcast %cst_34 : f32 to vector<1x64xf32>
    %112 = arith.divf %110, %111 : vector<1x64xf32>
    %113 = vector.broadcast %105 : vector<1x64xf32> to vector<16x64xf32>
    %114 = arith.subf %101, %113 : vector<16x64xf32>
    %cst_35 = arith.constant 9.99999974E-6 : f32
    %115 = vector.broadcast %cst_35 : f32 to vector<1x64xf32>
    %116 = arith.addf %112, %115 : vector<1x64xf32>
    %117 = math.rsqrt %116 : vector<1x64xf32>
    %118 = vector.broadcast %117 : vector<1x64xf32> to vector<16x64xf32>
    %119 = arith.mulf %114, %118 : vector<16x64xf32>
    %120 = vector.broadcast %10 : vector<1x64xf32> to vector<16x64xf32>
    %121 = arith.mulf %119, %120 : vector<16x64xf32>
    %122 = vector.broadcast %11 : vector<1x64xf32> to vector<16x64xf32>
    %123 = arith.addf %121, %122 : vector<16x64xf32>
    %cst_36 = arith.constant 0.000000e+00 : f32
    %124 = vector.broadcast %cst_36 : f32 to vector<16x64xf32>
    %125 = arith.cmpf oge, %123, %124 : vector<16x64xf32>
    %126 = vector.broadcast %17 : f32 to vector<16x64xf32>
    %127 = arith.mulf %126, %123 : vector<16x64xf32>
    %128 = arith.select %125, %123, %127 : vector<16x64xi1>, vector<16x64xf32>
    %129 = arith.truncf %128 : vector<16x64xf32> to vector<16x64xbf16>
    %c192 = arith.constant 192 : index
    %c0_37 = arith.constant 0 : index
    %130 = vector.load %arg2[%c192, %c0_37] : memref<256x64xbf16, #tpu.memory_space<vmem>>, vector<64x64xbf16>
    %cst_38 = arith.constant dense<0.000000e+00> : vector<16x64xf32>
    %131 = tpu.matmul %129, %130, %cst_38 {dimension_numbers = #tpu.dot_dimension_numbers<[1], [0], [0], [1], [0, 0, 1, 1], [], []>} : vector<16x64xbf16>, vector<64x64xbf16>, vector<16x64xf32> -> vector<16x64xf32>
    %132 = vector.extract_strided_slice %131 {offsets = [0, 0], sizes = [16, 1], strides = [1, 1]} : vector<16x64xf32> to vector<16x1xf32>
    %133 = vector.broadcast %12 : vector<1x1xf32> to vector<16x1xf32>
    %134 = arith.addf %132, %133 : vector<16x1xf32>
    %cst_39 = arith.constant dense<0.000000e+00> : vector<1xf32>
    %135 = vector.multi_reduction <add>, %134, %cst_39 [0] : vector<16x1xf32> to vector<1xf32>
    %136 = vector.shape_cast %135 : vector<1xf32> to vector<1x1xf32>
    %cst_40 = arith.constant 1.600000e+01 : f32
    %137 = vector.broadcast %cst_40 : f32 to vector<1x1xf32>
    %138 = arith.divf %136, %137 : vector<1x1xf32>
    %139 = vector.broadcast %138 : vector<1x1xf32> to vector<16x1xf32>
    %140 = arith.subf %134, %139 : vector<16x1xf32>
    %141 = arith.mulf %140, %140 : vector<16x1xf32>
    %cst_41 = arith.constant dense<0.000000e+00> : vector<1xf32>
    %142 = vector.multi_reduction <add>, %141, %cst_41 [0] : vector<16x1xf32> to vector<1xf32>
    %143 = vector.shape_cast %142 : vector<1xf32> to vector<1x1xf32>
    %cst_42 = arith.constant 1.600000e+01 : f32
    %144 = vector.broadcast %cst_42 : f32 to vector<1x1xf32>
    %145 = arith.divf %143, %144 : vector<1x1xf32>
    %146 = vector.broadcast %138 : vector<1x1xf32> to vector<16x1xf32>
    %147 = arith.subf %134, %146 : vector<16x1xf32>
    %cst_43 = arith.constant 9.99999974E-6 : f32
    %148 = vector.broadcast %cst_43 : f32 to vector<1x1xf32>
    %149 = arith.addf %145, %148 : vector<1x1xf32>
    %150 = math.rsqrt %149 : vector<1x1xf32>
    %151 = vector.broadcast %150 : vector<1x1xf32> to vector<16x1xf32>
    %152 = arith.mulf %147, %151 : vector<16x1xf32>
    %153 = vector.broadcast %13 : vector<1x1xf32> to vector<16x1xf32>
    %154 = arith.mulf %152, %153 : vector<16x1xf32>
    %155 = vector.broadcast %14 : vector<1x1xf32> to vector<16x1xf32>
    %156 = arith.addf %154, %155 : vector<16x1xf32>
    %cst_44 = arith.constant 0.000000e+00 : f32
    %157 = vector.broadcast %cst_44 : f32 to vector<16x1xf32>
    %158 = arith.cmpf oge, %156, %157 : vector<16x1xf32>
    %159 = vector.broadcast %18 : f32 to vector<16x1xf32>
    %160 = arith.mulf %159, %156 : vector<16x1xf32>
    %161 = arith.select %158, %156, %160 : vector<16x1xi1>, vector<16x1xf32>
    %c0_45 = arith.constant 0 : index
    %c0_46 = arith.constant 0 : index
    %162 = vector.load %arg6[%c0_45, %c0_46] : memref<16x1xf32, #tpu.memory_space<vmem>>, vector<16x1xf32>
    tpu.vector_store %arg6[%c0_45, %c0_46], %161 {strides = array<i32>} : memref<16x1xf32, #tpu.memory_space<vmem>>, vector<16x1xf32>,
    return
  }
}

</mosaic_0001>

<llo_original>
// kernel: gcn_forward_pallas.1
$region0: #{gcn_forward_pallas.1}
  #allocation0 [shape = 'u32[]', space=smem, size = 0x4, offset = 0x4, fixed_abs, tag = 'smem constant byte address 0x4 - core index']
  #allocation1 [shape = 'u32[144,128]{1,0:T(1,128)}', space=vmem, size = 0x12000, scoped, tag = 'internal scratch']
  %s0 = inlined_call_operand.vmem [shape: bf16[256,256], index: 0, kind: input, shape index: {}]
  %s1 = inlined_call_operand.vmem [shape: bf16[256,16], index: 1, kind: input, shape index: {}]
  %s2 = inlined_call_operand.vmem [shape: bf16[256,64], index: 2, kind: input, shape index: {}]
  %s3 = inlined_call_operand.vmem [shape: f32[16,64], index: 3, kind: input, shape index: {}]
  %s4 = inlined_call_operand.vmem [shape: f32[256,16], index: 4, kind: input, shape index: {}]
  %s5 = inlined_call_operand.vmem [shape: f32[4], index: 5, kind: input, shape index: {}]
  %s6 = inlined_call_operand.vmem [shape: f32[16,1], index: 6, kind: output, shape index: {}]
  %s7 = sld [smem:[#allocation0]]
  $region38: #{gcn_forward_pallas.1} parent=0
    _
  %s9 = ssub.s32 1, %s7
  %s10 = scalar_select 0, %s9, %s7
  $region1: #{gcn_forward_pallas.1} parent=0
    #allocation2 [shape = 'u8[512]{0}', space=smem, size = 0x200, scoped, tag = 'input window, operand 5, single buffered']
    #allocation3 [shape = 's32[1]{0}', space=sflag, size = 0x4, scoped, tag = 'scoped memory for gcn_forward_pallas.1']
    %11 = vsyncpa [#allocation3], 0
    // Predicated region
    $region2: #{gcn_forward_pallas.1} parent=1 // pred_check
      _
    $region3: #{gcn_forward_pallas.1} parent=1 // pred_check_branch
      %13 = sbr.rel (0) target = $region5
    $region4: #{gcn_forward_pallas.1} parent=1 // pred_region
      _
    $region5: #{gcn_forward_pallas.1} parent=1 // pred_fallthru
      _
    // Predicated region
    $region6: #{gcn_forward_pallas.1} parent=1 // pred_check
      _
    $region7: #{gcn_forward_pallas.1} parent=1 // pred_check_branch
      %15 = sbr.rel (0) target = $region9
    $region8: #{gcn_forward_pallas.1} parent=1 // pred_region
      _
    $region9: #{gcn_forward_pallas.1} parent=1 // pred_fallthru
      _
    // Predicated region
    $region10: #{gcn_forward_pallas.1} parent=1 // pred_check
      _
    $region11: #{gcn_forward_pallas.1} parent=1 // pred_check_branch
      %17 = sbr.rel (0) target = $region13
    $region12: #{gcn_forward_pallas.1} parent=1 // pred_region
      _
    $region13: #{gcn_forward_pallas.1} parent=1 // pred_fallthru
      _
    // Predicated region
    $region14: #{gcn_forward_pallas.1} parent=1 // pred_check
      _
    $region15: #{gcn_forward_pallas.1} parent=1 // pred_check_branch
      %19 = sbr.rel (0) target = $region17
    $region16: #{gcn_forward_pallas.1} parent=1 // pred_region
      _
    $region17: #{gcn_forward_pallas.1} parent=1 // pred_fallthru
      _
    // Predicated region
    $region18: #{gcn_forward_pallas.1} parent=1 // pred_check
      _
    $region19: #{gcn_forward_pallas.1} parent=1 // pred_check_branch
      %21 = sbr.rel (0) target = $region21
    $region20: #{gcn_forward_pallas.1} parent=1 // pred_region
      _
    $region21: #{gcn_forward_pallas.1} parent=1 // pred_fallthru
      _
    // Predicated region
    $region22: #{gcn_forward_pallas.1} parent=1 // pred_check
      _
    $region23: #{gcn_forward_pallas.1} parent=1 // pred_check_branch
      %23 = sbr.rel (0) target = $region25
    $region24: #{gcn_forward_pallas.1} parent=1 // pred_region
      %s25 = ssub.s32 16, 16
      %26 = vsyncadd [#allocation3], %s25
      %s28 = sshll.u32 %s5, 4
      %s29 = int_to_ptr.vmem [resolvable:$true] %s28
      %31 = dma.vmem_to_smem %s29, 16, [#allocation2], [#allocation3]
    $region25: #{gcn_forward_pallas.1} parent=1 // pred_fallthru
      _
    // Predicated region
    $region26: #{gcn_forward_pallas.1} parent=1 // pred_check
      _
    $region27: #{gcn_forward_pallas.1} parent=1 // pred_check_branch
      %33 = sbr.rel (0) target = $region29
    $region28: #{gcn_forward_pallas.1} parent=1 // pred_region
      %34 = dma.done [#allocation3], 16
    $region29: #{gcn_forward_pallas.1} parent=1 // pred_fallthru
      _
    %35 = sfence
    %v37 = vld [vmem:[%s0] sm:$0xff]
    %v38 = vld [vmem:[%s0 + $0x8] sm:$0xff]
    %v39 = vld [vmem:[%s0 + $0x10] sm:$0xff]
    %v40 = vld [vmem:[%s0 + $0x18] sm:$0xff]
    %v41 = vld [vmem:[%s0 + $0x20] sm:$0xff]
    %v42 = vld [vmem:[%s0 + $0x28] sm:$0xff]
    %v43 = vld [vmem:[%s0 + $0x30] sm:$0xff]
    %v44 = vld [vmem:[%s0 + $0x38] sm:$0xff]
    %v45 = vld [vmem:[%s0 + $0x40] sm:$0xff]
    %v46 = vld [vmem:[%s0 + $0x48] sm:$0xff]
    %v47 = vld [vmem:[%s0 + $0x50] sm:$0xff]
    %v48 = vld [vmem:[%s0 + $0x58] sm:$0xff]
    %v49 = vld [vmem:[%s0 + $0x60] sm:$0xff]
    %v50 = vld [vmem:[%s0 + $0x68] sm:$0xff]
    %v51 = vld [vmem:[%s0 + $0x70] sm:$0xff]
    %v52 = vld [vmem:[%s0 + $0x78] sm:$0xff]
    %v53 = vld [vmem:[%s0 + $0x80] sm:$0xff]
    %v54 = vld [vmem:[%s0 + $0x88] sm:$0xff]
    %v55 = vld [vmem:[%s0 + $0x90] sm:$0xff]
    %v56 = vld [vmem:[%s0 + $0x98] sm:$0xff]
    %v57 = vld [vmem:[%s0 + $0xa0] sm:$0xff]
    %v58 = vld [vmem:[%s0 + $0xa8] sm:$0xff]
    %v59 = vld [vmem:[%s0 + $0xb0] sm:$0xff]
    %v60 = vld [vmem:[%s0 + $0xb8] sm:$0xff]
    %v61 = vld [vmem:[%s0 + $0xc0] sm:$0xff]
    %v62 = vld [vmem:[%s0 + $0xc8] sm:$0xff]
    %v63 = vld [vmem:[%s0 + $0xd0] sm:$0xff]
    %v64 = vld [vmem:[%s0 + $0xd8] sm:$0xff]
    %v65 = vld [vmem:[%s0 + $0xe0] sm:$0xff]
    %v66 = vld [vmem:[%s0 + $0xe8] sm:$0xff]
    %v67 = vld [vmem:[%s0 + $0xf0] sm:$0xff]
    %v68 = vld [vmem:[%s0 + $0xf8] sm:$0xff]
    %v69 = vld [vmem:[%s1] sm:$0xf]
    %v70 = vld [vmem:[%s1 + $0x4] sm:$0xf]
    %v71 = vld [vmem:[%s1 + $0x8] sm:$0xf]
    %v72 = vld [vmem:[%s1 + $0xc] sm:$0xf]
    %v73 = vld [vmem:[%s1 + $0x10] sm:$0xf]
    %v74 = vld [vmem:[%s1 + $0x14] sm:$0xf]
    %v75 = vld [vmem:[%s1 + $0x18] sm:$0xf]
    %v76 = vld [vmem:[%s1 + $0x1c] sm:$0xf]
    %v77 = vld [vmem:[%s1 + $0x20] sm:$0xf]
    %v78 = vld [vmem:[%s1 + $0x24] sm:$0xf]
    %v79 = vld [vmem:[%s1 + $0x28] sm:$0xf]
    %v80 = vld [vmem:[%s1 + $0x2c] sm:$0xf]
    %v81 = vld [vmem:[%s1 + $0x30] sm:$0xf]
    %v82 = vld [vmem:[%s1 + $0x34] sm:$0xf]
    %v83 = vld [vmem:[%s1 + $0x38] sm:$0xf]
    %v84 = vld [vmem:[%s1 + $0x3c] sm:$0xf]
    %v85 = vld [vmem:[%s1 + $0x40] sm:$0xf]
    %v86 = vld [vmem:[%s1 + $0x44] sm:$0xf]
    %v87 = vld [vmem:[%s1 + $0x48] sm:$0xf]
    %v88 = vld [vmem:[%s1 + $0x4c] sm:$0xf]
    %v89 = vld [vmem:[%s1 + $0x50] sm:$0xf]
    %v90 = vld [vmem:[%s1 + $0x54] sm:$0xf]
    %v91 = vld [vmem:[%s1 + $0x58] sm:$0xf]
    %v92 = vld [vmem:[%s1 + $0x5c] sm:$0xf]
    %v93 = vld [vmem:[%s1 + $0x60] sm:$0xf]
    %v94 = vld [vmem:[%s1 + $0x64] sm:$0xf]
    %v95 = vld [vmem:[%s1 + $0x68] sm:$0xf]
    %v96 = vld [vmem:[%s1 + $0x6c] sm:$0xf]
    %v97 = vld [vmem:[%s1 + $0x70] sm:$0xf]
    %v98 = vld [vmem:[%s1 + $0x74] sm:$0xf]
    %v99 = vld [vmem:[%s1 + $0x78] sm:$0xf]
    %v100 = vld [vmem:[%s1 + $0x7c] sm:$0xf]
    %v101 = vld [vmem:[%s3] sm:$0xff]
    %v102 = vld [vmem:[%s3 + $0x8] sm:$0xff]
    %s103 = sld [smem:[#allocation2]]
    %s104 = sld [smem:[#allocation2 + $0x1]]
    %s105 = sld [smem:[#allocation2 + $0x2]]
    %s106 = sld [smem:[#allocation2 + $0x3]]
    %v139 = vunpack.c.l.b16 %v37
    %v140 = vunpack.c.h.b16 %v37
    %v141 = vunpack.c.l.b16 %v38
    %v142 = vunpack.c.h.b16 %v38
    %v143 = vunpack.c.l.b16 %v39
    %v144 = vunpack.c.h.b16 %v39
    %v145 = vunpack.c.l.b16 %v40
    %v146 = vunpack.c.h.b16 %v40
    %v147 = vunpack.c.l.b16 %v41
    %v148 = vunpack.c.h.b16 %v41
    %v149 = vunpack.c.l.b16 %v42
    %v150 = vunpack.c.h.b16 %v42
    %v151 = vunpack.c.l.b16 %v43
    %v152 = vunpack.c.h.b16 %v43
    %v153 = vunpack.c.l.b16 %v44
    %v154 = vunpack.c.h.b16 %v44
    %v155 = vunpack.c.l.b16 %v45
    %v156 = vunpack.c.h.b16 %v45
    %v157 = vunpack.c.l.b16 %v46
    %v158 = vunpack.c.h.b16 %v46
    %v159 = vunpack.c.l.b16 %v47
    %v160 = vunpack.c.h.b16 %v47
    %v161 = vunpack.c.l.b16 %v48
    %v162 = vunpack.c.h.b16 %v48
    %v163 = vunpack.c.l.b16 %v49
    %v164 = vunpack.c.h.b16 %v49
    %v165 = vunpack.c.l.b16 %v50
    %v166 = vunpack.c.h.b16 %v50
    %v167 = vunpack.c.l.b16 %v51
    %v168 = vunpack.c.h.b16 %v51
    %v169 = vunpack.c.l.b16 %v52
    %v170 = vunpack.c.h.b16 %v52
    %v171 = vunpack.c.l.b16 %v53
    %v172 = vunpack.c.h.b16 %v53
    %v173 = vunpack.c.l.b16 %v54
    %v174 = vunpack.c.h.b16 %v54
    %v175 = vunpack.c.l.b16 %v55
    %v176 = vunpack.c.h.b16 %v55
    %v177 = vunpack.c.l.b16 %v56
    %v178 = vunpack.c.h.b16 %v56
    %v179 = vunpack.c.l.b16 %v57
    %v180 = vunpack.c.h.b16 %v57
    %v181 = vunpack.c.l.b16 %v58
    %v182 = vunpack.c.h.b16 %v58
    %v183 = vunpack.c.l.b16 %v59
    %v184 = vunpack.c.h.b16 %v59
    %v185 = vunpack.c.l.b16 %v60
    %v186 = vunpack.c.h.b16 %v60
    %v187 = vunpack.c.l.b16 %v61
    %v188 = vunpack.c.h.b16 %v61
    %v189 = vunpack.c.l.b16 %v62
    %v190 = vunpack.c.h.b16 %v62
    %v191 = vunpack.c.l.b16 %v63
    %v192 = vunpack.c.h.b16 %v63
    %v193 = vunpack.c.l.b16 %v64
    %v194 = vunpack.c.h.b16 %v64
    %v195 = vunpack.c.l.b16 %v65
    %v196 = vunpack.c.h.b16 %v65
    %v197 = vunpack.c.l.b16 %v66
    %v198 = vunpack.c.h.b16 %v66
    %v199 = vunpack.c.l.b16 %v67
    %v200 = vunpack.c.h.b16 %v67
    %v201 = vunpack.c.l.b16 %v68
    %v202 = vunpack.c.h.b16 %v68
    %v203 = vpack.c.b16 %v141, %v139
    %v204 = vpack.c.b16 %v142, %v140
    %v205 = vpack.c.b16 %v145, %v143
    %v206 = vpack.c.b16 %v146, %v144
    %v207 = vpack.c.b16 %v149, %v147
    %v208 = vpack.c.b16 %v150, %v148
    %v209 = vpack.c.b16 %v153, %v151
    %v210 = vpack.c.b16 %v154, %v152
    %v211 = vpack.c.b16 %v157, %v155
    %v212 = vpack.c.b16 %v158, %v156
    %v213 = vpack.c.b16 %v161, %v159
    %v214 = vpack.c.b16 %v162, %v160
    %v215 = vpack.c.b16 %v165, %v163
    %v216 = vpack.c.b16 %v166, %v164
    %v217 = vpack.c.b16 %v169, %v167
    %v218 = vpack.c.b16 %v170, %v168
    %v219 = vpack.c.b16 %v173, %v171
    %v220 = vpack.c.b16 %v174, %v172
    %v221 = vpack.c.b16 %v177, %v175
    %v222 = vpack.c.b16 %v178, %v176
    %v223 = vpack.c.b16 %v181, %v179
    %v224 = vpack.c.b16 %v182, %v180
    %v225 = vpack.c.b16 %v185, %v183
    %v226 = vpack.c.b16 %v186, %v184
    %v227 = vpack.c.b16 %v189, %v187
    %v228 = vpack.c.b16 %v190, %v188
    %v229 = vpack.c.b16 %v193, %v191
    %v230 = vpack.c.b16 %v194, %v192
    %v231 = vpack.c.b16 %v197, %v195
    %v232 = vpack.c.b16 %v198, %v196
    %v233 = vpack.c.b16 %v201, %v199
    %v234 = vpack.c.b16 %v202, %v200
    %v299 = vunpack.c.l.b16 %v69
    %v300 = vunpack.c.l.b16 %v70
    %v301 = vunpack.c.l.b16 %v71
    %v302 = vunpack.c.l.b16 %v72
    %v303 = vunpack.c.l.b16 %v73
    %v304 = vunpack.c.l.b16 %v74
    %v305 = vunpack.c.l.b16 %v75
    %v306 = vunpack.c.l.b16 %v76
    %v307 = vunpack.c.l.b16 %v77
    %v308 = vunpack.c.l.b16 %v78
    %v309 = vunpack.c.l.b16 %v79
    %v310 = vunpack.c.l.b16 %v80
    %v311 = vunpack.c.l.b16 %v81
    %v312 = vunpack.c.l.b16 %v82
    %v313 = vunpack.c.l.b16 %v83
    %v314 = vunpack.c.l.b16 %v84
    %v315 = vunpack.c.l.b16 %v85
    %v316 = vunpack.c.l.b16 %v86
    %v317 = vunpack.c.l.b16 %v87
    %v318 = vunpack.c.l.b16 %v88
    %v319 = vunpack.c.l.b16 %v89
    %v320 = vunpack.c.l.b16 %v90
    %v321 = vunpack.c.l.b16 %v91
    %v322 = vunpack.c.l.b16 %v92
    %v323 = vunpack.c.l.b16 %v93
    %v324 = vunpack.c.l.b16 %v94
    %v325 = vunpack.c.l.b16 %v95
    %v326 = vunpack.c.l.b16 %v96
    %v327 = vunpack.c.l.b16 %v97
    %v328 = vunpack.c.l.b16 %v98
    %v329 = vunpack.c.l.b16 %v99
    %v330 = vunpack.c.l.b16 %v100
    %v331 = vpack.c.b16 %v300, %v299
    %v332 = vpack.c.b16 %v302, %v301
    %v333 = vpack.c.b16 %v304, %v303
    %v334 = vpack.c.b16 %v306, %v305
    %v335 = vpack.c.b16 %v308, %v307
    %v336 = vpack.c.b16 %v310, %v309
    %v337 = vpack.c.b16 %v312, %v311
    %v338 = vpack.c.b16 %v314, %v313
    %v339 = vpack.c.b16 %v316, %v315
    %v340 = vpack.c.b16 %v318, %v317
    %v341 = vpack.c.b16 %v320, %v319
    %v342 = vpack.c.b16 %v322, %v321
    %v343 = vpack.c.b16 %v324, %v323
    %v344 = vpack.c.b16 %v326, %v325
    %v345 = vpack.c.b16 %v328, %v327
    %v346 = vpack.c.b16 %v330, %v329
    %363 = vmatprep.subr.bf16.mxu0 0
    %364 = vmatpush1.bf16.msra.mxu0 %v331
    %365 = vmatprep.subr.bf16.mxu0 0
    %366 = vmatpush1.bf16.msra.mxu0 %v332
    %367 = vmatprep.subr.bf16.mxu0 0
    %368 = vmatpush1.bf16.msra.mxu0 %v333
    %369 = vmatprep.subr.bf16.mxu0 0
    %370 = vmatpush1.bf16.msra.mxu0 %v334
    %371 = vmatprep.subr.bf16.mxu0 0
    %372 = vmatpush1.bf16.msra.mxu0 %v335
    %373 = vmatprep.subr.bf16.mxu0 0
    %374 = vmatpush1.bf16.msra.mxu0 %v336
    %375 = vmatprep.subr.bf16.mxu0 0
    %376 = vmatpush1.bf16.msra.mxu0 %v337
    %377 = vmatprep.subr.bf16.mxu0 0
    %378 = vmatpush1.bf16.msra.mxu0 %v338
    %379 = vmatprep.subr.bf16.mxu0 0
    %380 = vmatpush1.bf16.msra.mxu0 %v339
    %381 = vmatprep.subr.bf16.mxu0 0
    %382 = vmatpush1.bf16.msra.mxu0 %v340
    %383 = vmatprep.subr.bf16.mxu0 0
    %384 = vmatpush1.bf16.msra.mxu0 %v341
    %385 = vmatprep.subr.bf16.mxu0 0
    %386 = vmatpush1.bf16.msra.mxu0 %v342
    %387 = vmatprep.subr.bf16.mxu0 0
    %388 = vmatpush1.bf16.msra.mxu0 %v343
    %389 = vmatprep.subr.bf16.mxu0 0
    %390 = vmatpush1.bf16.msra.mxu0 %v344
    %391 = vmatprep.subr.bf16.mxu0 0
    %392 = vmatpush1.bf16.msra.mxu0 %v345
    %393 = vmatprep.subr.bf16.mxu0 0
    %394 = vmatpush1.bf16.msra.mxu0 %v346
    %395 = vmatprep.mubr.bf16.mxu0 %v204
    %396 = vmatmul.mubr.bf16.gmra.mrb[0].mxu0 %v203
    %v397 = vpop.f32.mrb[0].mxu0
    %v398 = vadd.f32 0.0, %v397
    %v399 = vpop.f32.mrb[0].mxu0
    %v400 = vpop.f32.mrb[0].mxu0
    %v401 = vadd.f32 0.0, %v400
    %v402 = vpop.f32.mrb[0].mxu0
    %403 = vmatprep.mubr.bf16.mxu0 %v206
    %404 = vmatmul.mubr.bf16.gmra.mrb[0].mxu0 %v205
    %v405 = vpop.f32.mrb[0].mxu0
    %v406 = vadd.f32 0.0, %v405
    %v407 = vpop.f32.mrb[0].mxu0
    %v408 = vpop.f32.mrb[0].mxu0
    %v409 = vadd.f32 0.0, %v408
    %v410 = vpop.f32.mrb[0].mxu0
    %411 = vmatprep.mubr.bf16.mxu0 %v208
    %412 = vmatmul.mubr.bf16.gmra.mrb[0].mxu0 %v207
    %v413 = vpop.f32.mrb[0].mxu0
    %v414 = vadd.f32 0.0, %v413
    %v415 = vpop.f32.mrb[0].mxu0
    %v416 = vpop.f32.mrb[0].mxu0
    %v417 = vadd.f32 0.0, %v416
    %v418 = vpop.f32.mrb[0].mxu0
    %419 = vmatprep.mubr.bf16.mxu0 %v210
    %420 = vmatmul.mubr.bf16.gmra.mrb[0].mxu0 %v209
    %v421 = vpop.f32.mrb[0].mxu0
    %v422 = vadd.f32 0.0, %v421
    %v423 = vpop.f32.mrb[0].mxu0
    %v424 = vpop.f32.mrb[0].mxu0
    %v425 = vadd.f32 0.0, %v424
    %v426 = vpop.f32.mrb[0].mxu0
    %427 = vmatprep.mubr.bf16.mxu0 %v212
    %428 = vmatmul.mubr.bf16.gmra.mrb[0].mxu0 %v211
    %v429 = vpop.f32.mrb[0].mxu0
    %v430 = vadd.f32 0.0, %v429
    %v431 = vpop.f32.mrb[0].mxu0
    %v432 = vpop.f32.mrb[0].mxu0
    %v433 = vadd.f32 0.0, %v432
    %v434 = vpop.f32.mrb[0].mxu0
    %435 = vmatprep.mubr.bf16.mxu0 %v214
    %436 = vmatmul.mubr.bf16.gmra.mrb[0].mxu0 %v213
    %v437 = vpop.f32.mrb[0].mxu0
    %v438 = vadd.f32 0.0, %v437
    %v439 = vpop.f32.mrb[0].mxu0
    %v440 = vpop.f32.mrb[0].mxu0
    %v441 = vadd.f32 0.0, %v440
    %v442 = vpop.f32.mrb[0].mxu0
    %443 = vmatprep.mubr.bf16.mxu0 %v216
    %444 = vmatmul.mubr.bf16.gmra.mrb[0].mxu0 %v215
    %v445 = vpop.f32.mrb[0].mxu0
    %v446 = vadd.f32 0.0, %v445
    %v447 = vpop.f32.mrb[0].mxu0
    %v448 = vpop.f32.mrb[0].mxu0
    %v449 = vadd.f32 0.0, %v448
    %v450 = vpop.f32.mrb[0].mxu0
    %451 = vmatprep.mubr.bf16.mxu0 %v218
    %452 = vmatmul.mubr.bf16.gmra.mrb[0].mxu0 %v217
    %v453 = vpop.f32.mrb[0].mxu0
    %v454 = vadd.f32 0.0, %v453
    %v455 = vpop.f32.mrb[0].mxu0
    %v456 = vpop.f32.mrb[0].mxu0
    %v457 = vadd.f32 0.0, %v456
    %v458 = vpop.f32.mrb[0].mxu0
    %459 = vmatprep.mubr.bf16.mxu0 %v220
    %460 = vmatmul.mubr.bf16.gmra.mrb[0].mxu0 %v219
    %v461 = vpop.f32.mrb[0].mxu0
    %v462 = vadd.f32 0.0, %v461
    %v463 = vpop.f32.mrb[0].mxu0
    %v464 = vpop.f32.mrb[0].mxu0
    %v465 = vadd.f32 0.0, %v464
    %v466 = vpop.f32.mrb[0].mxu0
    %467 = vmatprep.mubr.bf16.mxu0 %v222
    %468 = vmatmul.mubr.bf16.gmra.mrb[0].mxu0 %v221
    %v469 = vpop.f32.mrb[0].mxu0
    %v470 = vadd.f32 0.0, %v469
    %v471 = vpop.f32.mrb[0].mxu0
    %v472 = vpop.f32.mrb[0].mxu0
    %v473 = vadd.f32 0.0, %v472
    %v474 = vpop.f32.mrb[0].mxu0
    %475 = vmatprep.mubr.bf16.mxu0 %v224
    %476 = vmatmul.mubr.bf16.gmra.mrb[0].mxu0 %v223
    %v477 = vpop.f32.mrb[0].mxu0
    %v478 = vadd.f32 0.0, %v477
    %v479 = vpop.f32.mrb[0].mxu0
    %v480 = vpop.f32.mrb[0].mxu0
    %v481 = vadd.f32 0.0, %v480
    %v482 = vpop.f32.mrb[0].mxu0
    %483 = vmatprep.mubr.bf16.mxu0 %v226
    %484 = vmatmul.mubr.bf16.gmra.mrb[0].mxu0 %v225
    %v485 = vpop.f32.mrb[0].mxu0
    %v486 = vadd.f32 0.0, %v485
    %v487 = vpop.f32.mrb[0].mxu0
    %v488 = vpop.f32.mrb[0].mxu0
    %v489 = vadd.f32 0.0, %v488
    %v490 = vpop.f32.mrb[0].mxu0
    %491 = vmatprep.mubr.bf16.mxu0 %v228
    %492 = vmatmul.mubr.bf16.gmra.mrb[0].mxu0 %v227
    %v493 = vpop.f32.mrb[0].mxu0
    %v494 = vadd.f32 0.0, %v493
    %v495 = vpop.f32.mrb[0].mxu0
    %v496 = vpop.f32.mrb[0].mxu0
    %v497 = vadd.f32 0.0, %v496
    %v498 = vpop.f32.mrb[0].mxu0
    %499 = vmatprep.mubr.bf16.mxu0 %v230
    %500 = vmatmul.mubr.bf16.gmra.mrb[0].mxu0 %v229
    %v501 = vpop.f32.mrb[0].mxu0
    %v502 = vadd.f32 0.0, %v501
    %v503 = vpop.f32.mrb[0].mxu0
    %v504 = vpop.f32.mrb[0].mxu0
    %v505 = vadd.f32 0.0, %v504
    %v506 = vpop.f32.mrb[0].mxu0
    %507 = vmatprep.mubr.bf16.mxu0 %v232
    %508 = vmatmul.mubr.bf16.gmra.mrb[0].mxu0 %v231
    %v509 = vpop.f32.mrb[0].mxu0
    %v510 = vadd.f32 0.0, %v509
    %v511 = vpop.f32.mrb[0].mxu0
    %v512 = vpop.f32.mrb[0].mxu0
    %v513 = vadd.f32 0.0, %v512
    %v514 = vpop.f32.mrb[0].mxu0
    %515 = vmatprep.mubr.bf16.mxu0 %v234
    %516 = vmatmul.mubr.bf16.gmra.mrb[0].mxu0 %v233
    %v517 = vpop.f32.mrb[0].mxu0
    %v518 = vadd.f32 0.0, %v517
    %v519 = vpop.f32.mrb[0].mxu0
    %v520 = vpop.f32.mrb[0].mxu0
    %v521 = vadd.f32 0.0, %v520
    %v522 = vpop.f32.mrb[0].mxu0
    %523 = vdwg.mxu0
    %v524 = vpack.c.bf16 %v401, %v398
    %v525 = vpack.c.bf16 %v409, %v406
    %v526 = vpack.c.bf16 %v417, %v414
    %v527 = vpack.c.bf16 %v425, %v422
    %v528 = vpack.c.bf16 %v433, %v430
    %v529 = vpack.c.bf16 %v441, %v438
    %v530 = vpack.c.bf16 %v449, %v446
    %v531 = vpack.c.bf16 %v457, %v454
    %v532 = vpack.c.bf16 %v465, %v462
    %v533 = vpack.c.bf16 %v473, %v470
    %v534 = vpack.c.bf16 %v481, %v478
    %v535 = vpack.c.bf16 %v489, %v486
    %v536 = vpack.c.bf16 %v497, %v494
    %v537 = vpack.c.bf16 %v505, %v502
    %v538 = vpack.c.bf16 %v513, %v510
    %v539 = vpack.c.bf16 %v521, %v518
    %v540 = vld [vmem:[%s2] sm:$0xf]
    %v541 = vld [vmem:[%s2 + $0x4] sm:$0xf]
    %v542 = vlaneseq
    %v543 = vshrl.u32 %v542, 7
    %v544 = vsub.s32 0, %v543
    %v545 = vrot.slane %v101, %v544
    %v548 = vunpack.c.l.b16 %v540
    %v549 = vunpack.c.l.b16 %v541
    %v550 = vpack.c.b16 %v549, %v548
    %vm552 = vcmask 130048
    %v554 = vsel %vm552, %v524, 0
    %v557 = vsel %vm552, %v525, 0
    %v560 = vsel %vm552, %v526, 0
    %v563 = vsel %vm552, %v527, 0
    %v566 = vsel %vm552, %v528, 0
    %v569 = vsel %vm552, %v529, 0
    %v572 = vsel %vm552, %v530, 0
    %v575 = vsel %vm552, %v531, 0
    %v578 = vsel %vm552, %v532, 0
    %v581 = vsel %vm552, %v533, 0
    %v584 = vsel %vm552, %v534, 0
    %v587 = vsel %vm552, %v535, 0
    %v590 = vsel %vm552, %v536, 0
    %v593 = vsel %vm552, %v537, 0
    %v596 = vsel %vm552, %v538, 0
    %v599 = vsel %vm552, %v539, 0
    %601 = vmatprep.subr.bf16.mxu0 0
    %602 = vmatpush1.bf16.msra.mxu0 %v550
    %603 = vmatprep.subr.bf16.mxu0 0
    %604 = vmatpush1.bf16.msra.mxu0 0
    %605 = vmatprep.subr.bf16.mxu0 0
    %606 = vmatpush1.bf16.msra.mxu0 0
    %607 = vmatprep.subr.bf16.mxu0 0
    %608 = vmatpush1.bf16.msra.mxu0 0
    %609 = vmatprep.subr.bf16.mxu0 0
    %610 = vmatpush1.bf16.msra.mxu0 0
    %611 = vmatprep.subr.bf16.mxu0 0
    %612 = vmatpush1.bf16.msra.mxu0 0
    %613 = vmatprep.subr.bf16.mxu0 0
    %614 = vmatpush1.bf16.msra.mxu0 0
    %615 = vmatprep.subr.bf16.mxu0 0
    %616 = vmatpush1.bf16.msra.mxu0 0
    %617 = vmatprep.subr.bf16.mxu0 0
    %618 = vmatpush1.bf16.msra.mxu0 0
    %619 = vmatprep.subr.bf16.mxu0 0
    %620 = vmatpush1.bf16.msra.mxu0 0
    %621 = vmatprep.subr.bf16.mxu0 0
    %622 = vmatpush1.bf16.msra.mxu0 0
    %623 = vmatprep.subr.bf16.mxu0 0
    %624 = vmatpush1.bf16.msra.mxu0 0
    %625 = vmatprep.subr.bf16.mxu0 0
    %626 = vmatpush1.bf16.msra.mxu0 0
    %627 = vmatprep.subr.bf16.mxu0 0
    %628 = vmatpush1.bf16.msra.mxu0 0
    %629 = vmatprep.subr.bf16.mxu0 0
    %630 = vmatpush1.bf16.msra.mxu0 0
    %631 = vmatprep.subr.bf16.mxu0 0
    %632 = vmatpush1.bf16.msra.mxu0 0
    %633 = vmatprep.mubr.bf16.mxu0 0
    %634 = vmatmul.mubr.bf16.gmra.mrb[0].mxu0 %v554
    %v635 = vpop.f32.mrb[0].mxu0
    %v636 = vadd.f32 %v545, %v635
    %v637 = vpop.f32.mrb[0].mxu0
    %v638 = vpop.f32.mrb[0].mxu0
    %v639 = vadd.f32 %v545, %v638
    %v640 = vpop.f32.mrb[0].mxu0
    %641 = vmatprep.mubr.bf16.mxu0 0
    %642 = vmatmul.mubr.bf16.gmra.mrb[0].mxu0 %v557
    %v643 = vpop.f32.mrb[0].mxu0
    %v644 = vadd.f32 %v545, %v643
    %v645 = vpop.f32.mrb[0].mxu0
    %v646 = vpop.f32.mrb[0].mxu0
    %v647 = vadd.f32 %v545, %v646
    %v648 = vpop.f32.mrb[0].mxu0
    %649 = vmatprep.mubr.bf16.mxu0 0
    %650 = vmatmul.mubr.bf16.gmra.mrb[0].mxu0 %v560
    %v651 = vpop.f32.mrb[0].mxu0
    %v652 = vadd.f32 %v545, %v651
    %v653 = vpop.f32.mrb[0].mxu0
    %v654 = vpop.f32.mrb[0].mxu0
    %v655 = vadd.f32 %v545, %v654
    %v656 = vpop.f32.mrb[0].mxu0
    %657 = vmatprep.mubr.bf16.mxu0 0
    %658 = vmatmul.mubr.bf16.gmra.mrb[0].mxu0 %v563
    %v659 = vpop.f32.mrb[0].mxu0
    %v660 = vadd.f32 %v545, %v659
    %v661 = vpop.f32.mrb[0].mxu0
    %v662 = vpop.f32.mrb[0].mxu0
    %v663 = vadd.f32 %v545, %v662
    %v664 = vpop.f32.mrb[0].mxu0
    %665 = vmatprep.mubr.bf16.mxu0 0
    %666 = vmatmul.mubr.bf16.gmra.mrb[0].mxu0 %v566
    %v667 = vpop.f32.mrb[0].mxu0
    %v668 = vadd.f32 %v545, %v667
    %v669 = vpop.f32.mrb[0].mxu0
    %v670 = vpop.f32.mrb[0].mxu0
    %v671 = vadd.f32 %v545, %v670
    %v672 = vpop.f32.mrb[0].mxu0
    %673 = vmatprep.mubr.bf16.mxu0 0
    %674 = vmatmul.mubr.bf16.gmra.mrb[0].mxu0 %v569
    %v675 = vpop.f32.mrb[0].mxu0
    %v676 = vadd.f32 %v545, %v675
    %v677 = vpop.f32.mrb[0].mxu0
    %v678 = vpop.f32.mrb[0].mxu0
    %v679 = vadd.f32 %v545, %v678
    %v680 = vpop.f32.mrb[0].mxu0
    %681 = vmatprep.mubr.bf16.mxu0 0
    %682 = vmatmul.mubr.bf16.gmra.mrb[0].mxu0 %v572
    %v683 = vpop.f32.mrb[0].mxu0
    %v684 = vadd.f32 %v545, %v683
    %v685 = vpop.f32.mrb[0].mxu0
    %v686 = vpop.f32.mrb[0].mxu0
    %v687 = vadd.f32 %v545, %v686
    %v688 = vpop.f32.mrb[0].mxu0
    %689 = vmatprep.mubr.bf16.mxu0 0
    %690 = vmatmul.mubr.bf16.gmra.mrb[0].mxu0 %v575
    %v691 = vpop.f32.mrb[0].mxu0
    %v692 = vadd.f32 %v545, %v691
    %v693 = vpop.f32.mrb[0].mxu0
    %v694 = vpop.f32.mrb[0].mxu0
    %v695 = vadd.f32 %v545, %v694
    %v696 = vpop.f32.mrb[0].mxu0
    %697 = vmatprep.mubr.bf16.mxu0 0
    %698 = vmatmul.mubr.bf16.gmra.mrb[0].mxu0 %v578
    %v699 = vpop.f32.mrb[0].mxu0
    %v700 = vadd.f32 %v545, %v699
    %v701 = vpop.f32.mrb[0].mxu0
    %v702 = vpop.f32.mrb[0].mxu0
    %v703 = vadd.f32 %v545, %v702
    %v704 = vpop.f32.mrb[0].mxu0
    %705 = vmatprep.mubr.bf16.mxu0 0
    %706 = vmatmul.mubr.bf16.gmra.mrb[0].mxu0 %v581
    %v707 = vpop.f32.mrb[0].mxu0
    %v708 = vadd.f32 %v545, %v707
    %v709 = vpop.f32.mrb[0].mxu0
    %v710 = vpop.f32.mrb[0].mxu0
    %v711 = vadd.f32 %v545, %v710
    %v712 = vpop.f32.mrb[0].mxu0
    %713 = vmatprep.mubr.bf16.mxu0 0
    %714 = vmatmul.mubr.bf16.gmra.mrb[0].mxu0 %v584
    %v715 = vpop.f32.mrb[0].mxu0
    %v716 = vadd.f32 %v545, %v715
    %v717 = vpop.f32.mrb[0].mxu0
    %v718 = vpop.f32.mrb[0].mxu0
    %v719 = vadd.f32 %v545, %v718
    %v720 = vpop.f32.mrb[0].mxu0
    %721 = vmatprep.mubr.bf16.mxu0 0
    %722 = vmatmul.mubr.bf16.gmra.mrb[0].mxu0 %v587
    %v723 = vpop.f32.mrb[0].mxu0
    %v724 = vadd.f32 %v545, %v723
    %v725 = vpop.f32.mrb[0].mxu0
    %v726 = vpop.f32.mrb[0].mxu0
    %v727 = vadd.f32 %v545, %v726
    %v728 = vpop.f32.mrb[0].mxu0
    %729 = vmatprep.mubr.bf16.mxu0 0
    %730 = vmatmul.mubr.bf16.gmra.mrb[0].mxu0 %v590
    %v731 = vpop.f32.mrb[0].mxu0
    %v732 = vadd.f32 %v545, %v731
    %v733 = vpop.f32.mrb[0].mxu0
    %v734 = vpop.f32.mrb[0].mxu0
    %v735 = vadd.f32 %v545, %v734
    %v736 = vpop.f32.mrb[0].mxu0
    %737 = vmatprep.mubr.bf16.mxu0 0
    %738 = vmatmul.mubr.bf16.gmra.mrb[0].mxu0 %v593
    %v739 = vpop.f32.mrb[0].mxu0
    %v740 = vadd.f32 %v545, %v739
    %v741 = vpop.f32.mrb[0].mxu0
    %v742 = vpop.f32.mrb[0].mxu0
    %v743 = vadd.f32 %v545, %v742
    %v744 = vpop.f32.mrb[0].mxu0
    %745 = vmatprep.mubr.bf16.mxu0 0
    %746 = vmatmul.mubr.bf16.gmra.mrb[0].mxu0 %v596
    %v747 = vpop.f32.mrb[0].mxu0
    %v748 = vadd.f32 %v545, %v747
    %v749 = vpop.f32.mrb[0].mxu0
    %v750 = vpop.f32.mrb[0].mxu0
    %v751 = vadd.f32 %v545, %v750
    %v752 = vpop.f32.mrb[0].mxu0
    %753 = vmatprep.mubr.bf16.mxu0 0
    %754 = vmatmul.mubr.bf16.gmra.mrb[0].mxu0 %v599
    %v755 = vpop.f32.mrb[0].mxu0
    %v756 = vadd.f32 %v545, %v755
    %v757 = vpop.f32.mrb[0].mxu0
    %v758 = vpop.f32.mrb[0].mxu0
    %v759 = vadd.f32 %v545, %v758
    %v760 = vpop.f32.mrb[0].mxu0
    %761 = vdwg.mxu0
    %vm762 = vcmask 523264
    %v763 = vsel %vm762, %v636, 0.0
    %v764 = vsel %vm762, %v639, 0.0
    %v765 = vadd.f32 %v763, %v764
    %v766 = vsel %vm762, %v644, 0.0
    %v767 = vadd.f32 %v765, %v766
    %v768 = vsel %vm762, %v647, 0.0
    %v769 = vadd.f32 %v767, %v768
    %v770 = vsel %vm762, %v652, 0.0
    %v771 = vadd.f32 %v769, %v770
    %v772 = vsel %vm762, %v655, 0.0
    %v773 = vadd.f32 %v771, %v772
    %v774 = vsel %vm762, %v660, 0.0
    %v775 = vadd.f32 %v773, %v774
    %v776 = vsel %vm762, %v663, 0.0
    %v777 = vadd.f32 %v775, %v776
    %v778 = vsel %vm762, %v668, 0.0
    %v779 = vadd.f32 %v777, %v778
    %v780 = vsel %vm762, %v671, 0.0
    %v781 = vadd.f32 %v779, %v780
    %v782 = vsel %vm762, %v676, 0.0
    %v783 = vadd.f32 %v781, %v782
    %v784 = vsel %vm762, %v679, 0.0
    %v785 = vadd.f32 %v783, %v784
    %v786 = vsel %vm762, %v684, 0.0
    %v787 = vadd.f32 %v785, %v786
    %v788 = vsel %vm762, %v687, 0.0
    %v789 = vadd.f32 %v787, %v788
    %v790 = vsel %vm762, %v692, 0.0
    %v791 = vadd.f32 %v789, %v790
    %v792 = vsel %vm762, %v695, 0.0
    %v793 = vadd.f32 %v791, %v792
    %v794 = vsel %vm762, %v700, 0.0
    %v795 = vadd.f32 %v793, %v794
    %v796 = vsel %vm762, %v703, 0.0
    %v797 = vadd.f32 %v795, %v796
    %v798 = vsel %vm762, %v708, 0.0
    %v799 = vadd.f32 %v797, %v798
    %v800 = vsel %vm762, %v711, 0.0
    %v801 = vadd.f32 %v799, %v800
    %v802 = vsel %vm762, %v716, 0.0
    %v803 = vadd.f32 %v801, %v802
    %v804 = vsel %vm762, %v719, 0.0
    %v805 = vadd.f32 %v803, %v804
    %v806 = vsel %vm762, %v724, 0.0
    %v807 = vadd.f32 %v805, %v806
    %v808 = vsel %vm762, %v727, 0.0
    %v809 = vadd.f32 %v807, %v808
    %v810 = vsel %vm762, %v732, 0.0
    %v811 = vadd.f32 %v809, %v810
    %v812 = vsel %vm762, %v735, 0.0
    %v813 = vadd.f32 %v811, %v812
    %v814 = vsel %vm762, %v740, 0.0
    %v815 = vadd.f32 %v813, %v814
    %v816 = vsel %vm762, %v743, 0.0
    %v817 = vadd.f32 %v815, %v816
    %v818 = vsel %vm762, %v748, 0.0
    %v819 = vadd.f32 %v817, %v818
    %v820 = vsel %vm762, %v751, 0.0
    %v821 = vadd.f32 %v819, %v820
    %v822 = vsel %vm762, %v756, 0.0
    %v823 = vadd.f32 %v821, %v822
    %v824 = vsel %vm762, %v759, 0.0
    %v825 = vadd.f32 %v823, %v824
    %v826 = vrot.slane %v825, 4
    %v827 = vadd.f32 %v825, %v826
    %v828 = vrot.slane %v827, 2
    %v829 = vadd.f32 %v827, %v828
    %v830 = vrot.slane %v829, 1
    %v831 = vadd.f32 %v829, %v830
    %v832 = vrcp.pop 256.0
    %v833 = vmul.f32 %v831, %v832
    %v834 = vsub.f32 %v636, %v833
    %v835 = vsub.f32 %v639, %v833
    %v836 = vsub.f32 %v644, %v833
    %v837 = vsub.f32 %v647, %v833
    %v838 = vsub.f32 %v652, %v833
    %v839 = vsub.f32 %v655, %v833
    %v840 = vsub.f32 %v660, %v833
    %v841 = vsub.f32 %v663, %v833
    %v842 = vsub.f32 %v668, %v833
    %v843 = vsub.f32 %v671, %v833
    %v844 = vsub.f32 %v676, %v833
    %v845 = vsub.f32 %v679, %v833
    %v846 = vsub.f32 %v684, %v833
    %v847 = vsub.f32 %v687, %v833
    %v848 = vsub.f32 %v692, %v833
    %v849 = vsub.f32 %v695, %v833
    %v850 = vsub.f32 %v700, %v833
    %v851 = vsub.f32 %v703, %v833
    %v852 = vsub.f32 %v708, %v833
    %v853 = vsub.f32 %v711, %v833
    %v854 = vsub.f32 %v716, %v833
    %v855 = vsub.f32 %v719, %v833
    %v856 = vsub.f32 %v724, %v833
    %v857 = vsub.f32 %v727, %v833
    %v858 = vsub.f32 %v732, %v833
    %v859 = vsub.f32 %v735, %v833
    %v860 = vsub.f32 %v740, %v833
    %v861 = vsub.f32 %v743, %v833
    %v862 = vsub.f32 %v748, %v833
    %v863 = vsub.f32 %v751, %v833
    %v864 = vsub.f32 %v756, %v833
    %v865 = vsub.f32 %v759, %v833
    %v866 = vmul.f32 %v834, %v834
    %v867 = vmul.f32 %v835, %v835
    %v868 = vmul.f32 %v836, %v836
    %v869 = vmul.f32 %v837, %v837
    %v870 = vmul.f32 %v838, %v838
    %v871 = vmul.f32 %v839, %v839
    %v872 = vmul.f32 %v840, %v840
    %v873 = vmul.f32 %v841, %v841
    %v874 = vmul.f32 %v842, %v842
    %v875 = vmul.f32 %v843, %v843
    %v876 = vmul.f32 %v844, %v844
    %v877 = vmul.f32 %v845, %v845
    %v878 = vmul.f32 %v846, %v846
    %v879 = vmul.f32 %v847, %v847
    %v880 = vmul.f32 %v848, %v848
    %v881 = vmul.f32 %v849, %v849
    %v882 = vmul.f32 %v850, %v850
    %v883 = vmul.f32 %v851, %v851
    %v884 = vmul.f32 %v852, %v852
    %v885 = vmul.f32 %v853, %v853
    %v886 = vmul.f32 %v854, %v854
    %v887 = vmul.f32 %v855, %v855
    %v888 = vmul.f32 %v856, %v856
    %v889 = vmul.f32 %v857, %v857
    %v890 = vmul.f32 %v858, %v858
    %v891 = vmul.f32 %v859, %v859
    %v892 = vmul.f32 %v860, %v860
    %v893 = vmul.f32 %v861, %v861
    %v894 = vmul.f32 %v862, %v862
    %v895 = vmul.f32 %v863, %v863
    %v896 = vmul.f32 %v864, %v864
    %v897 = vmul.f32 %v865, %v865
    %v898 = vsel %vm762, %v866, 0.0
    %v899 = vsel %vm762, %v867, 0.0
    %v900 = vadd.f32 %v898, %v899
    %v901 = vsel %vm762, %v868, 0.0
    %v902 = vadd.f32 %v900, %v901
    %v903 = vsel %vm762, %v869, 0.0
    %v904 = vadd.f32 %v902, %v903
    %v905 = vsel %vm762, %v870, 0.0
    %v906 = vadd.f32 %v904, %v905
    %v907 = vsel %vm762, %v871, 0.0
    %v908 = vadd.f32 %v906, %v907
    %v909 = vsel %vm762, %v872, 0.0
    %v910 = vadd.f32 %v908, %v909
    %v911 = vsel %vm762, %v873, 0.0
    %v912 = vadd.f32 %v910, %v911
    %v913 = vsel %vm762, %v874, 0.0
    %v914 = vadd.f32 %v912, %v913
    %v915 = vsel %vm762, %v875, 0.0
    %v916 = vadd.f32 %v914, %v915
    %v917 = vsel %vm762, %v876, 0.0
    %v918 = vadd.f32 %v916, %v917
    %v919 = vsel %vm762, %v877, 0.0
    %v920 = vadd.f32 %v918, %v919
    %v921 = vsel %vm762, %v878, 0.0
    %v922 = vadd.f32 %v920, %v921
    %v923 = vsel %vm762, %v879, 0.0
    %v924 = vadd.f32 %v922, %v923
    %v925 = vsel %vm762, %v880, 0.0
    %v926 = vadd.f32 %v924, %v925
    %v927 = vsel %vm762, %v881, 0.0
    %v928 = vadd.f32 %v926, %v927
    %v929 = vsel %vm762, %v882, 0.0
    %v930 = vadd.f32 %v928, %v929
    %v931 = vsel %vm762, %v883, 0.0
    %v932 = vadd.f32 %v930, %v931
    %v933 = vsel %vm762, %v884, 0.0
    %v934 = vadd.f32 %v932, %v933
    %v935 = vsel %vm762, %v885, 0.0
    %v936 = vadd.f32 %v934, %v935
    %v937 = vsel %vm762, %v886, 0.0
    %v938 = vadd.f32 %v936, %v937
    %v939 = vsel %vm762, %v887, 0.0
    %v940 = vadd.f32 %v938, %v939
    %v941 = vsel %vm762, %v888, 0.0
    %v942 = vadd.f32 %v940, %v941
    %v943 = vsel %vm762, %v889, 0.0
    %v944 = vadd.f32 %v942, %v943
    %v945 = vsel %vm762, %v890, 0.0
    %v946 = vadd.f32 %v944, %v945
    %v947 = vsel %vm762, %v891, 0.0
    %v948 = vadd.f32 %v946, %v947
    %v949 = vsel %vm762, %v892, 0.0
    %v950 = vadd.f32 %v948, %v949
    %v951 = vsel %vm762, %v893, 0.0
    %v952 = vadd.f32 %v950, %v951
    %v953 = vsel %vm762, %v894, 0.0
    %v954 = vadd.f32 %v952, %v953
    %v955 = vsel %vm762, %v895, 0.0
    %v956 = vadd.f32 %v954, %v955
    %v957 = vsel %vm762, %v896, 0.0
    %v958 = vadd.f32 %v956, %v957
    %v959 = vsel %vm762, %v897, 0.0
    %v960 = vadd.f32 %v958, %v959
    %v961 = vrot.slane %v960, 4
    %v962 = vadd.f32 %v960, %v961
    %v963 = vrot.slane %v962, 2
    %v964 = vadd.f32 %v962, %v963
    %v965 = vrot.slane %v964, 1
    %v966 = vadd.f32 %v964, %v965
    %v967 = vmul.f32 %v966, %v832
    %v968 = vadd.f32 %v967, 1e-05
    %v969 = vrsqrt.pop %v968
    %v970 = vmul.f32 %v834, %v969
    %v971 = vmul.f32 %v835, %v969
    %v972 = vmul.f32 %v836, %v969
    %v973 = vmul.f32 %v837, %v969
    %v974 = vmul.f32 %v838, %v969
    %v975 = vmul.f32 %v839, %v969
    %v976 = vmul.f32 %v840, %v969
    %v977 = vmul.f32 %v841, %v969
    %v978 = vmul.f32 %v842, %v969
    %v979 = vmul.f32 %v843, %v969
    %v980 = vmul.f32 %v844, %v969
    %v981 = vmul.f32 %v845, %v969
    %v982 = vmul.f32 %v846, %v969
    %v983 = vmul.f32 %v847, %v969
    %v984 = vmul.f32 %v848, %v969
    %v985 = vmul.f32 %v849, %v969
    %v986 = vmul.f32 %v850, %v969
    %v987 = vmul.f32 %v851, %v969
    %v988 = vmul.f32 %v852, %v969
    %v989 = vmul.f32 %v853, %v969
    %v990 = vmul.f32 %v854, %v969
    %v991 = vmul.f32 %v855, %v969
    %v992 = vmul.f32 %v856, %v969
    %v993 = vmul.f32 %v857, %v969
    %v994 = vmul.f32 %v858, %v969
    %v995 = vmul.f32 %v859, %v969
    %v996 = vmul.f32 %v860, %v969
    %v997 = vmul.f32 %v861, %v969
    %v998 = vmul.f32 %v862, %v969
    %v999 = vmul.f32 %v863, %v969
    %v1000 = vmul.f32 %v864, %v969
    %v1001 = vmul.f32 %v865, %v969
    %v1002 = vlaneseq
    %v1003 = vshrl.u32 %v1002, 7
    %v1004 = vsub.s32 1, %v1003
    %v1005 = vrot.slane %v101, %v1004
    %v1006 = vmul.f32 %v970, %v1005
    %v1007 = vmul.f32 %v971, %v1005
    %v1008 = vmul.f32 %v972, %v1005
    %v1009 = vmul.f32 %v973, %v1005
    %v1010 = vmul.f32 %v974, %v1005
    %v1011 = vmul.f32 %v975, %v1005
    %v1012 = vmul.f32 %v976, %v1005
    %v1013 = vmul.f32 %v977, %v1005
    %v1014 = vmul.f32 %v978, %v1005
    %v1015 = vmul.f32 %v979, %v1005
    %v1016 = vmul.f32 %v980, %v1005
    %v1017 = vmul.f32 %v981, %v1005
    %v1018 = vmul.f32 %v982, %v1005
    %v1019 = vmul.f32 %v983, %v1005
    %v1020 = vmul.f32 %v984, %v1005
    %v1021 = vmul.f32 %v985, %v1005
    %v1022 = vmul.f32 %v986, %v1005
    %v1023 = vmul.f32 %v987, %v1005
    %v1024 = vmul.f32 %v988, %v1005
    %v1025 = vmul.f32 %v989, %v1005
    %v1026 = vmul.f32 %v990, %v1005
    %v1027 = vmul.f32 %v991, %v1005
    %v1028 = vmul.f32 %v992, %v1005
    %v1029 = vmul.f32 %v993, %v1005
    %v1030 = vmul.f32 %v994, %v1005
    %v1031 = vmul.f32 %v995, %v1005
    %v1032 = vmul.f32 %v996, %v1005
    %v1033 = vmul.f32 %v997, %v1005
    %v1034 = vmul.f32 %v998, %v1005
    %v1035 = vmul.f32 %v999, %v1005
    %v1036 = vmul.f32 %v1000, %v1005
    %v1037 = vmul.f32 %v1001, %v1005
    %v1038 = vlaneseq
    %v1039 = vshrl.u32 %v1038, 7
    %v1040 = vsub.s32 2, %v1039
    %v1041 = vrot.slane %v101, %v1040
    %v1042 = vadd.f32 %v1006, %v1041
    %v1043 = vadd.f32 %v1007, %v1041
    %v1044 = vadd.f32 %v1008, %v1041
    %v1045 = vadd.f32 %v1009, %v1041
    %v1046 = vadd.f32 %v1010, %v1041
    %v1047 = vadd.f32 %v1011, %v1041
    %v1048 = vadd.f32 %v1012, %v1041
    %v1049 = vadd.f32 %v1013, %v1041
    %v1050 = vadd.f32 %v1014, %v1041
    %v1051 = vadd.f32 %v1015, %v1041
    %v1052 = vadd.f32 %v1016, %v1041
    %v1053 = vadd.f32 %v1017, %v1041
    %v1054 = vadd.f32 %v1018, %v1041
    %v1055 = vadd.f32 %v1019, %v1041
    %v1056 = vadd.f32 %v1020, %v1041
    %v1057 = vadd.f32 %v1021, %v1041
    %v1058 = vadd.f32 %v1022, %v1041
    %v1059 = vadd.f32 %v1023, %v1041
    %v1060 = vadd.f32 %v1024, %v1041
    %v1061 = vadd.f32 %v1025, %v1041
    %v1062 = vadd.f32 %v1026, %v1041
    %v1063 = vadd.f32 %v1027, %v1041
    %v1064 = vadd.f32 %v1028, %v1041
    %v1065 = vadd.f32 %v1029, %v1041
    %v1066 = vadd.f32 %v1030, %v1041
    %v1067 = vadd.f32 %v1031, %v1041
    %v1068 = vadd.f32 %v1032, %v1041
    %v1069 = vadd.f32 %v1033, %v1041
    %v1070 = vadd.f32 %v1034, %v1041
    %v1071 = vadd.f32 %v1035, %v1041
    %v1072 = vadd.f32 %v1036, %v1041
    %v1073 = vadd.f32 %v1037, %v1041
    %vm1074 = vcmp.ge.f32.partialorder %v1042, 0.0
    %vm1075 = vcmp.ge.f32.partialorder %v1043, 0.0
    %vm1076 = vcmp.ge.f32.partialorder %v1044, 0.0
    %vm1077 = vcmp.ge.f32.partialorder %v1045, 0.0
    %vm1078 = vcmp.ge.f32.partialorder %v1046, 0.0
    %vm1079 = vcmp.ge.f32.partialorder %v1047, 0.0
    %vm1080 = vcmp.ge.f32.partialorder %v1048, 0.0
    %vm1081 = vcmp.ge.f32.partialorder %v1049, 0.0
    %vm1082 = vcmp.ge.f32.partialorder %v1050, 0.0
    %vm1083 = vcmp.ge.f32.partialorder %v1051, 0.0
    %vm1084 = vcmp.ge.f32.partialorder %v1052, 0.0
    %vm1085 = vcmp.ge.f32.partialorder %v1053, 0.0
    %vm1086 = vcmp.ge.f32.partialorder %v1054, 0.0
    %vm1087 = vcmp.ge.f32.partialorder %v1055, 0.0
    %vm1088 = vcmp.ge.f32.partialorder %v1056, 0.0
    %vm1089 = vcmp.ge.f32.partialorder %v1057, 0.0
    %vm1090 = vcmp.ge.f32.partialorder %v1058, 0.0
    %vm1091 = vcmp.ge.f32.partialorder %v1059, 0.0
    %vm1092 = vcmp.ge.f32.partialorder %v1060, 0.0
    %vm1093 = vcmp.ge.f32.partialorder %v1061, 0.0
    %vm1094 = vcmp.ge.f32.partialorder %v1062, 0.0
    %vm1095 = vcmp.ge.f32.partialorder %v1063, 0.0
    %vm1096 = vcmp.ge.f32.partialorder %v1064, 0.0
    %vm1097 = vcmp.ge.f32.partialorder %v1065, 0.0
    %vm1098 = vcmp.ge.f32.partialorder %v1066, 0.0
    %vm1099 = vcmp.ge.f32.partialorder %v1067, 0.0
    %vm1100 = vcmp.ge.f32.partialorder %v1068, 0.0
    %vm1101 = vcmp.ge.f32.partialorder %v1069, 0.0
    %vm1102 = vcmp.ge.f32.partialorder %v1070, 0.0
    %vm1103 = vcmp.ge.f32.partialorder %v1071, 0.0
    %vm1104 = vcmp.ge.f32.partialorder %v1072, 0.0
    %vm1105 = vcmp.ge.f32.partialorder %v1073, 0.0
    %v1106 = vstv %s103
    %v1107 = vmul.f32 %v1106, %v1042
    %v1108 = vmul.f32 %v1106, %v1043
    %v1109 = vmul.f32 %v1106, %v1044
    %v1110 = vmul.f32 %v1106, %v1045
    %v1111 = vmul.f32 %v1106, %v1046
    %v1112 = vmul.f32 %v1106, %v1047
    %v1113 = vmul.f32 %v1106, %v1048
    %v1114 = vmul.f32 %v1106, %v1049
    %v1115 = vmul.f32 %v1106, %v1050
    %v1116 = vmul.f32 %v1106, %v1051
    %v1117 = vmul.f32 %v1106, %v1052
    %v1118 = vmul.f32 %v1106, %v1053
    %v1119 = vmul.f32 %v1106, %v1054
    %v1120 = vmul.f32 %v1106, %v1055
    %v1121 = vmul.f32 %v1106, %v1056
    %v1122 = vmul.f32 %v1106, %v1057
    %v1123 = vmul.f32 %v1106, %v1058
    %v1124 = vmul.f32 %v1106, %v1059
    %v1125 = vmul.f32 %v1106, %v1060
    %v1126 = vmul.f32 %v1106, %v1061
    %v1127 = vmul.f32 %v1106, %v1062
    %v1128 = vmul.f32 %v1106, %v1063
    %v1129 = vmul.f32 %v1106, %v1064
    %v1130 = vmul.f32 %v1106, %v1065
    %v1131 = vmul.f32 %v1106, %v1066
    %v1132 = vmul.f32 %v1106, %v1067
    %v1133 = vmul.f32 %v1106, %v1068
    %v1134 = vmul.f32 %v1106, %v1069
    %v1135 = vmul.f32 %v1106, %v1070
    %v1136 = vmul.f32 %v1106, %v1071
    %v1137 = vmul.f32 %v1106, %v1072
    %v1138 = vmul.f32 %v1106, %v1073
    %v1139 = vsel %vm1074, %v1042, %v1107
    %v1140 = vsel %vm1075, %v1043, %v1108
    %v1141 = vsel %vm1076, %v1044, %v1109
    %v1142 = vsel %vm1077, %v1045, %v1110
    %v1143 = vsel %vm1078, %v1046, %v1111
    %v1144 = vsel %vm1079, %v1047, %v1112
    %v1145 = vsel %vm1080, %v1048, %v1113
    %v1146 = vsel %vm1081, %v1049, %v1114
    %v1147 = vsel %vm1082, %v1050, %v1115
    %v1148 = vsel %vm1083, %v1051, %v1116
    %v1149 = vsel %vm1084, %v1052, %v1117
    %v1150 = vsel %vm1085, %v1053, %v1118
    %v1151 = vsel %vm1086, %v1054, %v1119
    %v1152 = vsel %vm1087, %v1055, %v1120
    %v1153 = vsel %vm1088, %v1056, %v1121
    %v1154 = vsel %vm1089, %v1057, %v1122
    %v1155 = vsel %vm1090, %v1058, %v1123
    %v1156 = vsel %vm1091, %v1059, %v1124
    %v1157 = vsel %vm1092, %v1060, %v1125
    %v1158 = vsel %vm1093, %v1061, %v1126
    %v1159 = vsel %vm1094, %v1062, %v1127
    %v1160 = vsel %vm1095, %v1063, %v1128
    %v1161 = vsel %vm1096, %v1064, %v1129
    %v1162 = vsel %vm1097, %v1065, %v1130
    %v1163 = vsel %vm1098, %v1066, %v1131
    %v1164 = vsel %vm1099, %v1067, %v1132
    %v1165 = vsel %vm1100, %v1068, %v1133
    %v1166 = vsel %vm1101, %v1069, %v1134
    %v1167 = vsel %vm1102, %v1070, %v1135
    %v1168 = vsel %vm1103, %v1071, %v1136
    %v1169 = vsel %vm1104, %v1072, %v1137
    %v1170 = vsel %vm1105, %v1073, %v1138
    %v1171 = vpack.c.bf16 %v1140, %v1139
    %v1172 = vpack.c.bf16 %v1142, %v1141
    %v1173 = vpack.c.bf16 %v1144, %v1143
    %v1174 = vpack.c.bf16 %v1146, %v1145
    %v1175 = vpack.c.bf16 %v1148, %v1147
    %v1176 = vpack.c.bf16 %v1150, %v1149
    %v1177 = vpack.c.bf16 %v1152, %v1151
    %v1178 = vpack.c.bf16 %v1154, %v1153
    %v1179 = vpack.c.bf16 %v1156, %v1155
    %v1180 = vpack.c.bf16 %v1158, %v1157
    %v1181 = vpack.c.bf16 %v1160, %v1159
    %v1182 = vpack.c.bf16 %v1162, %v1161
    %v1183 = vpack.c.bf16 %v1164, %v1163
    %v1184 = vpack.c.bf16 %v1166, %v1165
    %v1185 = vpack.c.bf16 %v1168, %v1167
    %v1186 = vpack.c.bf16 %v1170, %v1169
    %v1187 = vld [vmem:[%s2 + $0x20] sm:$0xf]
    %v1188 = vld [vmem:[%s2 + $0x24] sm:$0xf]
    %v1189 = vld [vmem:[%s2 + $0x28] sm:$0xf]
    %v1190 = vld [vmem:[%s2 + $0x2c] sm:$0xf]
    %v1191 = vld [vmem:[%s2 + $0x30] sm:$0xf]
    %v1192 = vld [vmem:[%s2 + $0x34] sm:$0xf]
    %v1193 = vld [vmem:[%s2 + $0x38] sm:$0xf]
    %v1194 = vld [vmem:[%s2 + $0x3c] sm:$0xf]
    %v1203 = vunpack.c.l.b16 %v1187
    %v1204 = vunpack.c.l.b16 %v1188
    %v1205 = vunpack.c.l.b16 %v1189
    %v1206 = vunpack.c.l.b16 %v1190
    %v1207 = vunpack.c.l.b16 %v1191
    %v1208 = vunpack.c.l.b16 %v1192
    %v1209 = vunpack.c.l.b16 %v1193
    %v1210 = vunpack.c.l.b16 %v1194
    %v1211 = vpack.c.b16 %v1204, %v1203
    %v1212 = vpack.c.b16 %v1206, %v1205
    %v1213 = vpack.c.b16 %v1208, %v1207
    %v1214 = vpack.c.b16 %v1210, %v1209
    %v1220 = vsel %vm762, %v1171, 0
    %v1223 = vsel %vm762, %v1172, 0
    %v1226 = vsel %vm762, %v1173, 0
    %v1229 = vsel %vm762, %v1174, 0
    %v1232 = vsel %vm762, %v1175, 0
    %v1235 = vsel %vm762, %v1176, 0
    %v1238 = vsel %vm762, %v1177, 0
    %v1241 = vsel %vm762, %v1178, 0
    %v1244 = vsel %vm762, %v1179, 0
    %v1247 = vsel %vm762, %v1180, 0
    %v1250 = vsel %vm762, %v1181, 0
    %v1253 = vsel %vm762, %v1182, 0
    %v1256 = vsel %vm762, %v1183, 0
    %v1259 = vsel %vm762, %v1184, 0
    %v1262 = vsel %vm762, %v1185, 0
    %v1265 = vsel %vm762, %v1186, 0
    %1267 = vmatprep.subr.bf16.mxu0 0
    %1268 = vmatpush1.bf16.msra.mxu0 %v1211
    %1269 = vmatprep.subr.bf16.mxu0 0
    %1270 = vmatpush1.bf16.msra.mxu0 %v1212
    %1271 = vmatprep.subr.bf16.mxu0 0
    %1272 = vmatpush1.bf16.msra.mxu0 %v1213
    %1273 = vmatprep.subr.bf16.mxu0 0
    %1274 = vmatpush1.bf16.msra.mxu0 %v1214
    %1275 = vmatprep.subr.bf16.mxu0 0
    %1276 = vmatpush1.bf16.msra.mxu0 0
    %1277 = vmatprep.subr.bf16.mxu0 0
    %1278 = vmatpush1.bf16.msra.mxu0 0
    %1279 = vmatprep.subr.bf16.mxu0 0
    %1280 = vmatpush1.bf16.msra.mxu0 0
    %1281 = vmatprep.subr.bf16.mxu0 0
    %1282 = vmatpush1.bf16.msra.mxu0 0
    %1283 = vmatprep.subr.bf16.mxu0 0
    %1284 = vmatpush1.bf16.msra.mxu0 0
    %1285 = vmatprep.subr.bf16.mxu0 0
    %1286 = vmatpush1.bf16.msra.mxu0 0
    %1287 = vmatprep.subr.bf16.mxu0 0
    %1288 = vmatpush1.bf16.msra.mxu0 0
    %1289 = vmatprep.subr.bf16.mxu0 0
    %1290 = vmatpush1.bf16.msra.mxu0 0
    %1291 = vmatprep.subr.bf16.mxu0 0
    %1292 = vmatpush1.bf16.msra.mxu0 0
    %1293 = vmatprep.subr.bf16.mxu0 0
    %1294 = vmatpush1.bf16.msra.mxu0 0
    %1295 = vmatprep.subr.bf16.mxu0 0
    %1296 = vmatpush1.bf16.msra.mxu0 0
    %1297 = vmatprep.subr.bf16.mxu0 0
    %1298 = vmatpush1.bf16.msra.mxu0 0
    %1299 = vmatprep.mubr.bf16.mxu0 0
    %1300 = vmatmul.mubr.bf16.gmra.mrb[0].mxu0 %v1220
    %v1301 = vpop.f32.mrb[0].mxu0
    %v1302 = vadd.f32 0.0, %v1301
    %v1303 = vpop.f32.mrb[0].mxu0
    %v1304 = vpop.f32.mrb[0].mxu0
    %v1305 = vadd.f32 0.0, %v1304
    %v1306 = vpop.f32.mrb[0].mxu0
    %1307 = vmatprep.mubr.bf16.mxu0 0
    %1308 = vmatmul.mubr.bf16.gmra.mrb[0].mxu0 %v1223
    %v1309 = vpop.f32.mrb[0].mxu0
    %v1310 = vadd.f32 0.0, %v1309
    %v1311 = vpop.f32.mrb[0].mxu0
    %v1312 = vpop.f32.mrb[0].mxu0
    %v1313 = vadd.f32 0.0, %v1312
    %v1314 = vpop.f32.mrb[0].mxu0
    %1315 = vmatprep.mubr.bf16.mxu0 0
    %1316 = vmatmul.mubr.bf16.gmra.mrb[0].mxu0 %v1226
    %v1317 = vpop.f32.mrb[0].mxu0
    %v1318 = vadd.f32 0.0, %v1317
    %v1319 = vpop.f32.mrb[0].mxu0
    %v1320 = vpop.f32.mrb[0].mxu0
    %v1321 = vadd.f32 0.0, %v1320
    %v1322 = vpop.f32.mrb[0].mxu0
    %1323 = vmatprep.mubr.bf16.mxu0 0
    %1324 = vmatmul.mubr.bf16.gmra.mrb[0].mxu0 %v1229
    %v1325 = vpop.f32.mrb[0].mxu0
    %v1326 = vadd.f32 0.0, %v1325
    %v1327 = vpop.f32.mrb[0].mxu0
    %v1328 = vpop.f32.mrb[0].mxu0
    %v1329 = vadd.f32 0.0, %v1328
    %v1330 = vpop.f32.mrb[0].mxu0
    %1331 = vmatprep.mubr.bf16.mxu0 0
    %1332 = vmatmul.mubr.bf16.gmra.mrb[0].mxu0 %v1232
    %v1333 = vpop.f32.mrb[0].mxu0
    %v1334 = vadd.f32 0.0, %v1333
    %v1335 = vpop.f32.mrb[0].mxu0
    %v1336 = vpop.f32.mrb[0].mxu0
    %v1337 = vadd.f32 0.0, %v1336
    %v1338 = vpop.f32.mrb[0].mxu0
    %1339 = vmatprep.mubr.bf16.mxu0 0
    %1340 = vmatmul.mubr.bf16.gmra.mrb[0].mxu0 %v1235
    %v1341 = vpop.f32.mrb[0].mxu0
    %v1342 = vadd.f32 0.0, %v1341
    %v1343 = vpop.f32.mrb[0].mxu0
    %v1344 = vpop.f32.mrb[0].mxu0
    %v1345 = vadd.f32 0.0, %v1344
    %v1346 = vpop.f32.mrb[0].mxu0
    %1347 = vmatprep.mubr.bf16.mxu0 0
    %1348 = vmatmul.mubr.bf16.gmra.mrb[0].mxu0 %v1238
    %v1349 = vpop.f32.mrb[0].mxu0
    %v1350 = vadd.f32 0.0, %v1349
    %v1351 = vpop.f32.mrb[0].mxu0
    %v1352 = vpop.f32.mrb[0].mxu0
    %v1353 = vadd.f32 0.0, %v1352
    %v1354 = vpop.f32.mrb[0].mxu0
    %1355 = vmatprep.mubr.bf16.mxu0 0
    %1356 = vmatmul.mubr.bf16.gmra.mrb[0].mxu0 %v1241
    %v1357 = vpop.f32.mrb[0].mxu0
    %v1358 = vadd.f32 0.0, %v1357
    %v1359 = vpop.f32.mrb[0].mxu0
    %v1360 = vpop.f32.mrb[0].mxu0
    %v1361 = vadd.f32 0.0, %v1360
    %v1362 = vpop.f32.mrb[0].mxu0
    %1363 = vmatprep.mubr.bf16.mxu0 0
    %1364 = vmatmul.mubr.bf16.gmra.mrb[0].mxu0 %v1244
    %v1365 = vpop.f32.mrb[0].mxu0
    %v1366 = vadd.f32 0.0, %v1365
    %v1367 = vpop.f32.mrb[0].mxu0
    %v1368 = vpop.f32.mrb[0].mxu0
    %v1369 = vadd.f32 0.0, %v1368
    %v1370 = vpop.f32.mrb[0].mxu0
    %1371 = vmatprep.mubr.bf16.mxu0 0
    %1372 = vmatmul.mubr.bf16.gmra.mrb[0].mxu0 %v1247
    %v1373 = vpop.f32.mrb[0].mxu0
    %v1374 = vadd.f32 0.0, %v1373
    %v1375 = vpop.f32.mrb[0].mxu0
    %v1376 = vpop.f32.mrb[0].mxu0
    %v1377 = vadd.f32 0.0, %v1376
    %v1378 = vpop.f32.mrb[0].mxu0
    %1379 = vmatprep.mubr.bf16.mxu0 0
    %1380 = vmatmul.mubr.bf16.gmra.mrb[0].mxu0 %v1250
    %v1381 = vpop.f32.mrb[0].mxu0
    %v1382 = vadd.f32 0.0, %v1381
    %v1383 = vpop.f32.mrb[0].mxu0
    %v1384 = vpop.f32.mrb[0].mxu0
    %v1385 = vadd.f32 0.0, %v1384
    %v1386 = vpop.f32.mrb[0].mxu0
    %1387 = vmatprep.mubr.bf16.mxu0 0
    %1388 = vmatmul.mubr.bf16.gmra.mrb[0].mxu0 %v1253
    %v1389 = vpop.f32.mrb[0].mxu0
    %v1390 = vadd.f32 0.0, %v1389
    %v1391 = vpop.f32.mrb[0].mxu0
    %v1392 = vpop.f32.mrb[0].mxu0
    %v1393 = vadd.f32 0.0, %v1392
    %v1394 = vpop.f32.mrb[0].mxu0
    %1395 = vmatprep.mubr.bf16.mxu0 0
    %1396 = vmatmul.mubr.bf16.gmra.mrb[0].mxu0 %v1256
    %v1397 = vpop.f32.mrb[0].mxu0
    %v1398 = vadd.f32 0.0, %v1397
    %v1399 = vpop.f32.mrb[0].mxu0
    %v1400 = vpop.f32.mrb[0].mxu0
    %v1401 = vadd.f32 0.0, %v1400
    %v1402 = vpop.f32.mrb[0].mxu0
    %1403 = vmatprep.mubr.bf16.mxu0 0
    %1404 = vmatmul.mubr.bf16.gmra.mrb[0].mxu0 %v1259
    %v1405 = vpop.f32.mrb[0].mxu0
    %v1406 = vadd.f32 0.0, %v1405
    %v1407 = vpop.f32.mrb[0].mxu0
    %v1408 = vpop.f32.mrb[0].mxu0
    %v1409 = vadd.f32 0.0, %v1408
    %v1410 = vpop.f32.mrb[0].mxu0
    %1411 = vmatprep.mubr.bf16.mxu0 0
    %1412 = vmatmul.mubr.bf16.gmra.mrb[0].mxu0 %v1262
    %v1413 = vpop.f32.mrb[0].mxu0
    %v1414 = vadd.f32 0.0, %v1413
    %v1415 = vpop.f32.mrb[0].mxu0
    %v1416 = vpop.f32.mrb[0].mxu0
    %v1417 = vadd.f32 0.0, %v1416
    %v1418 = vpop.f32.mrb[0].mxu0
    %1419 = vmatprep.mubr.bf16.mxu0 0
    %1420 = vmatmul.mubr.bf16.gmra.mrb[0].mxu0 %v1265
    %v1421 = vpop.f32.mrb[0].mxu0
    %v1422 = vadd.f32 0.0, %v1421
    %v1423 = vpop.f32.mrb[0].mxu0
    %v1424 = vpop.f32.mrb[0].mxu0
    %v1425 = vadd.f32 0.0, %v1424
    %v1426 = vpop.f32.mrb[0].mxu0
    %1427 = vdwg.mxu0
    %v1428 = vpack.c.bf16 %v1305, %v1302
    %v1429 = vpack.c.bf16 %v1313, %v1310
    %v1430 = vpack.c.bf16 %v1321, %v1318
    %v1431 = vpack.c.bf16 %v1329, %v1326
    %v1432 = vpack.c.bf16 %v1337, %v1334
    %v1433 = vpack.c.bf16 %v1345, %v1342
    %v1434 = vpack.c.bf16 %v1353, %v1350
    %v1435 = vpack.c.bf16 %v1361, %v1358
    %v1436 = vpack.c.bf16 %v1369, %v1366
    %v1437 = vpack.c.bf16 %v1377, %v1374
    %v1438 = vpack.c.bf16 %v1385, %v1382
    %v1439 = vpack.c.bf16 %v1393, %v1390
    %v1440 = vpack.c.bf16 %v1401, %v1398
    %v1441 = vpack.c.bf16 %v1409, %v1406
    %v1442 = vpack.c.bf16 %v1417, %v1414
    %v1443 = vpack.c.bf16 %v1425, %v1422
    %v1444 = vlaneseq
    %v1445 = vshrl.u32 %v1444, 7
    %v1446 = vsub.s32 3, %v1445
    %v1447 = vrot.slane %v101, %v1446
    %1448 = vmatprep.subr.bf16.mxu0 0
    %1449 = vmatpush1.bf16.msra.mxu0 %v1428
    %1450 = vmatprep.subr.bf16.mxu0 0
    %1451 = vmatpush1.bf16.msra.mxu0 %v1429
    %1452 = vmatprep.subr.bf16.mxu0 0
    %1453 = vmatpush1.bf16.msra.mxu0 %v1430
    %1454 = vmatprep.subr.bf16.mxu0 0
    %1455 = vmatpush1.bf16.msra.mxu0 %v1431
    %1456 = vmatprep.subr.bf16.mxu0 0
    %1457 = vmatpush1.bf16.msra.mxu0 %v1432
    %1458 = vmatprep.subr.bf16.mxu0 0
    %1459 = vmatpush1.bf16.msra.mxu0 %v1433
    %1460 = vmatprep.subr.bf16.mxu0 0
    %1461 = vmatpush1.bf16.msra.mxu0 %v1434
    %1462 = vmatprep.subr.bf16.mxu0 0
    %1463 = vmatpush1.bf16.msra.mxu0 %v1435
    %1464 = vmatprep.subr.bf16.mxu0 0
    %1465 = vmatpush1.bf16.msra.mxu0 %v1436
    %1466 = vmatprep.subr.bf16.mxu0 0
    %1467 = vmatpush1.bf16.msra.mxu0 %v1437
    %1468 = vmatprep.subr.bf16.mxu0 0
    %1469 = vmatpush1.bf16.msra.mxu0 %v1438
    %1470 = vmatprep.subr.bf16.mxu0 0
    %1471 = vmatpush1.bf16.msra.mxu0 %v1439
    %1472 = vmatprep.subr.bf16.mxu0 0
    %1473 = vmatpush1.bf16.msra.mxu0 %v1440
    %1474 = vmatprep.subr.bf16.mxu0 0
    %1475 = vmatpush1.bf16.msra.mxu0 %v1441
    %1476 = vmatprep.subr.bf16.mxu0 0
    %1477 = vmatpush1.bf16.msra.mxu0 %v1442
    %1478 = vmatprep.subr.bf16.mxu0 0
    %1479 = vmatpush1.bf16.msra.mxu0 %v1443
    %1480 = vmatprep.mubr.bf16.mxu0 %v204
    %1481 = vmatmul.mubr.bf16.gmra.mrb[0].mxu0 %v203
    %v1482 = vpop.f32.mrb[0].mxu0
    %v1483 = vadd.f32 %v1447, %v1482
    %v1484 = vpop.f32.mrb[0].mxu0
    %v1485 = vpop.f32.mrb[0].mxu0
    %v1486 = vadd.f32 %v1447, %v1485
    %v1487 = vpop.f32.mrb[0].mxu0
    %1488 = vmatprep.mubr.bf16.mxu0 %v206
    %1489 = vmatmul.mubr.bf16.gmra.mrb[0].mxu0 %v205
    %v1490 = vpop.f32.mrb[0].mxu0
    %v1491 = vadd.f32 %v1447, %v1490
    %v1492 = vpop.f32.mrb[0].mxu0
    %v1493 = vpop.f32.mrb[0].mxu0
    %v1494 = vadd.f32 %v1447, %v1493
    %v1495 = vpop.f32.mrb[0].mxu0
    %1496 = vmatprep.mubr.bf16.mxu0 %v208
    %1497 = vmatmul.mubr.bf16.gmra.mrb[0].mxu0 %v207
    %v1498 = vpop.f32.mrb[0].mxu0
    %v1499 = vadd.f32 %v1447, %v1498
    %v1500 = vpop.f32.mrb[0].mxu0
    %v1501 = vpop.f32.mrb[0].mxu0
    %v1502 = vadd.f32 %v1447, %v1501
    %v1503 = vpop.f32.mrb[0].mxu0
    %1504 = vmatprep.mubr.bf16.mxu0 %v210
    %1505 = vmatmul.mubr.bf16.gmra.mrb[0].mxu0 %v209
    %v1506 = vpop.f32.mrb[0].mxu0
    %v1507 = vadd.f32 %v1447, %v1506
    %v1508 = vpop.f32.mrb[0].mxu0
    %v1509 = vpop.f32.mrb[0].mxu0
    %v1510 = vadd.f32 %v1447, %v1509
    %v1511 = vpop.f32.mrb[0].mxu0
    %1512 = vmatprep.mubr.bf16.mxu0 %v212
    %1513 = vmatmul.mubr.bf16.gmra.mrb[0].mxu0 %v211
    %v1514 = vpop.f32.mrb[0].mxu0
    %v1515 = vadd.f32 %v1447, %v1514
    %v1516 = vpop.f32.mrb[0].mxu0
    %v1517 = vpop.f32.mrb[0].mxu0
    %v1518 = vadd.f32 %v1447, %v1517
    %v1519 = vpop.f32.mrb[0].mxu0
    %1520 = vmatprep.mubr.bf16.mxu0 %v214
    %1521 = vmatmul.mubr.bf16.gmra.mrb[0].mxu0 %v213
    %v1522 = vpop.f32.mrb[0].mxu0
    %v1523 = vadd.f32 %v1447, %v1522
    %v1524 = vpop.f32.mrb[0].mxu0
    %v1525 = vpop.f32.mrb[0].mxu0
    %v1526 = vadd.f32 %v1447, %v1525
    %v1527 = vpop.f32.mrb[0].mxu0
    %1528 = vmatprep.mubr.bf16.mxu0 %v216
    %1529 = vmatmul.mubr.bf16.gmra.mrb[0].mxu0 %v215
    %v1530 = vpop.f32.mrb[0].mxu0
    %v1531 = vadd.f32 %v1447, %v1530
    %v1532 = vpop.f32.mrb[0].mxu0
    %v1533 = vpop.f32.mrb[0].mxu0
    %v1534 = vadd.f32 %v1447, %v1533
    %v1535 = vpop.f32.mrb[0].mxu0
    %1536 = vmatprep.mubr.bf16.mxu0 %v218
    %1537 = vmatmul.mubr.bf16.gmra.mrb[0].mxu0 %v217
    %v1538 = vpop.f32.mrb[0].mxu0
    %v1539 = vadd.f32 %v1447, %v1538
    %v1540 = vpop.f32.mrb[0].mxu0
    %v1541 = vpop.f32.mrb[0].mxu0
    %v1542 = vadd.f32 %v1447, %v1541
    %v1543 = vpop.f32.mrb[0].mxu0
    %1544 = vmatprep.mubr.bf16.mxu0 %v220
    %1545 = vmatmul.mubr.bf16.gmra.mrb[0].mxu0 %v219
    %v1546 = vpop.f32.mrb[0].mxu0
    %v1547 = vadd.f32 %v1447, %v1546
    %v1548 = vpop.f32.mrb[0].mxu0
    %v1549 = vpop.f32.mrb[0].mxu0
    %v1550 = vadd.f32 %v1447, %v1549
    %v1551 = vpop.f32.mrb[0].mxu0
    %1552 = vmatprep.mubr.bf16.mxu0 %v222
    %1553 = vmatmul.mubr.bf16.gmra.mrb[0].mxu0 %v221
    %v1554 = vpop.f32.mrb[0].mxu0
    %v1555 = vadd.f32 %v1447, %v1554
    %v1556 = vpop.f32.mrb[0].mxu0
    %v1557 = vpop.f32.mrb[0].mxu0
    %v1558 = vadd.f32 %v1447, %v1557
    %v1559 = vpop.f32.mrb[0].mxu0
    %1560 = vmatprep.mubr.bf16.mxu0 %v224
    %1561 = vmatmul.mubr.bf16.gmra.mrb[0].mxu0 %v223
    %v1562 = vpop.f32.mrb[0].mxu0
    %v1563 = vadd.f32 %v1447, %v1562
    %v1564 = vpop.f32.mrb[0].mxu0
    %v1565 = vpop.f32.mrb[0].mxu0
    %v1566 = vadd.f32 %v1447, %v1565
    %v1567 = vpop.f32.mrb[0].mxu0
    %1568 = vmatprep.mubr.bf16.mxu0 %v226
    %1569 = vmatmul.mubr.bf16.gmra.mrb[0].mxu0 %v225
    %v1570 = vpop.f32.mrb[0].mxu0
    %v1571 = vadd.f32 %v1447, %v1570
    %v1572 = vpop.f32.mrb[0].mxu0
    %v1573 = vpop.f32.mrb[0].mxu0
    %v1574 = vadd.f32 %v1447, %v1573
    %v1575 = vpop.f32.mrb[0].mxu0
    %1576 = vmatprep.mubr.bf16.mxu0 %v228
    %1577 = vmatmul.mubr.bf16.gmra.mrb[0].mxu0 %v227
    %v1578 = vpop.f32.mrb[0].mxu0
    %v1579 = vadd.f32 %v1447, %v1578
    %v1580 = vpop.f32.mrb[0].mxu0
    %v1581 = vpop.f32.mrb[0].mxu0
    %v1582 = vadd.f32 %v1447, %v1581
    %v1583 = vpop.f32.mrb[0].mxu0
    %1584 = vmatprep.mubr.bf16.mxu0 %v230
    %1585 = vmatmul.mubr.bf16.gmra.mrb[0].mxu0 %v229
    %v1586 = vpop.f32.mrb[0].mxu0
    %v1587 = vadd.f32 %v1447, %v1586
    %v1588 = vpop.f32.mrb[0].mxu0
    %v1589 = vpop.f32.mrb[0].mxu0
    %v1590 = vadd.f32 %v1447, %v1589
    %v1591 = vpop.f32.mrb[0].mxu0
    %1592 = vmatprep.mubr.bf16.mxu0 %v232
    %1593 = vmatmul.mubr.bf16.gmra.mrb[0].mxu0 %v231
    %v1594 = vpop.f32.mrb[0].mxu0
    %v1595 = vadd.f32 %v1447, %v1594
    %v1596 = vpop.f32.mrb[0].mxu0
    %v1597 = vpop.f32.mrb[0].mxu0
    %v1598 = vadd.f32 %v1447, %v1597
    %v1599 = vpop.f32.mrb[0].mxu0
    %1600 = vmatprep.mubr.bf16.mxu0 %v234
    %1601 = vmatmul.mubr.bf16.gmra.mrb[0].mxu0 %v233
    %v1602 = vpop.f32.mrb[0].mxu0
    %v1603 = vadd.f32 %v1447, %v1602
    %v1604 = vpop.f32.mrb[0].mxu0
    %v1605 = vpop.f32.mrb[0].mxu0
    %v1606 = vadd.f32 %v1447, %v1605
    %v1607 = vpop.f32.mrb[0].mxu0
    %1608 = vdwg.mxu0
    %v1609 = vsel %vm762, %v1483, 0.0
    %v1610 = vsel %vm762, %v1486, 0.0
    %v1611 = vadd.f32 %v1609, %v1610
    %v1612 = vsel %vm762, %v1491, 0.0
    %v1613 = vadd.f32 %v1611, %v1612
    %v1614 = vsel %vm762, %v1494, 0.0
    %v1615 = vadd.f32 %v1613, %v1614
    %v1616 = vsel %vm762, %v1499, 0.0
    %v1617 = vadd.f32 %v1615, %v1616
    %v1618 = vsel %vm762, %v1502, 0.0
    %v1619 = vadd.f32 %v1617, %v1618
    %v1620 = vsel %vm762, %v1507, 0.0
    %v1621 = vadd.f32 %v1619, %v1620
    %v1622 = vsel %vm762, %v1510, 0.0
    %v1623 = vadd.f32 %v1621, %v1622
    %v1624 = vsel %vm762, %v1515, 0.0
    %v1625 = vadd.f32 %v1623, %v1624
    %v1626 = vsel %vm762, %v1518, 0.0
    %v1627 = vadd.f32 %v1625, %v1626
    %v1628 = vsel %vm762, %v1523, 0.0
    %v1629 = vadd.f32 %v1627, %v1628
    %v1630 = vsel %vm762, %v1526, 0.0
    %v1631 = vadd.f32 %v1629, %v1630
    %v1632 = vsel %vm762, %v1531, 0.0
    %v1633 = vadd.f32 %v1631, %v1632
    %v1634 = vsel %vm762, %v1534, 0.0
    %v1635 = vadd.f32 %v1633, %v1634
    %v1636 = vsel %vm762, %v1539, 0.0
    %v1637 = vadd.f32 %v1635, %v1636
    %v1638 = vsel %vm762, %v1542, 0.0
    %v1639 = vadd.f32 %v1637, %v1638
    %v1640 = vsel %vm762, %v1547, 0.0
    %v1641 = vadd.f32 %v1639, %v1640
    %v1642 = vsel %vm762, %v1550, 0.0
    %v1643 = vadd.f32 %v1641, %v1642
    %v1644 = vsel %vm762, %v1555, 0.0
    %v1645 = vadd.f32 %v1643, %v1644
    %v1646 = vsel %vm762, %v1558, 0.0
    %v1647 = vadd.f32 %v1645, %v1646
    %v1648 = vsel %vm762, %v1563, 0.0
    %v1649 = vadd.f32 %v1647, %v1648
    %v1650 = vsel %vm762, %v1566, 0.0
    %v1651 = vadd.f32 %v1649, %v1650
    %v1652 = vsel %vm762, %v1571, 0.0
    %v1653 = vadd.f32 %v1651, %v1652
    %v1654 = vsel %vm762, %v1574, 0.0
    %v1655 = vadd.f32 %v1653, %v1654
    %v1656 = vsel %vm762, %v1579, 0.0
    %v1657 = vadd.f32 %v1655, %v1656
    %v1658 = vsel %vm762, %v1582, 0.0
    %v1659 = vadd.f32 %v1657, %v1658
    %v1660 = vsel %vm762, %v1587, 0.0
    %v1661 = vadd.f32 %v1659, %v1660
    %v1662 = vsel %vm762, %v1590, 0.0
    %v1663 = vadd.f32 %v1661, %v1662
    %v1664 = vsel %vm762, %v1595, 0.0
    %v1665 = vadd.f32 %v1663, %v1664
    %v1666 = vsel %vm762, %v1598, 0.0
    %v1667 = vadd.f32 %v1665, %v1666
    %v1668 = vsel %vm762, %v1603, 0.0
    %v1669 = vadd.f32 %v1667, %v1668
    %v1670 = vsel %vm762, %v1606, 0.0
    %v1671 = vadd.f32 %v1669, %v1670
    %v1672 = vrot.slane %v1671, 4
    %v1673 = vadd.f32 %v1671, %v1672
    %v1674 = vrot.slane %v1673, 2
    %v1675 = vadd.f32 %v1673, %v1674
    %v1676 = vrot.slane %v1675, 1
    %v1677 = vadd.f32 %v1675, %v1676
    %v1678 = vmul.f32 %v1677, %v832
    %v1679 = vsub.f32 %v1483, %v1678
    %v1680 = vsub.f32 %v1486, %v1678
    %v1681 = vsub.f32 %v1491, %v1678
    %v1682 = vsub.f32 %v1494, %v1678
    %v1683 = vsub.f32 %v1499, %v1678
    %v1684 = vsub.f32 %v1502, %v1678
    %v1685 = vsub.f32 %v1507, %v1678
    %v1686 = vsub.f32 %v1510, %v1678
    %v1687 = vsub.f32 %v1515, %v1678
    %v1688 = vsub.f32 %v1518, %v1678
    %v1689 = vsub.f32 %v1523, %v1678
    %v1690 = vsub.f32 %v1526, %v1678
    %v1691 = vsub.f32 %v1531, %v1678
    %v1692 = vsub.f32 %v1534, %v1678
    %v1693 = vsub.f32 %v1539, %v1678
    %v1694 = vsub.f32 %v1542, %v1678
    %v1695 = vsub.f32 %v1547, %v1678
    %v1696 = vsub.f32 %v1550, %v1678
    %v1697 = vsub.f32 %v1555, %v1678
    %v1698 = vsub.f32 %v1558, %v1678
    %v1699 = vsub.f32 %v1563, %v1678
    %v1700 = vsub.f32 %v1566, %v1678
    %v1701 = vsub.f32 %v1571, %v1678
    %v1702 = vsub.f32 %v1574, %v1678
    %v1703 = vsub.f32 %v1579, %v1678
    %v1704 = vsub.f32 %v1582, %v1678
    %v1705 = vsub.f32 %v1587, %v1678
    %v1706 = vsub.f32 %v1590, %v1678
    %v1707 = vsub.f32 %v1595, %v1678
    %v1708 = vsub.f32 %v1598, %v1678
    %v1709 = vsub.f32 %v1603, %v1678
    %v1710 = vsub.f32 %v1606, %v1678
    %v1711 = vmul.f32 %v1679, %v1679
    %v1712 = vmul.f32 %v1680, %v1680
    %v1713 = vmul.f32 %v1681, %v1681
    %v1714 = vmul.f32 %v1682, %v1682
    %v1715 = vmul.f32 %v1683, %v1683
    %v1716 = vmul.f32 %v1684, %v1684
    %v1717 = vmul.f32 %v1685, %v1685
    %v1718 = vmul.f32 %v1686, %v1686
    %v1719 = vmul.f32 %v1687, %v1687
    %v1720 = vmul.f32 %v1688, %v1688
    %v1721 = vmul.f32 %v1689, %v1689
    %v1722 = vmul.f32 %v1690, %v1690
    %v1723 = vmul.f32 %v1691, %v1691
    %v1724 = vmul.f32 %v1692, %v1692
    %v1725 = vmul.f32 %v1693, %v1693
    %v1726 = vmul.f32 %v1694, %v1694
    %v1727 = vmul.f32 %v1695, %v1695
    %v1728 = vmul.f32 %v1696, %v1696
    %v1729 = vmul.f32 %v1697, %v1697
    %v1730 = vmul.f32 %v1698, %v1698
    %v1731 = vmul.f32 %v1699, %v1699
    %v1732 = vmul.f32 %v1700, %v1700
    %v1733 = vmul.f32 %v1701, %v1701
    %v1734 = vmul.f32 %v1702, %v1702
    %v1735 = vmul.f32 %v1703, %v1703
    %v1736 = vmul.f32 %v1704, %v1704
    %v1737 = vmul.f32 %v1705, %v1705
    %v1738 = vmul.f32 %v1706, %v1706
    %v1739 = vmul.f32 %v1707, %v1707
    %v1740 = vmul.f32 %v1708, %v1708
    %v1741 = vmul.f32 %v1709, %v1709
    %v1742 = vmul.f32 %v1710, %v1710
    %v1743 = vsel %vm762, %v1711, 0.0
    %v1744 = vsel %vm762, %v1712, 0.0
    %v1745 = vadd.f32 %v1743, %v1744
    %v1746 = vsel %vm762, %v1713, 0.0
    %v1747 = vadd.f32 %v1745, %v1746
    %v1748 = vsel %vm762, %v1714, 0.0
    %v1749 = vadd.f32 %v1747, %v1748
    %v1750 = vsel %vm762, %v1715, 0.0
    %v1751 = vadd.f32 %v1749, %v1750
    %v1752 = vsel %vm762, %v1716, 0.0
    %v1753 = vadd.f32 %v1751, %v1752
    %v1754 = vsel %vm762, %v1717, 0.0
    %v1755 = vadd.f32 %v1753, %v1754
    %v1756 = vsel %vm762, %v1718, 0.0
    %v1757 = vadd.f32 %v1755, %v1756
    %v1758 = vsel %vm762, %v1719, 0.0
    %v1759 = vadd.f32 %v1757, %v1758
    %v1760 = vsel %vm762, %v1720, 0.0
    %v1761 = vadd.f32 %v1759, %v1760
    %v1762 = vsel %vm762, %v1721, 0.0
    %v1763 = vadd.f32 %v1761, %v1762
    %v1764 = vsel %vm762, %v1722, 0.0
    %v1765 = vadd.f32 %v1763, %v1764
    %v1766 = vsel %vm762, %v1723, 0.0
    %v1767 = vadd.f32 %v1765, %v1766
    %v1768 = vsel %vm762, %v1724, 0.0
    %v1769 = vadd.f32 %v1767, %v1768
    %v1770 = vsel %vm762, %v1725, 0.0
    %v1771 = vadd.f32 %v1769, %v1770
    %v1772 = vsel %vm762, %v1726, 0.0
    %v1773 = vadd.f32 %v1771, %v1772
    %v1774 = vsel %vm762, %v1727, 0.0
    %v1775 = vadd.f32 %v1773, %v1774
    %v1776 = vsel %vm762, %v1728, 0.0
    %v1777 = vadd.f32 %v1775, %v1776
    %v1778 = vsel %vm762, %v1729, 0.0
    %v1779 = vadd.f32 %v1777, %v1778
    %v1780 = vsel %vm762, %v1730, 0.0
    %v1781 = vadd.f32 %v1779, %v1780
    %v1782 = vsel %vm762, %v1731, 0.0
    %v1783 = vadd.f32 %v1781, %v1782
    %v1784 = vsel %vm762, %v1732, 0.0
    %v1785 = vadd.f32 %v1783, %v1784
    %v1786 = vsel %vm762, %v1733, 0.0
    %v1787 = vadd.f32 %v1785, %v1786
    %v1788 = vsel %vm762, %v1734, 0.0
    %v1789 = vadd.f32 %v1787, %v1788
    %v1790 = vsel %vm762, %v1735, 0.0
    %v1791 = vadd.f32 %v1789, %v1790
    %v1792 = vsel %vm762, %v1736, 0.0
    %v1793 = vadd.f32 %v1791, %v1792
    %v1794 = vsel %vm762, %v1737, 0.0
    %v1795 = vadd.f32 %v1793, %v1794
    %v1796 = vsel %vm762, %v1738, 0.0
    %v1797 = vadd.f32 %v1795, %v1796
    %v1798 = vsel %vm762, %v1739, 0.0
    %v1799 = vadd.f32 %v1797, %v1798
    %v1800 = vsel %vm762, %v1740, 0.0
    %v1801 = vadd.f32 %v1799, %v1800
    %v1802 = vsel %vm762, %v1741, 0.0
    %v1803 = vadd.f32 %v1801, %v1802
    %v1804 = vsel %vm762, %v1742, 0.0
    %v1805 = vadd.f32 %v1803, %v1804
    %v1806 = vrot.slane %v1805, 4
    %v1807 = vadd.f32 %v1805, %v1806
    %v1808 = vrot.slane %v1807, 2
    %v1809 = vadd.f32 %v1807, %v1808
    %v1810 = vrot.slane %v1809, 1
    %v1811 = vadd.f32 %v1809, %v1810
    %v1812 = vmul.f32 %v1811, %v832
    %v1813 = vadd.f32 %v1812, 1e-05
    %v1814 = vrsqrt.pop %v1813
    %v1815 = vmul.f32 %v1679, %v1814
    %v1816 = vmul.f32 %v1680, %v1814
    %v1817 = vmul.f32 %v1681, %v1814
    %v1818 = vmul.f32 %v1682, %v1814
    %v1819 = vmul.f32 %v1683, %v1814
    %v1820 = vmul.f32 %v1684, %v1814
    %v1821 = vmul.f32 %v1685, %v1814
    %v1822 = vmul.f32 %v1686, %v1814
    %v1823 = vmul.f32 %v1687, %v1814
    %v1824 = vmul.f32 %v1688, %v1814
    %v1825 = vmul.f32 %v1689, %v1814
    %v1826 = vmul.f32 %v1690, %v1814
    %v1827 = vmul.f32 %v1691, %v1814
    %v1828 = vmul.f32 %v1692, %v1814
    %v1829 = vmul.f32 %v1693, %v1814
    %v1830 = vmul.f32 %v1694, %v1814
    %v1831 = vmul.f32 %v1695, %v1814
    %v1832 = vmul.f32 %v1696, %v1814
    %v1833 = vmul.f32 %v1697, %v1814
    %v1834 = vmul.f32 %v1698, %v1814
    %v1835 = vmul.f32 %v1699, %v1814
    %v1836 = vmul.f32 %v1700, %v1814
    %v1837 = vmul.f32 %v1701, %v1814
    %v1838 = vmul.f32 %v1702, %v1814
    %v1839 = vmul.f32 %v1703, %v1814
    %v1840 = vmul.f32 %v1704, %v1814
    %v1841 = vmul.f32 %v1705, %v1814
    %v1842 = vmul.f32 %v1706, %v1814
    %v1843 = vmul.f32 %v1707, %v1814
    %v1844 = vmul.f32 %v1708, %v1814
    %v1845 = vmul.f32 %v1709, %v1814
    %v1846 = vmul.f32 %v1710, %v1814
    %v1847 = vlaneseq
    %v1848 = vshrl.u32 %v1847, 7
    %v1849 = vsub.s32 4, %v1848
    %v1850 = vrot.slane %v101, %v1849
    %v1851 = vmul.f32 %v1815, %v1850
    %v1852 = vmul.f32 %v1816, %v1850
    %v1853 = vmul.f32 %v1817, %v1850
    %v1854 = vmul.f32 %v1818, %v1850
    %v1855 = vmul.f32 %v1819, %v1850
    %v1856 = vmul.f32 %v1820, %v1850
    %v1857 = vmul.f32 %v1821, %v1850
    %v1858 = vmul.f32 %v1822, %v1850
    %v1859 = vmul.f32 %v1823, %v1850
    %v1860 = vmul.f32 %v1824, %v1850
    %v1861 = vmul.f32 %v1825, %v1850
    %v1862 = vmul.f32 %v1826, %v1850
    %v1863 = vmul.f32 %v1827, %v1850
    %v1864 = vmul.f32 %v1828, %v1850
    %v1865 = vmul.f32 %v1829, %v1850
    %v1866 = vmul.f32 %v1830, %v1850
    %v1867 = vmul.f32 %v1831, %v1850
    %v1868 = vmul.f32 %v1832, %v1850
    %v1869 = vmul.f32 %v1833, %v1850
    %v1870 = vmul.f32 %v1834, %v1850
    %v1871 = vmul.f32 %v1835, %v1850
    %v1872 = vmul.f32 %v1836, %v1850
    %v1873 = vmul.f32 %v1837, %v1850
    %v1874 = vmul.f32 %v1838, %v1850
    %v1875 = vmul.f32 %v1839, %v1850
    %v1876 = vmul.f32 %v1840, %v1850
    %v1877 = vmul.f32 %v1841, %v1850
    %v1878 = vmul.f32 %v1842, %v1850
    %v1879 = vmul.f32 %v1843, %v1850
    %v1880 = vmul.f32 %v1844, %v1850
    %v1881 = vmul.f32 %v1845, %v1850
    %v1882 = vmul.f32 %v1846, %v1850
    %v1883 = vlaneseq
    %v1884 = vshrl.u32 %v1883, 7
    %v1885 = vsub.s32 5, %v1884
    %v1886 = vrot.slane %v101, %v1885
    %v1887 = vadd.f32 %v1851, %v1886
    %v1888 = vadd.f32 %v1852, %v1886
    %v1889 = vadd.f32 %v1853, %v1886
    %v1890 = vadd.f32 %v1854, %v1886
    %v1891 = vadd.f32 %v1855, %v1886
    %v1892 = vadd.f32 %v1856, %v1886
    %v1893 = vadd.f32 %v1857, %v1886
    %v1894 = vadd.f32 %v1858, %v1886
    %v1895 = vadd.f32 %v1859, %v1886
    %v1896 = vadd.f32 %v1860, %v1886
    %v1897 = vadd.f32 %v1861, %v1886
    %v1898 = vadd.f32 %v1862, %v1886
    %v1899 = vadd.f32 %v1863, %v1886
    %v1900 = vadd.f32 %v1864, %v1886
    %v1901 = vadd.f32 %v1865, %v1886
    %v1902 = vadd.f32 %v1866, %v1886
    %v1903 = vadd.f32 %v1867, %v1886
    %v1904 = vadd.f32 %v1868, %v1886
    %v1905 = vadd.f32 %v1869, %v1886
    %v1906 = vadd.f32 %v1870, %v1886
    %v1907 = vadd.f32 %v1871, %v1886
    %v1908 = vadd.f32 %v1872, %v1886
    %v1909 = vadd.f32 %v1873, %v1886
    %v1910 = vadd.f32 %v1874, %v1886
    %v1911 = vadd.f32 %v1875, %v1886
    %v1912 = vadd.f32 %v1876, %v1886
    %v1913 = vadd.f32 %v1877, %v1886
    %v1914 = vadd.f32 %v1878, %v1886
    %v1915 = vadd.f32 %v1879, %v1886
    %v1916 = vadd.f32 %v1880, %v1886
    %v1917 = vadd.f32 %v1881, %v1886
    %v1918 = vadd.f32 %v1882, %v1886
    %vm1919 = vcmp.ge.f32.partialorder %v1887, 0.0
    %vm1920 = vcmp.ge.f32.partialorder %v1888, 0.0
    %vm1921 = vcmp.ge.f32.partialorder %v1889, 0.0
    %vm1922 = vcmp.ge.f32.partialorder %v1890, 0.0
    %vm1923 = vcmp.ge.f32.partialorder %v1891, 0.0
    %vm1924 = vcmp.ge.f32.partialorder %v1892, 0.0
    %vm1925 = vcmp.ge.f32.partialorder %v1893, 0.0
    %vm1926 = vcmp.ge.f32.partialorder %v1894, 0.0
    %vm1927 = vcmp.ge.f32.partialorder %v1895, 0.0
    %vm1928 = vcmp.ge.f32.partialorder %v1896, 0.0
    %vm1929 = vcmp.ge.f32.partialorder %v1897, 0.0
    %vm1930 = vcmp.ge.f32.partialorder %v1898, 0.0
    %vm1931 = vcmp.ge.f32.partialorder %v1899, 0.0
    %vm1932 = vcmp.ge.f32.partialorder %v1900, 0.0
    %vm1933 = vcmp.ge.f32.partialorder %v1901, 0.0
    %vm1934 = vcmp.ge.f32.partialorder %v1902, 0.0
    %vm1935 = vcmp.ge.f32.partialorder %v1903, 0.0
    %vm1936 = vcmp.ge.f32.partialorder %v1904, 0.0
    %vm1937 = vcmp.ge.f32.partialorder %v1905, 0.0
    %vm1938 = vcmp.ge.f32.partialorder %v1906, 0.0
    %vm1939 = vcmp.ge.f32.partialorder %v1907, 0.0
    %vm1940 = vcmp.ge.f32.partialorder %v1908, 0.0
    %vm1941 = vcmp.ge.f32.partialorder %v1909, 0.0
    %vm1942 = vcmp.ge.f32.partialorder %v1910, 0.0
    %vm1943 = vcmp.ge.f32.partialorder %v1911, 0.0
    %vm1944 = vcmp.ge.f32.partialorder %v1912, 0.0
    %vm1945 = vcmp.ge.f32.partialorder %v1913, 0.0
    %vm1946 = vcmp.ge.f32.partialorder %v1914, 0.0
    %vm1947 = vcmp.ge.f32.partialorder %v1915, 0.0
    %vm1948 = vcmp.ge.f32.partialorder %v1916, 0.0
    %vm1949 = vcmp.ge.f32.partialorder %v1917, 0.0
    %vm1950 = vcmp.ge.f32.partialorder %v1918, 0.0
    %v1951 = vstv %s104
    %v1952 = vmul.f32 %v1951, %v1887
    %v1953 = vmul.f32 %v1951, %v1888
    %v1954 = vmul.f32 %v1951, %v1889
    %v1955 = vmul.f32 %v1951, %v1890
    %v1956 = vmul.f32 %v1951, %v1891
    %v1957 = vmul.f32 %v1951, %v1892
    %v1958 = vmul.f32 %v1951, %v1893
    %v1959 = vmul.f32 %v1951, %v1894
    %v1960 = vmul.f32 %v1951, %v1895
    %v1961 = vmul.f32 %v1951, %v1896
    %v1962 = vmul.f32 %v1951, %v1897
    %v1963 = vmul.f32 %v1951, %v1898
    %v1964 = vmul.f32 %v1951, %v1899
    %v1965 = vmul.f32 %v1951, %v1900
    %v1966 = vmul.f32 %v1951, %v1901
    %v1967 = vmul.f32 %v1951, %v1902
    %v1968 = vmul.f32 %v1951, %v1903
    %v1969 = vmul.f32 %v1951, %v1904
    %v1970 = vmul.f32 %v1951, %v1905
    %v1971 = vmul.f32 %v1951, %v1906
    %v1972 = vmul.f32 %v1951, %v1907
    %v1973 = vmul.f32 %v1951, %v1908
    %v1974 = vmul.f32 %v1951, %v1909
    %v1975 = vmul.f32 %v1951, %v1910
    %v1976 = vmul.f32 %v1951, %v1911
    %v1977 = vmul.f32 %v1951, %v1912
    %v1978 = vmul.f32 %v1951, %v1913
    %v1979 = vmul.f32 %v1951, %v1914
    %v1980 = vmul.f32 %v1951, %v1915
    %v1981 = vmul.f32 %v1951, %v1916
    %v1982 = vmul.f32 %v1951, %v1917
    %v1983 = vmul.f32 %v1951, %v1918
    %v1984 = vsel %vm1919, %v1887, %v1952
    %v1985 = vsel %vm1920, %v1888, %v1953
    %v1986 = vsel %vm1921, %v1889, %v1954
    %v1987 = vsel %vm1922, %v1890, %v1955
    %v1988 = vsel %vm1923, %v1891, %v1956
    %v1989 = vsel %vm1924, %v1892, %v1957
    %v1990 = vsel %vm1925, %v1893, %v1958
    %v1991 = vsel %vm1926, %v1894, %v1959
    %v1992 = vsel %vm1927, %v1895, %v1960
    %v1993 = vsel %vm1928, %v1896, %v1961
    %v1994 = vsel %vm1929, %v1897, %v1962
    %v1995 = vsel %vm1930, %v1898, %v1963
    %v1996 = vsel %vm1931, %v1899, %v1964
    %v1997 = vsel %vm1932, %v1900, %v1965
    %v1998 = vsel %vm1933, %v1901, %v1966
    %v1999 = vsel %vm1934, %v1902, %v1967
    %v2000 = vsel %vm1935, %v1903, %v1968
    %v2001 = vsel %vm1936, %v1904, %v1969
    %v2002 = vsel %vm1937, %v1905, %v1970
    %v2003 = vsel %vm1938, %v1906, %v1971
    %v2004 = vsel %vm1939, %v1907, %v1972
    %v2005 = vsel %vm1940, %v1908, %v1973
    %v2006 = vsel %vm1941, %v1909, %v1974
    %v2007 = vsel %vm1942, %v1910, %v1975
    %v2008 = vsel %vm1943, %v1911, %v1976
    %v2009 = vsel %vm1944, %v1912, %v1977
    %v2010 = vsel %vm1945, %v1913, %v1978
    %v2011 = vsel %vm1946, %v1914, %v1979
    %v2012 = vsel %vm1947, %v1915, %v1980
    %v2013 = vsel %vm1948, %v1916, %v1981
    %v2014 = vsel %vm1949, %v1917, %v1982
    %v2015 = vsel %vm1950, %v1918, %v1983
    %v2016 = vld [vmem:[%s4] sm:$0xff]
    %v2017 = vld [vmem:[%s4 + $0x8] sm:$0xff]
    %v2018 = vld [vmem:[%s4 + $0x10] sm:$0xff]
    %v2019 = vld [vmem:[%s4 + $0x18] sm:$0xff]
    %v2020 = vld [vmem:[%s4 + $0x20] sm:$0xff]
    %v2021 = vld [vmem:[%s4 + $0x28] sm:$0xff]
    %v2022 = vld [vmem:[%s4 + $0x30] sm:$0xff]
    %v2023 = vld [vmem:[%s4 + $0x38] sm:$0xff]
    %v2024 = vld [vmem:[%s4 + $0x40] sm:$0xff]
    %v2025 = vld [vmem:[%s4 + $0x48] sm:$0xff]
    %v2026 = vld [vmem:[%s4 + $0x50] sm:$0xff]
    %v2027 = vld [vmem:[%s4 + $0x58] sm:$0xff]
    %v2028 = vld [vmem:[%s4 + $0x60] sm:$0xff]
    %v2029 = vld [vmem:[%s4 + $0x68] sm:$0xff]
    %v2030 = vld [vmem:[%s4 + $0x70] sm:$0xff]
    %v2031 = vld [vmem:[%s4 + $0x78] sm:$0xff]
    %v2032 = vld [vmem:[%s4 + $0x80] sm:$0xff]
    %v2033 = vld [vmem:[%s4 + $0x88] sm:$0xff]
    %v2034 = vld [vmem:[%s4 + $0x90] sm:$0xff]
    %v2035 = vld [vmem:[%s4 + $0x98] sm:$0xff]
    %v2036 = vld [vmem:[%s4 + $0xa0] sm:$0xff]
    %v2037 = vld [vmem:[%s4 + $0xa8] sm:$0xff]
    %v2038 = vld [vmem:[%s4 + $0xb0] sm:$0xff]
    %v2039 = vld [vmem:[%s4 + $0xb8] sm:$0xff]
    %v2040 = vld [vmem:[%s4 + $0xc0] sm:$0xff]
    %v2041 = vld [vmem:[%s4 + $0xc8] sm:$0xff]
    %v2042 = vld [vmem:[%s4 + $0xd0] sm:$0xff]
    %v2043 = vld [vmem:[%s4 + $0xd8] sm:$0xff]
    %v2044 = vld [vmem:[%s4 + $0xe0] sm:$0xff]
    %v2045 = vld [vmem:[%s4 + $0xe8] sm:$0xff]
    %v2046 = vld [vmem:[%s4 + $0xf0] sm:$0xff]
    %v2047 = vld [vmem:[%s4 + $0xf8] sm:$0xff]
    %v2080 = vcombine.high %v1984, %v1984
    %v2082 = vunpack.c.l.s4 1966171168
    %v2083 = vunpack.c.0.s8 %v2082
    %v2084 = vlaneseq
    %v2085 = vshrl.u32 %v2084, 7
    %v2086 = vsub.s32 %v2083, %v2085
    %v2087 = vrot.slane %v1984, %v2086
    %v2089 = vunpack.c.l.s4 1966171168
    %v2090 = vunpack.c.0.s8 %v2089
    %v2091 = vlaneseq
    %v2092 = vshrl.u32 %v2091, 7
    %v2093 = vsub.s32 %v2090, %v2092
    %v2094 = vrot.slane %v2080, %v2093
    %v2095 = vcombine.high %v2087, %v2087
    %v2096 = vcombine.high %v2094, %v2094
    %v2098 = vunpack.c.l.s4 1966171168
    %v2099 = vunpack.c.0.s8 %v2098
    %v2100 = vlaneseq
    %v2101 = vshrl.u32 %v2100, 7
    %v2102 = vsub.s32 %v2099, %v2101
    %v2103 = vrot.slane %v2087, %v2102
    %v2105 = vunpack.c.l.s4 1966171168
    %v2106 = vunpack.c.0.s8 %v2105
    %v2107 = vlaneseq
    %v2108 = vshrl.u32 %v2107, 7
    %v2109 = vsub.s32 %v2106, %v2108
    %v2110 = vrot.slane %v2094, %v2109
    %v2112 = vunpack.c.l.s4 1966171168
    %v2113 = vunpack.c.0.s8 %v2112
    %v2114 = vlaneseq
    %v2115 = vshrl.u32 %v2114, 7
    %v2116 = vsub.s32 %v2113, %v2115
    %v2117 = vrot.slane %v2095, %v2116
    %v2119 = vunpack.c.l.s4 1966171168
    %v2120 = vunpack.c.0.s8 %v2119
    %v2121 = vlaneseq
    %v2122 = vshrl.u32 %v2121, 7
    %v2123 = vsub.s32 %v2120, %v2122
    %v2124 = vrot.slane %v2096, %v2123
    %v2125 = vcombine.high %v2103, %v2103
    %v2126 = vcombine.high %v2110, %v2110
    %v2127 = vcombine.high %v2117, %v2117
    %v2128 = vcombine.high %v2124, %v2124
    %v2129 = vcombine.high %v1985, %v1985
    %v2131 = vunpack.c.l.s4 1966171168
    %v2132 = vunpack.c.0.s8 %v2131
    %v2133 = vlaneseq
    %v2134 = vshrl.u32 %v2133, 7
    %v2135 = vsub.s32 %v2132, %v2134
    %v2136 = vrot.slane %v1985, %v2135
    %v2138 = vunpack.c.l.s4 1966171168
    %v2139 = vunpack.c.0.s8 %v2138
    %v2140 = vlaneseq
    %v2141 = vshrl.u32 %v2140, 7
    %v2142 = vsub.s32 %v2139, %v2141
    %v2143 = vrot.slane %v2129, %v2142
    %v2144 = vcombine.high %v2136, %v2136
    %v2145 = vcombine.high %v2143, %v2143
    %v2147 = vunpack.c.l.s4 1966171168
    %v2148 = vunpack.c.0.s8 %v2147
    %v2149 = vlaneseq
    %v2150 = vshrl.u32 %v2149, 7
    %v2151 = vsub.s32 %v2148, %v2150
    %v2152 = vrot.slane %v2136, %v2151
    %v2154 = vunpack.c.l.s4 1966171168
    %v2155 = vunpack.c.0.s8 %v2154
    %v2156 = vlaneseq
    %v2157 = vshrl.u32 %v2156, 7
    %v2158 = vsub.s32 %v2155, %v2157
    %v2159 = vrot.slane %v2143, %v2158
    %v2161 = vunpack.c.l.s4 1966171168
    %v2162 = vunpack.c.0.s8 %v2161
    %v2163 = vlaneseq
    %v2164 = vshrl.u32 %v2163, 7
    %v2165 = vsub.s32 %v2162, %v2164
    %v2166 = vrot.slane %v2144, %v2165
    %v2168 = vunpack.c.l.s4 1966171168
    %v2169 = vunpack.c.0.s8 %v2168
    %v2170 = vlaneseq
    %v2171 = vshrl.u32 %v2170, 7
    %v2172 = vsub.s32 %v2169, %v2171
    %v2173 = vrot.slane %v2145, %v2172
    %v2174 = vcombine.high %v2152, %v2152
    %v2175 = vcombine.high %v2159, %v2159
    %v2176 = vcombine.high %v2166, %v2166
    %v2177 = vcombine.high %v2173, %v2173
    %v2178 = vcombine.high %v1986, %v1986
    %v2180 = vunpack.c.l.s4 1966171168
    %v2181 = vunpack.c.0.s8 %v2180
    %v2182 = vlaneseq
    %v2183 = vshrl.u32 %v2182, 7
    %v2184 = vsub.s32 %v2181, %v2183
    %v2185 = vrot.slane %v1986, %v2184
    %v2187 = vunpack.c.l.s4 1966171168
    %v2188 = vunpack.c.0.s8 %v2187
    %v2189 = vlaneseq
    %v2190 = vshrl.u32 %v2189, 7
    %v2191 = vsub.s32 %v2188, %v2190
    %v2192 = vrot.slane %v2178, %v2191
    %v2193 = vcombine.high %v2185, %v2185
    %v2194 = vcombine.high %v2192, %v2192
    %v2196 = vunpack.c.l.s4 1966171168
    %v2197 = vunpack.c.0.s8 %v2196
    %v2198 = vlaneseq
    %v2199 = vshrl.u32 %v2198, 7
    %v2200 = vsub.s32 %v2197, %v2199
    %v2201 = vrot.slane %v2185, %v2200
    %v2203 = vunpack.c.l.s4 1966171168
    %v2204 = vunpack.c.0.s8 %v2203
    %v2205 = vlaneseq
    %v2206 = vshrl.u32 %v2205, 7
    %v2207 = vsub.s32 %v2204, %v2206
    %v2208 = vrot.slane %v2192, %v2207
    %v2210 = vunpack.c.l.s4 1966171168
    %v2211 = vunpack.c.0.s8 %v2210
    %v2212 = vlaneseq
    %v2213 = vshrl.u32 %v2212, 7
    %v2214 = vsub.s32 %v2211, %v2213
    %v2215 = vrot.slane %v2193, %v2214
    %v2217 = vunpack.c.l.s4 1966171168
    %v2218 = vunpack.c.0.s8 %v2217
    %v2219 = vlaneseq
    %v2220 = vshrl.u32 %v2219, 7
    %v2221 = vsub.s32 %v2218, %v2220
    %v2222 = vrot.slane %v2194, %v2221
    %v2223 = vcombine.high %v2201, %v2201
    %v2224 = vcombine.high %v2208, %v2208
    %v2225 = vcombine.high %v2215, %v2215
    %v2226 = vcombine.high %v2222, %v2222
    %v2227 = vcombine.high %v1987, %v1987
    %v2229 = vunpack.c.l.s4 1966171168
    %v2230 = vunpack.c.0.s8 %v2229
    %v2231 = vlaneseq
    %v2232 = vshrl.u32 %v2231, 7
    %v2233 = vsub.s32 %v2230, %v2232
    %v2234 = vrot.slane %v1987, %v2233
    %v2236 = vunpack.c.l.s4 1966171168
    %v2237 = vunpack.c.0.s8 %v2236
    %v2238 = vlaneseq
    %v2239 = vshrl.u32 %v2238, 7
    %v2240 = vsub.s32 %v2237, %v2239
    %v2241 = vrot.slane %v2227, %v2240
    %v2242 = vcombine.high %v2234, %v2234
    %v2243 = vcombine.high %v2241, %v2241
    %v2245 = vunpack.c.l.s4 1966171168
    %v2246 = vunpack.c.0.s8 %v2245
    %v2247 = vlaneseq
    %v2248 = vshrl.u32 %v2247, 7
    %v2249 = vsub.s32 %v2246, %v2248
    %v2250 = vrot.slane %v2234, %v2249
    %v2252 = vunpack.c.l.s4 1966171168
    %v2253 = vunpack.c.0.s8 %v2252
    %v2254 = vlaneseq
    %v2255 = vshrl.u32 %v2254, 7
    %v2256 = vsub.s32 %v2253, %v2255
    %v2257 = vrot.slane %v2241, %v2256
    %v2259 = vunpack.c.l.s4 1966171168
    %v2260 = vunpack.c.0.s8 %v2259
    %v2261 = vlaneseq
    %v2262 = vshrl.u32 %v2261, 7
    %v2263 = vsub.s32 %v2260, %v2262
    %v2264 = vrot.slane %v2242, %v2263
    %v2266 = vunpack.c.l.s4 1966171168
    %v2267 = vunpack.c.0.s8 %v2266
    %v2268 = vlaneseq
    %v2269 = vshrl.u32 %v2268, 7
    %v2270 = vsub.s32 %v2267, %v2269
    %v2271 = vrot.slane %v2243, %v2270
    %v2272 = vcombine.high %v2250, %v2250
    %v2273 = vcombine.high %v2257, %v2257
    %v2274 = vcombine.high %v2264, %v2264
    %v2275 = vcombine.high %v2271, %v2271
    %v2276 = vcombine.high %v1988, %v1988
    %v2278 = vunpack.c.l.s4 1966171168
    %v2279 = vunpack.c.0.s8 %v2278
    %v2280 = vlaneseq
    %v2281 = vshrl.u32 %v2280, 7
    %v2282 = vsub.s32 %v2279, %v2281
    %v2283 = vrot.slane %v1988, %v2282
    %v2285 = vunpack.c.l.s4 1966171168
    %v2286 = vunpack.c.0.s8 %v2285
    %v2287 = vlaneseq
    %v2288 = vshrl.u32 %v2287, 7
    %v2289 = vsub.s32 %v2286, %v2288
    %v2290 = vrot.slane %v2276, %v2289
    %v2291 = vcombine.high %v2283, %v2283
    %v2292 = vcombine.high %v2290, %v2290
    %v2294 = vunpack.c.l.s4 1966171168
    %v2295 = vunpack.c.0.s8 %v2294
    %v2296 = vlaneseq
    %v2297 = vshrl.u32 %v2296, 7
    %v2298 = vsub.s32 %v2295, %v2297
    %v2299 = vrot.slane %v2283, %v2298
    %v2301 = vunpack.c.l.s4 1966171168
    %v2302 = vunpack.c.0.s8 %v2301
    %v2303 = vlaneseq
    %v2304 = vshrl.u32 %v2303, 7
    %v2305 = vsub.s32 %v2302, %v2304
    %v2306 = vrot.slane %v2290, %v2305
    %v2308 = vunpack.c.l.s4 1966171168
    %v2309 = vunpack.c.0.s8 %v2308
    %v2310 = vlaneseq
    %v2311 = vshrl.u32 %v2310, 7
    %v2312 = vsub.s32 %v2309, %v2311
    %v2313 = vrot.slane %v2291, %v2312
    %v2315 = vunpack.c.l.s4 1966171168
    %v2316 = vunpack.c.0.s8 %v2315
    %v2317 = vlaneseq
    %v2318 = vshrl.u32 %v2317, 7
    %v2319 = vsub.s32 %v2316, %v2318
    %v2320 = vrot.slane %v2292, %v2319
    %v2321 = vcombine.high %v2299, %v2299
    %v2322 = vcombine.high %v2306, %v2306
    %v2323 = vcombine.high %v2313, %v2313
    %v2324 = vcombine.high %v2320, %v2320
    %v2325 = vcombine.high %v1989, %v1989
    %v2327 = vunpack.c.l.s4 1966171168
    %v2328 = vunpack.c.0.s8 %v2327
    %v2329 = vlaneseq
    %v2330 = vshrl.u32 %v2329, 7
    %v2331 = vsub.s32 %v2328, %v2330
    %v2332 = vrot.slane %v1989, %v2331
    %v2334 = vunpack.c.l.s4 1966171168
    %v2335 = vunpack.c.0.s8 %v2334
    %v2336 = vlaneseq
    %v2337 = vshrl.u32 %v2336, 7
    %v2338 = vsub.s32 %v2335, %v2337
    %v2339 = vrot.slane %v2325, %v2338
    %v2340 = vcombine.high %v2332, %v2332
    %v2341 = vcombine.high %v2339, %v2339
    %v2343 = vunpack.c.l.s4 1966171168
    %v2344 = vunpack.c.0.s8 %v2343
    %v2345 = vlaneseq
    %v2346 = vshrl.u32 %v2345, 7
    %v2347 = vsub.s32 %v2344, %v2346
    %v2348 = vrot.slane %v2332, %v2347
    %v2350 = vunpack.c.l.s4 1966171168
    %v2351 = vunpack.c.0.s8 %v2350
    %v2352 = vlaneseq
    %v2353 = vshrl.u32 %v2352, 7
    %v2354 = vsub.s32 %v2351, %v2353
    %v2355 = vrot.slane %v2339, %v2354
    %v2357 = vunpack.c.l.s4 1966171168
    %v2358 = vunpack.c.0.s8 %v2357
    %v2359 = vlaneseq
    %v2360 = vshrl.u32 %v2359, 7
    %v2361 = vsub.s32 %v2358, %v2360
    %v2362 = vrot.slane %v2340, %v2361
    %v2364 = vunpack.c.l.s4 1966171168
    %v2365 = vunpack.c.0.s8 %v2364
    %v2366 = vlaneseq
    %v2367 = vshrl.u32 %v2366, 7
    %v2368 = vsub.s32 %v2365, %v2367
    %v2369 = vrot.slane %v2341, %v2368
    %v2370 = vcombine.high %v2348, %v2348
    %v2371 = vcombine.high %v2355, %v2355
    %v2372 = vcombine.high %v2362, %v2362
    %v2373 = vcombine.high %v2369, %v2369
    %v2374 = vcombine.high %v1990, %v1990
    %v2376 = vunpack.c.l.s4 1966171168
    %v2377 = vunpack.c.0.s8 %v2376
    %v2378 = vlaneseq
    %v2379 = vshrl.u32 %v2378, 7
    %v2380 = vsub.s32 %v2377, %v2379
    %v2381 = vrot.slane %v1990, %v2380
    %v2383 = vunpack.c.l.s4 1966171168
    %v2384 = vunpack.c.0.s8 %v2383
    %v2385 = vlaneseq
    %v2386 = vshrl.u32 %v2385, 7
    %v2387 = vsub.s32 %v2384, %v2386
    %v2388 = vrot.slane %v2374, %v2387
    %v2389 = vcombine.high %v2381, %v2381
    %v2390 = vcombine.high %v2388, %v2388
    %v2392 = vunpack.c.l.s4 1966171168
    %v2393 = vunpack.c.0.s8 %v2392
    %v2394 = vlaneseq
    %v2395 = vshrl.u32 %v2394, 7
    %v2396 = vsub.s32 %v2393, %v2395
    %v2397 = vrot.slane %v2381, %v2396
    %v2399 = vunpack.c.l.s4 1966171168
    %v2400 = vunpack.c.0.s8 %v2399
    %v2401 = vlaneseq
    %v2402 = vshrl.u32 %v2401, 7
    %v2403 = vsub.s32 %v2400, %v2402
    %v2404 = vrot.slane %v2388, %v2403
    %v2406 = vunpack.c.l.s4 1966171168
    %v2407 = vunpack.c.0.s8 %v2406
    %v2408 = vlaneseq
    %v2409 = vshrl.u32 %v2408, 7
    %v2410 = vsub.s32 %v2407, %v2409
    %v2411 = vrot.slane %v2389, %v2410
    %v2413 = vunpack.c.l.s4 1966171168
    %v2414 = vunpack.c.0.s8 %v2413
    %v2415 = vlaneseq
    %v2416 = vshrl.u32 %v2415, 7
    %v2417 = vsub.s32 %v2414, %v2416
    %v2418 = vrot.slane %v2390, %v2417
    %v2419 = vcombine.high %v2397, %v2397
    %v2420 = vcombine.high %v2404, %v2404
    %v2421 = vcombine.high %v2411, %v2411
    %v2422 = vcombine.high %v2418, %v2418
    %v2423 = vcombine.high %v1991, %v1991
    %v2425 = vunpack.c.l.s4 1966171168
    %v2426 = vunpack.c.0.s8 %v2425
    %v2427 = vlaneseq
    %v2428 = vshrl.u32 %v2427, 7
    %v2429 = vsub.s32 %v2426, %v2428
    %v2430 = vrot.slane %v1991, %v2429
    %v2432 = vunpack.c.l.s4 1966171168
    %v2433 = vunpack.c.0.s8 %v2432
    %v2434 = vlaneseq
    %v2435 = vshrl.u32 %v2434, 7
    %v2436 = vsub.s32 %v2433, %v2435
    %v2437 = vrot.slane %v2423, %v2436
    %v2438 = vcombine.high %v2430, %v2430
    %v2439 = vcombine.high %v2437, %v2437
    %v2441 = vunpack.c.l.s4 1966171168
    %v2442 = vunpack.c.0.s8 %v2441
    %v2443 = vlaneseq
    %v2444 = vshrl.u32 %v2443, 7
    %v2445 = vsub.s32 %v2442, %v2444
    %v2446 = vrot.slane %v2430, %v2445
    %v2448 = vunpack.c.l.s4 1966171168
    %v2449 = vunpack.c.0.s8 %v2448
    %v2450 = vlaneseq
    %v2451 = vshrl.u32 %v2450, 7
    %v2452 = vsub.s32 %v2449, %v2451
    %v2453 = vrot.slane %v2437, %v2452
    %v2455 = vunpack.c.l.s4 1966171168
    %v2456 = vunpack.c.0.s8 %v2455
    %v2457 = vlaneseq
    %v2458 = vshrl.u32 %v2457, 7
    %v2459 = vsub.s32 %v2456, %v2458
    %v2460 = vrot.slane %v2438, %v2459
    %v2462 = vunpack.c.l.s4 1966171168
    %v2463 = vunpack.c.0.s8 %v2462
    %v2464 = vlaneseq
    %v2465 = vshrl.u32 %v2464, 7
    %v2466 = vsub.s32 %v2463, %v2465
    %v2467 = vrot.slane %v2439, %v2466
    %v2468 = vcombine.high %v2446, %v2446
    %v2469 = vcombine.high %v2453, %v2453
    %v2470 = vcombine.high %v2460, %v2460
    %v2471 = vcombine.high %v2467, %v2467
    %v2472 = vcombine.high %v1992, %v1992
    %v2474 = vunpack.c.l.s4 1966171168
    %v2475 = vunpack.c.0.s8 %v2474
    %v2476 = vlaneseq
    %v2477 = vshrl.u32 %v2476, 7
    %v2478 = vsub.s32 %v2475, %v2477
    %v2479 = vrot.slane %v1992, %v2478
    %v2481 = vunpack.c.l.s4 1966171168
    %v2482 = vunpack.c.0.s8 %v2481
    %v2483 = vlaneseq
    %v2484 = vshrl.u32 %v2483, 7
    %v2485 = vsub.s32 %v2482, %v2484
    %v2486 = vrot.slane %v2472, %v2485
    %v2487 = vcombine.high %v2479, %v2479
    %v2488 = vcombine.high %v2486, %v2486
    %v2490 = vunpack.c.l.s4 1966171168
    %v2491 = vunpack.c.0.s8 %v2490
    %v2492 = vlaneseq
    %v2493 = vshrl.u32 %v2492, 7
    %v2494 = vsub.s32 %v2491, %v2493
    %v2495 = vrot.slane %v2479, %v2494
    %v2497 = vunpack.c.l.s4 1966171168
    %v2498 = vunpack.c.0.s8 %v2497
    %v2499 = vlaneseq
    %v2500 = vshrl.u32 %v2499, 7
    %v2501 = vsub.s32 %v2498, %v2500
    %v2502 = vrot.slane %v2486, %v2501
    %v2504 = vunpack.c.l.s4 1966171168
    %v2505 = vunpack.c.0.s8 %v2504
    %v2506 = vlaneseq
    %v2507 = vshrl.u32 %v2506, 7
    %v2508 = vsub.s32 %v2505, %v2507
    %v2509 = vrot.slane %v2487, %v2508
    %v2511 = vunpack.c.l.s4 1966171168
    %v2512 = vunpack.c.0.s8 %v2511
    %v2513 = vlaneseq
    %v2514 = vshrl.u32 %v2513, 7
    %v2515 = vsub.s32 %v2512, %v2514
    %v2516 = vrot.slane %v2488, %v2515
    %v2517 = vcombine.high %v2495, %v2495
    %v2518 = vcombine.high %v2502, %v2502
    %v2519 = vcombine.high %v2509, %v2509
    %v2520 = vcombine.high %v2516, %v2516
    %v2521 = vcombine.high %v1993, %v1993
    %v2523 = vunpack.c.l.s4 1966171168
    %v2524 = vunpack.c.0.s8 %v2523
    %v2525 = vlaneseq
    %v2526 = vshrl.u32 %v2525, 7
    %v2527 = vsub.s32 %v2524, %v2526
    %v2528 = vrot.slane %v1993, %v2527
    %v2530 = vunpack.c.l.s4 1966171168
    %v2531 = vunpack.c.0.s8 %v2530
    %v2532 = vlaneseq
    %v2533 = vshrl.u32 %v2532, 7
    %v2534 = vsub.s32 %v2531, %v2533
    %v2535 = vrot.slane %v2521, %v2534
    %v2536 = vcombine.high %v2528, %v2528
    %v2537 = vcombine.high %v2535, %v2535
    %v2539 = vunpack.c.l.s4 1966171168
    %v2540 = vunpack.c.0.s8 %v2539
    %v2541 = vlaneseq
    %v2542 = vshrl.u32 %v2541, 7
    %v2543 = vsub.s32 %v2540, %v2542
    %v2544 = vrot.slane %v2528, %v2543
    %v2546 = vunpack.c.l.s4 1966171168
    %v2547 = vunpack.c.0.s8 %v2546
    %v2548 = vlaneseq
    %v2549 = vshrl.u32 %v2548, 7
    %v2550 = vsub.s32 %v2547, %v2549
    %v2551 = vrot.slane %v2535, %v2550
    %v2553 = vunpack.c.l.s4 1966171168
    %v2554 = vunpack.c.0.s8 %v2553
    %v2555 = vlaneseq
    %v2556 = vshrl.u32 %v2555, 7
    %v2557 = vsub.s32 %v2554, %v2556
    %v2558 = vrot.slane %v2536, %v2557
    %v2560 = vunpack.c.l.s4 1966171168
    %v2561 = vunpack.c.0.s8 %v2560
    %v2562 = vlaneseq
    %v2563 = vshrl.u32 %v2562, 7
    %v2564 = vsub.s32 %v2561, %v2563
    %v2565 = vrot.slane %v2537, %v2564
    %v2566 = vcombine.high %v2544, %v2544
    %v2567 = vcombine.high %v2551, %v2551
    %v2568 = vcombine.high %v2558, %v2558
    %v2569 = vcombine.high %v2565, %v2565
    %v2570 = vcombine.high %v1994, %v1994
    %v2572 = vunpack.c.l.s4 1966171168
    %v2573 = vunpack.c.0.s8 %v2572
    %v2574 = vlaneseq
    %v2575 = vshrl.u32 %v2574, 7
    %v2576 = vsub.s32 %v2573, %v2575
    %v2577 = vrot.slane %v1994, %v2576
    %v2579 = vunpack.c.l.s4 1966171168
    %v2580 = vunpack.c.0.s8 %v2579
    %v2581 = vlaneseq
    %v2582 = vshrl.u32 %v2581, 7
    %v2583 = vsub.s32 %v2580, %v2582
    %v2584 = vrot.slane %v2570, %v2583
    %v2585 = vcombine.high %v2577, %v2577
    %v2586 = vcombine.high %v2584, %v2584
    %v2588 = vunpack.c.l.s4 1966171168
    %v2589 = vunpack.c.0.s8 %v2588
    %v2590 = vlaneseq
    %v2591 = vshrl.u32 %v2590, 7
    %v2592 = vsub.s32 %v2589, %v2591
    %v2593 = vrot.slane %v2577, %v2592
    %v2595 = vunpack.c.l.s4 1966171168
    %v2596 = vunpack.c.0.s8 %v2595
    %v2597 = vlaneseq
    %v2598 = vshrl.u32 %v2597, 7
    %v2599 = vsub.s32 %v2596, %v2598
    %v2600 = vrot.slane %v2584, %v2599
    %v2602 = vunpack.c.l.s4 1966171168
    %v2603 = vunpack.c.0.s8 %v2602
    %v2604 = vlaneseq
    %v2605 = vshrl.u32 %v2604, 7
    %v2606 = vsub.s32 %v2603, %v2605
    %v2607 = vrot.slane %v2585, %v2606
    %v2609 = vunpack.c.l.s4 1966171168
    %v2610 = vunpack.c.0.s8 %v2609
    %v2611 = vlaneseq
    %v2612 = vshrl.u32 %v2611, 7
    %v2613 = vsub.s32 %v2610, %v2612
    %v2614 = vrot.slane %v2586, %v2613
    %v2615 = vcombine.high %v2593, %v2593
    %v2616 = vcombine.high %v2600, %v2600
    %v2617 = vcombine.high %v2607, %v2607
    %v2618 = vcombine.high %v2614, %v2614
    %v2619 = vcombine.high %v1995, %v1995
    %v2621 = vunpack.c.l.s4 1966171168
    %v2622 = vunpack.c.0.s8 %v2621
    %v2623 = vlaneseq
    %v2624 = vshrl.u32 %v2623, 7
    %v2625 = vsub.s32 %v2622, %v2624
    %v2626 = vrot.slane %v1995, %v2625
    %v2628 = vunpack.c.l.s4 1966171168
    %v2629 = vunpack.c.0.s8 %v2628
    %v2630 = vlaneseq
    %v2631 = vshrl.u32 %v2630, 7
    %v2632 = vsub.s32 %v2629, %v2631
    %v2633 = vrot.slane %v2619, %v2632
    %v2634 = vcombine.high %v2626, %v2626
    %v2635 = vcombine.high %v2633, %v2633
    %v2637 = vunpack.c.l.s4 1966171168
    %v2638 = vunpack.c.0.s8 %v2637
    %v2639 = vlaneseq
    %v2640 = vshrl.u32 %v2639, 7
    %v2641 = vsub.s32 %v2638, %v2640
    %v2642 = vrot.slane %v2626, %v2641
    %v2644 = vunpack.c.l.s4 1966171168
    %v2645 = vunpack.c.0.s8 %v2644
    %v2646 = vlaneseq
    %v2647 = vshrl.u32 %v2646, 7
    %v2648 = vsub.s32 %v2645, %v2647
    %v2649 = vrot.slane %v2633, %v2648
    %v2651 = vunpack.c.l.s4 1966171168
    %v2652 = vunpack.c.0.s8 %v2651
    %v2653 = vlaneseq
    %v2654 = vshrl.u32 %v2653, 7
    %v2655 = vsub.s32 %v2652, %v2654
    %v2656 = vrot.slane %v2634, %v2655
    %v2658 = vunpack.c.l.s4 1966171168
    %v2659 = vunpack.c.0.s8 %v2658
    %v2660 = vlaneseq
    %v2661 = vshrl.u32 %v2660, 7
    %v2662 = vsub.s32 %v2659, %v2661
    %v2663 = vrot.slane %v2635, %v2662
    %v2664 = vcombine.high %v2642, %v2642
    %v2665 = vcombine.high %v2649, %v2649
    %v2666 = vcombine.high %v2656, %v2656
    %v2667 = vcombine.high %v2663, %v2663
    %v2668 = vcombine.high %v1996, %v1996
    %v2670 = vunpack.c.l.s4 1966171168
    %v2671 = vunpack.c.0.s8 %v2670
    %v2672 = vlaneseq
    %v2673 = vshrl.u32 %v2672, 7
    %v2674 = vsub.s32 %v2671, %v2673
    %v2675 = vrot.slane %v1996, %v2674
    %v2677 = vunpack.c.l.s4 1966171168
    %v2678 = vunpack.c.0.s8 %v2677
    %v2679 = vlaneseq
    %v2680 = vshrl.u32 %v2679, 7
    %v2681 = vsub.s32 %v2678, %v2680
    %v2682 = vrot.slane %v2668, %v2681
    %v2683 = vcombine.high %v2675, %v2675
    %v2684 = vcombine.high %v2682, %v2682
    %v2686 = vunpack.c.l.s4 1966171168
    %v2687 = vunpack.c.0.s8 %v2686
    %v2688 = vlaneseq
    %v2689 = vshrl.u32 %v2688, 7
    %v2690 = vsub.s32 %v2687, %v2689
    %v2691 = vrot.slane %v2675, %v2690
    %v2693 = vunpack.c.l.s4 1966171168
    %v2694 = vunpack.c.0.s8 %v2693
    %v2695 = vlaneseq
    %v2696 = vshrl.u32 %v2695, 7
    %v2697 = vsub.s32 %v2694, %v2696
    %v2698 = vrot.slane %v2682, %v2697
    %v2700 = vunpack.c.l.s4 1966171168
    %v2701 = vunpack.c.0.s8 %v2700
    %v2702 = vlaneseq
    %v2703 = vshrl.u32 %v2702, 7
    %v2704 = vsub.s32 %v2701, %v2703
    %v2705 = vrot.slane %v2683, %v2704
    %v2707 = vunpack.c.l.s4 1966171168
    %v2708 = vunpack.c.0.s8 %v2707
    %v2709 = vlaneseq
    %v2710 = vshrl.u32 %v2709, 7
    %v2711 = vsub.s32 %v2708, %v2710
    %v2712 = vrot.slane %v2684, %v2711
    %v2713 = vcombine.high %v2691, %v2691
    %v2714 = vcombine.high %v2698, %v2698
    %v2715 = vcombine.high %v2705, %v2705
    %v2716 = vcombine.high %v2712, %v2712
    %v2717 = vcombine.high %v1997, %v1997
    %v2719 = vunpack.c.l.s4 1966171168
    %v2720 = vunpack.c.0.s8 %v2719
    %v2721 = vlaneseq
    %v2722 = vshrl.u32 %v2721, 7
    %v2723 = vsub.s32 %v2720, %v2722
    %v2724 = vrot.slane %v1997, %v2723
    %v2726 = vunpack.c.l.s4 1966171168
    %v2727 = vunpack.c.0.s8 %v2726
    %v2728 = vlaneseq
    %v2729 = vshrl.u32 %v2728, 7
    %v2730 = vsub.s32 %v2727, %v2729
    %v2731 = vrot.slane %v2717, %v2730
    %v2732 = vcombine.high %v2724, %v2724
    %v2733 = vcombine.high %v2731, %v2731
    %v2735 = vunpack.c.l.s4 1966171168
    %v2736 = vunpack.c.0.s8 %v2735
    %v2737 = vlaneseq
    %v2738 = vshrl.u32 %v2737, 7
    %v2739 = vsub.s32 %v2736, %v2738
    %v2740 = vrot.slane %v2724, %v2739
    %v2742 = vunpack.c.l.s4 1966171168
    %v2743 = vunpack.c.0.s8 %v2742
    %v2744 = vlaneseq
    %v2745 = vshrl.u32 %v2744, 7
    %v2746 = vsub.s32 %v2743, %v2745
    %v2747 = vrot.slane %v2731, %v2746
    %v2749 = vunpack.c.l.s4 1966171168
    %v2750 = vunpack.c.0.s8 %v2749
    %v2751 = vlaneseq
    %v2752 = vshrl.u32 %v2751, 7
    %v2753 = vsub.s32 %v2750, %v2752
    %v2754 = vrot.slane %v2732, %v2753
    %v2756 = vunpack.c.l.s4 1966171168
    %v2757 = vunpack.c.0.s8 %v2756
    %v2758 = vlaneseq
    %v2759 = vshrl.u32 %v2758, 7
    %v2760 = vsub.s32 %v2757, %v2759
    %v2761 = vrot.slane %v2733, %v2760
    %v2762 = vcombine.high %v2740, %v2740
    %v2763 = vcombine.high %v2747, %v2747
    %v2764 = vcombine.high %v2754, %v2754
    %v2765 = vcombine.high %v2761, %v2761
    %v2766 = vcombine.high %v1998, %v1998
    %v2768 = vunpack.c.l.s4 1966171168
    %v2769 = vunpack.c.0.s8 %v2768
    %v2770 = vlaneseq
    %v2771 = vshrl.u32 %v2770, 7
    %v2772 = vsub.s32 %v2769, %v2771
    %v2773 = vrot.slane %v1998, %v2772
    %v2775 = vunpack.c.l.s4 1966171168
    %v2776 = vunpack.c.0.s8 %v2775
    %v2777 = vlaneseq
    %v2778 = vshrl.u32 %v2777, 7
    %v2779 = vsub.s32 %v2776, %v2778
    %v2780 = vrot.slane %v2766, %v2779
    %v2781 = vcombine.high %v2773, %v2773
    %v2782 = vcombine.high %v2780, %v2780
    %v2784 = vunpack.c.l.s4 1966171168
    %v2785 = vunpack.c.0.s8 %v2784
    %v2786 = vlaneseq
    %v2787 = vshrl.u32 %v2786, 7
    %v2788 = vsub.s32 %v2785, %v2787
    %v2789 = vrot.slane %v2773, %v2788
    %v2791 = vunpack.c.l.s4 1966171168
    %v2792 = vunpack.c.0.s8 %v2791
    %v2793 = vlaneseq
    %v2794 = vshrl.u32 %v2793, 7
    %v2795 = vsub.s32 %v2792, %v2794
    %v2796 = vrot.slane %v2780, %v2795
    %v2798 = vunpack.c.l.s4 1966171168
    %v2799 = vunpack.c.0.s8 %v2798
    %v2800 = vlaneseq
    %v2801 = vshrl.u32 %v2800, 7
    %v2802 = vsub.s32 %v2799, %v2801
    %v2803 = vrot.slane %v2781, %v2802
    %v2805 = vunpack.c.l.s4 1966171168
    %v2806 = vunpack.c.0.s8 %v2805
    %v2807 = vlaneseq
    %v2808 = vshrl.u32 %v2807, 7
    %v2809 = vsub.s32 %v2806, %v2808
    %v2810 = vrot.slane %v2782, %v2809
    %v2811 = vcombine.high %v2789, %v2789
    %v2812 = vcombine.high %v2796, %v2796
    %v2813 = vcombine.high %v2803, %v2803
    %v2814 = vcombine.high %v2810, %v2810
    %v2815 = vcombine.high %v1999, %v1999
    %v2817 = vunpack.c.l.s4 1966171168
    %v2818 = vunpack.c.0.s8 %v2817
    %v2819 = vlaneseq
    %v2820 = vshrl.u32 %v2819, 7
    %v2821 = vsub.s32 %v2818, %v2820
    %v2822 = vrot.slane %v1999, %v2821
    %v2824 = vunpack.c.l.s4 1966171168
    %v2825 = vunpack.c.0.s8 %v2824
    %v2826 = vlaneseq
    %v2827 = vshrl.u32 %v2826, 7
    %v2828 = vsub.s32 %v2825, %v2827
    %v2829 = vrot.slane %v2815, %v2828
    %v2830 = vcombine.high %v2822, %v2822
    %v2831 = vcombine.high %v2829, %v2829
    %v2833 = vunpack.c.l.s4 1966171168
    %v2834 = vunpack.c.0.s8 %v2833
    %v2835 = vlaneseq
    %v2836 = vshrl.u32 %v2835, 7
    %v2837 = vsub.s32 %v2834, %v2836
    %v2838 = vrot.slane %v2822, %v2837
    %v2840 = vunpack.c.l.s4 1966171168
    %v2841 = vunpack.c.0.s8 %v2840
    %v2842 = vlaneseq
    %v2843 = vshrl.u32 %v2842, 7
    %v2844 = vsub.s32 %v2841, %v2843
    %v2845 = vrot.slane %v2829, %v2844
    %v2847 = vunpack.c.l.s4 1966171168
    %v2848 = vunpack.c.0.s8 %v2847
    %v2849 = vlaneseq
    %v2850 = vshrl.u32 %v2849, 7
    %v2851 = vsub.s32 %v2848, %v2850
    %v2852 = vrot.slane %v2830, %v2851
    %v2854 = vunpack.c.l.s4 1966171168
    %v2855 = vunpack.c.0.s8 %v2854
    %v2856 = vlaneseq
    %v2857 = vshrl.u32 %v2856, 7
    %v2858 = vsub.s32 %v2855, %v2857
    %v2859 = vrot.slane %v2831, %v2858
    %v2860 = vcombine.high %v2838, %v2838
    %v2861 = vcombine.high %v2845, %v2845
    %v2862 = vcombine.high %v2852, %v2852
    %v2863 = vcombine.high %v2859, %v2859
    %v2864 = vcombine.high %v2000, %v2000
    %v2866 = vunpack.c.l.s4 1966171168
    %v2867 = vunpack.c.0.s8 %v2866
    %v2868 = vlaneseq
    %v2869 = vshrl.u32 %v2868, 7
    %v2870 = vsub.s32 %v2867, %v2869
    %v2871 = vrot.slane %v2000, %v2870
    %v2873 = vunpack.c.l.s4 1966171168
    %v2874 = vunpack.c.0.s8 %v2873
    %v2875 = vlaneseq
    %v2876 = vshrl.u32 %v2875, 7
    %v2877 = vsub.s32 %v2874, %v2876
    %v2878 = vrot.slane %v2864, %v2877
    %v2879 = vcombine.high %v2871, %v2871
    %v2880 = vcombine.high %v2878, %v2878
    %v2882 = vunpack.c.l.s4 1966171168
    %v2883 = vunpack.c.0.s8 %v2882
    %v2884 = vlaneseq
    %v2885 = vshrl.u32 %v2884, 7
    %v2886 = vsub.s32 %v2883, %v2885
    %v2887 = vrot.slane %v2871, %v2886
    %v2889 = vunpack.c.l.s4 1966171168
    %v2890 = vunpack.c.0.s8 %v2889
    %v2891 = vlaneseq
    %v2892 = vshrl.u32 %v2891, 7
    %v2893 = vsub.s32 %v2890, %v2892
    %v2894 = vrot.slane %v2878, %v2893
    %v2896 = vunpack.c.l.s4 1966171168
    %v2897 = vunpack.c.0.s8 %v2896
    %v2898 = vlaneseq
    %v2899 = vshrl.u32 %v2898, 7
    %v2900 = vsub.s32 %v2897, %v2899
    %v2901 = vrot.slane %v2879, %v2900
    %v2903 = vunpack.c.l.s4 1966171168
    %v2904 = vunpack.c.0.s8 %v2903
    %v2905 = vlaneseq
    %v2906 = vshrl.u32 %v2905, 7
    %v2907 = vsub.s32 %v2904, %v2906
    %v2908 = vrot.slane %v2880, %v2907
    %v2909 = vcombine.high %v2887, %v2887
    %v2910 = vcombine.high %v2894, %v2894
    %v2911 = vcombine.high %v2901, %v2901
    %v2912 = vcombine.high %v2908, %v2908
    %v2913 = vcombine.high %v2001, %v2001
    %v2915 = vunpack.c.l.s4 1966171168
    %v2916 = vunpack.c.0.s8 %v2915
    %v2917 = vlaneseq
    %v2918 = vshrl.u32 %v2917, 7
    %v2919 = vsub.s32 %v2916, %v2918
    %v2920 = vrot.slane %v2001, %v2919
    %v2922 = vunpack.c.l.s4 1966171168
    %v2923 = vunpack.c.0.s8 %v2922
    %v2924 = vlaneseq
    %v2925 = vshrl.u32 %v2924, 7
    %v2926 = vsub.s32 %v2923, %v2925
    %v2927 = vrot.slane %v2913, %v2926
    %v2928 = vcombine.high %v2920, %v2920
    %v2929 = vcombine.high %v2927, %v2927
    %v2931 = vunpack.c.l.s4 1966171168
    %v2932 = vunpack.c.0.s8 %v2931
    %v2933 = vlaneseq
    %v2934 = vshrl.u32 %v2933, 7
    %v2935 = vsub.s32 %v2932, %v2934
    %v2936 = vrot.slane %v2920, %v2935
    %v2938 = vunpack.c.l.s4 1966171168
    %v2939 = vunpack.c.0.s8 %v2938
    %v2940 = vlaneseq
    %v2941 = vshrl.u32 %v2940, 7
    %v2942 = vsub.s32 %v2939, %v2941
    %v2943 = vrot.slane %v2927, %v2942
    %v2945 = vunpack.c.l.s4 1966171168
    %v2946 = vunpack.c.0.s8 %v2945
    %v2947 = vlaneseq
    %v2948 = vshrl.u32 %v2947, 7
    %v2949 = vsub.s32 %v2946, %v2948
    %v2950 = vrot.slane %v2928, %v2949
    %v2952 = vunpack.c.l.s4 1966171168
    %v2953 = vunpack.c.0.s8 %v2952
    %v2954 = vlaneseq
    %v2955 = vshrl.u32 %v2954, 7
    %v2956 = vsub.s32 %v2953, %v2955
    %v2957 = vrot.slane %v2929, %v2956
    %v2958 = vcombine.high %v2936, %v2936
    %v2959 = vcombine.high %v2943, %v2943
    %v2960 = vcombine.high %v2950, %v2950
    %v2961 = vcombine.high %v2957, %v2957
    %v2962 = vcombine.high %v2002, %v2002
    %v2964 = vunpack.c.l.s4 1966171168
    %v2965 = vunpack.c.0.s8 %v2964
    %v2966 = vlaneseq
    %v2967 = vshrl.u32 %v2966, 7
    %v2968 = vsub.s32 %v2965, %v2967
    %v2969 = vrot.slane %v2002, %v2968
    %v2971 = vunpack.c.l.s4 1966171168
    %v2972 = vunpack.c.0.s8 %v2971
    %v2973 = vlaneseq
    %v2974 = vshrl.u32 %v2973, 7
    %v2975 = vsub.s32 %v2972, %v2974
    %v2976 = vrot.slane %v2962, %v2975
    %v2977 = vcombine.high %v2969, %v2969
    %v2978 = vcombine.high %v2976, %v2976
    %v2980 = vunpack.c.l.s4 1966171168
    %v2981 = vunpack.c.0.s8 %v2980
    %v2982 = vlaneseq
    %v2983 = vshrl.u32 %v2982, 7
    %v2984 = vsub.s32 %v2981, %v2983
    %v2985 = vrot.slane %v2969, %v2984
    %v2987 = vunpack.c.l.s4 1966171168
    %v2988 = vunpack.c.0.s8 %v2987
    %v2989 = vlaneseq
    %v2990 = vshrl.u32 %v2989, 7
    %v2991 = vsub.s32 %v2988, %v2990
    %v2992 = vrot.slane %v2976, %v2991
    %v2994 = vunpack.c.l.s4 1966171168
    %v2995 = vunpack.c.0.s8 %v2994
    %v2996 = vlaneseq
    %v2997 = vshrl.u32 %v2996, 7
    %v2998 = vsub.s32 %v2995, %v2997
    %v2999 = vrot.slane %v2977, %v2998
    %v3001 = vunpack.c.l.s4 1966171168
    %v3002 = vunpack.c.0.s8 %v3001
    %v3003 = vlaneseq
    %v3004 = vshrl.u32 %v3003, 7
    %v3005 = vsub.s32 %v3002, %v3004
    %v3006 = vrot.slane %v2978, %v3005
    %v3007 = vcombine.high %v2985, %v2985
    %v3008 = vcombine.high %v2992, %v2992
    %v3009 = vcombine.high %v2999, %v2999
    %v3010 = vcombine.high %v3006, %v3006
    %v3011 = vcombine.high %v2003, %v2003
    %v3013 = vunpack.c.l.s4 1966171168
    %v3014 = vunpack.c.0.s8 %v3013
    %v3015 = vlaneseq
    %v3016 = vshrl.u32 %v3015, 7
    %v3017 = vsub.s32 %v3014, %v3016
    %v3018 = vrot.slane %v2003, %v3017
    %v3020 = vunpack.c.l.s4 1966171168
    %v3021 = vunpack.c.0.s8 %v3020
    %v3022 = vlaneseq
    %v3023 = vshrl.u32 %v3022, 7
    %v3024 = vsub.s32 %v3021, %v3023
    %v3025 = vrot.slane %v3011, %v3024
    %v3026 = vcombine.high %v3018, %v3018
    %v3027 = vcombine.high %v3025, %v3025
    %v3029 = vunpack.c.l.s4 1966171168
    %v3030 = vunpack.c.0.s8 %v3029
    %v3031 = vlaneseq
    %v3032 = vshrl.u32 %v3031, 7
    %v3033 = vsub.s32 %v3030, %v3032
    %v3034 = vrot.slane %v3018, %v3033
    %v3036 = vunpack.c.l.s4 1966171168
    %v3037 = vunpack.c.0.s8 %v3036
    %v3038 = vlaneseq
    %v3039 = vshrl.u32 %v3038, 7
    %v3040 = vsub.s32 %v3037, %v3039
    %v3041 = vrot.slane %v3025, %v3040
    %v3043 = vunpack.c.l.s4 1966171168
    %v3044 = vunpack.c.0.s8 %v3043
    %v3045 = vlaneseq
    %v3046 = vshrl.u32 %v3045, 7
    %v3047 = vsub.s32 %v3044, %v3046
    %v3048 = vrot.slane %v3026, %v3047
    %v3050 = vunpack.c.l.s4 1966171168
    %v3051 = vunpack.c.0.s8 %v3050
    %v3052 = vlaneseq
    %v3053 = vshrl.u32 %v3052, 7
    %v3054 = vsub.s32 %v3051, %v3053
    %v3055 = vrot.slane %v3027, %v3054
    %v3056 = vcombine.high %v3034, %v3034
    %v3057 = vcombine.high %v3041, %v3041
    %v3058 = vcombine.high %v3048, %v3048
    %v3059 = vcombine.high %v3055, %v3055
    %v3060 = vcombine.high %v2004, %v2004
    %v3062 = vunpack.c.l.s4 1966171168
    %v3063 = vunpack.c.0.s8 %v3062
    %v3064 = vlaneseq
    %v3065 = vshrl.u32 %v3064, 7
    %v3066 = vsub.s32 %v3063, %v3065
    %v3067 = vrot.slane %v2004, %v3066
    %v3069 = vunpack.c.l.s4 1966171168
    %v3070 = vunpack.c.0.s8 %v3069
    %v3071 = vlaneseq
    %v3072 = vshrl.u32 %v3071, 7
    %v3073 = vsub.s32 %v3070, %v3072
    %v3074 = vrot.slane %v3060, %v3073
    %v3075 = vcombine.high %v3067, %v3067
    %v3076 = vcombine.high %v3074, %v3074
    %v3078 = vunpack.c.l.s4 1966171168
    %v3079 = vunpack.c.0.s8 %v3078
    %v3080 = vlaneseq
    %v3081 = vshrl.u32 %v3080, 7
    %v3082 = vsub.s32 %v3079, %v3081
    %v3083 = vrot.slane %v3067, %v3082
    %v3085 = vunpack.c.l.s4 1966171168
    %v3086 = vunpack.c.0.s8 %v3085
    %v3087 = vlaneseq
    %v3088 = vshrl.u32 %v3087, 7
    %v3089 = vsub.s32 %v3086, %v3088
    %v3090 = vrot.slane %v3074, %v3089
    %v3092 = vunpack.c.l.s4 1966171168
    %v3093 = vunpack.c.0.s8 %v3092
    %v3094 = vlaneseq
    %v3095 = vshrl.u32 %v3094, 7
    %v3096 = vsub.s32 %v3093, %v3095
    %v3097 = vrot.slane %v3075, %v3096
    %v3099 = vunpack.c.l.s4 1966171168
    %v3100 = vunpack.c.0.s8 %v3099
    %v3101 = vlaneseq
    %v3102 = vshrl.u32 %v3101, 7
    %v3103 = vsub.s32 %v3100, %v3102
    %v3104 = vrot.slane %v3076, %v3103
    %v3105 = vcombine.high %v3083, %v3083
    %v3106 = vcombine.high %v3090, %v3090
    %v3107 = vcombine.high %v3097, %v3097
    %v3108 = vcombine.high %v3104, %v3104
    %v3109 = vcombine.high %v2005, %v2005
    %v3111 = vunpack.c.l.s4 1966171168
    %v3112 = vunpack.c.0.s8 %v3111
    %v3113 = vlaneseq
    %v3114 = vshrl.u32 %v3113, 7
    %v3115 = vsub.s32 %v3112, %v3114
    %v3116 = vrot.slane %v2005, %v3115
    %v3118 = vunpack.c.l.s4 1966171168
    %v3119 = vunpack.c.0.s8 %v3118
    %v3120 = vlaneseq
    %v3121 = vshrl.u32 %v3120, 7
    %v3122 = vsub.s32 %v3119, %v3121
    %v3123 = vrot.slane %v3109, %v3122
    %v3124 = vcombine.high %v3116, %v3116
    %v3125 = vcombine.high %v3123, %v3123
    %v3127 = vunpack.c.l.s4 1966171168
    %v3128 = vunpack.c.0.s8 %v3127
    %v3129 = vlaneseq
    %v3130 = vshrl.u32 %v3129, 7
    %v3131 = vsub.s32 %v3128, %v3130
    %v3132 = vrot.slane %v3116, %v3131
    %v3134 = vunpack.c.l.s4 1966171168
    %v3135 = vunpack.c.0.s8 %v3134
    %v3136 = vlaneseq
    %v3137 = vshrl.u32 %v3136, 7
    %v3138 = vsub.s32 %v3135, %v3137
    %v3139 = vrot.slane %v3123, %v3138
    %v3141 = vunpack.c.l.s4 1966171168
    %v3142 = vunpack.c.0.s8 %v3141
    %v3143 = vlaneseq
    %v3144 = vshrl.u32 %v3143, 7
    %v3145 = vsub.s32 %v3142, %v3144
    %v3146 = vrot.slane %v3124, %v3145
    %v3148 = vunpack.c.l.s4 1966171168
    %v3149 = vunpack.c.0.s8 %v3148
    %v3150 = vlaneseq
    %v3151 = vshrl.u32 %v3150, 7
    %v3152 = vsub.s32 %v3149, %v3151
    %v3153 = vrot.slane %v3125, %v3152
    %v3154 = vcombine.high %v3132, %v3132
    %v3155 = vcombine.high %v3139, %v3139
    %v3156 = vcombine.high %v3146, %v3146
    %v3157 = vcombine.high %v3153, %v3153
    %v3158 = vcombine.high %v2006, %v2006
    %v3160 = vunpack.c.l.s4 1966171168
    %v3161 = vunpack.c.0.s8 %v3160
    %v3162 = vlaneseq
    %v3163 = vshrl.u32 %v3162, 7
    %v3164 = vsub.s32 %v3161, %v3163
    %v3165 = vrot.slane %v2006, %v3164
    %v3167 = vunpack.c.l.s4 1966171168
    %v3168 = vunpack.c.0.s8 %v3167
    %v3169 = vlaneseq
    %v3170 = vshrl.u32 %v3169, 7
    %v3171 = vsub.s32 %v3168, %v3170
    %v3172 = vrot.slane %v3158, %v3171
    %v3173 = vcombine.high %v3165, %v3165
    %v3174 = vcombine.high %v3172, %v3172
    %v3176 = vunpack.c.l.s4 1966171168
    %v3177 = vunpack.c.0.s8 %v3176
    %v3178 = vlaneseq
    %v3179 = vshrl.u32 %v3178, 7
    %v3180 = vsub.s32 %v3177, %v3179
    %v3181 = vrot.slane %v3165, %v3180
    %v3183 = vunpack.c.l.s4 1966171168
    %v3184 = vunpack.c.0.s8 %v3183
    %v3185 = vlaneseq
    %v3186 = vshrl.u32 %v3185, 7
    %v3187 = vsub.s32 %v3184, %v3186
    %v3188 = vrot.slane %v3172, %v3187
    %v3190 = vunpack.c.l.s4 1966171168
    %v3191 = vunpack.c.0.s8 %v3190
    %v3192 = vlaneseq
    %v3193 = vshrl.u32 %v3192, 7
    %v3194 = vsub.s32 %v3191, %v3193
    %v3195 = vrot.slane %v3173, %v3194
    %v3197 = vunpack.c.l.s4 1966171168
    %v3198 = vunpack.c.0.s8 %v3197
    %v3199 = vlaneseq
    %v3200 = vshrl.u32 %v3199, 7
    %v3201 = vsub.s32 %v3198, %v3200
    %v3202 = vrot.slane %v3174, %v3201
    %v3203 = vcombine.high %v3181, %v3181
    %v3204 = vcombine.high %v3188, %v3188
    %v3205 = vcombine.high %v3195, %v3195
    %v3206 = vcombine.high %v3202, %v3202
    %v3207 = vcombine.high %v2007, %v2007
    %v3209 = vunpack.c.l.s4 1966171168
    %v3210 = vunpack.c.0.s8 %v3209
    %v3211 = vlaneseq
    %v3212 = vshrl.u32 %v3211, 7
    %v3213 = vsub.s32 %v3210, %v3212
    %v3214 = vrot.slane %v2007, %v3213
    %v3216 = vunpack.c.l.s4 1966171168
    %v3217 = vunpack.c.0.s8 %v3216
    %v3218 = vlaneseq
    %v3219 = vshrl.u32 %v3218, 7
    %v3220 = vsub.s32 %v3217, %v3219
    %v3221 = vrot.slane %v3207, %v3220
    %v3222 = vcombine.high %v3214, %v3214
    %v3223 = vcombine.high %v3221, %v3221
    %v3225 = vunpack.c.l.s4 1966171168
    %v3226 = vunpack.c.0.s8 %v3225
    %v3227 = vlaneseq
    %v3228 = vshrl.u32 %v3227, 7
    %v3229 = vsub.s32 %v3226, %v3228
    %v3230 = vrot.slane %v3214, %v3229
    %v3232 = vunpack.c.l.s4 1966171168
    %v3233 = vunpack.c.0.s8 %v3232
    %v3234 = vlaneseq
    %v3235 = vshrl.u32 %v3234, 7
    %v3236 = vsub.s32 %v3233, %v3235
    %v3237 = vrot.slane %v3221, %v3236
    %v3239 = vunpack.c.l.s4 1966171168
    %v3240 = vunpack.c.0.s8 %v3239
    %v3241 = vlaneseq
    %v3242 = vshrl.u32 %v3241, 7
    %v3243 = vsub.s32 %v3240, %v3242
    %v3244 = vrot.slane %v3222, %v3243
    %v3246 = vunpack.c.l.s4 1966171168
    %v3247 = vunpack.c.0.s8 %v3246
    %v3248 = vlaneseq
    %v3249 = vshrl.u32 %v3248, 7
    %v3250 = vsub.s32 %v3247, %v3249
    %v3251 = vrot.slane %v3223, %v3250
    %v3252 = vcombine.high %v3230, %v3230
    %v3253 = vcombine.high %v3237, %v3237
    %v3254 = vcombine.high %v3244, %v3244
    %v3255 = vcombine.high %v3251, %v3251
    %v3256 = vcombine.high %v2008, %v2008
    %v3258 = vunpack.c.l.s4 1966171168
    %v3259 = vunpack.c.0.s8 %v3258
    %v3260 = vlaneseq
    %v3261 = vshrl.u32 %v3260, 7
    %v3262 = vsub.s32 %v3259, %v3261
    %v3263 = vrot.slane %v2008, %v3262
    %v3265 = vunpack.c.l.s4 1966171168
    %v3266 = vunpack.c.0.s8 %v3265
    %v3267 = vlaneseq
    %v3268 = vshrl.u32 %v3267, 7
    %v3269 = vsub.s32 %v3266, %v3268
    %v3270 = vrot.slane %v3256, %v3269
    %v3271 = vcombine.high %v3263, %v3263
    %v3272 = vcombine.high %v3270, %v3270
    %v3274 = vunpack.c.l.s4 1966171168
    %v3275 = vunpack.c.0.s8 %v3274
    %v3276 = vlaneseq
    %v3277 = vshrl.u32 %v3276, 7
    %v3278 = vsub.s32 %v3275, %v3277
    %v3279 = vrot.slane %v3263, %v3278
    %v3281 = vunpack.c.l.s4 1966171168
    %v3282 = vunpack.c.0.s8 %v3281
    %v3283 = vlaneseq
    %v3284 = vshrl.u32 %v3283, 7
    %v3285 = vsub.s32 %v3282, %v3284
    %v3286 = vrot.slane %v3270, %v3285
    %v3288 = vunpack.c.l.s4 1966171168
    %v3289 = vunpack.c.0.s8 %v3288
    %v3290 = vlaneseq
    %v3291 = vshrl.u32 %v3290, 7
    %v3292 = vsub.s32 %v3289, %v3291
    %v3293 = vrot.slane %v3271, %v3292
    %v3295 = vunpack.c.l.s4 1966171168
    %v3296 = vunpack.c.0.s8 %v3295
    %v3297 = vlaneseq
    %v3298 = vshrl.u32 %v3297, 7
    %v3299 = vsub.s32 %v3296, %v3298
    %v3300 = vrot.slane %v3272, %v3299
    %v3301 = vcombine.high %v3279, %v3279
    %v3302 = vcombine.high %v3286, %v3286
    %v3303 = vcombine.high %v3293, %v3293
    %v3304 = vcombine.high %v3300, %v3300
    %v3305 = vcombine.high %v2009, %v2009
    %v3307 = vunpack.c.l.s4 1966171168
    %v3308 = vunpack.c.0.s8 %v3307
    %v3309 = vlaneseq
    %v3310 = vshrl.u32 %v3309, 7
    %v3311 = vsub.s32 %v3308, %v3310
    %v3312 = vrot.slane %v2009, %v3311
    %v3314 = vunpack.c.l.s4 1966171168
    %v3315 = vunpack.c.0.s8 %v3314
    %v3316 = vlaneseq
    %v3317 = vshrl.u32 %v3316, 7
    %v3318 = vsub.s32 %v3315, %v3317
    %v3319 = vrot.slane %v3305, %v3318
    %v3320 = vcombine.high %v3312, %v3312
    %v3321 = vcombine.high %v3319, %v3319
    %v3323 = vunpack.c.l.s4 1966171168
    %v3324 = vunpack.c.0.s8 %v3323
    %v3325 = vlaneseq
    %v3326 = vshrl.u32 %v3325, 7
    %v3327 = vsub.s32 %v3324, %v3326
    %v3328 = vrot.slane %v3312, %v3327
    %v3330 = vunpack.c.l.s4 1966171168
    %v3331 = vunpack.c.0.s8 %v3330
    %v3332 = vlaneseq
    %v3333 = vshrl.u32 %v3332, 7
    %v3334 = vsub.s32 %v3331, %v3333
    %v3335 = vrot.slane %v3319, %v3334
    %v3337 = vunpack.c.l.s4 1966171168
    %v3338 = vunpack.c.0.s8 %v3337
    %v3339 = vlaneseq
    %v3340 = vshrl.u32 %v3339, 7
    %v3341 = vsub.s32 %v3338, %v3340
    %v3342 = vrot.slane %v3320, %v3341
    %v3344 = vunpack.c.l.s4 1966171168
    %v3345 = vunpack.c.0.s8 %v3344
    %v3346 = vlaneseq
    %v3347 = vshrl.u32 %v3346, 7
    %v3348 = vsub.s32 %v3345, %v3347
    %v3349 = vrot.slane %v3321, %v3348
    %v3350 = vcombine.high %v3328, %v3328
    %v3351 = vcombine.high %v3335, %v3335
    %v3352 = vcombine.high %v3342, %v3342
    %v3353 = vcombine.high %v3349, %v3349
    %v3354 = vcombine.high %v2010, %v2010
    %v3356 = vunpack.c.l.s4 1966171168
    %v3357 = vunpack.c.0.s8 %v3356
    %v3358 = vlaneseq
    %v3359 = vshrl.u32 %v3358, 7
    %v3360 = vsub.s32 %v3357, %v3359
    %v3361 = vrot.slane %v2010, %v3360
    %v3363 = vunpack.c.l.s4 1966171168
    %v3364 = vunpack.c.0.s8 %v3363
    %v3365 = vlaneseq
    %v3366 = vshrl.u32 %v3365, 7
    %v3367 = vsub.s32 %v3364, %v3366
    %v3368 = vrot.slane %v3354, %v3367
    %v3369 = vcombine.high %v3361, %v3361
    %v3370 = vcombine.high %v3368, %v3368
    %v3372 = vunpack.c.l.s4 1966171168
    %v3373 = vunpack.c.0.s8 %v3372
    %v3374 = vlaneseq
    %v3375 = vshrl.u32 %v3374, 7
    %v3376 = vsub.s32 %v3373, %v3375
    %v3377 = vrot.slane %v3361, %v3376
    %v3379 = vunpack.c.l.s4 1966171168
    %v3380 = vunpack.c.0.s8 %v3379
    %v3381 = vlaneseq
    %v3382 = vshrl.u32 %v3381, 7
    %v3383 = vsub.s32 %v3380, %v3382
    %v3384 = vrot.slane %v3368, %v3383
    %v3386 = vunpack.c.l.s4 1966171168
    %v3387 = vunpack.c.0.s8 %v3386
    %v3388 = vlaneseq
    %v3389 = vshrl.u32 %v3388, 7
    %v3390 = vsub.s32 %v3387, %v3389
    %v3391 = vrot.slane %v3369, %v3390
    %v3393 = vunpack.c.l.s4 1966171168
    %v3394 = vunpack.c.0.s8 %v3393
    %v3395 = vlaneseq
    %v3396 = vshrl.u32 %v3395, 7
    %v3397 = vsub.s32 %v3394, %v3396
    %v3398 = vrot.slane %v3370, %v3397
    %v3399 = vcombine.high %v3377, %v3377
    %v3400 = vcombine.high %v3384, %v3384
    %v3401 = vcombine.high %v3391, %v3391
    %v3402 = vcombine.high %v3398, %v3398
    %v3403 = vcombine.high %v2011, %v2011
    %v3405 = vunpack.c.l.s4 1966171168
    %v3406 = vunpack.c.0.s8 %v3405
    %v3407 = vlaneseq
    %v3408 = vshrl.u32 %v3407, 7
    %v3409 = vsub.s32 %v3406, %v3408
    %v3410 = vrot.slane %v2011, %v3409
    %v3412 = vunpack.c.l.s4 1966171168
    %v3413 = vunpack.c.0.s8 %v3412
    %v3414 = vlaneseq
    %v3415 = vshrl.u32 %v3414, 7
    %v3416 = vsub.s32 %v3413, %v3415
    %v3417 = vrot.slane %v3403, %v3416
    %v3418 = vcombine.high %v3410, %v3410
    %v3419 = vcombine.high %v3417, %v3417
    %v3421 = vunpack.c.l.s4 1966171168
    %v3422 = vunpack.c.0.s8 %v3421
    %v3423 = vlaneseq
    %v3424 = vshrl.u32 %v3423, 7
    %v3425 = vsub.s32 %v3422, %v3424
    %v3426 = vrot.slane %v3410, %v3425
    %v3428 = vunpack.c.l.s4 1966171168
    %v3429 = vunpack.c.0.s8 %v3428
    %v3430 = vlaneseq
    %v3431 = vshrl.u32 %v3430, 7
    %v3432 = vsub.s32 %v3429, %v3431
    %v3433 = vrot.slane %v3417, %v3432
    %v3435 = vunpack.c.l.s4 1966171168
    %v3436 = vunpack.c.0.s8 %v3435
    %v3437 = vlaneseq
    %v3438 = vshrl.u32 %v3437, 7
    %v3439 = vsub.s32 %v3436, %v3438
    %v3440 = vrot.slane %v3418, %v3439
    %v3442 = vunpack.c.l.s4 1966171168
    %v3443 = vunpack.c.0.s8 %v3442
    %v3444 = vlaneseq
    %v3445 = vshrl.u32 %v3444, 7
    %v3446 = vsub.s32 %v3443, %v3445
    %v3447 = vrot.slane %v3419, %v3446
    %v3448 = vcombine.high %v3426, %v3426
    %v3449 = vcombine.high %v3433, %v3433
    %v3450 = vcombine.high %v3440, %v3440
    %v3451 = vcombine.high %v3447, %v3447
    %v3452 = vcombine.high %v2012, %v2012
    %v3454 = vunpack.c.l.s4 1966171168
    %v3455 = vunpack.c.0.s8 %v3454
    %v3456 = vlaneseq
    %v3457 = vshrl.u32 %v3456, 7
    %v3458 = vsub.s32 %v3455, %v3457
    %v3459 = vrot.slane %v2012, %v3458
    %v3461 = vunpack.c.l.s4 1966171168
    %v3462 = vunpack.c.0.s8 %v3461
    %v3463 = vlaneseq
    %v3464 = vshrl.u32 %v3463, 7
    %v3465 = vsub.s32 %v3462, %v3464
    %v3466 = vrot.slane %v3452, %v3465
    %v3467 = vcombine.high %v3459, %v3459
    %v3468 = vcombine.high %v3466, %v3466
    %v3470 = vunpack.c.l.s4 1966171168
    %v3471 = vunpack.c.0.s8 %v3470
    %v3472 = vlaneseq
    %v3473 = vshrl.u32 %v3472, 7
    %v3474 = vsub.s32 %v3471, %v3473
    %v3475 = vrot.slane %v3459, %v3474
    %v3477 = vunpack.c.l.s4 1966171168
    %v3478 = vunpack.c.0.s8 %v3477
    %v3479 = vlaneseq
    %v3480 = vshrl.u32 %v3479, 7
    %v3481 = vsub.s32 %v3478, %v3480
    %v3482 = vrot.slane %v3466, %v3481
    %v3484 = vunpack.c.l.s4 1966171168
    %v3485 = vunpack.c.0.s8 %v3484
    %v3486 = vlaneseq
    %v3487 = vshrl.u32 %v3486, 7
    %v3488 = vsub.s32 %v3485, %v3487
    %v3489 = vrot.slane %v3467, %v3488
    %v3491 = vunpack.c.l.s4 1966171168
    %v3492 = vunpack.c.0.s8 %v3491
    %v3493 = vlaneseq
    %v3494 = vshrl.u32 %v3493, 7
    %v3495 = vsub.s32 %v3492, %v3494
    %v3496 = vrot.slane %v3468, %v3495
    %v3497 = vcombine.high %v3475, %v3475
    %v3498 = vcombine.high %v3482, %v3482
    %v3499 = vcombine.high %v3489, %v3489
    %v3500 = vcombine.high %v3496, %v3496
    %v3501 = vcombine.high %v2013, %v2013
    %v3503 = vunpack.c.l.s4 1966171168
    %v3504 = vunpack.c.0.s8 %v3503
    %v3505 = vlaneseq
    %v3506 = vshrl.u32 %v3505, 7
    %v3507 = vsub.s32 %v3504, %v3506
    %v3508 = vrot.slane %v2013, %v3507
    %v3510 = vunpack.c.l.s4 1966171168
    %v3511 = vunpack.c.0.s8 %v3510
    %v3512 = vlaneseq
    %v3513 = vshrl.u32 %v3512, 7
    %v3514 = vsub.s32 %v3511, %v3513
    %v3515 = vrot.slane %v3501, %v3514
    %v3516 = vcombine.high %v3508, %v3508
    %v3517 = vcombine.high %v3515, %v3515
    %v3519 = vunpack.c.l.s4 1966171168
    %v3520 = vunpack.c.0.s8 %v3519
    %v3521 = vlaneseq
    %v3522 = vshrl.u32 %v3521, 7
    %v3523 = vsub.s32 %v3520, %v3522
    %v3524 = vrot.slane %v3508, %v3523
    %v3526 = vunpack.c.l.s4 1966171168
    %v3527 = vunpack.c.0.s8 %v3526
    %v3528 = vlaneseq
    %v3529 = vshrl.u32 %v3528, 7
    %v3530 = vsub.s32 %v3527, %v3529
    %v3531 = vrot.slane %v3515, %v3530
    %v3533 = vunpack.c.l.s4 1966171168
    %v3534 = vunpack.c.0.s8 %v3533
    %v3535 = vlaneseq
    %v3536 = vshrl.u32 %v3535, 7
    %v3537 = vsub.s32 %v3534, %v3536
    %v3538 = vrot.slane %v3516, %v3537
    %v3540 = vunpack.c.l.s4 1966171168
    %v3541 = vunpack.c.0.s8 %v3540
    %v3542 = vlaneseq
    %v3543 = vshrl.u32 %v3542, 7
    %v3544 = vsub.s32 %v3541, %v3543
    %v3545 = vrot.slane %v3517, %v3544
    %v3546 = vcombine.high %v3524, %v3524
    %v3547 = vcombine.high %v3531, %v3531
    %v3548 = vcombine.high %v3538, %v3538
    %v3549 = vcombine.high %v3545, %v3545
    %v3550 = vcombine.high %v2014, %v2014
    %v3552 = vunpack.c.l.s4 1966171168
    %v3553 = vunpack.c.0.s8 %v3552
    %v3554 = vlaneseq
    %v3555 = vshrl.u32 %v3554, 7
    %v3556 = vsub.s32 %v3553, %v3555
    %v3557 = vrot.slane %v2014, %v3556
    %v3559 = vunpack.c.l.s4 1966171168
    %v3560 = vunpack.c.0.s8 %v3559
    %v3561 = vlaneseq
    %v3562 = vshrl.u32 %v3561, 7
    %v3563 = vsub.s32 %v3560, %v3562
    %v3564 = vrot.slane %v3550, %v3563
    %v3565 = vcombine.high %v3557, %v3557
    %v3566 = vcombine.high %v3564, %v3564
    %v3568 = vunpack.c.l.s4 1966171168
    %v3569 = vunpack.c.0.s8 %v3568
    %v3570 = vlaneseq
    %v3571 = vshrl.u32 %v3570, 7
    %v3572 = vsub.s32 %v3569, %v3571
    %v3573 = vrot.slane %v3557, %v3572
    %v3575 = vunpack.c.l.s4 1966171168
    %v3576 = vunpack.c.0.s8 %v3575
    %v3577 = vlaneseq
    %v3578 = vshrl.u32 %v3577, 7
    %v3579 = vsub.s32 %v3576, %v3578
    %v3580 = vrot.slane %v3564, %v3579
    %v3582 = vunpack.c.l.s4 1966171168
    %v3583 = vunpack.c.0.s8 %v3582
    %v3584 = vlaneseq
    %v3585 = vshrl.u32 %v3584, 7
    %v3586 = vsub.s32 %v3583, %v3585
    %v3587 = vrot.slane %v3565, %v3586
    %v3589 = vunpack.c.l.s4 1966171168
    %v3590 = vunpack.c.0.s8 %v3589
    %v3591 = vlaneseq
    %v3592 = vshrl.u32 %v3591, 7
    %v3593 = vsub.s32 %v3590, %v3592
    %v3594 = vrot.slane %v3566, %v3593
    %v3595 = vcombine.high %v3573, %v3573
    %v3596 = vcombine.high %v3580, %v3580
    %v3597 = vcombine.high %v3587, %v3587
    %v3598 = vcombine.high %v3594, %v3594
    %v3599 = vcombine.high %v2015, %v2015
    %v3601 = vunpack.c.l.s4 1966171168
    %v3602 = vunpack.c.0.s8 %v3601
    %v3603 = vlaneseq
    %v3604 = vshrl.u32 %v3603, 7
    %v3605 = vsub.s32 %v3602, %v3604
    %v3606 = vrot.slane %v2015, %v3605
    %v3608 = vunpack.c.l.s4 1966171168
    %v3609 = vunpack.c.0.s8 %v3608
    %v3610 = vlaneseq
    %v3611 = vshrl.u32 %v3610, 7
    %v3612 = vsub.s32 %v3609, %v3611
    %v3613 = vrot.slane %v3599, %v3612
    %v3614 = vcombine.high %v3606, %v3606
    %v3615 = vcombine.high %v3613, %v3613
    %v3617 = vunpack.c.l.s4 1966171168
    %v3618 = vunpack.c.0.s8 %v3617
    %v3619 = vlaneseq
    %v3620 = vshrl.u32 %v3619, 7
    %v3621 = vsub.s32 %v3618, %v3620
    %v3622 = vrot.slane %v3606, %v3621
    %v3624 = vunpack.c.l.s4 1966171168
    %v3625 = vunpack.c.0.s8 %v3624
    %v3626 = vlaneseq
    %v3627 = vshrl.u32 %v3626, 7
    %v3628 = vsub.s32 %v3625, %v3627
    %v3629 = vrot.slane %v3613, %v3628
    %v3631 = vunpack.c.l.s4 1966171168
    %v3632 = vunpack.c.0.s8 %v3631
    %v3633 = vlaneseq
    %v3634 = vshrl.u32 %v3633, 7
    %v3635 = vsub.s32 %v3632, %v3634
    %v3636 = vrot.slane %v3614, %v3635
    %v3638 = vunpack.c.l.s4 1966171168
    %v3639 = vunpack.c.0.s8 %v3638
    %v3640 = vlaneseq
    %v3641 = vshrl.u32 %v3640, 7
    %v3642 = vsub.s32 %v3639, %v3641
    %v3643 = vrot.slane %v3615, %v3642
    %v3644 = vcombine.high %v3622, %v3622
    %v3645 = vcombine.high %v3629, %v3629
    %v3646 = vcombine.high %v3636, %v3636
    %v3647 = vcombine.high %v3643, %v3643
    %v3648 = vlaneseq
    %v3649 = vshrl.u32 %v3648, 7
    %v3650 = vsub.s32 0, %v3649
    %v3651 = vrot.slane %v2016, %v3650
    %3653 = vbcast.lane.b32.xlu0 %v3651, 256
    %v3654 = vpop.permute.xlu0 %3653
    %s3656 = sor.u32 256, 8
    %3657 = vbcast.lane.b32.xlu0 %v3651, %s3656
    %v3658 = vpop.permute.xlu0 %3657
    %v3659 = vlaneseq
    %v3660 = vshrl.u32 %v3659, 7
    %v3661 = vsub.s32 1, %v3660
    %v3662 = vrot.slane %v2016, %v3661
    %3664 = vbcast.lane.b32.xlu0 %v3662, 256
    %v3665 = vpop.permute.xlu0 %3664
    %s3667 = sor.u32 256, 8
    %3668 = vbcast.lane.b32.xlu0 %v3662, %s3667
    %v3669 = vpop.permute.xlu0 %3668
    %v3670 = vlaneseq
    %v3671 = vshrl.u32 %v3670, 7
    %v3672 = vsub.s32 2, %v3671
    %v3673 = vrot.slane %v2016, %v3672
    %3675 = vbcast.lane.b32.xlu0 %v3673, 256
    %v3676 = vpop.permute.xlu0 %3675
    %s3678 = sor.u32 256, 8
    %3679 = vbcast.lane.b32.xlu0 %v3673, %s3678
    %v3680 = vpop.permute.xlu0 %3679
    %v3681 = vlaneseq
    %v3682 = vshrl.u32 %v3681, 7
    %v3683 = vsub.s32 3, %v3682
    %v3684 = vrot.slane %v2016, %v3683
    %3686 = vbcast.lane.b32.xlu0 %v3684, 256
    %v3687 = vpop.permute.xlu0 %3686
    %s3689 = sor.u32 256, 8
    %3690 = vbcast.lane.b32.xlu0 %v3684, %s3689
    %v3691 = vpop.permute.xlu0 %3690
    %v3692 = vlaneseq
    %v3693 = vshrl.u32 %v3692, 7
    %v3694 = vsub.s32 4, %v3693
    %v3695 = vrot.slane %v2016, %v3694
    %3697 = vbcast.lane.b32.xlu0 %v3695, 256
    %v3698 = vpop.permute.xlu0 %3697
    %s3700 = sor.u32 256, 8
    %3701 = vbcast.lane.b32.xlu0 %v3695, %s3700
    %v3702 = vpop.permute.xlu0 %3701
    %v3703 = vlaneseq
    %v3704 = vshrl.u32 %v3703, 7
    %v3705 = vsub.s32 5, %v3704
    %v3706 = vrot.slane %v2016, %v3705
    %3708 = vbcast.lane.b32.xlu0 %v3706, 256
    %v3709 = vpop.permute.xlu0 %3708
    %s3711 = sor.u32 256, 8
    %3712 = vbcast.lane.b32.xlu0 %v3706, %s3711
    %v3713 = vpop.permute.xlu0 %3712
    %v3714 = vlaneseq
    %v3715 = vshrl.u32 %v3714, 7
    %v3716 = vsub.s32 6, %v3715
    %v3717 = vrot.slane %v2016, %v3716
    %3719 = vbcast.lane.b32.xlu0 %v3717, 256
    %v3720 = vpop.permute.xlu0 %3719
    %s3722 = sor.u32 256, 8
    %3723 = vbcast.lane.b32.xlu0 %v3717, %s3722
    %v3724 = vpop.permute.xlu0 %3723
    %v3725 = vlaneseq
    %v3726 = vshrl.u32 %v3725, 7
    %v3727 = vsub.s32 7, %v3726
    %v3728 = vrot.slane %v2016, %v3727
    %3730 = vbcast.lane.b32.xlu0 %v3728, 256
    %v3731 = vpop.permute.xlu0 %3730
    %s3733 = sor.u32 256, 8
    %3734 = vbcast.lane.b32.xlu0 %v3728, %s3733
    %v3735 = vpop.permute.xlu0 %3734
    %v3736 = vlaneseq
    %v3737 = vshrl.u32 %v3736, 7
    %v3738 = vsub.s32 0, %v3737
    %v3739 = vrot.slane %v2017, %v3738
    %3741 = vbcast.lane.b32.xlu0 %v3739, 256
    %v3742 = vpop.permute.xlu0 %3741
    %s3744 = sor.u32 256, 8
    %3745 = vbcast.lane.b32.xlu0 %v3739, %s3744
    %v3746 = vpop.permute.xlu0 %3745
    %v3747 = vlaneseq
    %v3748 = vshrl.u32 %v3747, 7
    %v3749 = vsub.s32 1, %v3748
    %v3750 = vrot.slane %v2017, %v3749
    %3752 = vbcast.lane.b32.xlu0 %v3750, 256
    %v3753 = vpop.permute.xlu0 %3752
    %s3755 = sor.u32 256, 8
    %3756 = vbcast.lane.b32.xlu0 %v3750, %s3755
    %v3757 = vpop.permute.xlu0 %3756
    %v3758 = vlaneseq
    %v3759 = vshrl.u32 %v3758, 7
    %v3760 = vsub.s32 2, %v3759
    %v3761 = vrot.slane %v2017, %v3760
    %3763 = vbcast.lane.b32.xlu0 %v3761, 256
    %v3764 = vpop.permute.xlu0 %3763
    %s3766 = sor.u32 256, 8
    %3767 = vbcast.lane.b32.xlu0 %v3761, %s3766
    %v3768 = vpop.permute.xlu0 %3767
    %v3769 = vlaneseq
    %v3770 = vshrl.u32 %v3769, 7
    %v3771 = vsub.s32 3, %v3770
    %v3772 = vrot.slane %v2017, %v3771
    %3774 = vbcast.lane.b32.xlu0 %v3772, 256
    %v3775 = vpop.permute.xlu0 %3774
    %s3777 = sor.u32 256, 8
    %3778 = vbcast.lane.b32.xlu0 %v3772, %s3777
    %v3779 = vpop.permute.xlu0 %3778
    %v3780 = vlaneseq
    %v3781 = vshrl.u32 %v3780, 7
    %v3782 = vsub.s32 4, %v3781
    %v3783 = vrot.slane %v2017, %v3782
    %3785 = vbcast.lane.b32.xlu0 %v3783, 256
    %v3786 = vpop.permute.xlu0 %3785
    %s3788 = sor.u32 256, 8
    %3789 = vbcast.lane.b32.xlu0 %v3783, %s3788
    %v3790 = vpop.permute.xlu0 %3789
    %v3791 = vlaneseq
    %v3792 = vshrl.u32 %v3791, 7
    %v3793 = vsub.s32 5, %v3792
    %v3794 = vrot.slane %v2017, %v3793
    %3796 = vbcast.lane.b32.xlu0 %v3794, 256
    %v3797 = vpop.permute.xlu0 %3796
    %s3799 = sor.u32 256, 8
    %3800 = vbcast.lane.b32.xlu0 %v3794, %s3799
    %v3801 = vpop.permute.xlu0 %3800
    %v3802 = vlaneseq
    %v3803 = vshrl.u32 %v3802, 7
    %v3804 = vsub.s32 6, %v3803
    %v3805 = vrot.slane %v2017, %v3804
    %3807 = vbcast.lane.b32.xlu0 %v3805, 256
    %v3808 = vpop.permute.xlu0 %3807
    %s3810 = sor.u32 256, 8
    %3811 = vbcast.lane.b32.xlu0 %v3805, %s3810
    %v3812 = vpop.permute.xlu0 %3811
    %v3813 = vlaneseq
    %v3814 = vshrl.u32 %v3813, 7
    %v3815 = vsub.s32 7, %v3814
    %v3816 = vrot.slane %v2017, %v3815
    %3818 = vbcast.lane.b32.xlu0 %v3816, 256
    %v3819 = vpop.permute.xlu0 %3818
    %s3821 = sor.u32 256, 8
    %3822 = vbcast.lane.b32.xlu0 %v3816, %s3821
    %v3823 = vpop.permute.xlu0 %3822
    %v3824 = vlaneseq
    %v3825 = vshrl.u32 %v3824, 7
    %v3826 = vsub.s32 0, %v3825
    %v3827 = vrot.slane %v2018, %v3826
    %3829 = vbcast.lane.b32.xlu0 %v3827, 256
    %v3830 = vpop.permute.xlu0 %3829
    %s3832 = sor.u32 256, 8
    %3833 = vbcast.lane.b32.xlu0 %v3827, %s3832
    %v3834 = vpop.permute.xlu0 %3833
    %v3835 = vlaneseq
    %v3836 = vshrl.u32 %v3835, 7
    %v3837 = vsub.s32 1, %v3836
    %v3838 = vrot.slane %v2018, %v3837
    %3840 = vbcast.lane.b32.xlu0 %v3838, 256
    %v3841 = vpop.permute.xlu0 %3840
    %s3843 = sor.u32 256, 8
    %3844 = vbcast.lane.b32.xlu0 %v3838, %s3843
    %v3845 = vpop.permute.xlu0 %3844
    %v3846 = vlaneseq
    %v3847 = vshrl.u32 %v3846, 7
    %v3848 = vsub.s32 2, %v3847
    %v3849 = vrot.slane %v2018, %v3848
    %3851 = vbcast.lane.b32.xlu0 %v3849, 256
    %v3852 = vpop.permute.xlu0 %3851
    %s3854 = sor.u32 256, 8
    %3855 = vbcast.lane.b32.xlu0 %v3849, %s3854
    %v3856 = vpop.permute.xlu0 %3855
    %v3857 = vlaneseq
    %v3858 = vshrl.u32 %v3857, 7
    %v3859 = vsub.s32 3, %v3858
    %v3860 = vrot.slane %v2018, %v3859
    %3862 = vbcast.lane.b32.xlu0 %v3860, 256
    %v3863 = vpop.permute.xlu0 %3862
    %s3865 = sor.u32 256, 8
    %3866 = vbcast.lane.b32.xlu0 %v3860, %s3865
    %v3867 = vpop.permute.xlu0 %3866
    %v3868 = vlaneseq
    %v3869 = vshrl.u32 %v3868, 7
    %v3870 = vsub.s32 4, %v3869
    %v3871 = vrot.slane %v2018, %v3870
    %3873 = vbcast.lane.b32.xlu0 %v3871, 256
    %v3874 = vpop.permute.xlu0 %3873
    %s3876 = sor.u32 256, 8
    %3877 = vbcast.lane.b32.xlu0 %v3871, %s3876
    %v3878 = vpop.permute.xlu0 %3877
    %v3879 = vlaneseq
    %v3880 = vshrl.u32 %v3879, 7
    %v3881 = vsub.s32 5, %v3880
    %v3882 = vrot.slane %v2018, %v3881
    %3884 = vbcast.lane.b32.xlu0 %v3882, 256
    %v3885 = vpop.permute.xlu0 %3884
    %s3887 = sor.u32 256, 8
    %3888 = vbcast.lane.b32.xlu0 %v3882, %s3887
    %v3889 = vpop.permute.xlu0 %3888
    %v3890 = vlaneseq
    %v3891 = vshrl.u32 %v3890, 7
    %v3892 = vsub.s32 6, %v3891
    %v3893 = vrot.slane %v2018, %v3892
    %3895 = vbcast.lane.b32.xlu0 %v3893, 256
    %v3896 = vpop.permute.xlu0 %3895
    %s3898 = sor.u32 256, 8
    %3899 = vbcast.lane.b32.xlu0 %v3893, %s3898
    %v3900 = vpop.permute.xlu0 %3899
    %v3901 = vlaneseq
    %v3902 = vshrl.u32 %v3901, 7
    %v3903 = vsub.s32 7, %v3902
    %v3904 = vrot.slane %v2018, %v3903
    %3906 = vbcast.lane.b32.xlu0 %v3904, 256
    %v3907 = vpop.permute.xlu0 %3906
    %s3909 = sor.u32 256, 8
    %3910 = vbcast.lane.b32.xlu0 %v3904, %s3909
    %v3911 = vpop.permute.xlu0 %3910
    %v3912 = vlaneseq
    %v3913 = vshrl.u32 %v3912, 7
    %v3914 = vsub.s32 0, %v3913
    %v3915 = vrot.slane %v2019, %v3914
    %3917 = vbcast.lane.b32.xlu0 %v3915, 256
    %v3918 = vpop.permute.xlu0 %3917
    %s3920 = sor.u32 256, 8
    %3921 = vbcast.lane.b32.xlu0 %v3915, %s3920
    %v3922 = vpop.permute.xlu0 %3921
    %v3923 = vlaneseq
    %v3924 = vshrl.u32 %v3923, 7
    %v3925 = vsub.s32 1, %v3924
    %v3926 = vrot.slane %v2019, %v3925
    %3928 = vbcast.lane.b32.xlu0 %v3926, 256
    %v3929 = vpop.permute.xlu0 %3928
    %s3931 = sor.u32 256, 8
    %3932 = vbcast.lane.b32.xlu0 %v3926, %s3931
    %v3933 = vpop.permute.xlu0 %3932
    %v3934 = vlaneseq
    %v3935 = vshrl.u32 %v3934, 7
    %v3936 = vsub.s32 2, %v3935
    %v3937 = vrot.slane %v2019, %v3936
    %3939 = vbcast.lane.b32.xlu0 %v3937, 256
    %v3940 = vpop.permute.xlu0 %3939
    %s3942 = sor.u32 256, 8
    %3943 = vbcast.lane.b32.xlu0 %v3937, %s3942
    %v3944 = vpop.permute.xlu0 %3943
    %v3945 = vlaneseq
    %v3946 = vshrl.u32 %v3945, 7
    %v3947 = vsub.s32 3, %v3946
    %v3948 = vrot.slane %v2019, %v3947
    %3950 = vbcast.lane.b32.xlu0 %v3948, 256
    %v3951 = vpop.permute.xlu0 %3950
    %s3953 = sor.u32 256, 8
    %3954 = vbcast.lane.b32.xlu0 %v3948, %s3953
    %v3955 = vpop.permute.xlu0 %3954
    %v3956 = vlaneseq
    %v3957 = vshrl.u32 %v3956, 7
    %v3958 = vsub.s32 4, %v3957
    %v3959 = vrot.slane %v2019, %v3958
    %3961 = vbcast.lane.b32.xlu0 %v3959, 256
    %v3962 = vpop.permute.xlu0 %3961
    %s3964 = sor.u32 256, 8
    %3965 = vbcast.lane.b32.xlu0 %v3959, %s3964
    %v3966 = vpop.permute.xlu0 %3965
    %v3967 = vlaneseq
    %v3968 = vshrl.u32 %v3967, 7
    %v3969 = vsub.s32 5, %v3968
    %v3970 = vrot.slane %v2019, %v3969
    %3972 = vbcast.lane.b32.xlu0 %v3970, 256
    %v3973 = vpop.permute.xlu0 %3972
    %s3975 = sor.u32 256, 8
    %3976 = vbcast.lane.b32.xlu0 %v3970, %s3975
    %v3977 = vpop.permute.xlu0 %3976
    %v3978 = vlaneseq
    %v3979 = vshrl.u32 %v3978, 7
    %v3980 = vsub.s32 6, %v3979
    %v3981 = vrot.slane %v2019, %v3980
    %3983 = vbcast.lane.b32.xlu0 %v3981, 256
    %v3984 = vpop.permute.xlu0 %3983
    %s3986 = sor.u32 256, 8
    %3987 = vbcast.lane.b32.xlu0 %v3981, %s3986
    %v3988 = vpop.permute.xlu0 %3987
    %v3989 = vlaneseq
    %v3990 = vshrl.u32 %v3989, 7
    %v3991 = vsub.s32 7, %v3990
    %v3992 = vrot.slane %v2019, %v3991
    %3994 = vbcast.lane.b32.xlu0 %v3992, 256
    %v3995 = vpop.permute.xlu0 %3994
    %s3997 = sor.u32 256, 8
    %3998 = vbcast.lane.b32.xlu0 %v3992, %s3997
    %v3999 = vpop.permute.xlu0 %3998
    %v4000 = vlaneseq
    %v4001 = vshrl.u32 %v4000, 7
    %v4002 = vsub.s32 0, %v4001
    %v4003 = vrot.slane %v2020, %v4002
    %4005 = vbcast.lane.b32.xlu0 %v4003, 256
    %v4006 = vpop.permute.xlu0 %4005
    %s4008 = sor.u32 256, 8
    %4009 = vbcast.lane.b32.xlu0 %v4003, %s4008
    %v4010 = vpop.permute.xlu0 %4009
    %v4011 = vlaneseq
    %v4012 = vshrl.u32 %v4011, 7
    %v4013 = vsub.s32 1, %v4012
    %v4014 = vrot.slane %v2020, %v4013
    %4016 = vbcast.lane.b32.xlu0 %v4014, 256
    %v4017 = vpop.permute.xlu0 %4016
    %s4019 = sor.u32 256, 8
    %4020 = vbcast.lane.b32.xlu0 %v4014, %s4019
    %v4021 = vpop.permute.xlu0 %4020
    %v4022 = vlaneseq
    %v4023 = vshrl.u32 %v4022, 7
    %v4024 = vsub.s32 2, %v4023
    %v4025 = vrot.slane %v2020, %v4024
    %4027 = vbcast.lane.b32.xlu0 %v4025, 256
    %v4028 = vpop.permute.xlu0 %4027
    %s4030 = sor.u32 256, 8
    %4031 = vbcast.lane.b32.xlu0 %v4025, %s4030
    %v4032 = vpop.permute.xlu0 %4031
    %v4033 = vlaneseq
    %v4034 = vshrl.u32 %v4033, 7
    %v4035 = vsub.s32 3, %v4034
    %v4036 = vrot.slane %v2020, %v4035
    %4038 = vbcast.lane.b32.xlu0 %v4036, 256
    %v4039 = vpop.permute.xlu0 %4038
    %s4041 = sor.u32 256, 8
    %4042 = vbcast.lane.b32.xlu0 %v4036, %s4041
    %v4043 = vpop.permute.xlu0 %4042
    %v4044 = vlaneseq
    %v4045 = vshrl.u32 %v4044, 7
    %v4046 = vsub.s32 4, %v4045
    %v4047 = vrot.slane %v2020, %v4046
    %4049 = vbcast.lane.b32.xlu0 %v4047, 256
    %v4050 = vpop.permute.xlu0 %4049
    %s4052 = sor.u32 256, 8
    %4053 = vbcast.lane.b32.xlu0 %v4047, %s4052
    %v4054 = vpop.permute.xlu0 %4053
    %v4055 = vlaneseq
    %v4056 = vshrl.u32 %v4055, 7
    %v4057 = vsub.s32 5, %v4056
    %v4058 = vrot.slane %v2020, %v4057
    %4060 = vbcast.lane.b32.xlu0 %v4058, 256
    %v4061 = vpop.permute.xlu0 %4060
    %s4063 = sor.u32 256, 8
    %4064 = vbcast.lane.b32.xlu0 %v4058, %s4063
    %v4065 = vpop.permute.xlu0 %4064
    %v4066 = vlaneseq
    %v4067 = vshrl.u32 %v4066, 7
    %v4068 = vsub.s32 6, %v4067
    %v4069 = vrot.slane %v2020, %v4068
    %4071 = vbcast.lane.b32.xlu0 %v4069, 256
    %v4072 = vpop.permute.xlu0 %4071
    %s4074 = sor.u32 256, 8
    %4075 = vbcast.lane.b32.xlu0 %v4069, %s4074
    %v4076 = vpop.permute.xlu0 %4075
    %v4077 = vlaneseq
    %v4078 = vshrl.u32 %v4077, 7
    %v4079 = vsub.s32 7, %v4078
    %v4080 = vrot.slane %v2020, %v4079
    %4082 = vbcast.lane.b32.xlu0 %v4080, 256
    %v4083 = vpop.permute.xlu0 %4082
    %s4085 = sor.u32 256, 8
    %4086 = vbcast.lane.b32.xlu0 %v4080, %s4085
    %v4087 = vpop.permute.xlu0 %4086
    %v4088 = vlaneseq
    %v4089 = vshrl.u32 %v4088, 7
    %v4090 = vsub.s32 0, %v4089
    %v4091 = vrot.slane %v2021, %v4090
    %4093 = vbcast.lane.b32.xlu0 %v4091, 256
    %v4094 = vpop.permute.xlu0 %4093
    %s4096 = sor.u32 256, 8
    %4097 = vbcast.lane.b32.xlu0 %v4091, %s4096
    %v4098 = vpop.permute.xlu0 %4097
    %v4099 = vlaneseq
    %v4100 = vshrl.u32 %v4099, 7
    %v4101 = vsub.s32 1, %v4100
    %v4102 = vrot.slane %v2021, %v4101
    %4104 = vbcast.lane.b32.xlu0 %v4102, 256
    %v4105 = vpop.permute.xlu0 %4104
    %s4107 = sor.u32 256, 8
    %4108 = vbcast.lane.b32.xlu0 %v4102, %s4107
    %v4109 = vpop.permute.xlu0 %4108
    %v4110 = vlaneseq
    %v4111 = vshrl.u32 %v4110, 7
    %v4112 = vsub.s32 2, %v4111
    %v4113 = vrot.slane %v2021, %v4112
    %4115 = vbcast.lane.b32.xlu0 %v4113, 256
    %v4116 = vpop.permute.xlu0 %4115
    %s4118 = sor.u32 256, 8
    %4119 = vbcast.lane.b32.xlu0 %v4113, %s4118
    %v4120 = vpop.permute.xlu0 %4119
    %v4121 = vlaneseq
    %v4122 = vshrl.u32 %v4121, 7
    %v4123 = vsub.s32 3, %v4122
    %v4124 = vrot.slane %v2021, %v4123
    %4126 = vbcast.lane.b32.xlu0 %v4124, 256
    %v4127 = vpop.permute.xlu0 %4126
    %s4129 = sor.u32 256, 8
    %4130 = vbcast.lane.b32.xlu0 %v4124, %s4129
    %v4131 = vpop.permute.xlu0 %4130
    %v4132 = vlaneseq
    %v4133 = vshrl.u32 %v4132, 7
    %v4134 = vsub.s32 4, %v4133
    %v4135 = vrot.slane %v2021, %v4134
    %4137 = vbcast.lane.b32.xlu0 %v4135, 256
    %v4138 = vpop.permute.xlu0 %4137
    %s4140 = sor.u32 256, 8
    %4141 = vbcast.lane.b32.xlu0 %v4135, %s4140
    %v4142 = vpop.permute.xlu0 %4141
    %v4143 = vlaneseq
    %v4144 = vshrl.u32 %v4143, 7
    %v4145 = vsub.s32 5, %v4144
    %v4146 = vrot.slane %v2021, %v4145
    %4148 = vbcast.lane.b32.xlu0 %v4146, 256
    %v4149 = vpop.permute.xlu0 %4148
    %s4151 = sor.u32 256, 8
    %4152 = vbcast.lane.b32.xlu0 %v4146, %s4151
    %v4153 = vpop.permute.xlu0 %4152
    %v4154 = vlaneseq
    %v4155 = vshrl.u32 %v4154, 7
    %v4156 = vsub.s32 6, %v4155
    %v4157 = vrot.slane %v2021, %v4156
    %4159 = vbcast.lane.b32.xlu0 %v4157, 256
    %v4160 = vpop.permute.xlu0 %4159
    %s4162 = sor.u32 256, 8
    %4163 = vbcast.lane.b32.xlu0 %v4157, %s4162
    %v4164 = vpop.permute.xlu0 %4163
    %v4165 = vlaneseq
    %v4166 = vshrl.u32 %v4165, 7
    %v4167 = vsub.s32 7, %v4166
    %v4168 = vrot.slane %v2021, %v4167
    %4170 = vbcast.lane.b32.xlu0 %v4168, 256
    %v4171 = vpop.permute.xlu0 %4170
    %s4173 = sor.u32 256, 8
    %4174 = vbcast.lane.b32.xlu0 %v4168, %s4173
    %v4175 = vpop.permute.xlu0 %4174
    %v4176 = vlaneseq
    %v4177 = vshrl.u32 %v4176, 7
    %v4178 = vsub.s32 0, %v4177
    %v4179 = vrot.slane %v2022, %v4178
    %4181 = vbcast.lane.b32.xlu0 %v4179, 256
    %v4182 = vpop.permute.xlu0 %4181
    %s4184 = sor.u32 256, 8
    %4185 = vbcast.lane.b32.xlu0 %v4179, %s4184
    %v4186 = vpop.permute.xlu0 %4185
    %v4187 = vlaneseq
    %v4188 = vshrl.u32 %v4187, 7
    %v4189 = vsub.s32 1, %v4188
    %v4190 = vrot.slane %v2022, %v4189
    %4192 = vbcast.lane.b32.xlu0 %v4190, 256
    %v4193 = vpop.permute.xlu0 %4192
    %s4195 = sor.u32 256, 8
    %4196 = vbcast.lane.b32.xlu0 %v4190, %s4195
    %v4197 = vpop.permute.xlu0 %4196
    %v4198 = vlaneseq
    %v4199 = vshrl.u32 %v4198, 7
    %v4200 = vsub.s32 2, %v4199
    %v4201 = vrot.slane %v2022, %v4200
    %4203 = vbcast.lane.b32.xlu0 %v4201, 256
    %v4204 = vpop.permute.xlu0 %4203
    %s4206 = sor.u32 256, 8
    %4207 = vbcast.lane.b32.xlu0 %v4201, %s4206
    %v4208 = vpop.permute.xlu0 %4207
    %v4209 = vlaneseq
    %v4210 = vshrl.u32 %v4209, 7
    %v4211 = vsub.s32 3, %v4210
    %v4212 = vrot.slane %v2022, %v4211
    %4214 = vbcast.lane.b32.xlu0 %v4212, 256
    %v4215 = vpop.permute.xlu0 %4214
    %s4217 = sor.u32 256, 8
    %4218 = vbcast.lane.b32.xlu0 %v4212, %s4217
    %v4219 = vpop.permute.xlu0 %4218
    %v4220 = vlaneseq
    %v4221 = vshrl.u32 %v4220, 7
    %v4222 = vsub.s32 4, %v4221
    %v4223 = vrot.slane %v2022, %v4222
    %4225 = vbcast.lane.b32.xlu0 %v4223, 256
    %v4226 = vpop.permute.xlu0 %4225
    %s4228 = sor.u32 256, 8
    %4229 = vbcast.lane.b32.xlu0 %v4223, %s4228
    %v4230 = vpop.permute.xlu0 %4229
    %v4231 = vlaneseq
    %v4232 = vshrl.u32 %v4231, 7
    %v4233 = vsub.s32 5, %v4232
    %v4234 = vrot.slane %v2022, %v4233
    %4236 = vbcast.lane.b32.xlu0 %v4234, 256
    %v4237 = vpop.permute.xlu0 %4236
    %s4239 = sor.u32 256, 8
    %4240 = vbcast.lane.b32.xlu0 %v4234, %s4239
    %v4241 = vpop.permute.xlu0 %4240
    %v4242 = vlaneseq
    %v4243 = vshrl.u32 %v4242, 7
    %v4244 = vsub.s32 6, %v4243
    %v4245 = vrot.slane %v2022, %v4244
    %4247 = vbcast.lane.b32.xlu0 %v4245, 256
    %v4248 = vpop.permute.xlu0 %4247
    %s4250 = sor.u32 256, 8
    %4251 = vbcast.lane.b32.xlu0 %v4245, %s4250
    %v4252 = vpop.permute.xlu0 %4251
    %v4253 = vlaneseq
    %v4254 = vshrl.u32 %v4253, 7
    %v4255 = vsub.s32 7, %v4254
    %v4256 = vrot.slane %v2022, %v4255
    %4258 = vbcast.lane.b32.xlu0 %v4256, 256
    %v4259 = vpop.permute.xlu0 %4258
    %s4261 = sor.u32 256, 8
    %4262 = vbcast.lane.b32.xlu0 %v4256, %s4261
    %v4263 = vpop.permute.xlu0 %4262
    %v4264 = vlaneseq
    %v4265 = vshrl.u32 %v4264, 7
    %v4266 = vsub.s32 0, %v4265
    %v4267 = vrot.slane %v2023, %v4266
    %4269 = vbcast.lane.b32.xlu0 %v4267, 256
    %v4270 = vpop.permute.xlu0 %4269
    %s4272 = sor.u32 256, 8
    %4273 = vbcast.lane.b32.xlu0 %v4267, %s4272
    %v4274 = vpop.permute.xlu0 %4273
    %v4275 = vlaneseq
    %v4276 = vshrl.u32 %v4275, 7
    %v4277 = vsub.s32 1, %v4276
    %v4278 = vrot.slane %v2023, %v4277
    %4280 = vbcast.lane.b32.xlu0 %v4278, 256
    %v4281 = vpop.permute.xlu0 %4280
    %s4283 = sor.u32 256, 8
    %4284 = vbcast.lane.b32.xlu0 %v4278, %s4283
    %v4285 = vpop.permute.xlu0 %4284
    %v4286 = vlaneseq
    %v4287 = vshrl.u32 %v4286, 7
    %v4288 = vsub.s32 2, %v4287
    %v4289 = vrot.slane %v2023, %v4288
    %4291 = vbcast.lane.b32.xlu0 %v4289, 256
    %v4292 = vpop.permute.xlu0 %4291
    %s4294 = sor.u32 256, 8
    %4295 = vbcast.lane.b32.xlu0 %v4289, %s4294
    %v4296 = vpop.permute.xlu0 %4295
    %v4297 = vlaneseq
    %v4298 = vshrl.u32 %v4297, 7
    %v4299 = vsub.s32 3, %v4298
    %v4300 = vrot.slane %v2023, %v4299
    %4302 = vbcast.lane.b32.xlu0 %v4300, 256
    %v4303 = vpop.permute.xlu0 %4302
    %s4305 = sor.u32 256, 8
    %4306 = vbcast.lane.b32.xlu0 %v4300, %s4305
    %v4307 = vpop.permute.xlu0 %4306
    %v4308 = vlaneseq
    %v4309 = vshrl.u32 %v4308, 7
    %v4310 = vsub.s32 4, %v4309
    %v4311 = vrot.slane %v2023, %v4310
    %4313 = vbcast.lane.b32.xlu0 %v4311, 256
    %v4314 = vpop.permute.xlu0 %4313
    %s4316 = sor.u32 256, 8
    %4317 = vbcast.lane.b32.xlu0 %v4311, %s4316
    %v4318 = vpop.permute.xlu0 %4317
    %v4319 = vlaneseq
    %v4320 = vshrl.u32 %v4319, 7
    %v4321 = vsub.s32 5, %v4320
    %v4322 = vrot.slane %v2023, %v4321
    %4324 = vbcast.lane.b32.xlu0 %v4322, 256
    %v4325 = vpop.permute.xlu0 %4324
    %s4327 = sor.u32 256, 8
    %4328 = vbcast.lane.b32.xlu0 %v4322, %s4327
    %v4329 = vpop.permute.xlu0 %4328
    %v4330 = vlaneseq
    %v4331 = vshrl.u32 %v4330, 7
    %v4332 = vsub.s32 6, %v4331
    %v4333 = vrot.slane %v2023, %v4332
    %4335 = vbcast.lane.b32.xlu0 %v4333, 256
    %v4336 = vpop.permute.xlu0 %4335
    %s4338 = sor.u32 256, 8
    %4339 = vbcast.lane.b32.xlu0 %v4333, %s4338
    %v4340 = vpop.permute.xlu0 %4339
    %v4341 = vlaneseq
    %v4342 = vshrl.u32 %v4341, 7
    %v4343 = vsub.s32 7, %v4342
    %v4344 = vrot.slane %v2023, %v4343
    %4346 = vbcast.lane.b32.xlu0 %v4344, 256
    %v4347 = vpop.permute.xlu0 %4346
    %s4349 = sor.u32 256, 8
    %4350 = vbcast.lane.b32.xlu0 %v4344, %s4349
    %v4351 = vpop.permute.xlu0 %4350
    %v4352 = vlaneseq
    %v4353 = vshrl.u32 %v4352, 7
    %v4354 = vsub.s32 0, %v4353
    %v4355 = vrot.slane %v2024, %v4354
    %4357 = vbcast.lane.b32.xlu0 %v4355, 256
    %v4358 = vpop.permute.xlu0 %4357
    %s4360 = sor.u32 256, 8
    %4361 = vbcast.lane.b32.xlu0 %v4355, %s4360
    %v4362 = vpop.permute.xlu0 %4361
    %v4363 = vlaneseq
    %v4364 = vshrl.u32 %v4363, 7
    %v4365 = vsub.s32 1, %v4364
    %v4366 = vrot.slane %v2024, %v4365
    %4368 = vbcast.lane.b32.xlu0 %v4366, 256
    %v4369 = vpop.permute.xlu0 %4368
    %s4371 = sor.u32 256, 8
    %4372 = vbcast.lane.b32.xlu0 %v4366, %s4371
    %v4373 = vpop.permute.xlu0 %4372
    %v4374 = vlaneseq
    %v4375 = vshrl.u32 %v4374, 7
    %v4376 = vsub.s32 2, %v4375
    %v4377 = vrot.slane %v2024, %v4376
    %4379 = vbcast.lane.b32.xlu0 %v4377, 256
    %v4380 = vpop.permute.xlu0 %4379
    %s4382 = sor.u32 256, 8
    %4383 = vbcast.lane.b32.xlu0 %v4377, %s4382
    %v4384 = vpop.permute.xlu0 %4383
    %v4385 = vlaneseq
    %v4386 = vshrl.u32 %v4385, 7
    %v4387 = vsub.s32 3, %v4386
    %v4388 = vrot.slane %v2024, %v4387
    %4390 = vbcast.lane.b32.xlu0 %v4388, 256
    %v4391 = vpop.permute.xlu0 %4390
    %s4393 = sor.u32 256, 8
    %4394 = vbcast.lane.b32.xlu0 %v4388, %s4393
    %v4395 = vpop.permute.xlu0 %4394
    %v4396 = vlaneseq
    %v4397 = vshrl.u32 %v4396, 7
    %v4398 = vsub.s32 4, %v4397
    %v4399 = vrot.slane %v2024, %v4398
    %4401 = vbcast.lane.b32.xlu0 %v4399, 256
    %v4402 = vpop.permute.xlu0 %4401
    %s4404 = sor.u32 256, 8
    %4405 = vbcast.lane.b32.xlu0 %v4399, %s4404
    %v4406 = vpop.permute.xlu0 %4405
    %v4407 = vlaneseq
    %v4408 = vshrl.u32 %v4407, 7
    %v4409 = vsub.s32 5, %v4408
    %v4410 = vrot.slane %v2024, %v4409
    %4412 = vbcast.lane.b32.xlu0 %v4410, 256
    %v4413 = vpop.permute.xlu0 %4412
    %s4415 = sor.u32 256, 8
    %4416 = vbcast.lane.b32.xlu0 %v4410, %s4415
    %v4417 = vpop.permute.xlu0 %4416
    %v4418 = vlaneseq
    %v4419 = vshrl.u32 %v4418, 7
    %v4420 = vsub.s32 6, %v4419
    %v4421 = vrot.slane %v2024, %v4420
    %4423 = vbcast.lane.b32.xlu0 %v4421, 256
    %v4424 = vpop.permute.xlu0 %4423
    %s4426 = sor.u32 256, 8
    %4427 = vbcast.lane.b32.xlu0 %v4421, %s4426
    %v4428 = vpop.permute.xlu0 %4427
    %v4429 = vlaneseq
    %v4430 = vshrl.u32 %v4429, 7
    %v4431 = vsub.s32 7, %v4430
    %v4432 = vrot.slane %v2024, %v4431
    %4434 = vbcast.lane.b32.xlu0 %v4432, 256
    %v4435 = vpop.permute.xlu0 %4434
    %s4437 = sor.u32 256, 8
    %4438 = vbcast.lane.b32.xlu0 %v4432, %s4437
    %v4439 = vpop.permute.xlu0 %4438
    %v4440 = vlaneseq
    %v4441 = vshrl.u32 %v4440, 7
    %v4442 = vsub.s32 0, %v4441
    %v4443 = vrot.slane %v2025, %v4442
    %4445 = vbcast.lane.b32.xlu0 %v4443, 256
    %v4446 = vpop.permute.xlu0 %4445
    %s4448 = sor.u32 256, 8
    %4449 = vbcast.lane.b32.xlu0 %v4443, %s4448
    %v4450 = vpop.permute.xlu0 %4449
    %v4451 = vlaneseq
    %v4452 = vshrl.u32 %v4451, 7
    %v4453 = vsub.s32 1, %v4452
    %v4454 = vrot.slane %v2025, %v4453
    %4456 = vbcast.lane.b32.xlu0 %v4454, 256
    %v4457 = vpop.permute.xlu0 %4456
    %s4459 = sor.u32 256, 8
    %4460 = vbcast.lane.b32.xlu0 %v4454, %s4459
    %v4461 = vpop.permute.xlu0 %4460
    %v4462 = vlaneseq
    %v4463 = vshrl.u32 %v4462, 7
    %v4464 = vsub.s32 2, %v4463
    %v4465 = vrot.slane %v2025, %v4464
    %4467 = vbcast.lane.b32.xlu0 %v4465, 256
    %v4468 = vpop.permute.xlu0 %4467
    %s4470 = sor.u32 256, 8
    %4471 = vbcast.lane.b32.xlu0 %v4465, %s4470
    %v4472 = vpop.permute.xlu0 %4471
    %v4473 = vlaneseq
    %v4474 = vshrl.u32 %v4473, 7
    %v4475 = vsub.s32 3, %v4474
    %v4476 = vrot.slane %v2025, %v4475
    %4478 = vbcast.lane.b32.xlu0 %v4476, 256
    %v4479 = vpop.permute.xlu0 %4478
    %s4481 = sor.u32 256, 8
    %4482 = vbcast.lane.b32.xlu0 %v4476, %s4481
    %v4483 = vpop.permute.xlu0 %4482
    %v4484 = vlaneseq
    %v4485 = vshrl.u32 %v4484, 7
    %v4486 = vsub.s32 4, %v4485
    %v4487 = vrot.slane %v2025, %v4486
    %4489 = vbcast.lane.b32.xlu0 %v4487, 256
    %v4490 = vpop.permute.xlu0 %4489
    %s4492 = sor.u32 256, 8
    %4493 = vbcast.lane.b32.xlu0 %v4487, %s4492
    %v4494 = vpop.permute.xlu0 %4493
    %v4495 = vlaneseq
    %v4496 = vshrl.u32 %v4495, 7
    %v4497 = vsub.s32 5, %v4496
    %v4498 = vrot.slane %v2025, %v4497
    %4500 = vbcast.lane.b32.xlu0 %v4498, 256
    %v4501 = vpop.permute.xlu0 %4500
    %s4503 = sor.u32 256, 8
    %4504 = vbcast.lane.b32.xlu0 %v4498, %s4503
    %v4505 = vpop.permute.xlu0 %4504
    %v4506 = vlaneseq
    %v4507 = vshrl.u32 %v4506, 7
    %v4508 = vsub.s32 6, %v4507
    %v4509 = vrot.slane %v2025, %v4508
    %4511 = vbcast.lane.b32.xlu0 %v4509, 256
    %v4512 = vpop.permute.xlu0 %4511
    %s4514 = sor.u32 256, 8
    %4515 = vbcast.lane.b32.xlu0 %v4509, %s4514
    %v4516 = vpop.permute.xlu0 %4515
    %v4517 = vlaneseq
    %v4518 = vshrl.u32 %v4517, 7
    %v4519 = vsub.s32 7, %v4518
    %v4520 = vrot.slane %v2025, %v4519
    %4522 = vbcast.lane.b32.xlu0 %v4520, 256
    %v4523 = vpop.permute.xlu0 %4522
    %s4525 = sor.u32 256, 8
    %4526 = vbcast.lane.b32.xlu0 %v4520, %s4525
    %v4527 = vpop.permute.xlu0 %4526
    %v4528 = vlaneseq
    %v4529 = vshrl.u32 %v4528, 7
    %v4530 = vsub.s32 0, %v4529
    %v4531 = vrot.slane %v2026, %v4530
    %4533 = vbcast.lane.b32.xlu0 %v4531, 256
    %v4534 = vpop.permute.xlu0 %4533
    %s4536 = sor.u32 256, 8
    %4537 = vbcast.lane.b32.xlu0 %v4531, %s4536
    %v4538 = vpop.permute.xlu0 %4537
    %v4539 = vlaneseq
    %v4540 = vshrl.u32 %v4539, 7
    %v4541 = vsub.s32 1, %v4540
    %v4542 = vrot.slane %v2026, %v4541
    %4544 = vbcast.lane.b32.xlu0 %v4542, 256
    %v4545 = vpop.permute.xlu0 %4544
    %s4547 = sor.u32 256, 8
    %4548 = vbcast.lane.b32.xlu0 %v4542, %s4547
    %v4549 = vpop.permute.xlu0 %4548
    %v4550 = vlaneseq
    %v4551 = vshrl.u32 %v4550, 7
    %v4552 = vsub.s32 2, %v4551
    %v4553 = vrot.slane %v2026, %v4552
    %4555 = vbcast.lane.b32.xlu0 %v4553, 256
    %v4556 = vpop.permute.xlu0 %4555
    %s4558 = sor.u32 256, 8
    %4559 = vbcast.lane.b32.xlu0 %v4553, %s4558
    %v4560 = vpop.permute.xlu0 %4559
    %v4561 = vlaneseq
    %v4562 = vshrl.u32 %v4561, 7
    %v4563 = vsub.s32 3, %v4562
    %v4564 = vrot.slane %v2026, %v4563
    %4566 = vbcast.lane.b32.xlu0 %v4564, 256
    %v4567 = vpop.permute.xlu0 %4566
    %s4569 = sor.u32 256, 8
    %4570 = vbcast.lane.b32.xlu0 %v4564, %s4569
    %v4571 = vpop.permute.xlu0 %4570
    %v4572 = vlaneseq
    %v4573 = vshrl.u32 %v4572, 7
    %v4574 = vsub.s32 4, %v4573
    %v4575 = vrot.slane %v2026, %v4574
    %4577 = vbcast.lane.b32.xlu0 %v4575, 256
    %v4578 = vpop.permute.xlu0 %4577
    %s4580 = sor.u32 256, 8
    %4581 = vbcast.lane.b32.xlu0 %v4575, %s4580
    %v4582 = vpop.permute.xlu0 %4581
    %v4583 = vlaneseq
    %v4584 = vshrl.u32 %v4583, 7
    %v4585 = vsub.s32 5, %v4584
    %v4586 = vrot.slane %v2026, %v4585
    %4588 = vbcast.lane.b32.xlu0 %v4586, 256
    %v4589 = vpop.permute.xlu0 %4588
    %s4591 = sor.u32 256, 8
    %4592 = vbcast.lane.b32.xlu0 %v4586, %s4591
    %v4593 = vpop.permute.xlu0 %4592
    %v4594 = vlaneseq
    %v4595 = vshrl.u32 %v4594, 7
    %v4596 = vsub.s32 6, %v4595
    %v4597 = vrot.slane %v2026, %v4596
    %4599 = vbcast.lane.b32.xlu0 %v4597, 256
    %v4600 = vpop.permute.xlu0 %4599
    %s4602 = sor.u32 256, 8
    %4603 = vbcast.lane.b32.xlu0 %v4597, %s4602
    %v4604 = vpop.permute.xlu0 %4603
    %v4605 = vlaneseq
    %v4606 = vshrl.u32 %v4605, 7
    %v4607 = vsub.s32 7, %v4606
    %v4608 = vrot.slane %v2026, %v4607
    %4610 = vbcast.lane.b32.xlu0 %v4608, 256
    %v4611 = vpop.permute.xlu0 %4610
    %s4613 = sor.u32 256, 8
    %4614 = vbcast.lane.b32.xlu0 %v4608, %s4613
    %v4615 = vpop.permute.xlu0 %4614
    %v4616 = vlaneseq
    %v4617 = vshrl.u32 %v4616, 7
    %v4618 = vsub.s32 0, %v4617
    %v4619 = vrot.slane %v2027, %v4618
    %4621 = vbcast.lane.b32.xlu0 %v4619, 256
    %v4622 = vpop.permute.xlu0 %4621
    %s4624 = sor.u32 256, 8
    %4625 = vbcast.lane.b32.xlu0 %v4619, %s4624
    %v4626 = vpop.permute.xlu0 %4625
    %v4627 = vlaneseq
    %v4628 = vshrl.u32 %v4627, 7
    %v4629 = vsub.s32 1, %v4628
    %v4630 = vrot.slane %v2027, %v4629
    %4632 = vbcast.lane.b32.xlu0 %v4630, 256
    %v4633 = vpop.permute.xlu0 %4632
    %s4635 = sor.u32 256, 8
    %4636 = vbcast.lane.b32.xlu0 %v4630, %s4635
    %v4637 = vpop.permute.xlu0 %4636
    %v4638 = vlaneseq
    %v4639 = vshrl.u32 %v4638, 7
    %v4640 = vsub.s32 2, %v4639
    %v4641 = vrot.slane %v2027, %v4640
    %4643 = vbcast.lane.b32.xlu0 %v4641, 256
    %v4644 = vpop.permute.xlu0 %4643
    %s4646 = sor.u32 256, 8
    %4647 = vbcast.lane.b32.xlu0 %v4641, %s4646
    %v4648 = vpop.permute.xlu0 %4647
    %v4649 = vlaneseq
    %v4650 = vshrl.u32 %v4649, 7
    %v4651 = vsub.s32 3, %v4650
    %v4652 = vrot.slane %v2027, %v4651
    %4654 = vbcast.lane.b32.xlu0 %v4652, 256
    %v4655 = vpop.permute.xlu0 %4654
    %s4657 = sor.u32 256, 8
    %4658 = vbcast.lane.b32.xlu0 %v4652, %s4657
    %v4659 = vpop.permute.xlu0 %4658
    %v4660 = vlaneseq
    %v4661 = vshrl.u32 %v4660, 7
    %v4662 = vsub.s32 4, %v4661
    %v4663 = vrot.slane %v2027, %v4662
    %4665 = vbcast.lane.b32.xlu0 %v4663, 256
    %v4666 = vpop.permute.xlu0 %4665
    %s4668 = sor.u32 256, 8
    %4669 = vbcast.lane.b32.xlu0 %v4663, %s4668
    %v4670 = vpop.permute.xlu0 %4669
    %v4671 = vlaneseq
    %v4672 = vshrl.u32 %v4671, 7
    %v4673 = vsub.s32 5, %v4672
    %v4674 = vrot.slane %v2027, %v4673
    %4676 = vbcast.lane.b32.xlu0 %v4674, 256
    %v4677 = vpop.permute.xlu0 %4676
    %s4679 = sor.u32 256, 8
    %4680 = vbcast.lane.b32.xlu0 %v4674, %s4679
    %v4681 = vpop.permute.xlu0 %4680
    %v4682 = vlaneseq
    %v4683 = vshrl.u32 %v4682, 7
    %v4684 = vsub.s32 6, %v4683
    %v4685 = vrot.slane %v2027, %v4684
    %4687 = vbcast.lane.b32.xlu0 %v4685, 256
    %v4688 = vpop.permute.xlu0 %4687
    %s4690 = sor.u32 256, 8
    %4691 = vbcast.lane.b32.xlu0 %v4685, %s4690
    %v4692 = vpop.permute.xlu0 %4691
    %v4693 = vlaneseq
    %v4694 = vshrl.u32 %v4693, 7
    %v4695 = vsub.s32 7, %v4694
    %v4696 = vrot.slane %v2027, %v4695
    %4698 = vbcast.lane.b32.xlu0 %v4696, 256
    %v4699 = vpop.permute.xlu0 %4698
    %s4701 = sor.u32 256, 8
    %4702 = vbcast.lane.b32.xlu0 %v4696, %s4701
    %v4703 = vpop.permute.xlu0 %4702
    %v4704 = vlaneseq
    %v4705 = vshrl.u32 %v4704, 7
    %v4706 = vsub.s32 0, %v4705
    %v4707 = vrot.slane %v2028, %v4706
    %4709 = vbcast.lane.b32.xlu0 %v4707, 256
    %v4710 = vpop.permute.xlu0 %4709
    %s4712 = sor.u32 256, 8
    %4713 = vbcast.lane.b32.xlu0 %v4707, %s4712
    %v4714 = vpop.permute.xlu0 %4713
    %v4715 = vlaneseq
    %v4716 = vshrl.u32 %v4715, 7
    %v4717 = vsub.s32 1, %v4716
    %v4718 = vrot.slane %v2028, %v4717
    %4720 = vbcast.lane.b32.xlu0 %v4718, 256
    %v4721 = vpop.permute.xlu0 %4720
    %s4723 = sor.u32 256, 8
    %4724 = vbcast.lane.b32.xlu0 %v4718, %s4723
    %v4725 = vpop.permute.xlu0 %4724
    %v4726 = vlaneseq
    %v4727 = vshrl.u32 %v4726, 7
    %v4728 = vsub.s32 2, %v4727
    %v4729 = vrot.slane %v2028, %v4728
    %4731 = vbcast.lane.b32.xlu0 %v4729, 256
    %v4732 = vpop.permute.xlu0 %4731
    %s4734 = sor.u32 256, 8
    %4735 = vbcast.lane.b32.xlu0 %v4729, %s4734
    %v4736 = vpop.permute.xlu0 %4735
    %v4737 = vlaneseq
    %v4738 = vshrl.u32 %v4737, 7
    %v4739 = vsub.s32 3, %v4738
    %v4740 = vrot.slane %v2028, %v4739
    %4742 = vbcast.lane.b32.xlu0 %v4740, 256
    %v4743 = vpop.permute.xlu0 %4742
    %s4745 = sor.u32 256, 8
    %4746 = vbcast.lane.b32.xlu0 %v4740, %s4745
    %v4747 = vpop.permute.xlu0 %4746
    %v4748 = vlaneseq
    %v4749 = vshrl.u32 %v4748, 7
    %v4750 = vsub.s32 4, %v4749
    %v4751 = vrot.slane %v2028, %v4750
    %4753 = vbcast.lane.b32.xlu0 %v4751, 256
    %v4754 = vpop.permute.xlu0 %4753
    %s4756 = sor.u32 256, 8
    %4757 = vbcast.lane.b32.xlu0 %v4751, %s4756
    %v4758 = vpop.permute.xlu0 %4757
    %v4759 = vlaneseq
    %v4760 = vshrl.u32 %v4759, 7
    %v4761 = vsub.s32 5, %v4760
    %v4762 = vrot.slane %v2028, %v4761
    %4764 = vbcast.lane.b32.xlu0 %v4762, 256
    %v4765 = vpop.permute.xlu0 %4764
    %s4767 = sor.u32 256, 8
    %4768 = vbcast.lane.b32.xlu0 %v4762, %s4767
    %v4769 = vpop.permute.xlu0 %4768
    %v4770 = vlaneseq
    %v4771 = vshrl.u32 %v4770, 7
    %v4772 = vsub.s32 6, %v4771
    %v4773 = vrot.slane %v2028, %v4772
    %4775 = vbcast.lane.b32.xlu0 %v4773, 256
    %v4776 = vpop.permute.xlu0 %4775
    %s4778 = sor.u32 256, 8
    %4779 = vbcast.lane.b32.xlu0 %v4773, %s4778
    %v4780 = vpop.permute.xlu0 %4779
    %v4781 = vlaneseq
    %v4782 = vshrl.u32 %v4781, 7
    %v4783 = vsub.s32 7, %v4782
    %v4784 = vrot.slane %v2028, %v4783
    %4786 = vbcast.lane.b32.xlu0 %v4784, 256
    %v4787 = vpop.permute.xlu0 %4786
    %s4789 = sor.u32 256, 8
    %4790 = vbcast.lane.b32.xlu0 %v4784, %s4789
    %v4791 = vpop.permute.xlu0 %4790
    %v4792 = vlaneseq
    %v4793 = vshrl.u32 %v4792, 7
    %v4794 = vsub.s32 0, %v4793
    %v4795 = vrot.slane %v2029, %v4794
    %4797 = vbcast.lane.b32.xlu0 %v4795, 256
    %v4798 = vpop.permute.xlu0 %4797
    %s4800 = sor.u32 256, 8
    %4801 = vbcast.lane.b32.xlu0 %v4795, %s4800
    %v4802 = vpop.permute.xlu0 %4801
    %v4803 = vlaneseq
    %v4804 = vshrl.u32 %v4803, 7
    %v4805 = vsub.s32 1, %v4804
    %v4806 = vrot.slane %v2029, %v4805
    %4808 = vbcast.lane.b32.xlu0 %v4806, 256
    %v4809 = vpop.permute.xlu0 %4808
    %s4811 = sor.u32 256, 8
    %4812 = vbcast.lane.b32.xlu0 %v4806, %s4811
    %v4813 = vpop.permute.xlu0 %4812
    %v4814 = vlaneseq
    %v4815 = vshrl.u32 %v4814, 7
    %v4816 = vsub.s32 2, %v4815
    %v4817 = vrot.slane %v2029, %v4816
    %4819 = vbcast.lane.b32.xlu0 %v4817, 256
    %v4820 = vpop.permute.xlu0 %4819
    %s4822 = sor.u32 256, 8
    %4823 = vbcast.lane.b32.xlu0 %v4817, %s4822
    %v4824 = vpop.permute.xlu0 %4823
    %v4825 = vlaneseq
    %v4826 = vshrl.u32 %v4825, 7
    %v4827 = vsub.s32 3, %v4826
    %v4828 = vrot.slane %v2029, %v4827
    %4830 = vbcast.lane.b32.xlu0 %v4828, 256
    %v4831 = vpop.permute.xlu0 %4830
    %s4833 = sor.u32 256, 8
    %4834 = vbcast.lane.b32.xlu0 %v4828, %s4833
    %v4835 = vpop.permute.xlu0 %4834
    %v4836 = vlaneseq
    %v4837 = vshrl.u32 %v4836, 7
    %v4838 = vsub.s32 4, %v4837
    %v4839 = vrot.slane %v2029, %v4838
    %4841 = vbcast.lane.b32.xlu0 %v4839, 256
    %v4842 = vpop.permute.xlu0 %4841
    %s4844 = sor.u32 256, 8
    %4845 = vbcast.lane.b32.xlu0 %v4839, %s4844
    %v4846 = vpop.permute.xlu0 %4845
    %v4847 = vlaneseq
    %v4848 = vshrl.u32 %v4847, 7
    %v4849 = vsub.s32 5, %v4848
    %v4850 = vrot.slane %v2029, %v4849
    %4852 = vbcast.lane.b32.xlu0 %v4850, 256
    %v4853 = vpop.permute.xlu0 %4852
    %s4855 = sor.u32 256, 8
    %4856 = vbcast.lane.b32.xlu0 %v4850, %s4855
    %v4857 = vpop.permute.xlu0 %4856
    %v4858 = vlaneseq
    %v4859 = vshrl.u32 %v4858, 7
    %v4860 = vsub.s32 6, %v4859
    %v4861 = vrot.slane %v2029, %v4860
    %4863 = vbcast.lane.b32.xlu0 %v4861, 256
    %v4864 = vpop.permute.xlu0 %4863
    %s4866 = sor.u32 256, 8
    %4867 = vbcast.lane.b32.xlu0 %v4861, %s4866
    %v4868 = vpop.permute.xlu0 %4867
    %v4869 = vlaneseq
    %v4870 = vshrl.u32 %v4869, 7
    %v4871 = vsub.s32 7, %v4870
    %v4872 = vrot.slane %v2029, %v4871
    %4874 = vbcast.lane.b32.xlu0 %v4872, 256
    %v4875 = vpop.permute.xlu0 %4874
    %s4877 = sor.u32 256, 8
    %4878 = vbcast.lane.b32.xlu0 %v4872, %s4877
    %v4879 = vpop.permute.xlu0 %4878
    %v4880 = vlaneseq
    %v4881 = vshrl.u32 %v4880, 7
    %v4882 = vsub.s32 0, %v4881
    %v4883 = vrot.slane %v2030, %v4882
    %4885 = vbcast.lane.b32.xlu0 %v4883, 256
    %v4886 = vpop.permute.xlu0 %4885
    %s4888 = sor.u32 256, 8
    %4889 = vbcast.lane.b32.xlu0 %v4883, %s4888
    %v4890 = vpop.permute.xlu0 %4889
    %v4891 = vlaneseq
    %v4892 = vshrl.u32 %v4891, 7
    %v4893 = vsub.s32 1, %v4892
    %v4894 = vrot.slane %v2030, %v4893
    %4896 = vbcast.lane.b32.xlu0 %v4894, 256
    %v4897 = vpop.permute.xlu0 %4896
    %s4899 = sor.u32 256, 8
    %4900 = vbcast.lane.b32.xlu0 %v4894, %s4899
    %v4901 = vpop.permute.xlu0 %4900
    %v4902 = vlaneseq
    %v4903 = vshrl.u32 %v4902, 7
    %v4904 = vsub.s32 2, %v4903
    %v4905 = vrot.slane %v2030, %v4904
    %4907 = vbcast.lane.b32.xlu0 %v4905, 256
    %v4908 = vpop.permute.xlu0 %4907
    %s4910 = sor.u32 256, 8
    %4911 = vbcast.lane.b32.xlu0 %v4905, %s4910
    %v4912 = vpop.permute.xlu0 %4911
    %v4913 = vlaneseq
    %v4914 = vshrl.u32 %v4913, 7
    %v4915 = vsub.s32 3, %v4914
    %v4916 = vrot.slane %v2030, %v4915
    %4918 = vbcast.lane.b32.xlu0 %v4916, 256
    %v4919 = vpop.permute.xlu0 %4918
    %s4921 = sor.u32 256, 8
    %4922 = vbcast.lane.b32.xlu0 %v4916, %s4921
    %v4923 = vpop.permute.xlu0 %4922
    %v4924 = vlaneseq
    %v4925 = vshrl.u32 %v4924, 7
    %v4926 = vsub.s32 4, %v4925
    %v4927 = vrot.slane %v2030, %v4926
    %4929 = vbcast.lane.b32.xlu0 %v4927, 256
    %v4930 = vpop.permute.xlu0 %4929
    %s4932 = sor.u32 256, 8
    %4933 = vbcast.lane.b32.xlu0 %v4927, %s4932
    %v4934 = vpop.permute.xlu0 %4933
    %v4935 = vlaneseq
    %v4936 = vshrl.u32 %v4935, 7
    %v4937 = vsub.s32 5, %v4936
    %v4938 = vrot.slane %v2030, %v4937
    %4940 = vbcast.lane.b32.xlu0 %v4938, 256
    %v4941 = vpop.permute.xlu0 %4940
    %s4943 = sor.u32 256, 8
    %4944 = vbcast.lane.b32.xlu0 %v4938, %s4943
    %v4945 = vpop.permute.xlu0 %4944
    %v4946 = vlaneseq
    %v4947 = vshrl.u32 %v4946, 7
    %v4948 = vsub.s32 6, %v4947
    %v4949 = vrot.slane %v2030, %v4948
    %4951 = vbcast.lane.b32.xlu0 %v4949, 256
    %v4952 = vpop.permute.xlu0 %4951
    %s4954 = sor.u32 256, 8
    %4955 = vbcast.lane.b32.xlu0 %v4949, %s4954
    %v4956 = vpop.permute.xlu0 %4955
    %v4957 = vlaneseq
    %v4958 = vshrl.u32 %v4957, 7
    %v4959 = vsub.s32 7, %v4958
    %v4960 = vrot.slane %v2030, %v4959
    %4962 = vbcast.lane.b32.xlu0 %v4960, 256
    %v4963 = vpop.permute.xlu0 %4962
    %s4965 = sor.u32 256, 8
    %4966 = vbcast.lane.b32.xlu0 %v4960, %s4965
    %v4967 = vpop.permute.xlu0 %4966
    %v4968 = vlaneseq
    %v4969 = vshrl.u32 %v4968, 7
    %v4970 = vsub.s32 0, %v4969
    %v4971 = vrot.slane %v2031, %v4970
    %4973 = vbcast.lane.b32.xlu0 %v4971, 256
    %v4974 = vpop.permute.xlu0 %4973
    %s4976 = sor.u32 256, 8
    %4977 = vbcast.lane.b32.xlu0 %v4971, %s4976
    %v4978 = vpop.permute.xlu0 %4977
    %v4979 = vlaneseq
    %v4980 = vshrl.u32 %v4979, 7
    %v4981 = vsub.s32 1, %v4980
    %v4982 = vrot.slane %v2031, %v4981
    %4984 = vbcast.lane.b32.xlu0 %v4982, 256
    %v4985 = vpop.permute.xlu0 %4984
    %s4987 = sor.u32 256, 8
    %4988 = vbcast.lane.b32.xlu0 %v4982, %s4987
    %v4989 = vpop.permute.xlu0 %4988
    %v4990 = vlaneseq
    %v4991 = vshrl.u32 %v4990, 7
    %v4992 = vsub.s32 2, %v4991
    %v4993 = vrot.slane %v2031, %v4992
    %4995 = vbcast.lane.b32.xlu0 %v4993, 256
    %v4996 = vpop.permute.xlu0 %4995
    %s4998 = sor.u32 256, 8
    %4999 = vbcast.lane.b32.xlu0 %v4993, %s4998
    %v5000 = vpop.permute.xlu0 %4999
    %v5001 = vlaneseq
    %v5002 = vshrl.u32 %v5001, 7
    %v5003 = vsub.s32 3, %v5002
    %v5004 = vrot.slane %v2031, %v5003
    %5006 = vbcast.lane.b32.xlu0 %v5004, 256
    %v5007 = vpop.permute.xlu0 %5006
    %s5009 = sor.u32 256, 8
    %5010 = vbcast.lane.b32.xlu0 %v5004, %s5009
    %v5011 = vpop.permute.xlu0 %5010
    %v5012 = vlaneseq
    %v5013 = vshrl.u32 %v5012, 7
    %v5014 = vsub.s32 4, %v5013
    %v5015 = vrot.slane %v2031, %v5014
    %5017 = vbcast.lane.b32.xlu0 %v5015, 256
    %v5018 = vpop.permute.xlu0 %5017
    %s5020 = sor.u32 256, 8
    %5021 = vbcast.lane.b32.xlu0 %v5015, %s5020
    %v5022 = vpop.permute.xlu0 %5021
    %v5023 = vlaneseq
    %v5024 = vshrl.u32 %v5023, 7
    %v5025 = vsub.s32 5, %v5024
    %v5026 = vrot.slane %v2031, %v5025
    %5028 = vbcast.lane.b32.xlu0 %v5026, 256
    %v5029 = vpop.permute.xlu0 %5028
    %s5031 = sor.u32 256, 8
    %5032 = vbcast.lane.b32.xlu0 %v5026, %s5031
    %v5033 = vpop.permute.xlu0 %5032
    %v5034 = vlaneseq
    %v5035 = vshrl.u32 %v5034, 7
    %v5036 = vsub.s32 6, %v5035
    %v5037 = vrot.slane %v2031, %v5036
    %5039 = vbcast.lane.b32.xlu0 %v5037, 256
    %v5040 = vpop.permute.xlu0 %5039
    %s5042 = sor.u32 256, 8
    %5043 = vbcast.lane.b32.xlu0 %v5037, %s5042
    %v5044 = vpop.permute.xlu0 %5043
    %v5045 = vlaneseq
    %v5046 = vshrl.u32 %v5045, 7
    %v5047 = vsub.s32 7, %v5046
    %v5048 = vrot.slane %v2031, %v5047
    %5050 = vbcast.lane.b32.xlu0 %v5048, 256
    %v5051 = vpop.permute.xlu0 %5050
    %s5053 = sor.u32 256, 8
    %5054 = vbcast.lane.b32.xlu0 %v5048, %s5053
    %v5055 = vpop.permute.xlu0 %5054
    %v5056 = vlaneseq
    %v5057 = vshrl.u32 %v5056, 7
    %v5058 = vsub.s32 0, %v5057
    %v5059 = vrot.slane %v2032, %v5058
    %5061 = vbcast.lane.b32.xlu0 %v5059, 256
    %v5062 = vpop.permute.xlu0 %5061
    %s5064 = sor.u32 256, 8
    %5065 = vbcast.lane.b32.xlu0 %v5059, %s5064
    %v5066 = vpop.permute.xlu0 %5065
    %v5067 = vlaneseq
    %v5068 = vshrl.u32 %v5067, 7
    %v5069 = vsub.s32 1, %v5068
    %v5070 = vrot.slane %v2032, %v5069
    %5072 = vbcast.lane.b32.xlu0 %v5070, 256
    %v5073 = vpop.permute.xlu0 %5072
    %s5075 = sor.u32 256, 8
    %5076 = vbcast.lane.b32.xlu0 %v5070, %s5075
    %v5077 = vpop.permute.xlu0 %5076
    %v5078 = vlaneseq
    %v5079 = vshrl.u32 %v5078, 7
    %v5080 = vsub.s32 2, %v5079
    %v5081 = vrot.slane %v2032, %v5080
    %5083 = vbcast.lane.b32.xlu0 %v5081, 256
    %v5084 = vpop.permute.xlu0 %5083
    %s5086 = sor.u32 256, 8
    %5087 = vbcast.lane.b32.xlu0 %v5081, %s5086
    %v5088 = vpop.permute.xlu0 %5087
    %v5089 = vlaneseq
    %v5090 = vshrl.u32 %v5089, 7
    %v5091 = vsub.s32 3, %v5090
    %v5092 = vrot.slane %v2032, %v5091
    %5094 = vbcast.lane.b32.xlu0 %v5092, 256
    %v5095 = vpop.permute.xlu0 %5094
    %s5097 = sor.u32 256, 8
    %5098 = vbcast.lane.b32.xlu0 %v5092, %s5097
    %v5099 = vpop.permute.xlu0 %5098
    %v5100 = vlaneseq
    %v5101 = vshrl.u32 %v5100, 7
    %v5102 = vsub.s32 4, %v5101
    %v5103 = vrot.slane %v2032, %v5102
    %5105 = vbcast.lane.b32.xlu0 %v5103, 256
    %v5106 = vpop.permute.xlu0 %5105
    %s5108 = sor.u32 256, 8
    %5109 = vbcast.lane.b32.xlu0 %v5103, %s5108
    %v5110 = vpop.permute.xlu0 %5109
    %v5111 = vlaneseq
    %v5112 = vshrl.u32 %v5111, 7
    %v5113 = vsub.s32 5, %v5112
    %v5114 = vrot.slane %v2032, %v5113
    %5116 = vbcast.lane.b32.xlu0 %v5114, 256
    %v5117 = vpop.permute.xlu0 %5116
    %s5119 = sor.u32 256, 8
    %5120 = vbcast.lane.b32.xlu0 %v5114, %s5119
    %v5121 = vpop.permute.xlu0 %5120
    %v5122 = vlaneseq
    %v5123 = vshrl.u32 %v5122, 7
    %v5124 = vsub.s32 6, %v5123
    %v5125 = vrot.slane %v2032, %v5124
    %5127 = vbcast.lane.b32.xlu0 %v5125, 256
    %v5128 = vpop.permute.xlu0 %5127
    %s5130 = sor.u32 256, 8
    %5131 = vbcast.lane.b32.xlu0 %v5125, %s5130
    %v5132 = vpop.permute.xlu0 %5131
    %v5133 = vlaneseq
    %v5134 = vshrl.u32 %v5133, 7
    %v5135 = vsub.s32 7, %v5134
    %v5136 = vrot.slane %v2032, %v5135
    %5138 = vbcast.lane.b32.xlu0 %v5136, 256
    %v5139 = vpop.permute.xlu0 %5138
    %s5141 = sor.u32 256, 8
    %5142 = vbcast.lane.b32.xlu0 %v5136, %s5141
    %v5143 = vpop.permute.xlu0 %5142
    %v5144 = vlaneseq
    %v5145 = vshrl.u32 %v5144, 7
    %v5146 = vsub.s32 0, %v5145
    %v5147 = vrot.slane %v2033, %v5146
    %5149 = vbcast.lane.b32.xlu0 %v5147, 256
    %v5150 = vpop.permute.xlu0 %5149
    %s5152 = sor.u32 256, 8
    %5153 = vbcast.lane.b32.xlu0 %v5147, %s5152
    %v5154 = vpop.permute.xlu0 %5153
    %v5155 = vlaneseq
    %v5156 = vshrl.u32 %v5155, 7
    %v5157 = vsub.s32 1, %v5156
    %v5158 = vrot.slane %v2033, %v5157
    %5160 = vbcast.lane.b32.xlu0 %v5158, 256
    %v5161 = vpop.permute.xlu0 %5160
    %s5163 = sor.u32 256, 8
    %5164 = vbcast.lane.b32.xlu0 %v5158, %s5163
    %v5165 = vpop.permute.xlu0 %5164
    %v5166 = vlaneseq
    %v5167 = vshrl.u32 %v5166, 7
    %v5168 = vsub.s32 2, %v5167
    %v5169 = vrot.slane %v2033, %v5168
    %5171 = vbcast.lane.b32.xlu0 %v5169, 256
    %v5172 = vpop.permute.xlu0 %5171
    %s5174 = sor.u32 256, 8
    %5175 = vbcast.lane.b32.xlu0 %v5169, %s5174
    %v5176 = vpop.permute.xlu0 %5175
    %v5177 = vlaneseq
    %v5178 = vshrl.u32 %v5177, 7
    %v5179 = vsub.s32 3, %v5178
    %v5180 = vrot.slane %v2033, %v5179
    %5182 = vbcast.lane.b32.xlu0 %v5180, 256
    %v5183 = vpop.permute.xlu0 %5182
    %s5185 = sor.u32 256, 8
    %5186 = vbcast.lane.b32.xlu0 %v5180, %s5185
    %v5187 = vpop.permute.xlu0 %5186
    %v5188 = vlaneseq
    %v5189 = vshrl.u32 %v5188, 7
    %v5190 = vsub.s32 4, %v5189
    %v5191 = vrot.slane %v2033, %v5190
    %5193 = vbcast.lane.b32.xlu0 %v5191, 256
    %v5194 = vpop.permute.xlu0 %5193
    %s5196 = sor.u32 256, 8
    %5197 = vbcast.lane.b32.xlu0 %v5191, %s5196
    %v5198 = vpop.permute.xlu0 %5197
    %v5199 = vlaneseq
    %v5200 = vshrl.u32 %v5199, 7
    %v5201 = vsub.s32 5, %v5200
    %v5202 = vrot.slane %v2033, %v5201
    %5204 = vbcast.lane.b32.xlu0 %v5202, 256
    %v5205 = vpop.permute.xlu0 %5204
    %s5207 = sor.u32 256, 8
    %5208 = vbcast.lane.b32.xlu0 %v5202, %s5207
    %v5209 = vpop.permute.xlu0 %5208
    %v5210 = vlaneseq
    %v5211 = vshrl.u32 %v5210, 7
    %v5212 = vsub.s32 6, %v5211
    %v5213 = vrot.slane %v2033, %v5212
    %5215 = vbcast.lane.b32.xlu0 %v5213, 256
    %v5216 = vpop.permute.xlu0 %5215
    %s5218 = sor.u32 256, 8
    %5219 = vbcast.lane.b32.xlu0 %v5213, %s5218
    %v5220 = vpop.permute.xlu0 %5219
    %v5221 = vlaneseq
    %v5222 = vshrl.u32 %v5221, 7
    %v5223 = vsub.s32 7, %v5222
    %v5224 = vrot.slane %v2033, %v5223
    %5226 = vbcast.lane.b32.xlu0 %v5224, 256
    %v5227 = vpop.permute.xlu0 %5226
    %s5229 = sor.u32 256, 8
    %5230 = vbcast.lane.b32.xlu0 %v5224, %s5229
    %v5231 = vpop.permute.xlu0 %5230
    %v5232 = vlaneseq
    %v5233 = vshrl.u32 %v5232, 7
    %v5234 = vsub.s32 0, %v5233
    %v5235 = vrot.slane %v2034, %v5234
    %5237 = vbcast.lane.b32.xlu0 %v5235, 256
    %v5238 = vpop.permute.xlu0 %5237
    %s5240 = sor.u32 256, 8
    %5241 = vbcast.lane.b32.xlu0 %v5235, %s5240
    %v5242 = vpop.permute.xlu0 %5241
    %v5243 = vlaneseq
    %v5244 = vshrl.u32 %v5243, 7
    %v5245 = vsub.s32 1, %v5244
    %v5246 = vrot.slane %v2034, %v5245
    %5248 = vbcast.lane.b32.xlu0 %v5246, 256
    %v5249 = vpop.permute.xlu0 %5248
    %s5251 = sor.u32 256, 8
    %5252 = vbcast.lane.b32.xlu0 %v5246, %s5251
    %v5253 = vpop.permute.xlu0 %5252
    %v5254 = vlaneseq
    %v5255 = vshrl.u32 %v5254, 7
    %v5256 = vsub.s32 2, %v5255
    %v5257 = vrot.slane %v2034, %v5256
    %5259 = vbcast.lane.b32.xlu0 %v5257, 256
    %v5260 = vpop.permute.xlu0 %5259
    %s5262 = sor.u32 256, 8
    %5263 = vbcast.lane.b32.xlu0 %v5257, %s5262
    %v5264 = vpop.permute.xlu0 %5263
    %v5265 = vlaneseq
    %v5266 = vshrl.u32 %v5265, 7
    %v5267 = vsub.s32 3, %v5266
    %v5268 = vrot.slane %v2034, %v5267
    %5270 = vbcast.lane.b32.xlu0 %v5268, 256
    %v5271 = vpop.permute.xlu0 %5270
    %s5273 = sor.u32 256, 8
    %5274 = vbcast.lane.b32.xlu0 %v5268, %s5273
    %v5275 = vpop.permute.xlu0 %5274
    %v5276 = vlaneseq
    %v5277 = vshrl.u32 %v5276, 7
    %v5278 = vsub.s32 4, %v5277
    %v5279 = vrot.slane %v2034, %v5278
    %5281 = vbcast.lane.b32.xlu0 %v5279, 256
    %v5282 = vpop.permute.xlu0 %5281
    %s5284 = sor.u32 256, 8
    %5285 = vbcast.lane.b32.xlu0 %v5279, %s5284
    %v5286 = vpop.permute.xlu0 %5285
    %v5287 = vlaneseq
    %v5288 = vshrl.u32 %v5287, 7
    %v5289 = vsub.s32 5, %v5288
    %v5290 = vrot.slane %v2034, %v5289
    %5292 = vbcast.lane.b32.xlu0 %v5290, 256
    %v5293 = vpop.permute.xlu0 %5292
    %s5295 = sor.u32 256, 8
    %5296 = vbcast.lane.b32.xlu0 %v5290, %s5295
    %v5297 = vpop.permute.xlu0 %5296
    %v5298 = vlaneseq
    %v5299 = vshrl.u32 %v5298, 7
    %v5300 = vsub.s32 6, %v5299
    %v5301 = vrot.slane %v2034, %v5300
    %5303 = vbcast.lane.b32.xlu0 %v5301, 256
    %v5304 = vpop.permute.xlu0 %5303
    %s5306 = sor.u32 256, 8
    %5307 = vbcast.lane.b32.xlu0 %v5301, %s5306
    %v5308 = vpop.permute.xlu0 %5307
    %v5309 = vlaneseq
    %v5310 = vshrl.u32 %v5309, 7
    %v5311 = vsub.s32 7, %v5310
    %v5312 = vrot.slane %v2034, %v5311
    %5314 = vbcast.lane.b32.xlu0 %v5312, 256
    %v5315 = vpop.permute.xlu0 %5314
    %s5317 = sor.u32 256, 8
    %5318 = vbcast.lane.b32.xlu0 %v5312, %s5317
    %v5319 = vpop.permute.xlu0 %5318
    %v5320 = vlaneseq
    %v5321 = vshrl.u32 %v5320, 7
    %v5322 = vsub.s32 0, %v5321
    %v5323 = vrot.slane %v2035, %v5322
    %5325 = vbcast.lane.b32.xlu0 %v5323, 256
    %v5326 = vpop.permute.xlu0 %5325
    %s5328 = sor.u32 256, 8
    %5329 = vbcast.lane.b32.xlu0 %v5323, %s5328
    %v5330 = vpop.permute.xlu0 %5329
    %v5331 = vlaneseq
    %v5332 = vshrl.u32 %v5331, 7
    %v5333 = vsub.s32 1, %v5332
    %v5334 = vrot.slane %v2035, %v5333
    %5336 = vbcast.lane.b32.xlu0 %v5334, 256
    %v5337 = vpop.permute.xlu0 %5336
    %s5339 = sor.u32 256, 8
    %5340 = vbcast.lane.b32.xlu0 %v5334, %s5339
    %v5341 = vpop.permute.xlu0 %5340
    %v5342 = vlaneseq
    %v5343 = vshrl.u32 %v5342, 7
    %v5344 = vsub.s32 2, %v5343
    %v5345 = vrot.slane %v2035, %v5344
    %5347 = vbcast.lane.b32.xlu0 %v5345, 256
    %v5348 = vpop.permute.xlu0 %5347
    %s5350 = sor.u32 256, 8
    %5351 = vbcast.lane.b32.xlu0 %v5345, %s5350
    %v5352 = vpop.permute.xlu0 %5351
    %v5353 = vlaneseq
    %v5354 = vshrl.u32 %v5353, 7
    %v5355 = vsub.s32 3, %v5354
    %v5356 = vrot.slane %v2035, %v5355
    %5358 = vbcast.lane.b32.xlu0 %v5356, 256
    %v5359 = vpop.permute.xlu0 %5358
    %s5361 = sor.u32 256, 8
    %5362 = vbcast.lane.b32.xlu0 %v5356, %s5361
    %v5363 = vpop.permute.xlu0 %5362
    %v5364 = vlaneseq
    %v5365 = vshrl.u32 %v5364, 7
    %v5366 = vsub.s32 4, %v5365
    %v5367 = vrot.slane %v2035, %v5366
    %5369 = vbcast.lane.b32.xlu0 %v5367, 256
    %v5370 = vpop.permute.xlu0 %5369
    %s5372 = sor.u32 256, 8
    %5373 = vbcast.lane.b32.xlu0 %v5367, %s5372
    %v5374 = vpop.permute.xlu0 %5373
    %v5375 = vlaneseq
    %v5376 = vshrl.u32 %v5375, 7
    %v5377 = vsub.s32 5, %v5376
    %v5378 = vrot.slane %v2035, %v5377
    %5380 = vbcast.lane.b32.xlu0 %v5378, 256
    %v5381 = vpop.permute.xlu0 %5380
    %s5383 = sor.u32 256, 8
    %5384 = vbcast.lane.b32.xlu0 %v5378, %s5383
    %v5385 = vpop.permute.xlu0 %5384
    %v5386 = vlaneseq
    %v5387 = vshrl.u32 %v5386, 7
    %v5388 = vsub.s32 6, %v5387
    %v5389 = vrot.slane %v2035, %v5388
    %5391 = vbcast.lane.b32.xlu0 %v5389, 256
    %v5392 = vpop.permute.xlu0 %5391
    %s5394 = sor.u32 256, 8
    %5395 = vbcast.lane.b32.xlu0 %v5389, %s5394
    %v5396 = vpop.permute.xlu0 %5395
    %v5397 = vlaneseq
    %v5398 = vshrl.u32 %v5397, 7
    %v5399 = vsub.s32 7, %v5398
    %v5400 = vrot.slane %v2035, %v5399
    %5402 = vbcast.lane.b32.xlu0 %v5400, 256
    %v5403 = vpop.permute.xlu0 %5402
    %s5405 = sor.u32 256, 8
    %5406 = vbcast.lane.b32.xlu0 %v5400, %s5405
    %v5407 = vpop.permute.xlu0 %5406
    %v5408 = vlaneseq
    %v5409 = vshrl.u32 %v5408, 7
    %v5410 = vsub.s32 0, %v5409
    %v5411 = vrot.slane %v2036, %v5410
    %5413 = vbcast.lane.b32.xlu0 %v5411, 256
    %v5414 = vpop.permute.xlu0 %5413
    %s5416 = sor.u32 256, 8
    %5417 = vbcast.lane.b32.xlu0 %v5411, %s5416
    %v5418 = vpop.permute.xlu0 %5417
    %v5419 = vlaneseq
    %v5420 = vshrl.u32 %v5419, 7
    %v5421 = vsub.s32 1, %v5420
    %v5422 = vrot.slane %v2036, %v5421
    %5424 = vbcast.lane.b32.xlu0 %v5422, 256
    %v5425 = vpop.permute.xlu0 %5424
    %s5427 = sor.u32 256, 8
    %5428 = vbcast.lane.b32.xlu0 %v5422, %s5427
    %v5429 = vpop.permute.xlu0 %5428
    %v5430 = vlaneseq
    %v5431 = vshrl.u32 %v5430, 7
    %v5432 = vsub.s32 2, %v5431
    %v5433 = vrot.slane %v2036, %v5432
    %5435 = vbcast.lane.b32.xlu0 %v5433, 256
    %v5436 = vpop.permute.xlu0 %5435
    %s5438 = sor.u32 256, 8
    %5439 = vbcast.lane.b32.xlu0 %v5433, %s5438
    %v5440 = vpop.permute.xlu0 %5439
    %v5441 = vlaneseq
    %v5442 = vshrl.u32 %v5441, 7
    %v5443 = vsub.s32 3, %v5442
    %v5444 = vrot.slane %v2036, %v5443
    %5446 = vbcast.lane.b32.xlu0 %v5444, 256
    %v5447 = vpop.permute.xlu0 %5446
    %s5449 = sor.u32 256, 8
    %5450 = vbcast.lane.b32.xlu0 %v5444, %s5449
    %v5451 = vpop.permute.xlu0 %5450
    %v5452 = vlaneseq
    %v5453 = vshrl.u32 %v5452, 7
    %v5454 = vsub.s32 4, %v5453
    %v5455 = vrot.slane %v2036, %v5454
    %5457 = vbcast.lane.b32.xlu0 %v5455, 256
    %v5458 = vpop.permute.xlu0 %5457
    %s5460 = sor.u32 256, 8
    %5461 = vbcast.lane.b32.xlu0 %v5455, %s5460
    %v5462 = vpop.permute.xlu0 %5461
    %v5463 = vlaneseq
    %v5464 = vshrl.u32 %v5463, 7
    %v5465 = vsub.s32 5, %v5464
    %v5466 = vrot.slane %v2036, %v5465
    %5468 = vbcast.lane.b32.xlu0 %v5466, 256
    %v5469 = vpop.permute.xlu0 %5468
    %s5471 = sor.u32 256, 8
    %5472 = vbcast.lane.b32.xlu0 %v5466, %s5471
    %v5473 = vpop.permute.xlu0 %5472
    %v5474 = vlaneseq
    %v5475 = vshrl.u32 %v5474, 7
    %v5476 = vsub.s32 6, %v5475
    %v5477 = vrot.slane %v2036, %v5476
    %5479 = vbcast.lane.b32.xlu0 %v5477, 256
    %v5480 = vpop.permute.xlu0 %5479
    %s5482 = sor.u32 256, 8
    %5483 = vbcast.lane.b32.xlu0 %v5477, %s5482
    %v5484 = vpop.permute.xlu0 %5483
    %v5485 = vlaneseq
    %v5486 = vshrl.u32 %v5485, 7
    %v5487 = vsub.s32 7, %v5486
    %v5488 = vrot.slane %v2036, %v5487
    %5490 = vbcast.lane.b32.xlu0 %v5488, 256
    %v5491 = vpop.permute.xlu0 %5490
    %s5493 = sor.u32 256, 8
    %5494 = vbcast.lane.b32.xlu0 %v5488, %s5493
    %v5495 = vpop.permute.xlu0 %5494
    %v5496 = vlaneseq
    %v5497 = vshrl.u32 %v5496, 7
    %v5498 = vsub.s32 0, %v5497
    %v5499 = vrot.slane %v2037, %v5498
    %5501 = vbcast.lane.b32.xlu0 %v5499, 256
    %v5502 = vpop.permute.xlu0 %5501
    %s5504 = sor.u32 256, 8
    %5505 = vbcast.lane.b32.xlu0 %v5499, %s5504
    %v5506 = vpop.permute.xlu0 %5505
    %v5507 = vlaneseq
    %v5508 = vshrl.u32 %v5507, 7
    %v5509 = vsub.s32 1, %v5508
    %v5510 = vrot.slane %v2037, %v5509
    %5512 = vbcast.lane.b32.xlu0 %v5510, 256
    %v5513 = vpop.permute.xlu0 %5512
    %s5515 = sor.u32 256, 8
    %5516 = vbcast.lane.b32.xlu0 %v5510, %s5515
    %v5517 = vpop.permute.xlu0 %5516
    %v5518 = vlaneseq
    %v5519 = vshrl.u32 %v5518, 7
    %v5520 = vsub.s32 2, %v5519
    %v5521 = vrot.slane %v2037, %v5520
    %5523 = vbcast.lane.b32.xlu0 %v5521, 256
    %v5524 = vpop.permute.xlu0 %5523
    %s5526 = sor.u32 256, 8
    %5527 = vbcast.lane.b32.xlu0 %v5521, %s5526
    %v5528 = vpop.permute.xlu0 %5527
    %v5529 = vlaneseq
    %v5530 = vshrl.u32 %v5529, 7
    %v5531 = vsub.s32 3, %v5530
    %v5532 = vrot.slane %v2037, %v5531
    %5534 = vbcast.lane.b32.xlu0 %v5532, 256
    %v5535 = vpop.permute.xlu0 %5534
    %s5537 = sor.u32 256, 8
    %5538 = vbcast.lane.b32.xlu0 %v5532, %s5537
    %v5539 = vpop.permute.xlu0 %5538
    %v5540 = vlaneseq
    %v5541 = vshrl.u32 %v5540, 7
    %v5542 = vsub.s32 4, %v5541
    %v5543 = vrot.slane %v2037, %v5542
    %5545 = vbcast.lane.b32.xlu0 %v5543, 256
    %v5546 = vpop.permute.xlu0 %5545
    %s5548 = sor.u32 256, 8
    %5549 = vbcast.lane.b32.xlu0 %v5543, %s5548
    %v5550 = vpop.permute.xlu0 %5549
    %v5551 = vlaneseq
    %v5552 = vshrl.u32 %v5551, 7
    %v5553 = vsub.s32 5, %v5552
    %v5554 = vrot.slane %v2037, %v5553
    %5556 = vbcast.lane.b32.xlu0 %v5554, 256
    %v5557 = vpop.permute.xlu0 %5556
    %s5559 = sor.u32 256, 8
    %5560 = vbcast.lane.b32.xlu0 %v5554, %s5559
    %v5561 = vpop.permute.xlu0 %5560
    %v5562 = vlaneseq
    %v5563 = vshrl.u32 %v5562, 7
    %v5564 = vsub.s32 6, %v5563
    %v5565 = vrot.slane %v2037, %v5564
    %5567 = vbcast.lane.b32.xlu0 %v5565, 256
    %v5568 = vpop.permute.xlu0 %5567
    %s5570 = sor.u32 256, 8
    %5571 = vbcast.lane.b32.xlu0 %v5565, %s5570
    %v5572 = vpop.permute.xlu0 %5571
    %v5573 = vlaneseq
    %v5574 = vshrl.u32 %v5573, 7
    %v5575 = vsub.s32 7, %v5574
    %v5576 = vrot.slane %v2037, %v5575
    %5578 = vbcast.lane.b32.xlu0 %v5576, 256
    %v5579 = vpop.permute.xlu0 %5578
    %s5581 = sor.u32 256, 8
    %5582 = vbcast.lane.b32.xlu0 %v5576, %s5581
    %v5583 = vpop.permute.xlu0 %5582
    %v5584 = vlaneseq
    %v5585 = vshrl.u32 %v5584, 7
    %v5586 = vsub.s32 0, %v5585
    %v5587 = vrot.slane %v2038, %v5586
    %5589 = vbcast.lane.b32.xlu0 %v5587, 256
    %v5590 = vpop.permute.xlu0 %5589
    %s5592 = sor.u32 256, 8
    %5593 = vbcast.lane.b32.xlu0 %v5587, %s5592
    %v5594 = vpop.permute.xlu0 %5593
    %v5595 = vlaneseq
    %v5596 = vshrl.u32 %v5595, 7
    %v5597 = vsub.s32 1, %v5596
    %v5598 = vrot.slane %v2038, %v5597
    %5600 = vbcast.lane.b32.xlu0 %v5598, 256
    %v5601 = vpop.permute.xlu0 %5600
    %s5603 = sor.u32 256, 8
    %5604 = vbcast.lane.b32.xlu0 %v5598, %s5603
    %v5605 = vpop.permute.xlu0 %5604
    %v5606 = vlaneseq
    %v5607 = vshrl.u32 %v5606, 7
    %v5608 = vsub.s32 2, %v5607
    %v5609 = vrot.slane %v2038, %v5608
    %5611 = vbcast.lane.b32.xlu0 %v5609, 256
    %v5612 = vpop.permute.xlu0 %5611
    %s5614 = sor.u32 256, 8
    %5615 = vbcast.lane.b32.xlu0 %v5609, %s5614
    %v5616 = vpop.permute.xlu0 %5615
    %v5617 = vlaneseq
    %v5618 = vshrl.u32 %v5617, 7
    %v5619 = vsub.s32 3, %v5618
    %v5620 = vrot.slane %v2038, %v5619
    %5622 = vbcast.lane.b32.xlu0 %v5620, 256
    %v5623 = vpop.permute.xlu0 %5622
    %s5625 = sor.u32 256, 8
    %5626 = vbcast.lane.b32.xlu0 %v5620, %s5625
    %v5627 = vpop.permute.xlu0 %5626
    %v5628 = vlaneseq
    %v5629 = vshrl.u32 %v5628, 7
    %v5630 = vsub.s32 4, %v5629
    %v5631 = vrot.slane %v2038, %v5630
    %5633 = vbcast.lane.b32.xlu0 %v5631, 256
    %v5634 = vpop.permute.xlu0 %5633
    %s5636 = sor.u32 256, 8
    %5637 = vbcast.lane.b32.xlu0 %v5631, %s5636
    %v5638 = vpop.permute.xlu0 %5637
    %v5639 = vlaneseq
    %v5640 = vshrl.u32 %v5639, 7
    %v5641 = vsub.s32 5, %v5640
    %v5642 = vrot.slane %v2038, %v5641
    %5644 = vbcast.lane.b32.xlu0 %v5642, 256
    %v5645 = vpop.permute.xlu0 %5644
    %s5647 = sor.u32 256, 8
    %5648 = vbcast.lane.b32.xlu0 %v5642, %s5647
    %v5649 = vpop.permute.xlu0 %5648
    %v5650 = vlaneseq
    %v5651 = vshrl.u32 %v5650, 7
    %v5652 = vsub.s32 6, %v5651
    %v5653 = vrot.slane %v2038, %v5652
    %5655 = vbcast.lane.b32.xlu0 %v5653, 256
    %v5656 = vpop.permute.xlu0 %5655
    %s5658 = sor.u32 256, 8
    %5659 = vbcast.lane.b32.xlu0 %v5653, %s5658
    %v5660 = vpop.permute.xlu0 %5659
    %v5661 = vlaneseq
    %v5662 = vshrl.u32 %v5661, 7
    %v5663 = vsub.s32 7, %v5662
    %v5664 = vrot.slane %v2038, %v5663
    %5666 = vbcast.lane.b32.xlu0 %v5664, 256
    %v5667 = vpop.permute.xlu0 %5666
    %s5669 = sor.u32 256, 8
    %5670 = vbcast.lane.b32.xlu0 %v5664, %s5669
    %v5671 = vpop.permute.xlu0 %5670
    %v5672 = vlaneseq
    %v5673 = vshrl.u32 %v5672, 7
    %v5674 = vsub.s32 0, %v5673
    %v5675 = vrot.slane %v2039, %v5674
    %5677 = vbcast.lane.b32.xlu0 %v5675, 256
    %v5678 = vpop.permute.xlu0 %5677
    %s5680 = sor.u32 256, 8
    %5681 = vbcast.lane.b32.xlu0 %v5675, %s5680
    %v5682 = vpop.permute.xlu0 %5681
    %v5683 = vlaneseq
    %v5684 = vshrl.u32 %v5683, 7
    %v5685 = vsub.s32 1, %v5684
    %v5686 = vrot.slane %v2039, %v5685
    %5688 = vbcast.lane.b32.xlu0 %v5686, 256
    %v5689 = vpop.permute.xlu0 %5688
    %s5691 = sor.u32 256, 8
    %5692 = vbcast.lane.b32.xlu0 %v5686, %s5691
    %v5693 = vpop.permute.xlu0 %5692
    %v5694 = vlaneseq
    %v5695 = vshrl.u32 %v5694, 7
    %v5696 = vsub.s32 2, %v5695
    %v5697 = vrot.slane %v2039, %v5696
    %5699 = vbcast.lane.b32.xlu0 %v5697, 256
    %v5700 = vpop.permute.xlu0 %5699
    %s5702 = sor.u32 256, 8
    %5703 = vbcast.lane.b32.xlu0 %v5697, %s5702
    %v5704 = vpop.permute.xlu0 %5703
    %v5705 = vlaneseq
    %v5706 = vshrl.u32 %v5705, 7
    %v5707 = vsub.s32 3, %v5706
    %v5708 = vrot.slane %v2039, %v5707
    %5710 = vbcast.lane.b32.xlu0 %v5708, 256
    %v5711 = vpop.permute.xlu0 %5710
    %s5713 = sor.u32 256, 8
    %5714 = vbcast.lane.b32.xlu0 %v5708, %s5713
    %v5715 = vpop.permute.xlu0 %5714
    %v5716 = vlaneseq
    %v5717 = vshrl.u32 %v5716, 7
    %v5718 = vsub.s32 4, %v5717
    %v5719 = vrot.slane %v2039, %v5718
    %5721 = vbcast.lane.b32.xlu0 %v5719, 256
    %v5722 = vpop.permute.xlu0 %5721
    %s5724 = sor.u32 256, 8
    %5725 = vbcast.lane.b32.xlu0 %v5719, %s5724
    %v5726 = vpop.permute.xlu0 %5725
    %v5727 = vlaneseq
    %v5728 = vshrl.u32 %v5727, 7
    %v5729 = vsub.s32 5, %v5728
    %v5730 = vrot.slane %v2039, %v5729
    %5732 = vbcast.lane.b32.xlu0 %v5730, 256
    %v5733 = vpop.permute.xlu0 %5732
    %s5735 = sor.u32 256, 8
    %5736 = vbcast.lane.b32.xlu0 %v5730, %s5735
    %v5737 = vpop.permute.xlu0 %5736
    %v5738 = vlaneseq
    %v5739 = vshrl.u32 %v5738, 7
    %v5740 = vsub.s32 6, %v5739
    %v5741 = vrot.slane %v2039, %v5740
    %5743 = vbcast.lane.b32.xlu0 %v5741, 256
    %v5744 = vpop.permute.xlu0 %5743
    %s5746 = sor.u32 256, 8
    %5747 = vbcast.lane.b32.xlu0 %v5741, %s5746
    %v5748 = vpop.permute.xlu0 %5747
    %v5749 = vlaneseq
    %v5750 = vshrl.u32 %v5749, 7
    %v5751 = vsub.s32 7, %v5750
    %v5752 = vrot.slane %v2039, %v5751
    %5754 = vbcast.lane.b32.xlu0 %v5752, 256
    %v5755 = vpop.permute.xlu0 %5754
    %s5757 = sor.u32 256, 8
    %5758 = vbcast.lane.b32.xlu0 %v5752, %s5757
    %v5759 = vpop.permute.xlu0 %5758
    %v5760 = vlaneseq
    %v5761 = vshrl.u32 %v5760, 7
    %v5762 = vsub.s32 0, %v5761
    %v5763 = vrot.slane %v2040, %v5762
    %5765 = vbcast.lane.b32.xlu0 %v5763, 256
    %v5766 = vpop.permute.xlu0 %5765
    %s5768 = sor.u32 256, 8
    %5769 = vbcast.lane.b32.xlu0 %v5763, %s5768
    %v5770 = vpop.permute.xlu0 %5769
    %v5771 = vlaneseq
    %v5772 = vshrl.u32 %v5771, 7
    %v5773 = vsub.s32 1, %v5772
    %v5774 = vrot.slane %v2040, %v5773
    %5776 = vbcast.lane.b32.xlu0 %v5774, 256
    %v5777 = vpop.permute.xlu0 %5776
    %s5779 = sor.u32 256, 8
    %5780 = vbcast.lane.b32.xlu0 %v5774, %s5779
    %v5781 = vpop.permute.xlu0 %5780
    %v5782 = vlaneseq
    %v5783 = vshrl.u32 %v5782, 7
    %v5784 = vsub.s32 2, %v5783
    %v5785 = vrot.slane %v2040, %v5784
    %5787 = vbcast.lane.b32.xlu0 %v5785, 256
    %v5788 = vpop.permute.xlu0 %5787
    %s5790 = sor.u32 256, 8
    %5791 = vbcast.lane.b32.xlu0 %v5785, %s5790
    %v5792 = vpop.permute.xlu0 %5791
    %v5793 = vlaneseq
    %v5794 = vshrl.u32 %v5793, 7
    %v5795 = vsub.s32 3, %v5794
    %v5796 = vrot.slane %v2040, %v5795
    %5798 = vbcast.lane.b32.xlu0 %v5796, 256
    %v5799 = vpop.permute.xlu0 %5798
    %s5801 = sor.u32 256, 8
    %5802 = vbcast.lane.b32.xlu0 %v5796, %s5801
    %v5803 = vpop.permute.xlu0 %5802
    %v5804 = vlaneseq
    %v5805 = vshrl.u32 %v5804, 7
    %v5806 = vsub.s32 4, %v5805
    %v5807 = vrot.slane %v2040, %v5806
    %5809 = vbcast.lane.b32.xlu0 %v5807, 256
    %v5810 = vpop.permute.xlu0 %5809
    %s5812 = sor.u32 256, 8
    %5813 = vbcast.lane.b32.xlu0 %v5807, %s5812
    %v5814 = vpop.permute.xlu0 %5813
    %v5815 = vlaneseq
    %v5816 = vshrl.u32 %v5815, 7
    %v5817 = vsub.s32 5, %v5816
    %v5818 = vrot.slane %v2040, %v5817
    %5820 = vbcast.lane.b32.xlu0 %v5818, 256
    %v5821 = vpop.permute.xlu0 %5820
    %s5823 = sor.u32 256, 8
    %5824 = vbcast.lane.b32.xlu0 %v5818, %s5823
    %v5825 = vpop.permute.xlu0 %5824
    %v5826 = vlaneseq
    %v5827 = vshrl.u32 %v5826, 7
    %v5828 = vsub.s32 6, %v5827
    %v5829 = vrot.slane %v2040, %v5828
    %5831 = vbcast.lane.b32.xlu0 %v5829, 256
    %v5832 = vpop.permute.xlu0 %5831
    %s5834 = sor.u32 256, 8
    %5835 = vbcast.lane.b32.xlu0 %v5829, %s5834
    %v5836 = vpop.permute.xlu0 %5835
    %v5837 = vlaneseq
    %v5838 = vshrl.u32 %v5837, 7
    %v5839 = vsub.s32 7, %v5838
    %v5840 = vrot.slane %v2040, %v5839
    %5842 = vbcast.lane.b32.xlu0 %v5840, 256
    %v5843 = vpop.permute.xlu0 %5842
    %s5845 = sor.u32 256, 8
    %5846 = vbcast.lane.b32.xlu0 %v5840, %s5845
    %v5847 = vpop.permute.xlu0 %5846
    %v5848 = vlaneseq
    %v5849 = vshrl.u32 %v5848, 7
    %v5850 = vsub.s32 0, %v5849
    %v5851 = vrot.slane %v2041, %v5850
    %5853 = vbcast.lane.b32.xlu0 %v5851, 256
    %v5854 = vpop.permute.xlu0 %5853
    %s5856 = sor.u32 256, 8
    %5857 = vbcast.lane.b32.xlu0 %v5851, %s5856
    %v5858 = vpop.permute.xlu0 %5857
    %v5859 = vlaneseq
    %v5860 = vshrl.u32 %v5859, 7
    %v5861 = vsub.s32 1, %v5860
    %v5862 = vrot.slane %v2041, %v5861
    %5864 = vbcast.lane.b32.xlu0 %v5862, 256
    %v5865 = vpop.permute.xlu0 %5864
    %s5867 = sor.u32 256, 8
    %5868 = vbcast.lane.b32.xlu0 %v5862, %s5867
    %v5869 = vpop.permute.xlu0 %5868
    %v5870 = vlaneseq
    %v5871 = vshrl.u32 %v5870, 7
    %v5872 = vsub.s32 2, %v5871
    %v5873 = vrot.slane %v2041, %v5872
    %5875 = vbcast.lane.b32.xlu0 %v5873, 256
    %v5876 = vpop.permute.xlu0 %5875
    %s5878 = sor.u32 256, 8
    %5879 = vbcast.lane.b32.xlu0 %v5873, %s5878
    %v5880 = vpop.permute.xlu0 %5879
    %v5881 = vlaneseq
    %v5882 = vshrl.u32 %v5881, 7
    %v5883 = vsub.s32 3, %v5882
    %v5884 = vrot.slane %v2041, %v5883
    %5886 = vbcast.lane.b32.xlu0 %v5884, 256
    %v5887 = vpop.permute.xlu0 %5886
    %s5889 = sor.u32 256, 8
    %5890 = vbcast.lane.b32.xlu0 %v5884, %s5889
    %v5891 = vpop.permute.xlu0 %5890
    %v5892 = vlaneseq
    %v5893 = vshrl.u32 %v5892, 7
    %v5894 = vsub.s32 4, %v5893
    %v5895 = vrot.slane %v2041, %v5894
    %5897 = vbcast.lane.b32.xlu0 %v5895, 256
    %v5898 = vpop.permute.xlu0 %5897
    %s5900 = sor.u32 256, 8
    %5901 = vbcast.lane.b32.xlu0 %v5895, %s5900
    %v5902 = vpop.permute.xlu0 %5901
    %v5903 = vlaneseq
    %v5904 = vshrl.u32 %v5903, 7
    %v5905 = vsub.s32 5, %v5904
    %v5906 = vrot.slane %v2041, %v5905
    %5908 = vbcast.lane.b32.xlu0 %v5906, 256
    %v5909 = vpop.permute.xlu0 %5908
    %s5911 = sor.u32 256, 8
    %5912 = vbcast.lane.b32.xlu0 %v5906, %s5911
    %v5913 = vpop.permute.xlu0 %5912
    %v5914 = vlaneseq
    %v5915 = vshrl.u32 %v5914, 7
    %v5916 = vsub.s32 6, %v5915
    %v5917 = vrot.slane %v2041, %v5916
    %5919 = vbcast.lane.b32.xlu0 %v5917, 256
    %v5920 = vpop.permute.xlu0 %5919
    %s5922 = sor.u32 256, 8
    %5923 = vbcast.lane.b32.xlu0 %v5917, %s5922
    %v5924 = vpop.permute.xlu0 %5923
    %v5925 = vlaneseq
    %v5926 = vshrl.u32 %v5925, 7
    %v5927 = vsub.s32 7, %v5926
    %v5928 = vrot.slane %v2041, %v5927
    %5930 = vbcast.lane.b32.xlu0 %v5928, 256
    %v5931 = vpop.permute.xlu0 %5930
    %s5933 = sor.u32 256, 8
    %5934 = vbcast.lane.b32.xlu0 %v5928, %s5933
    %v5935 = vpop.permute.xlu0 %5934
    %v5936 = vlaneseq
    %v5937 = vshrl.u32 %v5936, 7
    %v5938 = vsub.s32 0, %v5937
    %v5939 = vrot.slane %v2042, %v5938
    %5941 = vbcast.lane.b32.xlu0 %v5939, 256
    %v5942 = vpop.permute.xlu0 %5941
    %s5944 = sor.u32 256, 8
    %5945 = vbcast.lane.b32.xlu0 %v5939, %s5944
    %v5946 = vpop.permute.xlu0 %5945
    %v5947 = vlaneseq
    %v5948 = vshrl.u32 %v5947, 7
    %v5949 = vsub.s32 1, %v5948
    %v5950 = vrot.slane %v2042, %v5949
    %5952 = vbcast.lane.b32.xlu0 %v5950, 256
    %v5953 = vpop.permute.xlu0 %5952
    %s5955 = sor.u32 256, 8
    %5956 = vbcast.lane.b32.xlu0 %v5950, %s5955
    %v5957 = vpop.permute.xlu0 %5956
    %v5958 = vlaneseq
    %v5959 = vshrl.u32 %v5958, 7
    %v5960 = vsub.s32 2, %v5959
    %v5961 = vrot.slane %v2042, %v5960
    %5963 = vbcast.lane.b32.xlu0 %v5961, 256
    %v5964 = vpop.permute.xlu0 %5963
    %s5966 = sor.u32 256, 8
    %5967 = vbcast.lane.b32.xlu0 %v5961, %s5966
    %v5968 = vpop.permute.xlu0 %5967
    %v5969 = vlaneseq
    %v5970 = vshrl.u32 %v5969, 7
    %v5971 = vsub.s32 3, %v5970
    %v5972 = vrot.slane %v2042, %v5971
    %5974 = vbcast.lane.b32.xlu0 %v5972, 256
    %v5975 = vpop.permute.xlu0 %5974
    %s5977 = sor.u32 256, 8
    %5978 = vbcast.lane.b32.xlu0 %v5972, %s5977
    %v5979 = vpop.permute.xlu0 %5978
    %v5980 = vlaneseq
    %v5981 = vshrl.u32 %v5980, 7
    %v5982 = vsub.s32 4, %v5981
    %v5983 = vrot.slane %v2042, %v5982
    %5985 = vbcast.lane.b32.xlu0 %v5983, 256
    %v5986 = vpop.permute.xlu0 %5985
    %s5988 = sor.u32 256, 8
    %5989 = vbcast.lane.b32.xlu0 %v5983, %s5988
    %v5990 = vpop.permute.xlu0 %5989
    %v5991 = vlaneseq
    %v5992 = vshrl.u32 %v5991, 7
    %v5993 = vsub.s32 5, %v5992
    %v5994 = vrot.slane %v2042, %v5993
    %5996 = vbcast.lane.b32.xlu0 %v5994, 256
    %v5997 = vpop.permute.xlu0 %5996
    %s5999 = sor.u32 256, 8
    %6000 = vbcast.lane.b32.xlu0 %v5994, %s5999
    %v6001 = vpop.permute.xlu0 %6000
    %v6002 = vlaneseq
    %v6003 = vshrl.u32 %v6002, 7
    %v6004 = vsub.s32 6, %v6003
    %v6005 = vrot.slane %v2042, %v6004
    %6007 = vbcast.lane.b32.xlu0 %v6005, 256
    %v6008 = vpop.permute.xlu0 %6007
    %s6010 = sor.u32 256, 8
    %6011 = vbcast.lane.b32.xlu0 %v6005, %s6010
    %v6012 = vpop.permute.xlu0 %6011
    %v6013 = vlaneseq
    %v6014 = vshrl.u32 %v6013, 7
    %v6015 = vsub.s32 7, %v6014
    %v6016 = vrot.slane %v2042, %v6015
    %6018 = vbcast.lane.b32.xlu0 %v6016, 256
    %v6019 = vpop.permute.xlu0 %6018
    %s6021 = sor.u32 256, 8
    %6022 = vbcast.lane.b32.xlu0 %v6016, %s6021
    %v6023 = vpop.permute.xlu0 %6022
    %v6024 = vlaneseq
    %v6025 = vshrl.u32 %v6024, 7
    %v6026 = vsub.s32 0, %v6025
    %v6027 = vrot.slane %v2043, %v6026
    %6029 = vbcast.lane.b32.xlu0 %v6027, 256
    %v6030 = vpop.permute.xlu0 %6029
    %s6032 = sor.u32 256, 8
    %6033 = vbcast.lane.b32.xlu0 %v6027, %s6032
    %v6034 = vpop.permute.xlu0 %6033
    %v6035 = vlaneseq
    %v6036 = vshrl.u32 %v6035, 7
    %v6037 = vsub.s32 1, %v6036
    %v6038 = vrot.slane %v2043, %v6037
    %6040 = vbcast.lane.b32.xlu0 %v6038, 256
    %v6041 = vpop.permute.xlu0 %6040
    %s6043 = sor.u32 256, 8
    %6044 = vbcast.lane.b32.xlu0 %v6038, %s6043
    %v6045 = vpop.permute.xlu0 %6044
    %v6046 = vlaneseq
    %v6047 = vshrl.u32 %v6046, 7
    %v6048 = vsub.s32 2, %v6047
    %v6049 = vrot.slane %v2043, %v6048
    %6051 = vbcast.lane.b32.xlu0 %v6049, 256
    %v6052 = vpop.permute.xlu0 %6051
    %s6054 = sor.u32 256, 8
    %6055 = vbcast.lane.b32.xlu0 %v6049, %s6054
    %v6056 = vpop.permute.xlu0 %6055
    %v6057 = vlaneseq
    %v6058 = vshrl.u32 %v6057, 7
    %v6059 = vsub.s32 3, %v6058
    %v6060 = vrot.slane %v2043, %v6059
    %6062 = vbcast.lane.b32.xlu0 %v6060, 256
    %v6063 = vpop.permute.xlu0 %6062
    %s6065 = sor.u32 256, 8
    %6066 = vbcast.lane.b32.xlu0 %v6060, %s6065
    %v6067 = vpop.permute.xlu0 %6066
    %v6068 = vlaneseq
    %v6069 = vshrl.u32 %v6068, 7
    %v6070 = vsub.s32 4, %v6069
    %v6071 = vrot.slane %v2043, %v6070
    %6073 = vbcast.lane.b32.xlu0 %v6071, 256
    %v6074 = vpop.permute.xlu0 %6073
    %s6076 = sor.u32 256, 8
    %6077 = vbcast.lane.b32.xlu0 %v6071, %s6076
    %v6078 = vpop.permute.xlu0 %6077
    %v6079 = vlaneseq
    %v6080 = vshrl.u32 %v6079, 7
    %v6081 = vsub.s32 5, %v6080
    %v6082 = vrot.slane %v2043, %v6081
    %6084 = vbcast.lane.b32.xlu0 %v6082, 256
    %v6085 = vpop.permute.xlu0 %6084
    %s6087 = sor.u32 256, 8
    %6088 = vbcast.lane.b32.xlu0 %v6082, %s6087
    %v6089 = vpop.permute.xlu0 %6088
    %v6090 = vlaneseq
    %v6091 = vshrl.u32 %v6090, 7
    %v6092 = vsub.s32 6, %v6091
    %v6093 = vrot.slane %v2043, %v6092
    %6095 = vbcast.lane.b32.xlu0 %v6093, 256
    %v6096 = vpop.permute.xlu0 %6095
    %s6098 = sor.u32 256, 8
    %6099 = vbcast.lane.b32.xlu0 %v6093, %s6098
    %v6100 = vpop.permute.xlu0 %6099
    %v6101 = vlaneseq
    %v6102 = vshrl.u32 %v6101, 7
    %v6103 = vsub.s32 7, %v6102
    %v6104 = vrot.slane %v2043, %v6103
    %6106 = vbcast.lane.b32.xlu0 %v6104, 256
    %v6107 = vpop.permute.xlu0 %6106
    %s6109 = sor.u32 256, 8
    %6110 = vbcast.lane.b32.xlu0 %v6104, %s6109
    %v6111 = vpop.permute.xlu0 %6110
    %v6112 = vlaneseq
    %v6113 = vshrl.u32 %v6112, 7
    %v6114 = vsub.s32 0, %v6113
    %v6115 = vrot.slane %v2044, %v6114
    %6117 = vbcast.lane.b32.xlu0 %v6115, 256
    %v6118 = vpop.permute.xlu0 %6117
    %s6120 = sor.u32 256, 8
    %6121 = vbcast.lane.b32.xlu0 %v6115, %s6120
    %v6122 = vpop.permute.xlu0 %6121
    %v6123 = vlaneseq
    %v6124 = vshrl.u32 %v6123, 7
    %v6125 = vsub.s32 1, %v6124
    %v6126 = vrot.slane %v2044, %v6125
    %6128 = vbcast.lane.b32.xlu0 %v6126, 256
    %v6129 = vpop.permute.xlu0 %6128
    %s6131 = sor.u32 256, 8
    %6132 = vbcast.lane.b32.xlu0 %v6126, %s6131
    %v6133 = vpop.permute.xlu0 %6132
    %v6134 = vlaneseq
    %v6135 = vshrl.u32 %v6134, 7
    %v6136 = vsub.s32 2, %v6135
    %v6137 = vrot.slane %v2044, %v6136
    %6139 = vbcast.lane.b32.xlu0 %v6137, 256
    %v6140 = vpop.permute.xlu0 %6139
    %s6142 = sor.u32 256, 8
    %6143 = vbcast.lane.b32.xlu0 %v6137, %s6142
    %v6144 = vpop.permute.xlu0 %6143
    %v6145 = vlaneseq
    %v6146 = vshrl.u32 %v6145, 7
    %v6147 = vsub.s32 3, %v6146
    %v6148 = vrot.slane %v2044, %v6147
    %6150 = vbcast.lane.b32.xlu0 %v6148, 256
    %v6151 = vpop.permute.xlu0 %6150
    %s6153 = sor.u32 256, 8
    %6154 = vbcast.lane.b32.xlu0 %v6148, %s6153
    %v6155 = vpop.permute.xlu0 %6154
    %v6156 = vlaneseq
    %v6157 = vshrl.u32 %v6156, 7
    %v6158 = vsub.s32 4, %v6157
    %v6159 = vrot.slane %v2044, %v6158
    %6161 = vbcast.lane.b32.xlu0 %v6159, 256
    %v6162 = vpop.permute.xlu0 %6161
    %s6164 = sor.u32 256, 8
    %6165 = vbcast.lane.b32.xlu0 %v6159, %s6164
    %v6166 = vpop.permute.xlu0 %6165
    %v6167 = vlaneseq
    %v6168 = vshrl.u32 %v6167, 7
    %v6169 = vsub.s32 5, %v6168
    %v6170 = vrot.slane %v2044, %v6169
    %6172 = vbcast.lane.b32.xlu0 %v6170, 256
    %v6173 = vpop.permute.xlu0 %6172
    %s6175 = sor.u32 256, 8
    %6176 = vbcast.lane.b32.xlu0 %v6170, %s6175
    %v6177 = vpop.permute.xlu0 %6176
    %v6178 = vlaneseq
    %v6179 = vshrl.u32 %v6178, 7
    %v6180 = vsub.s32 6, %v6179
    %v6181 = vrot.slane %v2044, %v6180
    %6183 = vbcast.lane.b32.xlu0 %v6181, 256
    %v6184 = vpop.permute.xlu0 %6183
    %s6186 = sor.u32 256, 8
    %6187 = vbcast.lane.b32.xlu0 %v6181, %s6186
    %v6188 = vpop.permute.xlu0 %6187
    %v6189 = vlaneseq
    %v6190 = vshrl.u32 %v6189, 7
    %v6191 = vsub.s32 7, %v6190
    %v6192 = vrot.slane %v2044, %v6191
    %6194 = vbcast.lane.b32.xlu0 %v6192, 256
    %v6195 = vpop.permute.xlu0 %6194
    %s6197 = sor.u32 256, 8
    %6198 = vbcast.lane.b32.xlu0 %v6192, %s6197
    %v6199 = vpop.permute.xlu0 %6198
    %v6200 = vlaneseq
    %v6201 = vshrl.u32 %v6200, 7
    %v6202 = vsub.s32 0, %v6201
    %v6203 = vrot.slane %v2045, %v6202
    %6205 = vbcast.lane.b32.xlu0 %v6203, 256
    %v6206 = vpop.permute.xlu0 %6205
    %s6208 = sor.u32 256, 8
    %6209 = vbcast.lane.b32.xlu0 %v6203, %s6208
    %v6210 = vpop.permute.xlu0 %6209
    %v6211 = vlaneseq
    %v6212 = vshrl.u32 %v6211, 7
    %v6213 = vsub.s32 1, %v6212
    %v6214 = vrot.slane %v2045, %v6213
    %6216 = vbcast.lane.b32.xlu0 %v6214, 256
    %v6217 = vpop.permute.xlu0 %6216
    %s6219 = sor.u32 256, 8
    %6220 = vbcast.lane.b32.xlu0 %v6214, %s6219
    %v6221 = vpop.permute.xlu0 %6220
    %v6222 = vlaneseq
    %v6223 = vshrl.u32 %v6222, 7
    %v6224 = vsub.s32 2, %v6223
    %v6225 = vrot.slane %v2045, %v6224
    %6227 = vbcast.lane.b32.xlu0 %v6225, 256
    %v6228 = vpop.permute.xlu0 %6227
    %s6230 = sor.u32 256, 8
    %6231 = vbcast.lane.b32.xlu0 %v6225, %s6230
    %v6232 = vpop.permute.xlu0 %6231
    %v6233 = vlaneseq
    %v6234 = vshrl.u32 %v6233, 7
    %v6235 = vsub.s32 3, %v6234
    %v6236 = vrot.slane %v2045, %v6235
    %6238 = vbcast.lane.b32.xlu0 %v6236, 256
    %v6239 = vpop.permute.xlu0 %6238
    %s6241 = sor.u32 256, 8
    %6242 = vbcast.lane.b32.xlu0 %v6236, %s6241
    %v6243 = vpop.permute.xlu0 %6242
    %v6244 = vlaneseq
    %v6245 = vshrl.u32 %v6244, 7
    %v6246 = vsub.s32 4, %v6245
    %v6247 = vrot.slane %v2045, %v6246
    %6249 = vbcast.lane.b32.xlu0 %v6247, 256
    %v6250 = vpop.permute.xlu0 %6249
    %s6252 = sor.u32 256, 8
    %6253 = vbcast.lane.b32.xlu0 %v6247, %s6252
    %v6254 = vpop.permute.xlu0 %6253
    %v6255 = vlaneseq
    %v6256 = vshrl.u32 %v6255, 7
    %v6257 = vsub.s32 5, %v6256
    %v6258 = vrot.slane %v2045, %v6257
    %6260 = vbcast.lane.b32.xlu0 %v6258, 256
    %v6261 = vpop.permute.xlu0 %6260
    %s6263 = sor.u32 256, 8
    %6264 = vbcast.lane.b32.xlu0 %v6258, %s6263
    %v6265 = vpop.permute.xlu0 %6264
    %v6266 = vlaneseq
    %v6267 = vshrl.u32 %v6266, 7
    %v6268 = vsub.s32 6, %v6267
    %v6269 = vrot.slane %v2045, %v6268
    %6271 = vbcast.lane.b32.xlu0 %v6269, 256
    %v6272 = vpop.permute.xlu0 %6271
    %s6274 = sor.u32 256, 8
    %6275 = vbcast.lane.b32.xlu0 %v6269, %s6274
    %v6276 = vpop.permute.xlu0 %6275
    %v6277 = vlaneseq
    %v6278 = vshrl.u32 %v6277, 7
    %v6279 = vsub.s32 7, %v6278
    %v6280 = vrot.slane %v2045, %v6279
    %6282 = vbcast.lane.b32.xlu0 %v6280, 256
    %v6283 = vpop.permute.xlu0 %6282
    %s6285 = sor.u32 256, 8
    %6286 = vbcast.lane.b32.xlu0 %v6280, %s6285
    %v6287 = vpop.permute.xlu0 %6286
    %v6288 = vlaneseq
    %v6289 = vshrl.u32 %v6288, 7
    %v6290 = vsub.s32 0, %v6289
    %v6291 = vrot.slane %v2046, %v6290
    %6293 = vbcast.lane.b32.xlu0 %v6291, 256
    %v6294 = vpop.permute.xlu0 %6293
    %s6296 = sor.u32 256, 8
    %6297 = vbcast.lane.b32.xlu0 %v6291, %s6296
    %v6298 = vpop.permute.xlu0 %6297
    %v6299 = vlaneseq
    %v6300 = vshrl.u32 %v6299, 7
    %v6301 = vsub.s32 1, %v6300
    %v6302 = vrot.slane %v2046, %v6301
    %6304 = vbcast.lane.b32.xlu0 %v6302, 256
    %v6305 = vpop.permute.xlu0 %6304
    %s6307 = sor.u32 256, 8
    %6308 = vbcast.lane.b32.xlu0 %v6302, %s6307
    %v6309 = vpop.permute.xlu0 %6308
    %v6310 = vlaneseq
    %v6311 = vshrl.u32 %v6310, 7
    %v6312 = vsub.s32 2, %v6311
    %v6313 = vrot.slane %v2046, %v6312
    %6315 = vbcast.lane.b32.xlu0 %v6313, 256
    %v6316 = vpop.permute.xlu0 %6315
    %s6318 = sor.u32 256, 8
    %6319 = vbcast.lane.b32.xlu0 %v6313, %s6318
    %v6320 = vpop.permute.xlu0 %6319
    %v6321 = vlaneseq
    %v6322 = vshrl.u32 %v6321, 7
    %v6323 = vsub.s32 3, %v6322
    %v6324 = vrot.slane %v2046, %v6323
    %6326 = vbcast.lane.b32.xlu0 %v6324, 256
    %v6327 = vpop.permute.xlu0 %6326
    %s6329 = sor.u32 256, 8
    %6330 = vbcast.lane.b32.xlu0 %v6324, %s6329
    %v6331 = vpop.permute.xlu0 %6330
    %v6332 = vlaneseq
    %v6333 = vshrl.u32 %v6332, 7
    %v6334 = vsub.s32 4, %v6333
    %v6335 = vrot.slane %v2046, %v6334
    %6337 = vbcast.lane.b32.xlu0 %v6335, 256
    %v6338 = vpop.permute.xlu0 %6337
    %s6340 = sor.u32 256, 8
    %6341 = vbcast.lane.b32.xlu0 %v6335, %s6340
    %v6342 = vpop.permute.xlu0 %6341
    %v6343 = vlaneseq
    %v6344 = vshrl.u32 %v6343, 7
    %v6345 = vsub.s32 5, %v6344
    %v6346 = vrot.slane %v2046, %v6345
    %6348 = vbcast.lane.b32.xlu0 %v6346, 256
    %v6349 = vpop.permute.xlu0 %6348
    %s6351 = sor.u32 256, 8
    %6352 = vbcast.lane.b32.xlu0 %v6346, %s6351
    %v6353 = vpop.permute.xlu0 %6352
    %v6354 = vlaneseq
    %v6355 = vshrl.u32 %v6354, 7
    %v6356 = vsub.s32 6, %v6355
    %v6357 = vrot.slane %v2046, %v6356
    %6359 = vbcast.lane.b32.xlu0 %v6357, 256
    %v6360 = vpop.permute.xlu0 %6359
    %s6362 = sor.u32 256, 8
    %6363 = vbcast.lane.b32.xlu0 %v6357, %s6362
    %v6364 = vpop.permute.xlu0 %6363
    %v6365 = vlaneseq
    %v6366 = vshrl.u32 %v6365, 7
    %v6367 = vsub.s32 7, %v6366
    %v6368 = vrot.slane %v2046, %v6367
    %6370 = vbcast.lane.b32.xlu0 %v6368, 256
    %v6371 = vpop.permute.xlu0 %6370
    %s6373 = sor.u32 256, 8
    %6374 = vbcast.lane.b32.xlu0 %v6368, %s6373
    %v6375 = vpop.permute.xlu0 %6374
    %v6376 = vlaneseq
    %v6377 = vshrl.u32 %v6376, 7
    %v6378 = vsub.s32 0, %v6377
    %v6379 = vrot.slane %v2047, %v6378
    %6381 = vbcast.lane.b32.xlu0 %v6379, 256
    %v6382 = vpop.permute.xlu0 %6381
    %s6384 = sor.u32 256, 8
    %6385 = vbcast.lane.b32.xlu0 %v6379, %s6384
    %v6386 = vpop.permute.xlu0 %6385
    %v6387 = vlaneseq
    %v6388 = vshrl.u32 %v6387, 7
    %v6389 = vsub.s32 1, %v6388
    %v6390 = vrot.slane %v2047, %v6389
    %6392 = vbcast.lane.b32.xlu0 %v6390, 256
    %v6393 = vpop.permute.xlu0 %6392
    %s6395 = sor.u32 256, 8
    %6396 = vbcast.lane.b32.xlu0 %v6390, %s6395
    %v6397 = vpop.permute.xlu0 %6396
    %v6398 = vlaneseq
    %v6399 = vshrl.u32 %v6398, 7
    %v6400 = vsub.s32 2, %v6399
    %v6401 = vrot.slane %v2047, %v6400
    %6403 = vbcast.lane.b32.xlu0 %v6401, 256
    %v6404 = vpop.permute.xlu0 %6403
    %s6406 = sor.u32 256, 8
    %6407 = vbcast.lane.b32.xlu0 %v6401, %s6406
    %v6408 = vpop.permute.xlu0 %6407
    %v6409 = vlaneseq
    %v6410 = vshrl.u32 %v6409, 7
    %v6411 = vsub.s32 3, %v6410
    %v6412 = vrot.slane %v2047, %v6411
    %6414 = vbcast.lane.b32.xlu0 %v6412, 256
    %v6415 = vpop.permute.xlu0 %6414
    %s6417 = sor.u32 256, 8
    %6418 = vbcast.lane.b32.xlu0 %v6412, %s6417
    %v6419 = vpop.permute.xlu0 %6418
    %v6420 = vlaneseq
    %v6421 = vshrl.u32 %v6420, 7
    %v6422 = vsub.s32 4, %v6421
    %v6423 = vrot.slane %v2047, %v6422
    %6425 = vbcast.lane.b32.xlu0 %v6423, 256
    %v6426 = vpop.permute.xlu0 %6425
    %s6428 = sor.u32 256, 8
    %6429 = vbcast.lane.b32.xlu0 %v6423, %s6428
    %v6430 = vpop.permute.xlu0 %6429
    %v6431 = vlaneseq
    %v6432 = vshrl.u32 %v6431, 7
    %v6433 = vsub.s32 5, %v6432
    %v6434 = vrot.slane %v2047, %v6433
    %6436 = vbcast.lane.b32.xlu0 %v6434, 256
    %v6437 = vpop.permute.xlu0 %6436
    %s6439 = sor.u32 256, 8
    %6440 = vbcast.lane.b32.xlu0 %v6434, %s6439
    %v6441 = vpop.permute.xlu0 %6440
    %v6442 = vlaneseq
    %v6443 = vshrl.u32 %v6442, 7
    %v6444 = vsub.s32 6, %v6443
    %v6445 = vrot.slane %v2047, %v6444
    %6447 = vbcast.lane.b32.xlu0 %v6445, 256
    %v6448 = vpop.permute.xlu0 %6447
    %s6450 = sor.u32 256, 8
    %6451 = vbcast.lane.b32.xlu0 %v6445, %s6450
    %v6452 = vpop.permute.xlu0 %6451
    %v6453 = vlaneseq
    %v6454 = vshrl.u32 %v6453, 7
    %v6455 = vsub.s32 7, %v6454
    %v6456 = vrot.slane %v2047, %v6455
    %6458 = vbcast.lane.b32.xlu0 %v6456, 256
    %v6459 = vpop.permute.xlu0 %6458
    %s6461 = sor.u32 256, 8
    %6462 = vbcast.lane.b32.xlu0 %v6456, %s6461
    %v6463 = vpop.permute.xlu0 %6462
    %v6464 = vsub.f32 %v3654, 1.0
    %v6465 = vsub.f32 %v3658, 1.0
    %v6466 = vsub.f32 %v3665, 1.0
    %v6467 = vsub.f32 %v3669, 1.0
    %v6468 = vsub.f32 %v3676, 1.0
    %v6469 = vsub.f32 %v3680, 1.0
    %v6470 = vsub.f32 %v3687, 1.0
    %v6471 = vsub.f32 %v3691, 1.0
    %v6472 = vsub.f32 %v3698, 1.0
    %v6473 = vsub.f32 %v3702, 1.0
    %v6474 = vsub.f32 %v3709, 1.0
    %v6475 = vsub.f32 %v3713, 1.0
    %v6476 = vsub.f32 %v3720, 1.0
    %v6477 = vsub.f32 %v3724, 1.0
    %v6478 = vsub.f32 %v3731, 1.0
    %v6479 = vsub.f32 %v3735, 1.0
    %v6480 = vsub.f32 %v3742, 1.0
    %v6481 = vsub.f32 %v3746, 1.0
    %v6482 = vsub.f32 %v3753, 1.0
    %v6483 = vsub.f32 %v3757, 1.0
    %v6484 = vsub.f32 %v3764, 1.0
    %v6485 = vsub.f32 %v3768, 1.0
    %v6486 = vsub.f32 %v3775, 1.0
    %v6487 = vsub.f32 %v3779, 1.0
    %v6488 = vsub.f32 %v3786, 1.0
    %v6489 = vsub.f32 %v3790, 1.0
    %v6490 = vsub.f32 %v3797, 1.0
    %v6491 = vsub.f32 %v3801, 1.0
    %v6492 = vsub.f32 %v3808, 1.0
    %v6493 = vsub.f32 %v3812, 1.0
    %v6494 = vsub.f32 %v3819, 1.0
    %v6495 = vsub.f32 %v3823, 1.0
    %v6496 = vsub.f32 %v3830, 1.0
    %v6497 = vsub.f32 %v3834, 1.0
    %v6498 = vsub.f32 %v3841, 1.0
    %v6499 = vsub.f32 %v3845, 1.0
    %v6500 = vsub.f32 %v3852, 1.0
    %v6501 = vsub.f32 %v3856, 1.0
    %v6502 = vsub.f32 %v3863, 1.0
    %v6503 = vsub.f32 %v3867, 1.0
    %v6504 = vsub.f32 %v3874, 1.0
    %v6505 = vsub.f32 %v3878, 1.0
    %v6506 = vsub.f32 %v3885, 1.0
    %v6507 = vsub.f32 %v3889, 1.0
    %v6508 = vsub.f32 %v3896, 1.0
    %v6509 = vsub.f32 %v3900, 1.0
    %v6510 = vsub.f32 %v3907, 1.0
    %v6511 = vsub.f32 %v3911, 1.0
    %v6512 = vsub.f32 %v3918, 1.0
    %v6513 = vsub.f32 %v3922, 1.0
    %v6514 = vsub.f32 %v3929, 1.0
    %v6515 = vsub.f32 %v3933, 1.0
    %v6516 = vsub.f32 %v3940, 1.0
    %v6517 = vsub.f32 %v3944, 1.0
    %v6518 = vsub.f32 %v3951, 1.0
    %v6519 = vsub.f32 %v3955, 1.0
    %v6520 = vsub.f32 %v3962, 1.0
    %v6521 = vsub.f32 %v3966, 1.0
    %v6522 = vsub.f32 %v3973, 1.0
    %v6523 = vsub.f32 %v3977, 1.0
    %v6524 = vsub.f32 %v3984, 1.0
    %v6525 = vsub.f32 %v3988, 1.0
    %v6526 = vsub.f32 %v3995, 1.0
    %v6527 = vsub.f32 %v3999, 1.0
    %v6528 = vsub.f32 %v4006, 1.0
    %v6529 = vsub.f32 %v4010, 1.0
    %v6530 = vsub.f32 %v4017, 1.0
    %v6531 = vsub.f32 %v4021, 1.0
    %v6532 = vsub.f32 %v4028, 1.0
    %v6533 = vsub.f32 %v4032, 1.0
    %v6534 = vsub.f32 %v4039, 1.0
    %v6535 = vsub.f32 %v4043, 1.0
    %v6536 = vsub.f32 %v4050, 1.0
    %v6537 = vsub.f32 %v4054, 1.0
    %v6538 = vsub.f32 %v4061, 1.0
    %v6539 = vsub.f32 %v4065, 1.0
    %v6540 = vsub.f32 %v4072, 1.0
    %v6541 = vsub.f32 %v4076, 1.0
    %v6542 = vsub.f32 %v4083, 1.0
    %v6543 = vsub.f32 %v4087, 1.0
    %v6544 = vsub.f32 %v4094, 1.0
    %v6545 = vsub.f32 %v4098, 1.0
    %v6546 = vsub.f32 %v4105, 1.0
    %v6547 = vsub.f32 %v4109, 1.0
    %v6548 = vsub.f32 %v4116, 1.0
    %v6549 = vsub.f32 %v4120, 1.0
    %v6550 = vsub.f32 %v4127, 1.0
    %v6551 = vsub.f32 %v4131, 1.0
    %v6552 = vsub.f32 %v4138, 1.0
    %v6553 = vsub.f32 %v4142, 1.0
    %v6554 = vsub.f32 %v4149, 1.0
    %v6555 = vsub.f32 %v4153, 1.0
    %v6556 = vsub.f32 %v4160, 1.0
    %v6557 = vsub.f32 %v4164, 1.0
    %v6558 = vsub.f32 %v4171, 1.0
    %v6559 = vsub.f32 %v4175, 1.0
    %v6560 = vsub.f32 %v4182, 1.0
    %v6561 = vsub.f32 %v4186, 1.0
    %v6562 = vsub.f32 %v4193, 1.0
    %v6563 = vsub.f32 %v4197, 1.0
    %v6564 = vsub.f32 %v4204, 1.0
    %v6565 = vsub.f32 %v4208, 1.0
    %v6566 = vsub.f32 %v4215, 1.0
    %v6567 = vsub.f32 %v4219, 1.0
    %v6568 = vsub.f32 %v4226, 1.0
    %v6569 = vsub.f32 %v4230, 1.0
    %v6570 = vsub.f32 %v4237, 1.0
    %v6571 = vsub.f32 %v4241, 1.0
    %v6572 = vsub.f32 %v4248, 1.0
    %v6573 = vsub.f32 %v4252, 1.0
    %v6574 = vsub.f32 %v4259, 1.0
    %v6575 = vsub.f32 %v4263, 1.0
    %v6576 = vsub.f32 %v4270, 1.0
    %v6577 = vsub.f32 %v4274, 1.0
    %v6578 = vsub.f32 %v4281, 1.0
    %v6579 = vsub.f32 %v4285, 1.0
    %v6580 = vsub.f32 %v4292, 1.0
    %v6581 = vsub.f32 %v4296, 1.0
    %v6582 = vsub.f32 %v4303, 1.0
    %v6583 = vsub.f32 %v4307, 1.0
    %v6584 = vsub.f32 %v4314, 1.0
    %v6585 = vsub.f32 %v4318, 1.0
    %v6586 = vsub.f32 %v4325, 1.0
    %v6587 = vsub.f32 %v4329, 1.0
    %v6588 = vsub.f32 %v4336, 1.0
    %v6589 = vsub.f32 %v4340, 1.0
    %v6590 = vsub.f32 %v4347, 1.0
    %v6591 = vsub.f32 %v4351, 1.0
    %v6592 = vsub.f32 %v4358, 1.0
    %v6593 = vsub.f32 %v4362, 1.0
    %v6594 = vsub.f32 %v4369, 1.0
    %v6595 = vsub.f32 %v4373, 1.0
    %v6596 = vsub.f32 %v4380, 1.0
    %v6597 = vsub.f32 %v4384, 1.0
    %v6598 = vsub.f32 %v4391, 1.0
    %v6599 = vsub.f32 %v4395, 1.0
    %v6600 = vsub.f32 %v4402, 1.0
    %v6601 = vsub.f32 %v4406, 1.0
    %v6602 = vsub.f32 %v4413, 1.0
    %v6603 = vsub.f32 %v4417, 1.0
    %v6604 = vsub.f32 %v4424, 1.0
    %v6605 = vsub.f32 %v4428, 1.0
    %v6606 = vsub.f32 %v4435, 1.0
    %v6607 = vsub.f32 %v4439, 1.0
    %v6608 = vsub.f32 %v4446, 1.0
    %v6609 = vsub.f32 %v4450, 1.0
    %v6610 = vsub.f32 %v4457, 1.0
    %v6611 = vsub.f32 %v4461, 1.0
    %v6612 = vsub.f32 %v4468, 1.0
    %v6613 = vsub.f32 %v4472, 1.0
    %v6614 = vsub.f32 %v4479, 1.0
    %v6615 = vsub.f32 %v4483, 1.0
    %v6616 = vsub.f32 %v4490, 1.0
    %v6617 = vsub.f32 %v4494, 1.0
    %v6618 = vsub.f32 %v4501, 1.0
    %v6619 = vsub.f32 %v4505, 1.0
    %v6620 = vsub.f32 %v4512, 1.0
    %v6621 = vsub.f32 %v4516, 1.0
    %v6622 = vsub.f32 %v4523, 1.0
    %v6623 = vsub.f32 %v4527, 1.0
    %v6624 = vsub.f32 %v4534, 1.0
    %v6625 = vsub.f32 %v4538, 1.0
    %v6626 = vsub.f32 %v4545, 1.0
    %v6627 = vsub.f32 %v4549, 1.0
    %v6628 = vsub.f32 %v4556, 1.0
    %v6629 = vsub.f32 %v4560, 1.0
    %v6630 = vsub.f32 %v4567, 1.0
    %v6631 = vsub.f32 %v4571, 1.0
    %v6632 = vsub.f32 %v4578, 1.0
    %v6633 = vsub.f32 %v4582, 1.0
    %v6634 = vsub.f32 %v4589, 1.0
    %v6635 = vsub.f32 %v4593, 1.0
    %v6636 = vsub.f32 %v4600, 1.0
    %v6637 = vsub.f32 %v4604, 1.0
    %v6638 = vsub.f32 %v4611, 1.0
    %v6639 = vsub.f32 %v4615, 1.0
    %v6640 = vsub.f32 %v4622, 1.0
    %v6641 = vsub.f32 %v4626, 1.0
    %v6642 = vsub.f32 %v4633, 1.0
    %v6643 = vsub.f32 %v4637, 1.0
    %v6644 = vsub.f32 %v4644, 1.0
    %v6645 = vsub.f32 %v4648, 1.0
    %v6646 = vsub.f32 %v4655, 1.0
    %v6647 = vsub.f32 %v4659, 1.0
    %v6648 = vsub.f32 %v4666, 1.0
    %v6649 = vsub.f32 %v4670, 1.0
    %v6650 = vsub.f32 %v4677, 1.0
    %v6651 = vsub.f32 %v4681, 1.0
    %v6652 = vsub.f32 %v4688, 1.0
    %v6653 = vsub.f32 %v4692, 1.0
    %v6654 = vsub.f32 %v4699, 1.0
    %v6655 = vsub.f32 %v4703, 1.0
    %v6656 = vsub.f32 %v4710, 1.0
    %v6657 = vsub.f32 %v4714, 1.0
    %v6658 = vsub.f32 %v4721, 1.0
    %v6659 = vsub.f32 %v4725, 1.0
    %v6660 = vsub.f32 %v4732, 1.0
    %v6661 = vsub.f32 %v4736, 1.0
    %v6662 = vsub.f32 %v4743, 1.0
    %v6663 = vsub.f32 %v4747, 1.0
    %v6664 = vsub.f32 %v4754, 1.0
    %v6665 = vsub.f32 %v4758, 1.0
    %v6666 = vsub.f32 %v4765, 1.0
    %v6667 = vsub.f32 %v4769, 1.0
    %v6668 = vsub.f32 %v4776, 1.0
    %v6669 = vsub.f32 %v4780, 1.0
    %v6670 = vsub.f32 %v4787, 1.0
    %v6671 = vsub.f32 %v4791, 1.0
    %v6672 = vsub.f32 %v4798, 1.0
    %v6673 = vsub.f32 %v4802, 1.0
    %v6674 = vsub.f32 %v4809, 1.0
    %v6675 = vsub.f32 %v4813, 1.0
    %v6676 = vsub.f32 %v4820, 1.0
    %v6677 = vsub.f32 %v4824, 1.0
    %v6678 = vsub.f32 %v4831, 1.0
    %v6679 = vsub.f32 %v4835, 1.0
    %v6680 = vsub.f32 %v4842, 1.0
    %v6681 = vsub.f32 %v4846, 1.0
    %v6682 = vsub.f32 %v4853, 1.0
    %v6683 = vsub.f32 %v4857, 1.0
    %v6684 = vsub.f32 %v4864, 1.0
    %v6685 = vsub.f32 %v4868, 1.0
    %v6686 = vsub.f32 %v4875, 1.0
    %v6687 = vsub.f32 %v4879, 1.0
    %v6688 = vsub.f32 %v4886, 1.0
    %v6689 = vsub.f32 %v4890, 1.0
    %v6690 = vsub.f32 %v4897, 1.0
    %v6691 = vsub.f32 %v4901, 1.0
    %v6692 = vsub.f32 %v4908, 1.0
    %v6693 = vsub.f32 %v4912, 1.0
    %v6694 = vsub.f32 %v4919, 1.0
    %v6695 = vsub.f32 %v4923, 1.0
    %v6696 = vsub.f32 %v4930, 1.0
    %v6697 = vsub.f32 %v4934, 1.0
    %v6698 = vsub.f32 %v4941, 1.0
    %v6699 = vsub.f32 %v4945, 1.0
    %v6700 = vsub.f32 %v4952, 1.0
    %v6701 = vsub.f32 %v4956, 1.0
    %v6702 = vsub.f32 %v4963, 1.0
    %v6703 = vsub.f32 %v4967, 1.0
    %v6704 = vsub.f32 %v4974, 1.0
    %v6705 = vsub.f32 %v4978, 1.0
    %v6706 = vsub.f32 %v4985, 1.0
    %v6707 = vsub.f32 %v4989, 1.0
    %v6708 = vsub.f32 %v4996, 1.0
    %v6709 = vsub.f32 %v5000, 1.0
    %v6710 = vsub.f32 %v5007, 1.0
    %v6711 = vsub.f32 %v5011, 1.0
    %v6712 = vsub.f32 %v5018, 1.0
    %v6713 = vsub.f32 %v5022, 1.0
    %v6714 = vsub.f32 %v5029, 1.0
    %v6715 = vsub.f32 %v5033, 1.0
    %v6716 = vsub.f32 %v5040, 1.0
    %v6717 = vsub.f32 %v5044, 1.0
    %v6718 = vsub.f32 %v5051, 1.0
    %v6719 = vsub.f32 %v5055, 1.0
    %v6720 = vsub.f32 %v5062, 1.0
    %v6721 = vsub.f32 %v5066, 1.0
    %v6722 = vsub.f32 %v5073, 1.0
    %v6723 = vsub.f32 %v5077, 1.0
    %v6724 = vsub.f32 %v5084, 1.0
    %v6725 = vsub.f32 %v5088, 1.0
    %v6726 = vsub.f32 %v5095, 1.0
    %v6727 = vsub.f32 %v5099, 1.0
    %v6728 = vsub.f32 %v5106, 1.0
    %v6729 = vsub.f32 %v5110, 1.0
    %v6730 = vsub.f32 %v5117, 1.0
    %v6731 = vsub.f32 %v5121, 1.0
    %v6732 = vsub.f32 %v5128, 1.0
    %v6733 = vsub.f32 %v5132, 1.0
    %v6734 = vsub.f32 %v5139, 1.0
    %v6735 = vsub.f32 %v5143, 1.0
    %v6736 = vsub.f32 %v5150, 1.0
    %v6737 = vsub.f32 %v5154, 1.0
    %v6738 = vsub.f32 %v5161, 1.0
    %v6739 = vsub.f32 %v5165, 1.0
    %v6740 = vsub.f32 %v5172, 1.0
    %v6741 = vsub.f32 %v5176, 1.0
    %v6742 = vsub.f32 %v5183, 1.0
    %v6743 = vsub.f32 %v5187, 1.0
    %v6744 = vsub.f32 %v5194, 1.0
    %v6745 = vsub.f32 %v5198, 1.0
    %v6746 = vsub.f32 %v5205, 1.0
    %v6747 = vsub.f32 %v5209, 1.0
    %v6748 = vsub.f32 %v5216, 1.0
    %v6749 = vsub.f32 %v5220, 1.0
    %v6750 = vsub.f32 %v5227, 1.0
    %v6751 = vsub.f32 %v5231, 1.0
    %v6752 = vsub.f32 %v5238, 1.0
    %v6753 = vsub.f32 %v5242, 1.0
    %v6754 = vsub.f32 %v5249, 1.0
    %v6755 = vsub.f32 %v5253, 1.0
    %v6756 = vsub.f32 %v5260, 1.0
    %v6757 = vsub.f32 %v5264, 1.0
    %v6758 = vsub.f32 %v5271, 1.0
    %v6759 = vsub.f32 %v5275, 1.0
    %v6760 = vsub.f32 %v5282, 1.0
    %v6761 = vsub.f32 %v5286, 1.0
    %v6762 = vsub.f32 %v5293, 1.0
    %v6763 = vsub.f32 %v5297, 1.0
    %v6764 = vsub.f32 %v5304, 1.0
    %v6765 = vsub.f32 %v5308, 1.0
    %v6766 = vsub.f32 %v5315, 1.0
    %v6767 = vsub.f32 %v5319, 1.0
    %v6768 = vsub.f32 %v5326, 1.0
    %v6769 = vsub.f32 %v5330, 1.0
    %v6770 = vsub.f32 %v5337, 1.0
    %v6771 = vsub.f32 %v5341, 1.0
    %v6772 = vsub.f32 %v5348, 1.0
    %v6773 = vsub.f32 %v5352, 1.0
    %v6774 = vsub.f32 %v5359, 1.0
    %v6775 = vsub.f32 %v5363, 1.0
    %v6776 = vsub.f32 %v5370, 1.0
    %v6777 = vsub.f32 %v5374, 1.0
    %v6778 = vsub.f32 %v5381, 1.0
    %v6779 = vsub.f32 %v5385, 1.0
    %v6780 = vsub.f32 %v5392, 1.0
    %v6781 = vsub.f32 %v5396, 1.0
    %v6782 = vsub.f32 %v5403, 1.0
    %v6783 = vsub.f32 %v5407, 1.0
    %v6784 = vsub.f32 %v5414, 1.0
    %v6785 = vsub.f32 %v5418, 1.0
    %v6786 = vsub.f32 %v5425, 1.0
    %v6787 = vsub.f32 %v5429, 1.0
    %v6788 = vsub.f32 %v5436, 1.0
    %v6789 = vsub.f32 %v5440, 1.0
    %v6790 = vsub.f32 %v5447, 1.0
    %v6791 = vsub.f32 %v5451, 1.0
    %v6792 = vsub.f32 %v5458, 1.0
    %v6793 = vsub.f32 %v5462, 1.0
    %v6794 = vsub.f32 %v5469, 1.0
    %v6795 = vsub.f32 %v5473, 1.0
    %v6796 = vsub.f32 %v5480, 1.0
    %v6797 = vsub.f32 %v5484, 1.0
    %v6798 = vsub.f32 %v5491, 1.0
    %v6799 = vsub.f32 %v5495, 1.0
    %v6800 = vsub.f32 %v5502, 1.0
    %v6801 = vsub.f32 %v5506, 1.0
    %v6802 = vsub.f32 %v5513, 1.0
    %v6803 = vsub.f32 %v5517, 1.0
    %v6804 = vsub.f32 %v5524, 1.0
    %v6805 = vsub.f32 %v5528, 1.0
    %v6806 = vsub.f32 %v5535, 1.0
    %v6807 = vsub.f32 %v5539, 1.0
    %v6808 = vsub.f32 %v5546, 1.0
    %v6809 = vsub.f32 %v5550, 1.0
    %v6810 = vsub.f32 %v5557, 1.0
    %v6811 = vsub.f32 %v5561, 1.0
    %v6812 = vsub.f32 %v5568, 1.0
    %v6813 = vsub.f32 %v5572, 1.0
    %v6814 = vsub.f32 %v5579, 1.0
    %v6815 = vsub.f32 %v5583, 1.0
    %v6816 = vsub.f32 %v5590, 1.0
    %v6817 = vsub.f32 %v5594, 1.0
    %v6818 = vsub.f32 %v5601, 1.0
    %v6819 = vsub.f32 %v5605, 1.0
    %v6820 = vsub.f32 %v5612, 1.0
    %v6821 = vsub.f32 %v5616, 1.0
    %v6822 = vsub.f32 %v5623, 1.0
    %v6823 = vsub.f32 %v5627, 1.0
    %v6824 = vsub.f32 %v5634, 1.0
    %v6825 = vsub.f32 %v5638, 1.0
    %v6826 = vsub.f32 %v5645, 1.0
    %v6827 = vsub.f32 %v5649, 1.0
    %v6828 = vsub.f32 %v5656, 1.0
    %v6829 = vsub.f32 %v5660, 1.0
    %v6830 = vsub.f32 %v5667, 1.0
    %v6831 = vsub.f32 %v5671, 1.0
    %v6832 = vsub.f32 %v5678, 1.0
    %v6833 = vsub.f32 %v5682, 1.0
    %v6834 = vsub.f32 %v5689, 1.0
    %v6835 = vsub.f32 %v5693, 1.0
    %v6836 = vsub.f32 %v5700, 1.0
    %v6837 = vsub.f32 %v5704, 1.0
    %v6838 = vsub.f32 %v5711, 1.0
    %v6839 = vsub.f32 %v5715, 1.0
    %v6840 = vsub.f32 %v5722, 1.0
    %v6841 = vsub.f32 %v5726, 1.0
    %v6842 = vsub.f32 %v5733, 1.0
    %v6843 = vsub.f32 %v5737, 1.0
    %v6844 = vsub.f32 %v5744, 1.0
    %v6845 = vsub.f32 %v5748, 1.0
    %v6846 = vsub.f32 %v5755, 1.0
    %v6847 = vsub.f32 %v5759, 1.0
    %v6848 = vsub.f32 %v5766, 1.0
    %v6849 = vsub.f32 %v5770, 1.0
    %v6850 = vsub.f32 %v5777, 1.0
    %v6851 = vsub.f32 %v5781, 1.0
    %v6852 = vsub.f32 %v5788, 1.0
    %v6853 = vsub.f32 %v5792, 1.0
    %v6854 = vsub.f32 %v5799, 1.0
    %v6855 = vsub.f32 %v5803, 1.0
    %v6856 = vsub.f32 %v5810, 1.0
    %v6857 = vsub.f32 %v5814, 1.0
    %v6858 = vsub.f32 %v5821, 1.0
    %v6859 = vsub.f32 %v5825, 1.0
    %v6860 = vsub.f32 %v5832, 1.0
    %v6861 = vsub.f32 %v5836, 1.0
    %v6862 = vsub.f32 %v5843, 1.0
    %v6863 = vsub.f32 %v5847, 1.0
    %v6864 = vsub.f32 %v5854, 1.0
    %v6865 = vsub.f32 %v5858, 1.0
    %v6866 = vsub.f32 %v5865, 1.0
    %v6867 = vsub.f32 %v5869, 1.0
    %v6868 = vsub.f32 %v5876, 1.0
    %v6869 = vsub.f32 %v5880, 1.0
    %v6870 = vsub.f32 %v5887, 1.0
    %v6871 = vsub.f32 %v5891, 1.0
    %v6872 = vsub.f32 %v5898, 1.0
    %v6873 = vsub.f32 %v5902, 1.0
    %v6874 = vsub.f32 %v5909, 1.0
    %v6875 = vsub.f32 %v5913, 1.0
    %v6876 = vsub.f32 %v5920, 1.0
    %v6877 = vsub.f32 %v5924, 1.0
    %v6878 = vsub.f32 %v5931, 1.0
    %v6879 = vsub.f32 %v5935, 1.0
    %v6880 = vsub.f32 %v5942, 1.0
    %v6881 = vsub.f32 %v5946, 1.0
    %v6882 = vsub.f32 %v5953, 1.0
    %v6883 = vsub.f32 %v5957, 1.0
    %v6884 = vsub.f32 %v5964, 1.0
    %v6885 = vsub.f32 %v5968, 1.0
    %v6886 = vsub.f32 %v5975, 1.0
    %v6887 = vsub.f32 %v5979, 1.0
    %v6888 = vsub.f32 %v5986, 1.0
    %v6889 = vsub.f32 %v5990, 1.0
    %v6890 = vsub.f32 %v5997, 1.0
    %v6891 = vsub.f32 %v6001, 1.0
    %v6892 = vsub.f32 %v6008, 1.0
    %v6893 = vsub.f32 %v6012, 1.0
    %v6894 = vsub.f32 %v6019, 1.0
    %v6895 = vsub.f32 %v6023, 1.0
    %v6896 = vsub.f32 %v6030, 1.0
    %v6897 = vsub.f32 %v6034, 1.0
    %v6898 = vsub.f32 %v6041, 1.0
    %v6899 = vsub.f32 %v6045, 1.0
    %v6900 = vsub.f32 %v6052, 1.0
    %v6901 = vsub.f32 %v6056, 1.0
    %v6902 = vsub.f32 %v6063, 1.0
    %v6903 = vsub.f32 %v6067, 1.0
    %v6904 = vsub.f32 %v6074, 1.0
    %v6905 = vsub.f32 %v6078, 1.0
    %v6906 = vsub.f32 %v6085, 1.0
    %v6907 = vsub.f32 %v6089, 1.0
    %v6908 = vsub.f32 %v6096, 1.0
    %v6909 = vsub.f32 %v6100, 1.0
    %v6910 = vsub.f32 %v6107, 1.0
    %v6911 = vsub.f32 %v6111, 1.0
    %v6912 = vsub.f32 %v6118, 1.0
    %v6913 = vsub.f32 %v6122, 1.0
    %v6914 = vsub.f32 %v6129, 1.0
    %v6915 = vsub.f32 %v6133, 1.0
    %v6916 = vsub.f32 %v6140, 1.0
    %v6917 = vsub.f32 %v6144, 1.0
    %v6918 = vsub.f32 %v6151, 1.0
    %v6919 = vsub.f32 %v6155, 1.0
    %v6920 = vsub.f32 %v6162, 1.0
    %v6921 = vsub.f32 %v6166, 1.0
    %v6922 = vsub.f32 %v6173, 1.0
    %v6923 = vsub.f32 %v6177, 1.0
    %v6924 = vsub.f32 %v6184, 1.0
    %v6925 = vsub.f32 %v6188, 1.0
    %v6926 = vsub.f32 %v6195, 1.0
    %v6927 = vsub.f32 %v6199, 1.0
    %v6928 = vsub.f32 %v6206, 1.0
    %v6929 = vsub.f32 %v6210, 1.0
    %v6930 = vsub.f32 %v6217, 1.0
    %v6931 = vsub.f32 %v6221, 1.0
    %v6932 = vsub.f32 %v6228, 1.0
    %v6933 = vsub.f32 %v6232, 1.0
    %v6934 = vsub.f32 %v6239, 1.0
    %v6935 = vsub.f32 %v6243, 1.0
    %v6936 = vsub.f32 %v6250, 1.0
    %v6937 = vsub.f32 %v6254, 1.0
    %v6938 = vsub.f32 %v6261, 1.0
    %v6939 = vsub.f32 %v6265, 1.0
    %v6940 = vsub.f32 %v6272, 1.0
    %v6941 = vsub.f32 %v6276, 1.0
    %v6942 = vsub.f32 %v6283, 1.0
    %v6943 = vsub.f32 %v6287, 1.0
    %v6944 = vsub.f32 %v6294, 1.0
    %v6945 = vsub.f32 %v6298, 1.0
    %v6946 = vsub.f32 %v6305, 1.0
    %v6947 = vsub.f32 %v6309, 1.0
    %v6948 = vsub.f32 %v6316, 1.0
    %v6949 = vsub.f32 %v6320, 1.0
    %v6950 = vsub.f32 %v6327, 1.0
    %v6951 = vsub.f32 %v6331, 1.0
    %v6952 = vsub.f32 %v6338, 1.0
    %v6953 = vsub.f32 %v6342, 1.0
    %v6954 = vsub.f32 %v6349, 1.0
    %v6955 = vsub.f32 %v6353, 1.0
    %v6956 = vsub.f32 %v6360, 1.0
    %v6957 = vsub.f32 %v6364, 1.0
    %v6958 = vsub.f32 %v6371, 1.0
    %v6959 = vsub.f32 %v6375, 1.0
    %v6960 = vsub.f32 %v6382, 1.0
    %v6961 = vsub.f32 %v6386, 1.0
    %v6962 = vsub.f32 %v6393, 1.0
    %v6963 = vsub.f32 %v6397, 1.0
    %v6964 = vsub.f32 %v6404, 1.0
    %v6965 = vsub.f32 %v6408, 1.0
    %v6966 = vsub.f32 %v6415, 1.0
    %v6967 = vsub.f32 %v6419, 1.0
    %v6968 = vsub.f32 %v6426, 1.0
    %v6969 = vsub.f32 %v6430, 1.0
    %v6970 = vsub.f32 %v6437, 1.0
    %v6971 = vsub.f32 %v6441, 1.0
    %v6972 = vsub.f32 %v6448, 1.0
    %v6973 = vsub.f32 %v6452, 1.0
    %v6974 = vsub.f32 %v6459, 1.0
    %v6975 = vsub.f32 %v6463, 1.0
    %v6976 = vmul.f32 %v6464, 1e+30
    %v6977 = vmul.f32 %v6465, 1e+30
    %v6978 = vmul.f32 %v6466, 1e+30
    %v6979 = vmul.f32 %v6467, 1e+30
    %v6980 = vmul.f32 %v6468, 1e+30
    %v6981 = vmul.f32 %v6469, 1e+30
    %v6982 = vmul.f32 %v6470, 1e+30
    %v6983 = vmul.f32 %v6471, 1e+30
    %v6984 = vmul.f32 %v6472, 1e+30
    %v6985 = vmul.f32 %v6473, 1e+30
    %v6986 = vmul.f32 %v6474, 1e+30
    %v6987 = vmul.f32 %v6475, 1e+30
    %v6988 = vmul.f32 %v6476, 1e+30
    %v6989 = vmul.f32 %v6477, 1e+30
    %v6990 = vmul.f32 %v6478, 1e+30
    %v6991 = vmul.f32 %v6479, 1e+30
    %v6992 = vmul.f32 %v6480, 1e+30
    %v6993 = vmul.f32 %v6481, 1e+30
    %v6994 = vmul.f32 %v6482, 1e+30
    %v6995 = vmul.f32 %v6483, 1e+30
    %v6996 = vmul.f32 %v6484, 1e+30
    %v6997 = vmul.f32 %v6485, 1e+30
    %v6998 = vmul.f32 %v6486, 1e+30
    %v6999 = vmul.f32 %v6487, 1e+30
    %v7000 = vmul.f32 %v6488, 1e+30
    %v7001 = vmul.f32 %v6489, 1e+30
    %v7002 = vmul.f32 %v6490, 1e+30
    %v7003 = vmul.f32 %v6491, 1e+30
    %v7004 = vmul.f32 %v6492, 1e+30
    %v7005 = vmul.f32 %v6493, 1e+30
    %v7006 = vmul.f32 %v6494, 1e+30
    %v7007 = vmul.f32 %v6495, 1e+30
    %v7008 = vmul.f32 %v6496, 1e+30
    %v7009 = vmul.f32 %v6497, 1e+30
    %v7010 = vmul.f32 %v6498, 1e+30
    %v7011 = vmul.f32 %v6499, 1e+30
    %v7012 = vmul.f32 %v6500, 1e+30
    %v7013 = vmul.f32 %v6501, 1e+30
    %v7014 = vmul.f32 %v6502, 1e+30
    %v7015 = vmul.f32 %v6503, 1e+30
    %v7016 = vmul.f32 %v6504, 1e+30
    %v7017 = vmul.f32 %v6505, 1e+30
    %v7018 = vmul.f32 %v6506, 1e+30
    %v7019 = vmul.f32 %v6507, 1e+30
    %v7020 = vmul.f32 %v6508, 1e+30
    %v7021 = vmul.f32 %v6509, 1e+30
    %v7022 = vmul.f32 %v6510, 1e+30
    %v7023 = vmul.f32 %v6511, 1e+30
    %v7024 = vmul.f32 %v6512, 1e+30
    %v7025 = vmul.f32 %v6513, 1e+30
    %v7026 = vmul.f32 %v6514, 1e+30
    %v7027 = vmul.f32 %v6515, 1e+30
    %v7028 = vmul.f32 %v6516, 1e+30
    %v7029 = vmul.f32 %v6517, 1e+30
    %v7030 = vmul.f32 %v6518, 1e+30
    %v7031 = vmul.f32 %v6519, 1e+30
    %v7032 = vmul.f32 %v6520, 1e+30
    %v7033 = vmul.f32 %v6521, 1e+30
    %v7034 = vmul.f32 %v6522, 1e+30
    %v7035 = vmul.f32 %v6523, 1e+30
    %v7036 = vmul.f32 %v6524, 1e+30
    %v7037 = vmul.f32 %v6525, 1e+30
    %v7038 = vmul.f32 %v6526, 1e+30
    %v7039 = vmul.f32 %v6527, 1e+30
    %v7040 = vmul.f32 %v6528, 1e+30
    %v7041 = vmul.f32 %v6529, 1e+30
    %v7042 = vmul.f32 %v6530, 1e+30
    %v7043 = vmul.f32 %v6531, 1e+30
    %v7044 = vmul.f32 %v6532, 1e+30
    %v7045 = vmul.f32 %v6533, 1e+30
    %v7046 = vmul.f32 %v6534, 1e+30
    %v7047 = vmul.f32 %v6535, 1e+30
    %v7048 = vmul.f32 %v6536, 1e+30
    %v7049 = vmul.f32 %v6537, 1e+30
    %v7050 = vmul.f32 %v6538, 1e+30
    %v7051 = vmul.f32 %v6539, 1e+30
    %v7052 = vmul.f32 %v6540, 1e+30
    %v7053 = vmul.f32 %v6541, 1e+30
    %v7054 = vmul.f32 %v6542, 1e+30
    %v7055 = vmul.f32 %v6543, 1e+30
    %v7056 = vmul.f32 %v6544, 1e+30
    %v7057 = vmul.f32 %v6545, 1e+30
    %v7058 = vmul.f32 %v6546, 1e+30
    %v7059 = vmul.f32 %v6547, 1e+30
    %v7060 = vmul.f32 %v6548, 1e+30
    %v7061 = vmul.f32 %v6549, 1e+30
    %v7062 = vmul.f32 %v6550, 1e+30
    %v7063 = vmul.f32 %v6551, 1e+30
    %v7064 = vmul.f32 %v6552, 1e+30
    %v7065 = vmul.f32 %v6553, 1e+30
    %v7066 = vmul.f32 %v6554, 1e+30
    %v7067 = vmul.f32 %v6555, 1e+30
    %v7068 = vmul.f32 %v6556, 1e+30
    %v7069 = vmul.f32 %v6557, 1e+30
    %v7070 = vmul.f32 %v6558, 1e+30
    %v7071 = vmul.f32 %v6559, 1e+30
    %v7072 = vmul.f32 %v6560, 1e+30
    %v7073 = vmul.f32 %v6561, 1e+30
    %v7074 = vmul.f32 %v6562, 1e+30
    %v7075 = vmul.f32 %v6563, 1e+30
    %v7076 = vmul.f32 %v6564, 1e+30
    %v7077 = vmul.f32 %v6565, 1e+30
    %v7078 = vmul.f32 %v6566, 1e+30
    %v7079 = vmul.f32 %v6567, 1e+30
    %v7080 = vmul.f32 %v6568, 1e+30
    %v7081 = vmul.f32 %v6569, 1e+30
    %v7082 = vmul.f32 %v6570, 1e+30
    %v7083 = vmul.f32 %v6571, 1e+30
    %v7084 = vmul.f32 %v6572, 1e+30
    %v7085 = vmul.f32 %v6573, 1e+30
    %v7086 = vmul.f32 %v6574, 1e+30
    %v7087 = vmul.f32 %v6575, 1e+30
    %v7088 = vmul.f32 %v6576, 1e+30
    %v7089 = vmul.f32 %v6577, 1e+30
    %v7090 = vmul.f32 %v6578, 1e+30
    %v7091 = vmul.f32 %v6579, 1e+30
    %v7092 = vmul.f32 %v6580, 1e+30
    %v7093 = vmul.f32 %v6581, 1e+30
    %v7094 = vmul.f32 %v6582, 1e+30
    %v7095 = vmul.f32 %v6583, 1e+30
    %v7096 = vmul.f32 %v6584, 1e+30
    %v7097 = vmul.f32 %v6585, 1e+30
    %v7098 = vmul.f32 %v6586, 1e+30
    %v7099 = vmul.f32 %v6587, 1e+30
    %v7100 = vmul.f32 %v6588, 1e+30
    %v7101 = vmul.f32 %v6589, 1e+30
    %v7102 = vmul.f32 %v6590, 1e+30
    %v7103 = vmul.f32 %v6591, 1e+30
    %v7104 = vmul.f32 %v6592, 1e+30
    %v7105 = vmul.f32 %v6593, 1e+30
    %v7106 = vmul.f32 %v6594, 1e+30
    %v7107 = vmul.f32 %v6595, 1e+30
    %v7108 = vmul.f32 %v6596, 1e+30
    %v7109 = vmul.f32 %v6597, 1e+30
    %v7110 = vmul.f32 %v6598, 1e+30
    %v7111 = vmul.f32 %v6599, 1e+30
    %v7112 = vmul.f32 %v6600, 1e+30
    %v7113 = vmul.f32 %v6601, 1e+30
    %v7114 = vmul.f32 %v6602, 1e+30
    %v7115 = vmul.f32 %v6603, 1e+30
    %v7116 = vmul.f32 %v6604, 1e+30
    %v7117 = vmul.f32 %v6605, 1e+30
    %v7118 = vmul.f32 %v6606, 1e+30
    %v7119 = vmul.f32 %v6607, 1e+30
    %v7120 = vmul.f32 %v6608, 1e+30
    %v7121 = vmul.f32 %v6609, 1e+30
    %v7122 = vmul.f32 %v6610, 1e+30
    %v7123 = vmul.f32 %v6611, 1e+30
    %v7124 = vmul.f32 %v6612, 1e+30
    %v7125 = vmul.f32 %v6613, 1e+30
    %v7126 = vmul.f32 %v6614, 1e+30
    %v7127 = vmul.f32 %v6615, 1e+30
    %v7128 = vmul.f32 %v6616, 1e+30
    %v7129 = vmul.f32 %v6617, 1e+30
    %v7130 = vmul.f32 %v6618, 1e+30
    %v7131 = vmul.f32 %v6619, 1e+30
    %v7132 = vmul.f32 %v6620, 1e+30
    %v7133 = vmul.f32 %v6621, 1e+30
    %v7134 = vmul.f32 %v6622, 1e+30
    %v7135 = vmul.f32 %v6623, 1e+30
    %v7136 = vmul.f32 %v6624, 1e+30
    %v7137 = vmul.f32 %v6625, 1e+30
    %v7138 = vmul.f32 %v6626, 1e+30
    %v7139 = vmul.f32 %v6627, 1e+30
    %v7140 = vmul.f32 %v6628, 1e+30
    %v7141 = vmul.f32 %v6629, 1e+30
    %v7142 = vmul.f32 %v6630, 1e+30
    %v7143 = vmul.f32 %v6631, 1e+30
    %v7144 = vmul.f32 %v6632, 1e+30
    %v7145 = vmul.f32 %v6633, 1e+30
    %v7146 = vmul.f32 %v6634, 1e+30
    %v7147 = vmul.f32 %v6635, 1e+30
    %v7148 = vmul.f32 %v6636, 1e+30
    %v7149 = vmul.f32 %v6637, 1e+30
    %v7150 = vmul.f32 %v6638, 1e+30
    %v7151 = vmul.f32 %v6639, 1e+30
    %v7152 = vmul.f32 %v6640, 1e+30
    %v7153 = vmul.f32 %v6641, 1e+30
    %v7154 = vmul.f32 %v6642, 1e+30
    %v7155 = vmul.f32 %v6643, 1e+30
    %v7156 = vmul.f32 %v6644, 1e+30
    %v7157 = vmul.f32 %v6645, 1e+30
    %v7158 = vmul.f32 %v6646, 1e+30
    %v7159 = vmul.f32 %v6647, 1e+30
    %v7160 = vmul.f32 %v6648, 1e+30
    %v7161 = vmul.f32 %v6649, 1e+30
    %v7162 = vmul.f32 %v6650, 1e+30
    %v7163 = vmul.f32 %v6651, 1e+30
    %v7164 = vmul.f32 %v6652, 1e+30
    %v7165 = vmul.f32 %v6653, 1e+30
    %v7166 = vmul.f32 %v6654, 1e+30
    %v7167 = vmul.f32 %v6655, 1e+30
    %v7168 = vmul.f32 %v6656, 1e+30
    %v7169 = vmul.f32 %v6657, 1e+30
    %v7170 = vmul.f32 %v6658, 1e+30
    %v7171 = vmul.f32 %v6659, 1e+30
    %v7172 = vmul.f32 %v6660, 1e+30
    %v7173 = vmul.f32 %v6661, 1e+30
    %v7174 = vmul.f32 %v6662, 1e+30
    %v7175 = vmul.f32 %v6663, 1e+30
    %v7176 = vmul.f32 %v6664, 1e+30
    %v7177 = vmul.f32 %v6665, 1e+30
    %v7178 = vmul.f32 %v6666, 1e+30
    %v7179 = vmul.f32 %v6667, 1e+30
    %v7180 = vmul.f32 %v6668, 1e+30
    %v7181 = vmul.f32 %v6669, 1e+30
    %v7182 = vmul.f32 %v6670, 1e+30
    %v7183 = vmul.f32 %v6671, 1e+30
    %v7184 = vmul.f32 %v6672, 1e+30
    %v7185 = vmul.f32 %v6673, 1e+30
    %v7186 = vmul.f32 %v6674, 1e+30
    %v7187 = vmul.f32 %v6675, 1e+30
    %v7188 = vmul.f32 %v6676, 1e+30
    %v7189 = vmul.f32 %v6677, 1e+30
    %v7190 = vmul.f32 %v6678, 1e+30
    %v7191 = vmul.f32 %v6679, 1e+30
    %v7192 = vmul.f32 %v6680, 1e+30
    %v7193 = vmul.f32 %v6681, 1e+30
    %v7194 = vmul.f32 %v6682, 1e+30
    %v7195 = vmul.f32 %v6683, 1e+30
    %v7196 = vmul.f32 %v6684, 1e+30
    %v7197 = vmul.f32 %v6685, 1e+30
    %v7198 = vmul.f32 %v6686, 1e+30
    %v7199 = vmul.f32 %v6687, 1e+30
    %v7200 = vmul.f32 %v6688, 1e+30
    %v7201 = vmul.f32 %v6689, 1e+30
    %v7202 = vmul.f32 %v6690, 1e+30
    %v7203 = vmul.f32 %v6691, 1e+30
    %v7204 = vmul.f32 %v6692, 1e+30
    %v7205 = vmul.f32 %v6693, 1e+30
    %v7206 = vmul.f32 %v6694, 1e+30
    %v7207 = vmul.f32 %v6695, 1e+30
    %v7208 = vmul.f32 %v6696, 1e+30
    %v7209 = vmul.f32 %v6697, 1e+30
    %v7210 = vmul.f32 %v6698, 1e+30
    %v7211 = vmul.f32 %v6699, 1e+30
    %v7212 = vmul.f32 %v6700, 1e+30
    %v7213 = vmul.f32 %v6701, 1e+30
    %v7214 = vmul.f32 %v6702, 1e+30
    %v7215 = vmul.f32 %v6703, 1e+30
    %v7216 = vmul.f32 %v6704, 1e+30
    %v7217 = vmul.f32 %v6705, 1e+30
    %v7218 = vmul.f32 %v6706, 1e+30
    %v7219 = vmul.f32 %v6707, 1e+30
    %v7220 = vmul.f32 %v6708, 1e+30
    %v7221 = vmul.f32 %v6709, 1e+30
    %v7222 = vmul.f32 %v6710, 1e+30
    %v7223 = vmul.f32 %v6711, 1e+30
    %v7224 = vmul.f32 %v6712, 1e+30
    %v7225 = vmul.f32 %v6713, 1e+30
    %v7226 = vmul.f32 %v6714, 1e+30
    %v7227 = vmul.f32 %v6715, 1e+30
    %v7228 = vmul.f32 %v6716, 1e+30
    %v7229 = vmul.f32 %v6717, 1e+30
    %v7230 = vmul.f32 %v6718, 1e+30
    %v7231 = vmul.f32 %v6719, 1e+30
    %v7232 = vmul.f32 %v6720, 1e+30
    %v7233 = vmul.f32 %v6721, 1e+30
    %v7234 = vmul.f32 %v6722, 1e+30
    %v7235 = vmul.f32 %v6723, 1e+30
    %v7236 = vmul.f32 %v6724, 1e+30
    %v7237 = vmul.f32 %v6725, 1e+30
    %v7238 = vmul.f32 %v6726, 1e+30
    %v7239 = vmul.f32 %v6727, 1e+30
    %v7240 = vmul.f32 %v6728, 1e+30
    %v7241 = vmul.f32 %v6729, 1e+30
    %v7242 = vmul.f32 %v6730, 1e+30
    %v7243 = vmul.f32 %v6731, 1e+30
    %v7244 = vmul.f32 %v6732, 1e+30
    %v7245 = vmul.f32 %v6733, 1e+30
    %v7246 = vmul.f32 %v6734, 1e+30
    %v7247 = vmul.f32 %v6735, 1e+30
    %v7248 = vmul.f32 %v6736, 1e+30
    %v7249 = vmul.f32 %v6737, 1e+30
    %v7250 = vmul.f32 %v6738, 1e+30
    %v7251 = vmul.f32 %v6739, 1e+30
    %v7252 = vmul.f32 %v6740, 1e+30
    %v7253 = vmul.f32 %v6741, 1e+30
    %v7254 = vmul.f32 %v6742, 1e+30
    %v7255 = vmul.f32 %v6743, 1e+30
    %v7256 = vmul.f32 %v6744, 1e+30
    %v7257 = vmul.f32 %v6745, 1e+30
    %v7258 = vmul.f32 %v6746, 1e+30
    %v7259 = vmul.f32 %v6747, 1e+30
    %v7260 = vmul.f32 %v6748, 1e+30
    %v7261 = vmul.f32 %v6749, 1e+30
    %v7262 = vmul.f32 %v6750, 1e+30
    %v7263 = vmul.f32 %v6751, 1e+30
    %v7264 = vmul.f32 %v6752, 1e+30
    %v7265 = vmul.f32 %v6753, 1e+30
    %v7266 = vmul.f32 %v6754, 1e+30
    %v7267 = vmul.f32 %v6755, 1e+30
    %v7268 = vmul.f32 %v6756, 1e+30
    %v7269 = vmul.f32 %v6757, 1e+30
    %v7270 = vmul.f32 %v6758, 1e+30
    %v7271 = vmul.f32 %v6759, 1e+30
    %v7272 = vmul.f32 %v6760, 1e+30
    %v7273 = vmul.f32 %v6761, 1e+30
    %v7274 = vmul.f32 %v6762, 1e+30
    %v7275 = vmul.f32 %v6763, 1e+30
    %v7276 = vmul.f32 %v6764, 1e+30
    %v7277 = vmul.f32 %v6765, 1e+30
    %v7278 = vmul.f32 %v6766, 1e+30
    %v7279 = vmul.f32 %v6767, 1e+30
    %v7280 = vmul.f32 %v6768, 1e+30
    %v7281 = vmul.f32 %v6769, 1e+30
    %v7282 = vmul.f32 %v6770, 1e+30
    %v7283 = vmul.f32 %v6771, 1e+30
    %v7284 = vmul.f32 %v6772, 1e+30
    %v7285 = vmul.f32 %v6773, 1e+30
    %v7286 = vmul.f32 %v6774, 1e+30
    %v7287 = vmul.f32 %v6775, 1e+30
    %v7288 = vmul.f32 %v6776, 1e+30
    %v7289 = vmul.f32 %v6777, 1e+30
    %v7290 = vmul.f32 %v6778, 1e+30
    %v7291 = vmul.f32 %v6779, 1e+30
    %v7292 = vmul.f32 %v6780, 1e+30
    %v7293 = vmul.f32 %v6781, 1e+30
    %v7294 = vmul.f32 %v6782, 1e+30
    %v7295 = vmul.f32 %v6783, 1e+30
    %v7296 = vmul.f32 %v6784, 1e+30
    %v7297 = vmul.f32 %v6785, 1e+30
    %v7298 = vmul.f32 %v6786, 1e+30
    %v7299 = vmul.f32 %v6787, 1e+30
    %v7300 = vmul.f32 %v6788, 1e+30
    %v7301 = vmul.f32 %v6789, 1e+30
    %v7302 = vmul.f32 %v6790, 1e+30
    %v7303 = vmul.f32 %v6791, 1e+30
    %v7304 = vmul.f32 %v6792, 1e+30
    %v7305 = vmul.f32 %v6793, 1e+30
    %v7306 = vmul.f32 %v6794, 1e+30
    %v7307 = vmul.f32 %v6795, 1e+30
    %v7308 = vmul.f32 %v6796, 1e+30
    %v7309 = vmul.f32 %v6797, 1e+30
    %v7310 = vmul.f32 %v6798, 1e+30
    %v7311 = vmul.f32 %v6799, 1e+30
    %v7312 = vmul.f32 %v6800, 1e+30
    %v7313 = vmul.f32 %v6801, 1e+30
    %v7314 = vmul.f32 %v6802, 1e+30
    %v7315 = vmul.f32 %v6803, 1e+30
    %v7316 = vmul.f32 %v6804, 1e+30
    %v7317 = vmul.f32 %v6805, 1e+30
    %v7318 = vmul.f32 %v6806, 1e+30
    %v7319 = vmul.f32 %v6807, 1e+30
    %v7320 = vmul.f32 %v6808, 1e+30
    %v7321 = vmul.f32 %v6809, 1e+30
    %v7322 = vmul.f32 %v6810, 1e+30
    %v7323 = vmul.f32 %v6811, 1e+30
    %v7324 = vmul.f32 %v6812, 1e+30
    %v7325 = vmul.f32 %v6813, 1e+30
    %v7326 = vmul.f32 %v6814, 1e+30
    %v7327 = vmul.f32 %v6815, 1e+30
    %v7328 = vmul.f32 %v6816, 1e+30
    %v7329 = vmul.f32 %v6817, 1e+30
    %v7330 = vmul.f32 %v6818, 1e+30
    %v7331 = vmul.f32 %v6819, 1e+30
    %v7332 = vmul.f32 %v6820, 1e+30
    %v7333 = vmul.f32 %v6821, 1e+30
    %v7334 = vmul.f32 %v6822, 1e+30
    %v7335 = vmul.f32 %v6823, 1e+30
    %v7336 = vmul.f32 %v6824, 1e+30
    %v7337 = vmul.f32 %v6825, 1e+30
    %v7338 = vmul.f32 %v6826, 1e+30
    %v7339 = vmul.f32 %v6827, 1e+30
    %v7340 = vmul.f32 %v6828, 1e+30
    %v7341 = vmul.f32 %v6829, 1e+30
    %v7342 = vmul.f32 %v6830, 1e+30
    %v7343 = vmul.f32 %v6831, 1e+30
    %v7344 = vmul.f32 %v6832, 1e+30
    %v7345 = vmul.f32 %v6833, 1e+30
    %v7346 = vmul.f32 %v6834, 1e+30
    %v7347 = vmul.f32 %v6835, 1e+30
    %v7348 = vmul.f32 %v6836, 1e+30
    %v7349 = vmul.f32 %v6837, 1e+30
    %v7350 = vmul.f32 %v6838, 1e+30
    %v7351 = vmul.f32 %v6839, 1e+30
    %v7352 = vmul.f32 %v6840, 1e+30
    %v7353 = vmul.f32 %v6841, 1e+30
    %v7354 = vmul.f32 %v6842, 1e+30
    %v7355 = vmul.f32 %v6843, 1e+30
    %v7356 = vmul.f32 %v6844, 1e+30
    %v7357 = vmul.f32 %v6845, 1e+30
    %v7358 = vmul.f32 %v6846, 1e+30
    %v7359 = vmul.f32 %v6847, 1e+30
    %v7360 = vmul.f32 %v6848, 1e+30
    %v7361 = vmul.f32 %v6849, 1e+30
    %v7362 = vmul.f32 %v6850, 1e+30
    %v7363 = vmul.f32 %v6851, 1e+30
    %v7364 = vmul.f32 %v6852, 1e+30
    %v7365 = vmul.f32 %v6853, 1e+30
    %v7366 = vmul.f32 %v6854, 1e+30
    %v7367 = vmul.f32 %v6855, 1e+30
    %v7368 = vmul.f32 %v6856, 1e+30
    %v7369 = vmul.f32 %v6857, 1e+30
    %v7370 = vmul.f32 %v6858, 1e+30
    %v7371 = vmul.f32 %v6859, 1e+30
    %v7372 = vmul.f32 %v6860, 1e+30
    %v7373 = vmul.f32 %v6861, 1e+30
    %v7374 = vmul.f32 %v6862, 1e+30
    %v7375 = vmul.f32 %v6863, 1e+30
    %v7376 = vmul.f32 %v6864, 1e+30
    %v7377 = vmul.f32 %v6865, 1e+30
    %v7378 = vmul.f32 %v6866, 1e+30
    %v7379 = vmul.f32 %v6867, 1e+30
    %v7380 = vmul.f32 %v6868, 1e+30
    %v7381 = vmul.f32 %v6869, 1e+30
    %v7382 = vmul.f32 %v6870, 1e+30
    %v7383 = vmul.f32 %v6871, 1e+30
    %v7384 = vmul.f32 %v6872, 1e+30
    %v7385 = vmul.f32 %v6873, 1e+30
    %v7386 = vmul.f32 %v6874, 1e+30
    %v7387 = vmul.f32 %v6875, 1e+30
    %v7388 = vmul.f32 %v6876, 1e+30
    %v7389 = vmul.f32 %v6877, 1e+30
    %v7390 = vmul.f32 %v6878, 1e+30
    %v7391 = vmul.f32 %v6879, 1e+30
    %v7392 = vmul.f32 %v6880, 1e+30
    %v7393 = vmul.f32 %v6881, 1e+30
    %v7394 = vmul.f32 %v6882, 1e+30
    %v7395 = vmul.f32 %v6883, 1e+30
    %v7396 = vmul.f32 %v6884, 1e+30
    %v7397 = vmul.f32 %v6885, 1e+30
    %v7398 = vmul.f32 %v6886, 1e+30
    %v7399 = vmul.f32 %v6887, 1e+30
    %v7400 = vmul.f32 %v6888, 1e+30
    %v7401 = vmul.f32 %v6889, 1e+30
    %v7402 = vmul.f32 %v6890, 1e+30
    %v7403 = vmul.f32 %v6891, 1e+30
    %v7404 = vmul.f32 %v6892, 1e+30
    %v7405 = vmul.f32 %v6893, 1e+30
    %v7406 = vmul.f32 %v6894, 1e+30
    %v7407 = vmul.f32 %v6895, 1e+30
    %v7408 = vmul.f32 %v6896, 1e+30
    %v7409 = vmul.f32 %v6897, 1e+30
    %v7410 = vmul.f32 %v6898, 1e+30
    %v7411 = vmul.f32 %v6899, 1e+30
    %v7412 = vmul.f32 %v6900, 1e+30
    %v7413 = vmul.f32 %v6901, 1e+30
    %v7414 = vmul.f32 %v6902, 1e+30
    %v7415 = vmul.f32 %v6903, 1e+30
    %v7416 = vmul.f32 %v6904, 1e+30
    %v7417 = vmul.f32 %v6905, 1e+30
    %v7418 = vmul.f32 %v6906, 1e+30
    %v7419 = vmul.f32 %v6907, 1e+30
    %v7420 = vmul.f32 %v6908, 1e+30
    %v7421 = vmul.f32 %v6909, 1e+30
    %v7422 = vmul.f32 %v6910, 1e+30
    %v7423 = vmul.f32 %v6911, 1e+30
    %v7424 = vmul.f32 %v6912, 1e+30
    %v7425 = vmul.f32 %v6913, 1e+30
    %v7426 = vmul.f32 %v6914, 1e+30
    %v7427 = vmul.f32 %v6915, 1e+30
    %v7428 = vmul.f32 %v6916, 1e+30
    %v7429 = vmul.f32 %v6917, 1e+30
    %v7430 = vmul.f32 %v6918, 1e+30
    %v7431 = vmul.f32 %v6919, 1e+30
    %v7432 = vmul.f32 %v6920, 1e+30
    %v7433 = vmul.f32 %v6921, 1e+30
    %v7434 = vmul.f32 %v6922, 1e+30
    %v7435 = vmul.f32 %v6923, 1e+30
    %v7436 = vmul.f32 %v6924, 1e+30
    %v7437 = vmul.f32 %v6925, 1e+30
    %v7438 = vmul.f32 %v6926, 1e+30
    %v7439 = vmul.f32 %v6927, 1e+30
    %v7440 = vmul.f32 %v6928, 1e+30
    %v7441 = vmul.f32 %v6929, 1e+30
    %v7442 = vmul.f32 %v6930, 1e+30
    %v7443 = vmul.f32 %v6931, 1e+30
    %v7444 = vmul.f32 %v6932, 1e+30
    %v7445 = vmul.f32 %v6933, 1e+30
    %v7446 = vmul.f32 %v6934, 1e+30
    %v7447 = vmul.f32 %v6935, 1e+30
    %v7448 = vmul.f32 %v6936, 1e+30
    %v7449 = vmul.f32 %v6937, 1e+30
    %v7450 = vmul.f32 %v6938, 1e+30
    %v7451 = vmul.f32 %v6939, 1e+30
    %v7452 = vmul.f32 %v6940, 1e+30
    %v7453 = vmul.f32 %v6941, 1e+30
    %v7454 = vmul.f32 %v6942, 1e+30
    %v7455 = vmul.f32 %v6943, 1e+30
    %v7456 = vmul.f32 %v6944, 1e+30
    %v7457 = vmul.f32 %v6945, 1e+30
    %v7458 = vmul.f32 %v6946, 1e+30
    %v7459 = vmul.f32 %v6947, 1e+30
    %v7460 = vmul.f32 %v6948, 1e+30
    %v7461 = vmul.f32 %v6949, 1e+30
    %v7462 = vmul.f32 %v6950, 1e+30
    %v7463 = vmul.f32 %v6951, 1e+30
    %v7464 = vmul.f32 %v6952, 1e+30
    %v7465 = vmul.f32 %v6953, 1e+30
    %v7466 = vmul.f32 %v6954, 1e+30
    %v7467 = vmul.f32 %v6955, 1e+30
    %v7468 = vmul.f32 %v6956, 1e+30
    %v7469 = vmul.f32 %v6957, 1e+30
    %v7470 = vmul.f32 %v6958, 1e+30
    %v7471 = vmul.f32 %v6959, 1e+30
    %v7472 = vmul.f32 %v6960, 1e+30
    %v7473 = vmul.f32 %v6961, 1e+30
    %v7474 = vmul.f32 %v6962, 1e+30
    %v7475 = vmul.f32 %v6963, 1e+30
    %v7476 = vmul.f32 %v6964, 1e+30
    %v7477 = vmul.f32 %v6965, 1e+30
    %v7478 = vmul.f32 %v6966, 1e+30
    %v7479 = vmul.f32 %v6967, 1e+30
    %v7480 = vmul.f32 %v6968, 1e+30
    %v7481 = vmul.f32 %v6969, 1e+30
    %v7482 = vmul.f32 %v6970, 1e+30
    %v7483 = vmul.f32 %v6971, 1e+30
    %v7484 = vmul.f32 %v6972, 1e+30
    %v7485 = vmul.f32 %v6973, 1e+30
    %v7486 = vmul.f32 %v6974, 1e+30
    %v7487 = vmul.f32 %v6975, 1e+30
    %v7488 = vlaneseq
    %v7489 = vshrl.u32 %v7488, 7
    %v7490 = vsub.s32 0, %v7489
    %v7491 = vrot.slane %v2103, %v7490
    %v7492 = vlaneseq
    %v7493 = vshrl.u32 %v7492, 7
    %v7494 = vsub.s32 0, %v7493
    %v7495 = vrot.slane %v2117, %v7494
    %v7496 = vlaneseq
    %v7497 = vshrl.u32 %v7496, 7
    %v7498 = vsub.s32 0, %v7497
    %v7499 = vrot.slane %v2125, %v7498
    %v7500 = vlaneseq
    %v7501 = vshrl.u32 %v7500, 7
    %v7502 = vsub.s32 0, %v7501
    %v7503 = vrot.slane %v2127, %v7502
    %v7504 = vlaneseq
    %v7505 = vshrl.u32 %v7504, 7
    %v7506 = vsub.s32 0, %v7505
    %v7507 = vrot.slane %v2110, %v7506
    %v7508 = vlaneseq
    %v7509 = vshrl.u32 %v7508, 7
    %v7510 = vsub.s32 0, %v7509
    %v7511 = vrot.slane %v2124, %v7510
    %v7512 = vlaneseq
    %v7513 = vshrl.u32 %v7512, 7
    %v7514 = vsub.s32 0, %v7513
    %v7515 = vrot.slane %v2126, %v7514
    %v7516 = vlaneseq
    %v7517 = vshrl.u32 %v7516, 7
    %v7518 = vsub.s32 0, %v7517
    %v7519 = vrot.slane %v2128, %v7518
    %v7520 = vlaneseq
    %v7521 = vshrl.u32 %v7520, 7
    %v7522 = vsub.s32 0, %v7521
    %v7523 = vrot.slane %v2152, %v7522
    %v7524 = vlaneseq
    %v7525 = vshrl.u32 %v7524, 7
    %v7526 = vsub.s32 0, %v7525
    %v7527 = vrot.slane %v2166, %v7526
    %v7528 = vlaneseq
    %v7529 = vshrl.u32 %v7528, 7
    %v7530 = vsub.s32 0, %v7529
    %v7531 = vrot.slane %v2174, %v7530
    %v7532 = vlaneseq
    %v7533 = vshrl.u32 %v7532, 7
    %v7534 = vsub.s32 0, %v7533
    %v7535 = vrot.slane %v2176, %v7534
    %v7536 = vlaneseq
    %v7537 = vshrl.u32 %v7536, 7
    %v7538 = vsub.s32 0, %v7537
    %v7539 = vrot.slane %v2159, %v7538
    %v7540 = vlaneseq
    %v7541 = vshrl.u32 %v7540, 7
    %v7542 = vsub.s32 0, %v7541
    %v7543 = vrot.slane %v2173, %v7542
    %v7544 = vlaneseq
    %v7545 = vshrl.u32 %v7544, 7
    %v7546 = vsub.s32 0, %v7545
    %v7547 = vrot.slane %v2175, %v7546
    %v7548 = vlaneseq
    %v7549 = vshrl.u32 %v7548, 7
    %v7550 = vsub.s32 0, %v7549
    %v7551 = vrot.slane %v2177, %v7550
    %v7552 = vlaneseq
    %v7553 = vshrl.u32 %v7552, 7
    %v7554 = vsub.s32 0, %v7553
    %v7555 = vrot.slane %v2201, %v7554
    %v7556 = vlaneseq
    %v7557 = vshrl.u32 %v7556, 7
    %v7558 = vsub.s32 0, %v7557
    %v7559 = vrot.slane %v2215, %v7558
    %v7560 = vlaneseq
    %v7561 = vshrl.u32 %v7560, 7
    %v7562 = vsub.s32 0, %v7561
    %v7563 = vrot.slane %v2223, %v7562
    %v7564 = vlaneseq
    %v7565 = vshrl.u32 %v7564, 7
    %v7566 = vsub.s32 0, %v7565
    %v7567 = vrot.slane %v2225, %v7566
    %v7568 = vlaneseq
    %v7569 = vshrl.u32 %v7568, 7
    %v7570 = vsub.s32 0, %v7569
    %v7571 = vrot.slane %v2208, %v7570
    %v7572 = vlaneseq
    %v7573 = vshrl.u32 %v7572, 7
    %v7574 = vsub.s32 0, %v7573
    %v7575 = vrot.slane %v2222, %v7574
    %v7576 = vlaneseq
    %v7577 = vshrl.u32 %v7576, 7
    %v7578 = vsub.s32 0, %v7577
    %v7579 = vrot.slane %v2224, %v7578
    %v7580 = vlaneseq
    %v7581 = vshrl.u32 %v7580, 7
    %v7582 = vsub.s32 0, %v7581
    %v7583 = vrot.slane %v2226, %v7582
    %v7584 = vlaneseq
    %v7585 = vshrl.u32 %v7584, 7
    %v7586 = vsub.s32 0, %v7585
    %v7587 = vrot.slane %v2250, %v7586
    %v7588 = vlaneseq
    %v7589 = vshrl.u32 %v7588, 7
    %v7590 = vsub.s32 0, %v7589
    %v7591 = vrot.slane %v2264, %v7590
    %v7592 = vlaneseq
    %v7593 = vshrl.u32 %v7592, 7
    %v7594 = vsub.s32 0, %v7593
    %v7595 = vrot.slane %v2272, %v7594
    %v7596 = vlaneseq
    %v7597 = vshrl.u32 %v7596, 7
    %v7598 = vsub.s32 0, %v7597
    %v7599 = vrot.slane %v2274, %v7598
    %v7600 = vlaneseq
    %v7601 = vshrl.u32 %v7600, 7
    %v7602 = vsub.s32 0, %v7601
    %v7603 = vrot.slane %v2257, %v7602
    %v7604 = vlaneseq
    %v7605 = vshrl.u32 %v7604, 7
    %v7606 = vsub.s32 0, %v7605
    %v7607 = vrot.slane %v2271, %v7606
    %v7608 = vlaneseq
    %v7609 = vshrl.u32 %v7608, 7
    %v7610 = vsub.s32 0, %v7609
    %v7611 = vrot.slane %v2273, %v7610
    %v7612 = vlaneseq
    %v7613 = vshrl.u32 %v7612, 7
    %v7614 = vsub.s32 0, %v7613
    %v7615 = vrot.slane %v2275, %v7614
    %v7616 = vlaneseq
    %v7617 = vshrl.u32 %v7616, 7
    %v7618 = vsub.s32 0, %v7617
    %v7619 = vrot.slane %v2299, %v7618
    %v7620 = vlaneseq
    %v7621 = vshrl.u32 %v7620, 7
    %v7622 = vsub.s32 0, %v7621
    %v7623 = vrot.slane %v2313, %v7622
    %v7624 = vlaneseq
    %v7625 = vshrl.u32 %v7624, 7
    %v7626 = vsub.s32 0, %v7625
    %v7627 = vrot.slane %v2321, %v7626
    %v7628 = vlaneseq
    %v7629 = vshrl.u32 %v7628, 7
    %v7630 = vsub.s32 0, %v7629
    %v7631 = vrot.slane %v2323, %v7630
    %v7632 = vlaneseq
    %v7633 = vshrl.u32 %v7632, 7
    %v7634 = vsub.s32 0, %v7633
    %v7635 = vrot.slane %v2306, %v7634
    %v7636 = vlaneseq
    %v7637 = vshrl.u32 %v7636, 7
    %v7638 = vsub.s32 0, %v7637
    %v7639 = vrot.slane %v2320, %v7638
    %v7640 = vlaneseq
    %v7641 = vshrl.u32 %v7640, 7
    %v7642 = vsub.s32 0, %v7641
    %v7643 = vrot.slane %v2322, %v7642
    %v7644 = vlaneseq
    %v7645 = vshrl.u32 %v7644, 7
    %v7646 = vsub.s32 0, %v7645
    %v7647 = vrot.slane %v2324, %v7646
    %v7648 = vlaneseq
    %v7649 = vshrl.u32 %v7648, 7
    %v7650 = vsub.s32 0, %v7649
    %v7651 = vrot.slane %v2348, %v7650
    %v7652 = vlaneseq
    %v7653 = vshrl.u32 %v7652, 7
    %v7654 = vsub.s32 0, %v7653
    %v7655 = vrot.slane %v2362, %v7654
    %v7656 = vlaneseq
    %v7657 = vshrl.u32 %v7656, 7
    %v7658 = vsub.s32 0, %v7657
    %v7659 = vrot.slane %v2370, %v7658
    %v7660 = vlaneseq
    %v7661 = vshrl.u32 %v7660, 7
    %v7662 = vsub.s32 0, %v7661
    %v7663 = vrot.slane %v2372, %v7662
    %v7664 = vlaneseq
    %v7665 = vshrl.u32 %v7664, 7
    %v7666 = vsub.s32 0, %v7665
    %v7667 = vrot.slane %v2355, %v7666
    %v7668 = vlaneseq
    %v7669 = vshrl.u32 %v7668, 7
    %v7670 = vsub.s32 0, %v7669
    %v7671 = vrot.slane %v2369, %v7670
    %v7672 = vlaneseq
    %v7673 = vshrl.u32 %v7672, 7
    %v7674 = vsub.s32 0, %v7673
    %v7675 = vrot.slane %v2371, %v7674
    %v7676 = vlaneseq
    %v7677 = vshrl.u32 %v7676, 7
    %v7678 = vsub.s32 0, %v7677
    %v7679 = vrot.slane %v2373, %v7678
    %v7680 = vlaneseq
    %v7681 = vshrl.u32 %v7680, 7
    %v7682 = vsub.s32 0, %v7681
    %v7683 = vrot.slane %v2397, %v7682
    %v7684 = vlaneseq
    %v7685 = vshrl.u32 %v7684, 7
    %v7686 = vsub.s32 0, %v7685
    %v7687 = vrot.slane %v2411, %v7686
    %v7688 = vlaneseq
    %v7689 = vshrl.u32 %v7688, 7
    %v7690 = vsub.s32 0, %v7689
    %v7691 = vrot.slane %v2419, %v7690
    %v7692 = vlaneseq
    %v7693 = vshrl.u32 %v7692, 7
    %v7694 = vsub.s32 0, %v7693
    %v7695 = vrot.slane %v2421, %v7694
    %v7696 = vlaneseq
    %v7697 = vshrl.u32 %v7696, 7
    %v7698 = vsub.s32 0, %v7697
    %v7699 = vrot.slane %v2404, %v7698
    %v7700 = vlaneseq
    %v7701 = vshrl.u32 %v7700, 7
    %v7702 = vsub.s32 0, %v7701
    %v7703 = vrot.slane %v2418, %v7702
    %v7704 = vlaneseq
    %v7705 = vshrl.u32 %v7704, 7
    %v7706 = vsub.s32 0, %v7705
    %v7707 = vrot.slane %v2420, %v7706
    %v7708 = vlaneseq
    %v7709 = vshrl.u32 %v7708, 7
    %v7710 = vsub.s32 0, %v7709
    %v7711 = vrot.slane %v2422, %v7710
    %v7712 = vlaneseq
    %v7713 = vshrl.u32 %v7712, 7
    %v7714 = vsub.s32 0, %v7713
    %v7715 = vrot.slane %v2446, %v7714
    %v7716 = vlaneseq
    %v7717 = vshrl.u32 %v7716, 7
    %v7718 = vsub.s32 0, %v7717
    %v7719 = vrot.slane %v2460, %v7718
    %v7720 = vlaneseq
    %v7721 = vshrl.u32 %v7720, 7
    %v7722 = vsub.s32 0, %v7721
    %v7723 = vrot.slane %v2468, %v7722
    %v7724 = vlaneseq
    %v7725 = vshrl.u32 %v7724, 7
    %v7726 = vsub.s32 0, %v7725
    %v7727 = vrot.slane %v2470, %v7726
    %v7728 = vlaneseq
    %v7729 = vshrl.u32 %v7728, 7
    %v7730 = vsub.s32 0, %v7729
    %v7731 = vrot.slane %v2453, %v7730
    %v7732 = vlaneseq
    %v7733 = vshrl.u32 %v7732, 7
    %v7734 = vsub.s32 0, %v7733
    %v7735 = vrot.slane %v2467, %v7734
    %v7736 = vlaneseq
    %v7737 = vshrl.u32 %v7736, 7
    %v7738 = vsub.s32 0, %v7737
    %v7739 = vrot.slane %v2469, %v7738
    %v7740 = vlaneseq
    %v7741 = vshrl.u32 %v7740, 7
    %v7742 = vsub.s32 0, %v7741
    %v7743 = vrot.slane %v2471, %v7742
    %v7744 = vlaneseq
    %v7745 = vshrl.u32 %v7744, 7
    %v7746 = vsub.s32 0, %v7745
    %v7747 = vrot.slane %v2495, %v7746
    %v7748 = vlaneseq
    %v7749 = vshrl.u32 %v7748, 7
    %v7750 = vsub.s32 0, %v7749
    %v7751 = vrot.slane %v2509, %v7750
    %v7752 = vlaneseq
    %v7753 = vshrl.u32 %v7752, 7
    %v7754 = vsub.s32 0, %v7753
    %v7755 = vrot.slane %v2517, %v7754
    %v7756 = vlaneseq
    %v7757 = vshrl.u32 %v7756, 7
    %v7758 = vsub.s32 0, %v7757
    %v7759 = vrot.slane %v2519, %v7758
    %v7760 = vlaneseq
    %v7761 = vshrl.u32 %v7760, 7
    %v7762 = vsub.s32 0, %v7761
    %v7763 = vrot.slane %v2502, %v7762
    %v7764 = vlaneseq
    %v7765 = vshrl.u32 %v7764, 7
    %v7766 = vsub.s32 0, %v7765
    %v7767 = vrot.slane %v2516, %v7766
    %v7768 = vlaneseq
    %v7769 = vshrl.u32 %v7768, 7
    %v7770 = vsub.s32 0, %v7769
    %v7771 = vrot.slane %v2518, %v7770
    %v7772 = vlaneseq
    %v7773 = vshrl.u32 %v7772, 7
    %v7774 = vsub.s32 0, %v7773
    %v7775 = vrot.slane %v2520, %v7774
    %v7776 = vlaneseq
    %v7777 = vshrl.u32 %v7776, 7
    %v7778 = vsub.s32 0, %v7777
    %v7779 = vrot.slane %v2544, %v7778
    %v7780 = vlaneseq
    %v7781 = vshrl.u32 %v7780, 7
    %v7782 = vsub.s32 0, %v7781
    %v7783 = vrot.slane %v2558, %v7782
    %v7784 = vlaneseq
    %v7785 = vshrl.u32 %v7784, 7
    %v7786 = vsub.s32 0, %v7785
    %v7787 = vrot.slane %v2566, %v7786
    %v7788 = vlaneseq
    %v7789 = vshrl.u32 %v7788, 7
    %v7790 = vsub.s32 0, %v7789
    %v7791 = vrot.slane %v2568, %v7790
    %v7792 = vlaneseq
    %v7793 = vshrl.u32 %v7792, 7
    %v7794 = vsub.s32 0, %v7793
    %v7795 = vrot.slane %v2551, %v7794
    %v7796 = vlaneseq
    %v7797 = vshrl.u32 %v7796, 7
    %v7798 = vsub.s32 0, %v7797
    %v7799 = vrot.slane %v2565, %v7798
    %v7800 = vlaneseq
    %v7801 = vshrl.u32 %v7800, 7
    %v7802 = vsub.s32 0, %v7801
    %v7803 = vrot.slane %v2567, %v7802
    %v7804 = vlaneseq
    %v7805 = vshrl.u32 %v7804, 7
    %v7806 = vsub.s32 0, %v7805
    %v7807 = vrot.slane %v2569, %v7806
    %v7808 = vlaneseq
    %v7809 = vshrl.u32 %v7808, 7
    %v7810 = vsub.s32 0, %v7809
    %v7811 = vrot.slane %v2593, %v7810
    %v7812 = vlaneseq
    %v7813 = vshrl.u32 %v7812, 7
    %v7814 = vsub.s32 0, %v7813
    %v7815 = vrot.slane %v2607, %v7814
    %v7816 = vlaneseq
    %v7817 = vshrl.u32 %v7816, 7
    %v7818 = vsub.s32 0, %v7817
    %v7819 = vrot.slane %v2615, %v7818
    %v7820 = vlaneseq
    %v7821 = vshrl.u32 %v7820, 7
    %v7822 = vsub.s32 0, %v7821
    %v7823 = vrot.slane %v2617, %v7822
    %v7824 = vlaneseq
    %v7825 = vshrl.u32 %v7824, 7
    %v7826 = vsub.s32 0, %v7825
    %v7827 = vrot.slane %v2600, %v7826
    %v7828 = vlaneseq
    %v7829 = vshrl.u32 %v7828, 7
    %v7830 = vsub.s32 0, %v7829
    %v7831 = vrot.slane %v2614, %v7830
    %v7832 = vlaneseq
    %v7833 = vshrl.u32 %v7832, 7
    %v7834 = vsub.s32 0, %v7833
    %v7835 = vrot.slane %v2616, %v7834
    %v7836 = vlaneseq
    %v7837 = vshrl.u32 %v7836, 7
    %v7838 = vsub.s32 0, %v7837
    %v7839 = vrot.slane %v2618, %v7838
    %v7840 = vlaneseq
    %v7841 = vshrl.u32 %v7840, 7
    %v7842 = vsub.s32 0, %v7841
    %v7843 = vrot.slane %v2642, %v7842
    %v7844 = vlaneseq
    %v7845 = vshrl.u32 %v7844, 7
    %v7846 = vsub.s32 0, %v7845
    %v7847 = vrot.slane %v2656, %v7846
    %v7848 = vlaneseq
    %v7849 = vshrl.u32 %v7848, 7
    %v7850 = vsub.s32 0, %v7849
    %v7851 = vrot.slane %v2664, %v7850
    %v7852 = vlaneseq
    %v7853 = vshrl.u32 %v7852, 7
    %v7854 = vsub.s32 0, %v7853
    %v7855 = vrot.slane %v2666, %v7854
    %v7856 = vlaneseq
    %v7857 = vshrl.u32 %v7856, 7
    %v7858 = vsub.s32 0, %v7857
    %v7859 = vrot.slane %v2649, %v7858
    %v7860 = vlaneseq
    %v7861 = vshrl.u32 %v7860, 7
    %v7862 = vsub.s32 0, %v7861
    %v7863 = vrot.slane %v2663, %v7862
    %v7864 = vlaneseq
    %v7865 = vshrl.u32 %v7864, 7
    %v7866 = vsub.s32 0, %v7865
    %v7867 = vrot.slane %v2665, %v7866
    %v7868 = vlaneseq
    %v7869 = vshrl.u32 %v7868, 7
    %v7870 = vsub.s32 0, %v7869
    %v7871 = vrot.slane %v2667, %v7870
    %v7872 = vlaneseq
    %v7873 = vshrl.u32 %v7872, 7
    %v7874 = vsub.s32 0, %v7873
    %v7875 = vrot.slane %v2691, %v7874
    %v7876 = vlaneseq
    %v7877 = vshrl.u32 %v7876, 7
    %v7878 = vsub.s32 0, %v7877
    %v7879 = vrot.slane %v2705, %v7878
    %v7880 = vlaneseq
    %v7881 = vshrl.u32 %v7880, 7
    %v7882 = vsub.s32 0, %v7881
    %v7883 = vrot.slane %v2713, %v7882
    %v7884 = vlaneseq
    %v7885 = vshrl.u32 %v7884, 7
    %v7886 = vsub.s32 0, %v7885
    %v7887 = vrot.slane %v2715, %v7886
    %v7888 = vlaneseq
    %v7889 = vshrl.u32 %v7888, 7
    %v7890 = vsub.s32 0, %v7889
    %v7891 = vrot.slane %v2698, %v7890
    %v7892 = vlaneseq
    %v7893 = vshrl.u32 %v7892, 7
    %v7894 = vsub.s32 0, %v7893
    %v7895 = vrot.slane %v2712, %v7894
    %v7896 = vlaneseq
    %v7897 = vshrl.u32 %v7896, 7
    %v7898 = vsub.s32 0, %v7897
    %v7899 = vrot.slane %v2714, %v7898
    %v7900 = vlaneseq
    %v7901 = vshrl.u32 %v7900, 7
    %v7902 = vsub.s32 0, %v7901
    %v7903 = vrot.slane %v2716, %v7902
    %v7904 = vlaneseq
    %v7905 = vshrl.u32 %v7904, 7
    %v7906 = vsub.s32 0, %v7905
    %v7907 = vrot.slane %v2740, %v7906
    %v7908 = vlaneseq
    %v7909 = vshrl.u32 %v7908, 7
    %v7910 = vsub.s32 0, %v7909
    %v7911 = vrot.slane %v2754, %v7910
    %v7912 = vlaneseq
    %v7913 = vshrl.u32 %v7912, 7
    %v7914 = vsub.s32 0, %v7913
    %v7915 = vrot.slane %v2762, %v7914
    %v7916 = vlaneseq
    %v7917 = vshrl.u32 %v7916, 7
    %v7918 = vsub.s32 0, %v7917
    %v7919 = vrot.slane %v2764, %v7918
    %v7920 = vlaneseq
    %v7921 = vshrl.u32 %v7920, 7
    %v7922 = vsub.s32 0, %v7921
    %v7923 = vrot.slane %v2747, %v7922
    %v7924 = vlaneseq
    %v7925 = vshrl.u32 %v7924, 7
    %v7926 = vsub.s32 0, %v7925
    %v7927 = vrot.slane %v2761, %v7926
    %v7928 = vlaneseq
    %v7929 = vshrl.u32 %v7928, 7
    %v7930 = vsub.s32 0, %v7929
    %v7931 = vrot.slane %v2763, %v7930
    %v7932 = vlaneseq
    %v7933 = vshrl.u32 %v7932, 7
    %v7934 = vsub.s32 0, %v7933
    %v7935 = vrot.slane %v2765, %v7934
    %v7936 = vlaneseq
    %v7937 = vshrl.u32 %v7936, 7
    %v7938 = vsub.s32 0, %v7937
    %v7939 = vrot.slane %v2789, %v7938
    %v7940 = vlaneseq
    %v7941 = vshrl.u32 %v7940, 7
    %v7942 = vsub.s32 0, %v7941
    %v7943 = vrot.slane %v2803, %v7942
    %v7944 = vlaneseq
    %v7945 = vshrl.u32 %v7944, 7
    %v7946 = vsub.s32 0, %v7945
    %v7947 = vrot.slane %v2811, %v7946
    %v7948 = vlaneseq
    %v7949 = vshrl.u32 %v7948, 7
    %v7950 = vsub.s32 0, %v7949
    %v7951 = vrot.slane %v2813, %v7950
    %v7952 = vlaneseq
    %v7953 = vshrl.u32 %v7952, 7
    %v7954 = vsub.s32 0, %v7953
    %v7955 = vrot.slane %v2796, %v7954
    %v7956 = vlaneseq
    %v7957 = vshrl.u32 %v7956, 7
    %v7958 = vsub.s32 0, %v7957
    %v7959 = vrot.slane %v2810, %v7958
    %v7960 = vlaneseq
    %v7961 = vshrl.u32 %v7960, 7
    %v7962 = vsub.s32 0, %v7961
    %v7963 = vrot.slane %v2812, %v7962
    %v7964 = vlaneseq
    %v7965 = vshrl.u32 %v7964, 7
    %v7966 = vsub.s32 0, %v7965
    %v7967 = vrot.slane %v2814, %v7966
    %v7968 = vlaneseq
    %v7969 = vshrl.u32 %v7968, 7
    %v7970 = vsub.s32 0, %v7969
    %v7971 = vrot.slane %v2838, %v7970
    %v7972 = vlaneseq
    %v7973 = vshrl.u32 %v7972, 7
    %v7974 = vsub.s32 0, %v7973
    %v7975 = vrot.slane %v2852, %v7974
    %v7976 = vlaneseq
    %v7977 = vshrl.u32 %v7976, 7
    %v7978 = vsub.s32 0, %v7977
    %v7979 = vrot.slane %v2860, %v7978
    %v7980 = vlaneseq
    %v7981 = vshrl.u32 %v7980, 7
    %v7982 = vsub.s32 0, %v7981
    %v7983 = vrot.slane %v2862, %v7982
    %v7984 = vlaneseq
    %v7985 = vshrl.u32 %v7984, 7
    %v7986 = vsub.s32 0, %v7985
    %v7987 = vrot.slane %v2845, %v7986
    %v7988 = vlaneseq
    %v7989 = vshrl.u32 %v7988, 7
    %v7990 = vsub.s32 0, %v7989
    %v7991 = vrot.slane %v2859, %v7990
    %v7992 = vlaneseq
    %v7993 = vshrl.u32 %v7992, 7
    %v7994 = vsub.s32 0, %v7993
    %v7995 = vrot.slane %v2861, %v7994
    %v7996 = vlaneseq
    %v7997 = vshrl.u32 %v7996, 7
    %v7998 = vsub.s32 0, %v7997
    %v7999 = vrot.slane %v2863, %v7998
    %v8000 = vlaneseq
    %v8001 = vshrl.u32 %v8000, 7
    %v8002 = vsub.s32 0, %v8001
    %v8003 = vrot.slane %v2887, %v8002
    %v8004 = vlaneseq
    %v8005 = vshrl.u32 %v8004, 7
    %v8006 = vsub.s32 0, %v8005
    %v8007 = vrot.slane %v2901, %v8006
    %v8008 = vlaneseq
    %v8009 = vshrl.u32 %v8008, 7
    %v8010 = vsub.s32 0, %v8009
    %v8011 = vrot.slane %v2909, %v8010
    %v8012 = vlaneseq
    %v8013 = vshrl.u32 %v8012, 7
    %v8014 = vsub.s32 0, %v8013
    %v8015 = vrot.slane %v2911, %v8014
    %v8016 = vlaneseq
    %v8017 = vshrl.u32 %v8016, 7
    %v8018 = vsub.s32 0, %v8017
    %v8019 = vrot.slane %v2894, %v8018
    %v8020 = vlaneseq
    %v8021 = vshrl.u32 %v8020, 7
    %v8022 = vsub.s32 0, %v8021
    %v8023 = vrot.slane %v2908, %v8022
    %v8024 = vlaneseq
    %v8025 = vshrl.u32 %v8024, 7
    %v8026 = vsub.s32 0, %v8025
    %v8027 = vrot.slane %v2910, %v8026
    %v8028 = vlaneseq
    %v8029 = vshrl.u32 %v8028, 7
    %v8030 = vsub.s32 0, %v8029
    %v8031 = vrot.slane %v2912, %v8030
    %v8032 = vlaneseq
    %v8033 = vshrl.u32 %v8032, 7
    %v8034 = vsub.s32 0, %v8033
    %v8035 = vrot.slane %v2936, %v8034
    %v8036 = vlaneseq
    %v8037 = vshrl.u32 %v8036, 7
    %v8038 = vsub.s32 0, %v8037
    %v8039 = vrot.slane %v2950, %v8038
    %v8040 = vlaneseq
    %v8041 = vshrl.u32 %v8040, 7
    %v8042 = vsub.s32 0, %v8041
    %v8043 = vrot.slane %v2958, %v8042
    %v8044 = vlaneseq
    %v8045 = vshrl.u32 %v8044, 7
    %v8046 = vsub.s32 0, %v8045
    %v8047 = vrot.slane %v2960, %v8046
    %v8048 = vlaneseq
    %v8049 = vshrl.u32 %v8048, 7
    %v8050 = vsub.s32 0, %v8049
    %v8051 = vrot.slane %v2943, %v8050
    %v8052 = vlaneseq
    %v8053 = vshrl.u32 %v8052, 7
    %v8054 = vsub.s32 0, %v8053
    %v8055 = vrot.slane %v2957, %v8054
    %v8056 = vlaneseq
    %v8057 = vshrl.u32 %v8056, 7
    %v8058 = vsub.s32 0, %v8057
    %v8059 = vrot.slane %v2959, %v8058
    %v8060 = vlaneseq
    %v8061 = vshrl.u32 %v8060, 7
    %v8062 = vsub.s32 0, %v8061
    %v8063 = vrot.slane %v2961, %v8062
    %v8064 = vlaneseq
    %v8065 = vshrl.u32 %v8064, 7
    %v8066 = vsub.s32 0, %v8065
    %v8067 = vrot.slane %v2985, %v8066
    %v8068 = vlaneseq
    %v8069 = vshrl.u32 %v8068, 7
    %v8070 = vsub.s32 0, %v8069
    %v8071 = vrot.slane %v2999, %v8070
    %v8072 = vlaneseq
    %v8073 = vshrl.u32 %v8072, 7
    %v8074 = vsub.s32 0, %v8073
    %v8075 = vrot.slane %v3007, %v8074
    %v8076 = vlaneseq
    %v8077 = vshrl.u32 %v8076, 7
    %v8078 = vsub.s32 0, %v8077
    %v8079 = vrot.slane %v3009, %v8078
    %v8080 = vlaneseq
    %v8081 = vshrl.u32 %v8080, 7
    %v8082 = vsub.s32 0, %v8081
    %v8083 = vrot.slane %v2992, %v8082
    %v8084 = vlaneseq
    %v8085 = vshrl.u32 %v8084, 7
    %v8086 = vsub.s32 0, %v8085
    %v8087 = vrot.slane %v3006, %v8086
    %v8088 = vlaneseq
    %v8089 = vshrl.u32 %v8088, 7
    %v8090 = vsub.s32 0, %v8089
    %v8091 = vrot.slane %v3008, %v8090
    %v8092 = vlaneseq
    %v8093 = vshrl.u32 %v8092, 7
    %v8094 = vsub.s32 0, %v8093
    %v8095 = vrot.slane %v3010, %v8094
    %v8096 = vlaneseq
    %v8097 = vshrl.u32 %v8096, 7
    %v8098 = vsub.s32 0, %v8097
    %v8099 = vrot.slane %v3034, %v8098
    %v8100 = vlaneseq
    %v8101 = vshrl.u32 %v8100, 7
    %v8102 = vsub.s32 0, %v8101
    %v8103 = vrot.slane %v3048, %v8102
    %v8104 = vlaneseq
    %v8105 = vshrl.u32 %v8104, 7
    %v8106 = vsub.s32 0, %v8105
    %v8107 = vrot.slane %v3056, %v8106
    %v8108 = vlaneseq
    %v8109 = vshrl.u32 %v8108, 7
    %v8110 = vsub.s32 0, %v8109
    %v8111 = vrot.slane %v3058, %v8110
    %v8112 = vlaneseq
    %v8113 = vshrl.u32 %v8112, 7
    %v8114 = vsub.s32 0, %v8113
    %v8115 = vrot.slane %v3041, %v8114
    %v8116 = vlaneseq
    %v8117 = vshrl.u32 %v8116, 7
    %v8118 = vsub.s32 0, %v8117
    %v8119 = vrot.slane %v3055, %v8118
    %v8120 = vlaneseq
    %v8121 = vshrl.u32 %v8120, 7
    %v8122 = vsub.s32 0, %v8121
    %v8123 = vrot.slane %v3057, %v8122
    %v8124 = vlaneseq
    %v8125 = vshrl.u32 %v8124, 7
    %v8126 = vsub.s32 0, %v8125
    %v8127 = vrot.slane %v3059, %v8126
    %v8128 = vlaneseq
    %v8129 = vshrl.u32 %v8128, 7
    %v8130 = vsub.s32 0, %v8129
    %v8131 = vrot.slane %v3083, %v8130
    %v8132 = vlaneseq
    %v8133 = vshrl.u32 %v8132, 7
    %v8134 = vsub.s32 0, %v8133
    %v8135 = vrot.slane %v3097, %v8134
    %v8136 = vlaneseq
    %v8137 = vshrl.u32 %v8136, 7
    %v8138 = vsub.s32 0, %v8137
    %v8139 = vrot.slane %v3105, %v8138
    %v8140 = vlaneseq
    %v8141 = vshrl.u32 %v8140, 7
    %v8142 = vsub.s32 0, %v8141
    %v8143 = vrot.slane %v3107, %v8142
    %v8144 = vlaneseq
    %v8145 = vshrl.u32 %v8144, 7
    %v8146 = vsub.s32 0, %v8145
    %v8147 = vrot.slane %v3090, %v8146
    %v8148 = vlaneseq
    %v8149 = vshrl.u32 %v8148, 7
    %v8150 = vsub.s32 0, %v8149
    %v8151 = vrot.slane %v3104, %v8150
    %v8152 = vlaneseq
    %v8153 = vshrl.u32 %v8152, 7
    %v8154 = vsub.s32 0, %v8153
    %v8155 = vrot.slane %v3106, %v8154
    %v8156 = vlaneseq
    %v8157 = vshrl.u32 %v8156, 7
    %v8158 = vsub.s32 0, %v8157
    %v8159 = vrot.slane %v3108, %v8158
    %v8160 = vlaneseq
    %v8161 = vshrl.u32 %v8160, 7
    %v8162 = vsub.s32 0, %v8161
    %v8163 = vrot.slane %v3132, %v8162
    %v8164 = vlaneseq
    %v8165 = vshrl.u32 %v8164, 7
    %v8166 = vsub.s32 0, %v8165
    %v8167 = vrot.slane %v3146, %v8166
    %v8168 = vlaneseq
    %v8169 = vshrl.u32 %v8168, 7
    %v8170 = vsub.s32 0, %v8169
    %v8171 = vrot.slane %v3154, %v8170
    %v8172 = vlaneseq
    %v8173 = vshrl.u32 %v8172, 7
    %v8174 = vsub.s32 0, %v8173
    %v8175 = vrot.slane %v3156, %v8174
    %v8176 = vlaneseq
    %v8177 = vshrl.u32 %v8176, 7
    %v8178 = vsub.s32 0, %v8177
    %v8179 = vrot.slane %v3139, %v8178
    %v8180 = vlaneseq
    %v8181 = vshrl.u32 %v8180, 7
    %v8182 = vsub.s32 0, %v8181
    %v8183 = vrot.slane %v3153, %v8182
    %v8184 = vlaneseq
    %v8185 = vshrl.u32 %v8184, 7
    %v8186 = vsub.s32 0, %v8185
    %v8187 = vrot.slane %v3155, %v8186
    %v8188 = vlaneseq
    %v8189 = vshrl.u32 %v8188, 7
    %v8190 = vsub.s32 0, %v8189
    %v8191 = vrot.slane %v3157, %v8190
    %v8192 = vlaneseq
    %v8193 = vshrl.u32 %v8192, 7
    %v8194 = vsub.s32 0, %v8193
    %v8195 = vrot.slane %v3181, %v8194
    %v8196 = vlaneseq
    %v8197 = vshrl.u32 %v8196, 7
    %v8198 = vsub.s32 0, %v8197
    %v8199 = vrot.slane %v3195, %v8198
    %v8200 = vlaneseq
    %v8201 = vshrl.u32 %v8200, 7
    %v8202 = vsub.s32 0, %v8201
    %v8203 = vrot.slane %v3203, %v8202
    %v8204 = vlaneseq
    %v8205 = vshrl.u32 %v8204, 7
    %v8206 = vsub.s32 0, %v8205
    %v8207 = vrot.slane %v3205, %v8206
    %v8208 = vlaneseq
    %v8209 = vshrl.u32 %v8208, 7
    %v8210 = vsub.s32 0, %v8209
    %v8211 = vrot.slane %v3188, %v8210
    %v8212 = vlaneseq
    %v8213 = vshrl.u32 %v8212, 7
    %v8214 = vsub.s32 0, %v8213
    %v8215 = vrot.slane %v3202, %v8214
    %v8216 = vlaneseq
    %v8217 = vshrl.u32 %v8216, 7
    %v8218 = vsub.s32 0, %v8217
    %v8219 = vrot.slane %v3204, %v8218
    %v8220 = vlaneseq
    %v8221 = vshrl.u32 %v8220, 7
    %v8222 = vsub.s32 0, %v8221
    %v8223 = vrot.slane %v3206, %v8222
    %v8224 = vlaneseq
    %v8225 = vshrl.u32 %v8224, 7
    %v8226 = vsub.s32 0, %v8225
    %v8227 = vrot.slane %v3230, %v8226
    %v8228 = vlaneseq
    %v8229 = vshrl.u32 %v8228, 7
    %v8230 = vsub.s32 0, %v8229
    %v8231 = vrot.slane %v3244, %v8230
    %v8232 = vlaneseq
    %v8233 = vshrl.u32 %v8232, 7
    %v8234 = vsub.s32 0, %v8233
    %v8235 = vrot.slane %v3252, %v8234
    %v8236 = vlaneseq
    %v8237 = vshrl.u32 %v8236, 7
    %v8238 = vsub.s32 0, %v8237
    %v8239 = vrot.slane %v3254, %v8238
    %v8240 = vlaneseq
    %v8241 = vshrl.u32 %v8240, 7
    %v8242 = vsub.s32 0, %v8241
    %v8243 = vrot.slane %v3237, %v8242
    %v8244 = vlaneseq
    %v8245 = vshrl.u32 %v8244, 7
    %v8246 = vsub.s32 0, %v8245
    %v8247 = vrot.slane %v3251, %v8246
    %v8248 = vlaneseq
    %v8249 = vshrl.u32 %v8248, 7
    %v8250 = vsub.s32 0, %v8249
    %v8251 = vrot.slane %v3253, %v8250
    %v8252 = vlaneseq
    %v8253 = vshrl.u32 %v8252, 7
    %v8254 = vsub.s32 0, %v8253
    %v8255 = vrot.slane %v3255, %v8254
    %v8256 = vlaneseq
    %v8257 = vshrl.u32 %v8256, 7
    %v8258 = vsub.s32 0, %v8257
    %v8259 = vrot.slane %v3279, %v8258
    %v8260 = vlaneseq
    %v8261 = vshrl.u32 %v8260, 7
    %v8262 = vsub.s32 0, %v8261
    %v8263 = vrot.slane %v3293, %v8262
    %v8264 = vlaneseq
    %v8265 = vshrl.u32 %v8264, 7
    %v8266 = vsub.s32 0, %v8265
    %v8267 = vrot.slane %v3301, %v8266
    %v8268 = vlaneseq
    %v8269 = vshrl.u32 %v8268, 7
    %v8270 = vsub.s32 0, %v8269
    %v8271 = vrot.slane %v3303, %v8270
    %v8272 = vlaneseq
    %v8273 = vshrl.u32 %v8272, 7
    %v8274 = vsub.s32 0, %v8273
    %v8275 = vrot.slane %v3286, %v8274
    %v8276 = vlaneseq
    %v8277 = vshrl.u32 %v8276, 7
    %v8278 = vsub.s32 0, %v8277
    %v8279 = vrot.slane %v3300, %v8278
    %v8280 = vlaneseq
    %v8281 = vshrl.u32 %v8280, 7
    %v8282 = vsub.s32 0, %v8281
    %v8283 = vrot.slane %v3302, %v8282
    %v8284 = vlaneseq
    %v8285 = vshrl.u32 %v8284, 7
    %v8286 = vsub.s32 0, %v8285
    %v8287 = vrot.slane %v3304, %v8286
    %v8288 = vlaneseq
    %v8289 = vshrl.u32 %v8288, 7
    %v8290 = vsub.s32 0, %v8289
    %v8291 = vrot.slane %v3328, %v8290
    %v8292 = vlaneseq
    %v8293 = vshrl.u32 %v8292, 7
    %v8294 = vsub.s32 0, %v8293
    %v8295 = vrot.slane %v3342, %v8294
    %v8296 = vlaneseq
    %v8297 = vshrl.u32 %v8296, 7
    %v8298 = vsub.s32 0, %v8297
    %v8299 = vrot.slane %v3350, %v8298
    %v8300 = vlaneseq
    %v8301 = vshrl.u32 %v8300, 7
    %v8302 = vsub.s32 0, %v8301
    %v8303 = vrot.slane %v3352, %v8302
    %v8304 = vlaneseq
    %v8305 = vshrl.u32 %v8304, 7
    %v8306 = vsub.s32 0, %v8305
    %v8307 = vrot.slane %v3335, %v8306
    %v8308 = vlaneseq
    %v8309 = vshrl.u32 %v8308, 7
    %v8310 = vsub.s32 0, %v8309
    %v8311 = vrot.slane %v3349, %v8310
    %v8312 = vlaneseq
    %v8313 = vshrl.u32 %v8312, 7
    %v8314 = vsub.s32 0, %v8313
    %v8315 = vrot.slane %v3351, %v8314
    %v8316 = vlaneseq
    %v8317 = vshrl.u32 %v8316, 7
    %v8318 = vsub.s32 0, %v8317
    %v8319 = vrot.slane %v3353, %v8318
    %v8320 = vlaneseq
    %v8321 = vshrl.u32 %v8320, 7
    %v8322 = vsub.s32 0, %v8321
    %v8323 = vrot.slane %v3377, %v8322
    %v8324 = vlaneseq
    %v8325 = vshrl.u32 %v8324, 7
    %v8326 = vsub.s32 0, %v8325
    %v8327 = vrot.slane %v3391, %v8326
    %v8328 = vlaneseq
    %v8329 = vshrl.u32 %v8328, 7
    %v8330 = vsub.s32 0, %v8329
    %v8331 = vrot.slane %v3399, %v8330
    %v8332 = vlaneseq
    %v8333 = vshrl.u32 %v8332, 7
    %v8334 = vsub.s32 0, %v8333
    %v8335 = vrot.slane %v3401, %v8334
    %v8336 = vlaneseq
    %v8337 = vshrl.u32 %v8336, 7
    %v8338 = vsub.s32 0, %v8337
    %v8339 = vrot.slane %v3384, %v8338
    %v8340 = vlaneseq
    %v8341 = vshrl.u32 %v8340, 7
    %v8342 = vsub.s32 0, %v8341
    %v8343 = vrot.slane %v3398, %v8342
    %v8344 = vlaneseq
    %v8345 = vshrl.u32 %v8344, 7
    %v8346 = vsub.s32 0, %v8345
    %v8347 = vrot.slane %v3400, %v8346
    %v8348 = vlaneseq
    %v8349 = vshrl.u32 %v8348, 7
    %v8350 = vsub.s32 0, %v8349
    %v8351 = vrot.slane %v3402, %v8350
    %v8352 = vlaneseq
    %v8353 = vshrl.u32 %v8352, 7
    %v8354 = vsub.s32 0, %v8353
    %v8355 = vrot.slane %v3426, %v8354
    %v8356 = vlaneseq
    %v8357 = vshrl.u32 %v8356, 7
    %v8358 = vsub.s32 0, %v8357
    %v8359 = vrot.slane %v3440, %v8358
    %v8360 = vlaneseq
    %v8361 = vshrl.u32 %v8360, 7
    %v8362 = vsub.s32 0, %v8361
    %v8363 = vrot.slane %v3448, %v8362
    %v8364 = vlaneseq
    %v8365 = vshrl.u32 %v8364, 7
    %v8366 = vsub.s32 0, %v8365
    %v8367 = vrot.slane %v3450, %v8366
    %v8368 = vlaneseq
    %v8369 = vshrl.u32 %v8368, 7
    %v8370 = vsub.s32 0, %v8369
    %v8371 = vrot.slane %v3433, %v8370
    %v8372 = vlaneseq
    %v8373 = vshrl.u32 %v8372, 7
    %v8374 = vsub.s32 0, %v8373
    %v8375 = vrot.slane %v3447, %v8374
    %v8376 = vlaneseq
    %v8377 = vshrl.u32 %v8376, 7
    %v8378 = vsub.s32 0, %v8377
    %v8379 = vrot.slane %v3449, %v8378
    %v8380 = vlaneseq
    %v8381 = vshrl.u32 %v8380, 7
    %v8382 = vsub.s32 0, %v8381
    %v8383 = vrot.slane %v3451, %v8382
    %v8384 = vlaneseq
    %v8385 = vshrl.u32 %v8384, 7
    %v8386 = vsub.s32 0, %v8385
    %v8387 = vrot.slane %v3475, %v8386
    %v8388 = vlaneseq
    %v8389 = vshrl.u32 %v8388, 7
    %v8390 = vsub.s32 0, %v8389
    %v8391 = vrot.slane %v3489, %v8390
    %v8392 = vlaneseq
    %v8393 = vshrl.u32 %v8392, 7
    %v8394 = vsub.s32 0, %v8393
    %v8395 = vrot.slane %v3497, %v8394
    %v8396 = vlaneseq
    %v8397 = vshrl.u32 %v8396, 7
    %v8398 = vsub.s32 0, %v8397
    %v8399 = vrot.slane %v3499, %v8398
    %v8400 = vlaneseq
    %v8401 = vshrl.u32 %v8400, 7
    %v8402 = vsub.s32 0, %v8401
    %v8403 = vrot.slane %v3482, %v8402
    %v8404 = vlaneseq
    %v8405 = vshrl.u32 %v8404, 7
    %v8406 = vsub.s32 0, %v8405
    %v8407 = vrot.slane %v3496, %v8406
    %v8408 = vlaneseq
    %v8409 = vshrl.u32 %v8408, 7
    %v8410 = vsub.s32 0, %v8409
    %v8411 = vrot.slane %v3498, %v8410
    %v8412 = vlaneseq
    %v8413 = vshrl.u32 %v8412, 7
    %v8414 = vsub.s32 0, %v8413
    %v8415 = vrot.slane %v3500, %v8414
    %v8416 = vlaneseq
    %v8417 = vshrl.u32 %v8416, 7
    %v8418 = vsub.s32 0, %v8417
    %v8419 = vrot.slane %v3524, %v8418
    %v8420 = vlaneseq
    %v8421 = vshrl.u32 %v8420, 7
    %v8422 = vsub.s32 0, %v8421
    %v8423 = vrot.slane %v3538, %v8422
    %v8424 = vlaneseq
    %v8425 = vshrl.u32 %v8424, 7
    %v8426 = vsub.s32 0, %v8425
    %v8427 = vrot.slane %v3546, %v8426
    %v8428 = vlaneseq
    %v8429 = vshrl.u32 %v8428, 7
    %v8430 = vsub.s32 0, %v8429
    %v8431 = vrot.slane %v3548, %v8430
    %v8432 = vlaneseq
    %v8433 = vshrl.u32 %v8432, 7
    %v8434 = vsub.s32 0, %v8433
    %v8435 = vrot.slane %v3531, %v8434
    %v8436 = vlaneseq
    %v8437 = vshrl.u32 %v8436, 7
    %v8438 = vsub.s32 0, %v8437
    %v8439 = vrot.slane %v3545, %v8438
    %v8440 = vlaneseq
    %v8441 = vshrl.u32 %v8440, 7
    %v8442 = vsub.s32 0, %v8441
    %v8443 = vrot.slane %v3547, %v8442
    %v8444 = vlaneseq
    %v8445 = vshrl.u32 %v8444, 7
    %v8446 = vsub.s32 0, %v8445
    %v8447 = vrot.slane %v3549, %v8446
    %v8448 = vlaneseq
    %v8449 = vshrl.u32 %v8448, 7
    %v8450 = vsub.s32 0, %v8449
    %v8451 = vrot.slane %v3573, %v8450
    %v8452 = vlaneseq
    %v8453 = vshrl.u32 %v8452, 7
    %v8454 = vsub.s32 0, %v8453
    %v8455 = vrot.slane %v3587, %v8454
    %v8456 = vlaneseq
    %v8457 = vshrl.u32 %v8456, 7
    %v8458 = vsub.s32 0, %v8457
    %v8459 = vrot.slane %v3595, %v8458
    %v8460 = vlaneseq
    %v8461 = vshrl.u32 %v8460, 7
    %v8462 = vsub.s32 0, %v8461
    %v8463 = vrot.slane %v3597, %v8462
    %v8464 = vlaneseq
    %v8465 = vshrl.u32 %v8464, 7
    %v8466 = vsub.s32 0, %v8465
    %v8467 = vrot.slane %v3580, %v8466
    %v8468 = vlaneseq
    %v8469 = vshrl.u32 %v8468, 7
    %v8470 = vsub.s32 0, %v8469
    %v8471 = vrot.slane %v3594, %v8470
    %v8472 = vlaneseq
    %v8473 = vshrl.u32 %v8472, 7
    %v8474 = vsub.s32 0, %v8473
    %v8475 = vrot.slane %v3596, %v8474
    %v8476 = vlaneseq
    %v8477 = vshrl.u32 %v8476, 7
    %v8478 = vsub.s32 0, %v8477
    %v8479 = vrot.slane %v3598, %v8478
    %v8480 = vlaneseq
    %v8481 = vshrl.u32 %v8480, 7
    %v8482 = vsub.s32 0, %v8481
    %v8483 = vrot.slane %v3622, %v8482
    %v8484 = vlaneseq
    %v8485 = vshrl.u32 %v8484, 7
    %v8486 = vsub.s32 0, %v8485
    %v8487 = vrot.slane %v3636, %v8486
    %v8488 = vlaneseq
    %v8489 = vshrl.u32 %v8488, 7
    %v8490 = vsub.s32 0, %v8489
    %v8491 = vrot.slane %v3644, %v8490
    %v8492 = vlaneseq
    %v8493 = vshrl.u32 %v8492, 7
    %v8494 = vsub.s32 0, %v8493
    %v8495 = vrot.slane %v3646, %v8494
    %v8496 = vlaneseq
    %v8497 = vshrl.u32 %v8496, 7
    %v8498 = vsub.s32 0, %v8497
    %v8499 = vrot.slane %v3629, %v8498
    %v8500 = vlaneseq
    %v8501 = vshrl.u32 %v8500, 7
    %v8502 = vsub.s32 0, %v8501
    %v8503 = vrot.slane %v3643, %v8502
    %v8504 = vlaneseq
    %v8505 = vshrl.u32 %v8504, 7
    %v8506 = vsub.s32 0, %v8505
    %v8507 = vrot.slane %v3645, %v8506
    %v8508 = vlaneseq
    %v8509 = vshrl.u32 %v8508, 7
    %v8510 = vsub.s32 0, %v8509
    %v8511 = vrot.slane %v3647, %v8510
    %v8768 = vadd.f32 %v7491, %v6976
    %v8769 = vadd.f32 %v7491, %v6977
    %v8770 = vadd.f32 %v7495, %v6978
    %v8771 = vadd.f32 %v7495, %v6979
    %v8772 = vadd.f32 %v7499, %v6980
    %v8773 = vadd.f32 %v7499, %v6981
    %v8774 = vadd.f32 %v7503, %v6982
    %v8775 = vadd.f32 %v7503, %v6983
    %v8776 = vadd.f32 %v7507, %v6984
    %v8777 = vadd.f32 %v7507, %v6985
    %v8778 = vadd.f32 %v7511, %v6986
    %v8779 = vadd.f32 %v7511, %v6987
    %v8780 = vadd.f32 %v7515, %v6988
    %v8781 = vadd.f32 %v7515, %v6989
    %v8782 = vadd.f32 %v7519, %v6990
    %v8783 = vadd.f32 %v7519, %v6991
    %v8784 = vadd.f32 %v7523, %v6992
    %v8785 = vadd.f32 %v7523, %v6993
    %v8786 = vadd.f32 %v7527, %v6994
    %v8787 = vadd.f32 %v7527, %v6995
    %v8788 = vadd.f32 %v7531, %v6996
    %v8789 = vadd.f32 %v7531, %v6997
    %v8790 = vadd.f32 %v7535, %v6998
    %v8791 = vadd.f32 %v7535, %v6999
    %v8792 = vadd.f32 %v7539, %v7000
    %v8793 = vadd.f32 %v7539, %v7001
    %v8794 = vadd.f32 %v7543, %v7002
    %v8795 = vadd.f32 %v7543, %v7003
    %v8796 = vadd.f32 %v7547, %v7004
    %v8797 = vadd.f32 %v7547, %v7005
    %v8798 = vadd.f32 %v7551, %v7006
    %v8799 = vadd.f32 %v7551, %v7007
    %v8800 = vadd.f32 %v7555, %v7008
    %v8801 = vadd.f32 %v7555, %v7009
    %v8802 = vadd.f32 %v7559, %v7010
    %v8803 = vadd.f32 %v7559, %v7011
    %v8804 = vadd.f32 %v7563, %v7012
    %v8805 = vadd.f32 %v7563, %v7013
    %v8806 = vadd.f32 %v7567, %v7014
    %v8807 = vadd.f32 %v7567, %v7015
    %v8808 = vadd.f32 %v7571, %v7016
    %v8809 = vadd.f32 %v7571, %v7017
    %v8810 = vadd.f32 %v7575, %v7018
    %v8811 = vadd.f32 %v7575, %v7019
    %v8812 = vadd.f32 %v7579, %v7020
    %v8813 = vadd.f32 %v7579, %v7021
    %v8814 = vadd.f32 %v7583, %v7022
    %v8815 = vadd.f32 %v7583, %v7023
    %v8816 = vadd.f32 %v7587, %v7024
    %v8817 = vadd.f32 %v7587, %v7025
    %v8818 = vadd.f32 %v7591, %v7026
    %v8819 = vadd.f32 %v7591, %v7027
    %v8820 = vadd.f32 %v7595, %v7028
    %v8821 = vadd.f32 %v7595, %v7029
    %v8822 = vadd.f32 %v7599, %v7030
    %v8823 = vadd.f32 %v7599, %v7031
    %v8824 = vadd.f32 %v7603, %v7032
    %v8825 = vadd.f32 %v7603, %v7033
    %v8826 = vadd.f32 %v7607, %v7034
    %v8827 = vadd.f32 %v7607, %v7035
    %v8828 = vadd.f32 %v7611, %v7036
    %v8829 = vadd.f32 %v7611, %v7037
    %v8830 = vadd.f32 %v7615, %v7038
    %v8831 = vadd.f32 %v7615, %v7039
    %v8832 = vadd.f32 %v7619, %v7040
    %v8833 = vadd.f32 %v7619, %v7041
    %v8834 = vadd.f32 %v7623, %v7042
    %v8835 = vadd.f32 %v7623, %v7043
    %v8836 = vadd.f32 %v7627, %v7044
    %v8837 = vadd.f32 %v7627, %v7045
    %v8838 = vadd.f32 %v7631, %v7046
    %v8839 = vadd.f32 %v7631, %v7047
    %v8840 = vadd.f32 %v7635, %v7048
    %v8841 = vadd.f32 %v7635, %v7049
    %v8842 = vadd.f32 %v7639, %v7050
    %v8843 = vadd.f32 %v7639, %v7051
    %v8844 = vadd.f32 %v7643, %v7052
    %v8845 = vadd.f32 %v7643, %v7053
    %v8846 = vadd.f32 %v7647, %v7054
    %v8847 = vadd.f32 %v7647, %v7055
    %v8848 = vadd.f32 %v7651, %v7056
    %v8849 = vadd.f32 %v7651, %v7057
    %v8850 = vadd.f32 %v7655, %v7058
    %v8851 = vadd.f32 %v7655, %v7059
    %v8852 = vadd.f32 %v7659, %v7060
    %v8853 = vadd.f32 %v7659, %v7061
    %v8854 = vadd.f32 %v7663, %v7062
    %v8855 = vadd.f32 %v7663, %v7063
    %v8856 = vadd.f32 %v7667, %v7064
    %v8857 = vadd.f32 %v7667, %v7065
    %v8858 = vadd.f32 %v7671, %v7066
    %v8859 = vadd.f32 %v7671, %v7067
    %v8860 = vadd.f32 %v7675, %v7068
    %v8861 = vadd.f32 %v7675, %v7069
    %v8862 = vadd.f32 %v7679, %v7070
    %v8863 = vadd.f32 %v7679, %v7071
    %v8864 = vadd.f32 %v7683, %v7072
    %v8865 = vadd.f32 %v7683, %v7073
    %v8866 = vadd.f32 %v7687, %v7074
    %v8867 = vadd.f32 %v7687, %v7075
    %v8868 = vadd.f32 %v7691, %v7076
    %v8869 = vadd.f32 %v7691, %v7077
    %v8870 = vadd.f32 %v7695, %v7078
    %v8871 = vadd.f32 %v7695, %v7079
    %v8872 = vadd.f32 %v7699, %v7080
    %v8873 = vadd.f32 %v7699, %v7081
    %v8874 = vadd.f32 %v7703, %v7082
    %v8875 = vadd.f32 %v7703, %v7083
    %v8876 = vadd.f32 %v7707, %v7084
    %v8877 = vadd.f32 %v7707, %v7085
    %v8878 = vadd.f32 %v7711, %v7086
    %v8879 = vadd.f32 %v7711, %v7087
    %v8880 = vadd.f32 %v7715, %v7088
    %v8881 = vadd.f32 %v7715, %v7089
    %v8882 = vadd.f32 %v7719, %v7090
    %v8883 = vadd.f32 %v7719, %v7091
    %v8884 = vadd.f32 %v7723, %v7092
    %v8885 = vadd.f32 %v7723, %v7093
    %v8886 = vadd.f32 %v7727, %v7094
    %v8887 = vadd.f32 %v7727, %v7095
    %v8888 = vadd.f32 %v7731, %v7096
    %v8889 = vadd.f32 %v7731, %v7097
    %v8890 = vadd.f32 %v7735, %v7098
    %v8891 = vadd.f32 %v7735, %v7099
    %v8892 = vadd.f32 %v7739, %v7100
    %v8893 = vadd.f32 %v7739, %v7101
    %v8894 = vadd.f32 %v7743, %v7102
    %v8895 = vadd.f32 %v7743, %v7103
    %v8896 = vadd.f32 %v7747, %v7104
    %v8897 = vadd.f32 %v7747, %v7105
    %v8898 = vadd.f32 %v7751, %v7106
    %v8899 = vadd.f32 %v7751, %v7107
    %v8900 = vadd.f32 %v7755, %v7108
    %v8901 = vadd.f32 %v7755, %v7109
    %v8902 = vadd.f32 %v7759, %v7110
    %v8903 = vadd.f32 %v7759, %v7111
    %v8904 = vadd.f32 %v7763, %v7112
    %v8905 = vadd.f32 %v7763, %v7113
    %v8906 = vadd.f32 %v7767, %v7114
    %v8907 = vadd.f32 %v7767, %v7115
    %v8908 = vadd.f32 %v7771, %v7116
    %v8909 = vadd.f32 %v7771, %v7117
    %v8910 = vadd.f32 %v7775, %v7118
    %v8911 = vadd.f32 %v7775, %v7119
    %v8912 = vadd.f32 %v7779, %v7120
    %v8913 = vadd.f32 %v7779, %v7121
    %v8914 = vadd.f32 %v7783, %v7122
    %v8915 = vadd.f32 %v7783, %v7123
    %v8916 = vadd.f32 %v7787, %v7124
    %v8917 = vadd.f32 %v7787, %v7125
    %v8918 = vadd.f32 %v7791, %v7126
    %v8919 = vadd.f32 %v7791, %v7127
    %v8920 = vadd.f32 %v7795, %v7128
    %v8921 = vadd.f32 %v7795, %v7129
    %v8922 = vadd.f32 %v7799, %v7130
    %v8923 = vadd.f32 %v7799, %v7131
    %v8924 = vadd.f32 %v7803, %v7132
    %v8925 = vadd.f32 %v7803, %v7133
    %v8926 = vadd.f32 %v7807, %v7134
    %v8927 = vadd.f32 %v7807, %v7135
    %v8928 = vadd.f32 %v7811, %v7136
    %v8929 = vadd.f32 %v7811, %v7137
    %v8930 = vadd.f32 %v7815, %v7138
    %v8931 = vadd.f32 %v7815, %v7139
    %v8932 = vadd.f32 %v7819, %v7140
    %v8933 = vadd.f32 %v7819, %v7141
    %v8934 = vadd.f32 %v7823, %v7142
    %v8935 = vadd.f32 %v7823, %v7143
    %v8936 = vadd.f32 %v7827, %v7144
    %v8937 = vadd.f32 %v7827, %v7145
    %v8938 = vadd.f32 %v7831, %v7146
    %v8939 = vadd.f32 %v7831, %v7147
    %v8940 = vadd.f32 %v7835, %v7148
    %v8941 = vadd.f32 %v7835, %v7149
    %v8942 = vadd.f32 %v7839, %v7150
    %v8943 = vadd.f32 %v7839, %v7151
    %v8944 = vadd.f32 %v7843, %v7152
    %v8945 = vadd.f32 %v7843, %v7153
    %v8946 = vadd.f32 %v7847, %v7154
    %v8947 = vadd.f32 %v7847, %v7155
    %v8948 = vadd.f32 %v7851, %v7156
    %v8949 = vadd.f32 %v7851, %v7157
    %v8950 = vadd.f32 %v7855, %v7158
    %v8951 = vadd.f32 %v7855, %v7159
    %v8952 = vadd.f32 %v7859, %v7160
    %v8953 = vadd.f32 %v7859, %v7161
    %v8954 = vadd.f32 %v7863, %v7162
    %v8955 = vadd.f32 %v7863, %v7163
    %v8956 = vadd.f32 %v7867, %v7164
    %v8957 = vadd.f32 %v7867, %v7165
    %v8958 = vadd.f32 %v7871, %v7166
    %v8959 = vadd.f32 %v7871, %v7167
    %v8960 = vadd.f32 %v7875, %v7168
    %v8961 = vadd.f32 %v7875, %v7169
    %v8962 = vadd.f32 %v7879, %v7170
    %v8963 = vadd.f32 %v7879, %v7171
    %v8964 = vadd.f32 %v7883, %v7172
    %v8965 = vadd.f32 %v7883, %v7173
    %v8966 = vadd.f32 %v7887, %v7174
    %v8967 = vadd.f32 %v7887, %v7175
    %v8968 = vadd.f32 %v7891, %v7176
    %v8969 = vadd.f32 %v7891, %v7177
    %v8970 = vadd.f32 %v7895, %v7178
    %v8971 = vadd.f32 %v7895, %v7179
    %v8972 = vadd.f32 %v7899, %v7180
    %v8973 = vadd.f32 %v7899, %v7181
    %v8974 = vadd.f32 %v7903, %v7182
    %v8975 = vadd.f32 %v7903, %v7183
    %v8976 = vadd.f32 %v7907, %v7184
    %v8977 = vadd.f32 %v7907, %v7185
    %v8978 = vadd.f32 %v7911, %v7186
    %v8979 = vadd.f32 %v7911, %v7187
    %v8980 = vadd.f32 %v7915, %v7188
    %v8981 = vadd.f32 %v7915, %v7189
    %v8982 = vadd.f32 %v7919, %v7190
    %v8983 = vadd.f32 %v7919, %v7191
    %v8984 = vadd.f32 %v7923, %v7192
    %v8985 = vadd.f32 %v7923, %v7193
    %v8986 = vadd.f32 %v7927, %v7194
    %v8987 = vadd.f32 %v7927, %v7195
    %v8988 = vadd.f32 %v7931, %v7196
    %v8989 = vadd.f32 %v7931, %v7197
    %v8990 = vadd.f32 %v7935, %v7198
    %v8991 = vadd.f32 %v7935, %v7199
    %v8992 = vadd.f32 %v7939, %v7200
    %v8993 = vadd.f32 %v7939, %v7201
    %v8994 = vadd.f32 %v7943, %v7202
    %v8995 = vadd.f32 %v7943, %v7203
    %v8996 = vadd.f32 %v7947, %v7204
    %v8997 = vadd.f32 %v7947, %v7205
    %v8998 = vadd.f32 %v7951, %v7206
    %v8999 = vadd.f32 %v7951, %v7207
    %v9000 = vadd.f32 %v7955, %v7208
    %v9001 = vadd.f32 %v7955, %v7209
    %v9002 = vadd.f32 %v7959, %v7210
    %v9003 = vadd.f32 %v7959, %v7211
    %v9004 = vadd.f32 %v7963, %v7212
    %v9005 = vadd.f32 %v7963, %v7213
    %v9006 = vadd.f32 %v7967, %v7214
    %v9007 = vadd.f32 %v7967, %v7215
    %v9008 = vadd.f32 %v7971, %v7216
    %v9009 = vadd.f32 %v7971, %v7217
    %v9010 = vadd.f32 %v7975, %v7218
    %v9011 = vadd.f32 %v7975, %v7219
    %v9012 = vadd.f32 %v7979, %v7220
    %v9013 = vadd.f32 %v7979, %v7221
    %v9014 = vadd.f32 %v7983, %v7222
    %v9015 = vadd.f32 %v7983, %v7223
    %v9016 = vadd.f32 %v7987, %v7224
    %v9017 = vadd.f32 %v7987, %v7225
    %v9018 = vadd.f32 %v7991, %v7226
    %v9019 = vadd.f32 %v7991, %v7227
    %v9020 = vadd.f32 %v7995, %v7228
    %v9021 = vadd.f32 %v7995, %v7229
    %v9022 = vadd.f32 %v7999, %v7230
    %v9023 = vadd.f32 %v7999, %v7231
    %v9024 = vadd.f32 %v8003, %v7232
    %v9025 = vadd.f32 %v8003, %v7233
    %v9026 = vadd.f32 %v8007, %v7234
    %v9027 = vadd.f32 %v8007, %v7235
    %v9028 = vadd.f32 %v8011, %v7236
    %v9029 = vadd.f32 %v8011, %v7237
    %v9030 = vadd.f32 %v8015, %v7238
    %v9031 = vadd.f32 %v8015, %v7239
    %v9032 = vadd.f32 %v8019, %v7240
    %v9033 = vadd.f32 %v8019, %v7241
    %v9034 = vadd.f32 %v8023, %v7242
    %v9035 = vadd.f32 %v8023, %v7243
    %v9036 = vadd.f32 %v8027, %v7244
    %v9037 = vadd.f32 %v8027, %v7245
    %v9038 = vadd.f32 %v8031, %v7246
    %v9039 = vadd.f32 %v8031, %v7247
    %v9040 = vadd.f32 %v8035, %v7248
    %v9041 = vadd.f32 %v8035, %v7249
    %v9042 = vadd.f32 %v8039, %v7250
    %v9043 = vadd.f32 %v8039, %v7251
    %v9044 = vadd.f32 %v8043, %v7252
    %v9045 = vadd.f32 %v8043, %v7253
    %v9046 = vadd.f32 %v8047, %v7254
    %v9047 = vadd.f32 %v8047, %v7255
    %v9048 = vadd.f32 %v8051, %v7256
    %v9049 = vadd.f32 %v8051, %v7257
    %v9050 = vadd.f32 %v8055, %v7258
    %v9051 = vadd.f32 %v8055, %v7259
    %v9052 = vadd.f32 %v8059, %v7260
    %v9053 = vadd.f32 %v8059, %v7261
    %v9054 = vadd.f32 %v8063, %v7262
    %v9055 = vadd.f32 %v8063, %v7263
    %v9056 = vadd.f32 %v8067, %v7264
    %v9057 = vadd.f32 %v8067, %v7265
    %v9058 = vadd.f32 %v8071, %v7266
    %v9059 = vadd.f32 %v8071, %v7267
    %v9060 = vadd.f32 %v8075, %v7268
    %v9061 = vadd.f32 %v8075, %v7269
    %v9062 = vadd.f32 %v8079, %v7270
    %v9063 = vadd.f32 %v8079, %v7271
    %v9064 = vadd.f32 %v8083, %v7272
    %v9065 = vadd.f32 %v8083, %v7273
    %v9066 = vadd.f32 %v8087, %v7274
    %v9067 = vadd.f32 %v8087, %v7275
    %v9068 = vadd.f32 %v8091, %v7276
    %v9069 = vadd.f32 %v8091, %v7277
    %v9070 = vadd.f32 %v8095, %v7278
    %v9071 = vadd.f32 %v8095, %v7279
    %v9072 = vadd.f32 %v8099, %v7280
    %v9073 = vadd.f32 %v8099, %v7281
    %v9074 = vadd.f32 %v8103, %v7282
    %v9075 = vadd.f32 %v8103, %v7283
    %v9076 = vadd.f32 %v8107, %v7284
    %v9077 = vadd.f32 %v8107, %v7285
    %v9078 = vadd.f32 %v8111, %v7286
    %v9079 = vadd.f32 %v8111, %v7287
    %v9080 = vadd.f32 %v8115, %v7288
    %v9081 = vadd.f32 %v8115, %v7289
    %v9082 = vadd.f32 %v8119, %v7290
    %v9083 = vadd.f32 %v8119, %v7291
    %v9084 = vadd.f32 %v8123, %v7292
    %v9085 = vadd.f32 %v8123, %v7293
    %v9086 = vadd.f32 %v8127, %v7294
    %v9087 = vadd.f32 %v8127, %v7295
    %v9088 = vadd.f32 %v8131, %v7296
    %v9089 = vadd.f32 %v8131, %v7297
    %v9090 = vadd.f32 %v8135, %v7298
    %v9091 = vadd.f32 %v8135, %v7299
    %v9092 = vadd.f32 %v8139, %v7300
    %v9093 = vadd.f32 %v8139, %v7301
    %v9094 = vadd.f32 %v8143, %v7302
    %v9095 = vadd.f32 %v8143, %v7303
    %v9096 = vadd.f32 %v8147, %v7304
    %v9097 = vadd.f32 %v8147, %v7305
    %v9098 = vadd.f32 %v8151, %v7306
    %v9099 = vadd.f32 %v8151, %v7307
    %v9100 = vadd.f32 %v8155, %v7308
    %v9101 = vadd.f32 %v8155, %v7309
    %v9102 = vadd.f32 %v8159, %v7310
    %v9103 = vadd.f32 %v8159, %v7311
    %v9104 = vadd.f32 %v8163, %v7312
    %v9105 = vadd.f32 %v8163, %v7313
    %v9106 = vadd.f32 %v8167, %v7314
    %v9107 = vadd.f32 %v8167, %v7315
    %v9108 = vadd.f32 %v8171, %v7316
    %v9109 = vadd.f32 %v8171, %v7317
    %v9110 = vadd.f32 %v8175, %v7318
    %v9111 = vadd.f32 %v8175, %v7319
    %v9112 = vadd.f32 %v8179, %v7320
    %v9113 = vadd.f32 %v8179, %v7321
    %v9114 = vadd.f32 %v8183, %v7322
    %v9115 = vadd.f32 %v8183, %v7323
    %v9116 = vadd.f32 %v8187, %v7324
    %v9117 = vadd.f32 %v8187, %v7325
    %v9118 = vadd.f32 %v8191, %v7326
    %v9119 = vadd.f32 %v8191, %v7327
    %v9120 = vadd.f32 %v8195, %v7328
    %v9121 = vadd.f32 %v8195, %v7329
    %v9122 = vadd.f32 %v8199, %v7330
    %v9123 = vadd.f32 %v8199, %v7331
    %v9124 = vadd.f32 %v8203, %v7332
    %v9125 = vadd.f32 %v8203, %v7333
    %v9126 = vadd.f32 %v8207, %v7334
    %v9127 = vadd.f32 %v8207, %v7335
    %v9128 = vadd.f32 %v8211, %v7336
    %v9129 = vadd.f32 %v8211, %v7337
    %v9130 = vadd.f32 %v8215, %v7338
    %v9131 = vadd.f32 %v8215, %v7339
    %v9132 = vadd.f32 %v8219, %v7340
    %v9133 = vadd.f32 %v8219, %v7341
    %v9134 = vadd.f32 %v8223, %v7342
    %v9135 = vadd.f32 %v8223, %v7343
    %v9136 = vadd.f32 %v8227, %v7344
    %v9137 = vadd.f32 %v8227, %v7345
    %v9138 = vadd.f32 %v8231, %v7346
    %v9139 = vadd.f32 %v8231, %v7347
    %v9140 = vadd.f32 %v8235, %v7348
    %v9141 = vadd.f32 %v8235, %v7349
    %v9142 = vadd.f32 %v8239, %v7350
    %v9143 = vadd.f32 %v8239, %v7351
    %v9144 = vadd.f32 %v8243, %v7352
    %v9145 = vadd.f32 %v8243, %v7353
    %v9146 = vadd.f32 %v8247, %v7354
    %v9147 = vadd.f32 %v8247, %v7355
    %v9148 = vadd.f32 %v8251, %v7356
    %v9149 = vadd.f32 %v8251, %v7357
    %v9150 = vadd.f32 %v8255, %v7358
    %v9151 = vadd.f32 %v8255, %v7359
    %v9152 = vadd.f32 %v8259, %v7360
    %v9153 = vadd.f32 %v8259, %v7361
    %v9154 = vadd.f32 %v8263, %v7362
    %v9155 = vadd.f32 %v8263, %v7363
    %v9156 = vadd.f32 %v8267, %v7364
    %v9157 = vadd.f32 %v8267, %v7365
    %v9158 = vadd.f32 %v8271, %v7366
    %v9159 = vadd.f32 %v8271, %v7367
    %v9160 = vadd.f32 %v8275, %v7368
    %v9161 = vadd.f32 %v8275, %v7369
    %v9162 = vadd.f32 %v8279, %v7370
    %v9163 = vadd.f32 %v8279, %v7371
    %v9164 = vadd.f32 %v8283, %v7372
    %v9165 = vadd.f32 %v8283, %v7373
    %v9166 = vadd.f32 %v8287, %v7374
    %v9167 = vadd.f32 %v8287, %v7375
    %v9168 = vadd.f32 %v8291, %v7376
    %v9169 = vadd.f32 %v8291, %v7377
    %v9170 = vadd.f32 %v8295, %v7378
    %v9171 = vadd.f32 %v8295, %v7379
    %v9172 = vadd.f32 %v8299, %v7380
    %v9173 = vadd.f32 %v8299, %v7381
    %v9174 = vadd.f32 %v8303, %v7382
    %v9175 = vadd.f32 %v8303, %v7383
    %v9176 = vadd.f32 %v8307, %v7384
    %v9177 = vadd.f32 %v8307, %v7385
    %v9178 = vadd.f32 %v8311, %v7386
    %v9179 = vadd.f32 %v8311, %v7387
    %v9180 = vadd.f32 %v8315, %v7388
    %v9181 = vadd.f32 %v8315, %v7389
    %v9182 = vadd.f32 %v8319, %v7390
    %v9183 = vadd.f32 %v8319, %v7391
    %v9184 = vadd.f32 %v8323, %v7392
    %v9185 = vadd.f32 %v8323, %v7393
    %v9186 = vadd.f32 %v8327, %v7394
    %v9187 = vadd.f32 %v8327, %v7395
    %v9188 = vadd.f32 %v8331, %v7396
    %v9189 = vadd.f32 %v8331, %v7397
    %v9190 = vadd.f32 %v8335, %v7398
    %v9191 = vadd.f32 %v8335, %v7399
    %v9192 = vadd.f32 %v8339, %v7400
    %v9193 = vadd.f32 %v8339, %v7401
    %v9194 = vadd.f32 %v8343, %v7402
    %v9195 = vadd.f32 %v8343, %v7403
    %v9196 = vadd.f32 %v8347, %v7404
    %v9197 = vadd.f32 %v8347, %v7405
    %v9198 = vadd.f32 %v8351, %v7406
    %v9199 = vadd.f32 %v8351, %v7407
    %v9200 = vadd.f32 %v8355, %v7408
    %v9201 = vadd.f32 %v8355, %v7409
    %v9202 = vadd.f32 %v8359, %v7410
    %v9203 = vadd.f32 %v8359, %v7411
    %v9204 = vadd.f32 %v8363, %v7412
    %v9205 = vadd.f32 %v8363, %v7413
    %v9206 = vadd.f32 %v8367, %v7414
    %v9207 = vadd.f32 %v8367, %v7415
    %v9208 = vadd.f32 %v8371, %v7416
    %v9209 = vadd.f32 %v8371, %v7417
    %v9210 = vadd.f32 %v8375, %v7418
    %v9211 = vadd.f32 %v8375, %v7419
    %v9212 = vadd.f32 %v8379, %v7420
    %v9213 = vadd.f32 %v8379, %v7421
    %v9214 = vadd.f32 %v8383, %v7422
    %v9215 = vadd.f32 %v8383, %v7423
    %v9216 = vadd.f32 %v8387, %v7424
    %v9217 = vadd.f32 %v8387, %v7425
    %v9218 = vadd.f32 %v8391, %v7426
    %v9219 = vadd.f32 %v8391, %v7427
    %v9220 = vadd.f32 %v8395, %v7428
    %v9221 = vadd.f32 %v8395, %v7429
    %v9222 = vadd.f32 %v8399, %v7430
    %v9223 = vadd.f32 %v8399, %v7431
    %v9224 = vadd.f32 %v8403, %v7432
    %v9225 = vadd.f32 %v8403, %v7433
    %v9226 = vadd.f32 %v8407, %v7434
    %v9227 = vadd.f32 %v8407, %v7435
    %v9228 = vadd.f32 %v8411, %v7436
    %v9229 = vadd.f32 %v8411, %v7437
    %v9230 = vadd.f32 %v8415, %v7438
    %v9231 = vadd.f32 %v8415, %v7439
    %v9232 = vadd.f32 %v8419, %v7440
    %v9233 = vadd.f32 %v8419, %v7441
    %v9234 = vadd.f32 %v8423, %v7442
    %v9235 = vadd.f32 %v8423, %v7443
    %v9236 = vadd.f32 %v8427, %v7444
    %v9237 = vadd.f32 %v8427, %v7445
    %v9238 = vadd.f32 %v8431, %v7446
    %v9239 = vadd.f32 %v8431, %v7447
    %v9240 = vadd.f32 %v8435, %v7448
    %v9241 = vadd.f32 %v8435, %v7449
    %v9242 = vadd.f32 %v8439, %v7450
    %v9243 = vadd.f32 %v8439, %v7451
    %v9244 = vadd.f32 %v8443, %v7452
    %v9245 = vadd.f32 %v8443, %v7453
    %v9246 = vadd.f32 %v8447, %v7454
    %v9247 = vadd.f32 %v8447, %v7455
    %v9248 = vadd.f32 %v8451, %v7456
    %v9249 = vadd.f32 %v8451, %v7457
    %v9250 = vadd.f32 %v8455, %v7458
    %v9251 = vadd.f32 %v8455, %v7459
    %v9252 = vadd.f32 %v8459, %v7460
    %v9253 = vadd.f32 %v8459, %v7461
    %v9254 = vadd.f32 %v8463, %v7462
    %v9255 = vadd.f32 %v8463, %v7463
    %v9256 = vadd.f32 %v8467, %v7464
    %v9257 = vadd.f32 %v8467, %v7465
    %v9258 = vadd.f32 %v8471, %v7466
    %v9259 = vadd.f32 %v8471, %v7467
    %v9260 = vadd.f32 %v8475, %v7468
    %v9261 = vadd.f32 %v8475, %v7469
    %v9262 = vadd.f32 %v8479, %v7470
    %v9263 = vadd.f32 %v8479, %v7471
    %v9264 = vadd.f32 %v8483, %v7472
    %v9265 = vadd.f32 %v8483, %v7473
    %v9266 = vadd.f32 %v8487, %v7474
    %v9267 = vadd.f32 %v8487, %v7475
    %v9268 = vadd.f32 %v8491, %v7476
    %v9269 = vadd.f32 %v8491, %v7477
    %v9270 = vadd.f32 %v8495, %v7478
    %v9271 = vadd.f32 %v8495, %v7479
    %v9272 = vadd.f32 %v8499, %v7480
    %v9273 = vadd.f32 %v8499, %v7481
    %v9274 = vadd.f32 %v8503, %v7482
    %v9275 = vadd.f32 %v8503, %v7483
    %v9276 = vadd.f32 %v8507, %v7484
    %v9277 = vadd.f32 %v8507, %v7485
    %v9278 = vadd.f32 %v8511, %v7486
    %v9279 = vadd.f32 %v8511, %v7487
    %v9280 = vsel %vm762, %v8768, -inf
    %v9281 = vsel %vm762, %v8770, -inf
    %v9282 = vsel %vm762, %v8772, -inf
    %v9283 = vmax.f32 %v9280, %v9282
    %v9284 = vsel %vm762, %v8774, -inf
    %v9285 = vmax.f32 %v9281, %v9284
    %v9286 = vsel %vm762, %v8776, -inf
    %v9287 = vmax.f32 %v9283, %v9286
    %v9288 = vsel %vm762, %v8778, -inf
    %v9289 = vmax.f32 %v9285, %v9288
    %v9290 = vsel %vm762, %v8780, -inf
    %v9291 = vmax.f32 %v9287, %v9290
    %v9292 = vsel %vm762, %v8782, -inf
    %v9293 = vmax.f32 %v9289, %v9292
    %v9294 = vsel %vm762, %v8784, -inf
    %v9295 = vmax.f32 %v9291, %v9294
    %v9296 = vsel %vm762, %v8786, -inf
    %v9297 = vmax.f32 %v9293, %v9296
    %v9298 = vsel %vm762, %v8788, -inf
    %v9299 = vmax.f32 %v9295, %v9298
    %v9300 = vsel %vm762, %v8790, -inf
    %v9301 = vmax.f32 %v9297, %v9300
    %v9302 = vsel %vm762, %v8792, -inf
    %v9303 = vmax.f32 %v9299, %v9302
    %v9304 = vsel %vm762, %v8794, -inf
    %v9305 = vmax.f32 %v9301, %v9304
    %v9306 = vsel %vm762, %v8796, -inf
    %v9307 = vmax.f32 %v9303, %v9306
    %v9308 = vsel %vm762, %v8798, -inf
    %v9309 = vmax.f32 %v9305, %v9308
    %v9310 = vsel %vm762, %v8800, -inf
    %v9311 = vmax.f32 %v9307, %v9310
    %v9312 = vsel %vm762, %v8802, -inf
    %v9313 = vmax.f32 %v9309, %v9312
    %v9314 = vsel %vm762, %v8804, -inf
    %v9315 = vmax.f32 %v9311, %v9314
    %v9316 = vsel %vm762, %v8806, -inf
    %v9317 = vmax.f32 %v9313, %v9316
    %v9318 = vsel %vm762, %v8808, -inf
    %v9319 = vmax.f32 %v9315, %v9318
    %v9320 = vsel %vm762, %v8810, -inf
    %v9321 = vmax.f32 %v9317, %v9320
    %v9322 = vsel %vm762, %v8812, -inf
    %v9323 = vmax.f32 %v9319, %v9322
    %v9324 = vsel %vm762, %v8814, -inf
    %v9325 = vmax.f32 %v9321, %v9324
    %v9326 = vsel %vm762, %v8816, -inf
    %v9327 = vmax.f32 %v9323, %v9326
    %v9328 = vsel %vm762, %v8818, -inf
    %v9329 = vmax.f32 %v9325, %v9328
    %v9330 = vsel %vm762, %v8820, -inf
    %v9331 = vmax.f32 %v9327, %v9330
    %v9332 = vsel %vm762, %v8822, -inf
    %v9333 = vmax.f32 %v9329, %v9332
    %v9334 = vsel %vm762, %v8824, -inf
    %v9335 = vmax.f32 %v9331, %v9334
    %v9336 = vsel %vm762, %v8826, -inf
    %v9337 = vmax.f32 %v9333, %v9336
    %v9338 = vsel %vm762, %v8828, -inf
    %v9339 = vmax.f32 %v9335, %v9338
    %v9340 = vsel %vm762, %v8830, -inf
    %v9341 = vmax.f32 %v9337, %v9340
    %v9342 = vsel %vm762, %v8832, -inf
    %v9343 = vmax.f32 %v9339, %v9342
    %v9344 = vsel %vm762, %v8834, -inf
    %v9345 = vmax.f32 %v9341, %v9344
    %v9346 = vsel %vm762, %v8836, -inf
    %v9347 = vmax.f32 %v9343, %v9346
    %v9348 = vsel %vm762, %v8838, -inf
    %v9349 = vmax.f32 %v9345, %v9348
    %v9350 = vsel %vm762, %v8840, -inf
    %v9351 = vmax.f32 %v9347, %v9350
    %v9352 = vsel %vm762, %v8842, -inf
    %v9353 = vmax.f32 %v9349, %v9352
    %v9354 = vsel %vm762, %v8844, -inf
    %v9355 = vmax.f32 %v9351, %v9354
    %v9356 = vsel %vm762, %v8846, -inf
    %v9357 = vmax.f32 %v9353, %v9356
    %v9358 = vsel %vm762, %v8848, -inf
    %v9359 = vmax.f32 %v9355, %v9358
    %v9360 = vsel %vm762, %v8850, -inf
    %v9361 = vmax.f32 %v9357, %v9360
    %v9362 = vsel %vm762, %v8852, -inf
    %v9363 = vmax.f32 %v9359, %v9362
    %v9364 = vsel %vm762, %v8854, -inf
    %v9365 = vmax.f32 %v9361, %v9364
    %v9366 = vsel %vm762, %v8856, -inf
    %v9367 = vmax.f32 %v9363, %v9366
    %v9368 = vsel %vm762, %v8858, -inf
    %v9369 = vmax.f32 %v9365, %v9368
    %v9370 = vsel %vm762, %v8860, -inf
    %v9371 = vmax.f32 %v9367, %v9370
    %v9372 = vsel %vm762, %v8862, -inf
    %v9373 = vmax.f32 %v9369, %v9372
    %v9374 = vsel %vm762, %v8864, -inf
    %v9375 = vmax.f32 %v9371, %v9374
    %v9376 = vsel %vm762, %v8866, -inf
    %v9377 = vmax.f32 %v9373, %v9376
    %v9378 = vsel %vm762, %v8868, -inf
    %v9379 = vmax.f32 %v9375, %v9378
    %v9380 = vsel %vm762, %v8870, -inf
    %v9381 = vmax.f32 %v9377, %v9380
    %v9382 = vsel %vm762, %v8872, -inf
    %v9383 = vmax.f32 %v9379, %v9382
    %v9384 = vsel %vm762, %v8874, -inf
    %v9385 = vmax.f32 %v9381, %v9384
    %v9386 = vsel %vm762, %v8876, -inf
    %v9387 = vmax.f32 %v9383, %v9386
    %v9388 = vsel %vm762, %v8878, -inf
    %v9389 = vmax.f32 %v9385, %v9388
    %v9390 = vsel %vm762, %v8880, -inf
    %v9391 = vmax.f32 %v9387, %v9390
    %v9392 = vsel %vm762, %v8882, -inf
    %v9393 = vmax.f32 %v9389, %v9392
    %v9394 = vsel %vm762, %v8884, -inf
    %v9395 = vmax.f32 %v9391, %v9394
    %v9396 = vsel %vm762, %v8886, -inf
    %v9397 = vmax.f32 %v9393, %v9396
    %v9398 = vsel %vm762, %v8888, -inf
    %v9399 = vmax.f32 %v9395, %v9398
    %v9400 = vsel %vm762, %v8890, -inf
    %v9401 = vmax.f32 %v9397, %v9400
    %v9402 = vsel %vm762, %v8892, -inf
    %v9403 = vmax.f32 %v9399, %v9402
    %v9404 = vsel %vm762, %v8894, -inf
    %v9405 = vmax.f32 %v9401, %v9404
    %v9406 = vsel %vm762, %v8896, -inf
    %v9407 = vmax.f32 %v9403, %v9406
    %v9408 = vsel %vm762, %v8898, -inf
    %v9409 = vmax.f32 %v9405, %v9408
    %v9410 = vsel %vm762, %v8900, -inf
    %v9411 = vmax.f32 %v9407, %v9410
    %v9412 = vsel %vm762, %v8902, -inf
    %v9413 = vmax.f32 %v9409, %v9412
    %v9414 = vsel %vm762, %v8904, -inf
    %v9415 = vmax.f32 %v9411, %v9414
    %v9416 = vsel %vm762, %v8906, -inf
    %v9417 = vmax.f32 %v9413, %v9416
    %v9418 = vsel %vm762, %v8908, -inf
    %v9419 = vmax.f32 %v9415, %v9418
    %v9420 = vsel %vm762, %v8910, -inf
    %v9421 = vmax.f32 %v9417, %v9420
    %v9422 = vsel %vm762, %v8912, -inf
    %v9423 = vmax.f32 %v9419, %v9422
    %v9424 = vsel %vm762, %v8914, -inf
    %v9425 = vmax.f32 %v9421, %v9424
    %v9426 = vsel %vm762, %v8916, -inf
    %v9427 = vmax.f32 %v9423, %v9426
    %v9428 = vsel %vm762, %v8918, -inf
    %v9429 = vmax.f32 %v9425, %v9428
    %v9430 = vsel %vm762, %v8920, -inf
    %v9431 = vmax.f32 %v9427, %v9430
    %v9432 = vsel %vm762, %v8922, -inf
    %v9433 = vmax.f32 %v9429, %v9432
    %v9434 = vsel %vm762, %v8924, -inf
    %v9435 = vmax.f32 %v9431, %v9434
    %v9436 = vsel %vm762, %v8926, -inf
    %v9437 = vmax.f32 %v9433, %v9436
    %v9438 = vsel %vm762, %v8928, -inf
    %v9439 = vmax.f32 %v9435, %v9438
    %v9440 = vsel %vm762, %v8930, -inf
    %v9441 = vmax.f32 %v9437, %v9440
    %v9442 = vsel %vm762, %v8932, -inf
    %v9443 = vmax.f32 %v9439, %v9442
    %v9444 = vsel %vm762, %v8934, -inf
    %v9445 = vmax.f32 %v9441, %v9444
    %v9446 = vsel %vm762, %v8936, -inf
    %v9447 = vmax.f32 %v9443, %v9446
    %v9448 = vsel %vm762, %v8938, -inf
    %v9449 = vmax.f32 %v9445, %v9448
    %v9450 = vsel %vm762, %v8940, -inf
    %v9451 = vmax.f32 %v9447, %v9450
    %v9452 = vsel %vm762, %v8942, -inf
    %v9453 = vmax.f32 %v9449, %v9452
    %v9454 = vsel %vm762, %v8944, -inf
    %v9455 = vmax.f32 %v9451, %v9454
    %v9456 = vsel %vm762, %v8946, -inf
    %v9457 = vmax.f32 %v9453, %v9456
    %v9458 = vsel %vm762, %v8948, -inf
    %v9459 = vmax.f32 %v9455, %v9458
    %v9460 = vsel %vm762, %v8950, -inf
    %v9461 = vmax.f32 %v9457, %v9460
    %v9462 = vsel %vm762, %v8952, -inf
    %v9463 = vmax.f32 %v9459, %v9462
    %v9464 = vsel %vm762, %v8954, -inf
    %v9465 = vmax.f32 %v9461, %v9464
    %v9466 = vsel %vm762, %v8956, -inf
    %v9467 = vmax.f32 %v9463, %v9466
    %v9468 = vsel %vm762, %v8958, -inf
    %v9469 = vmax.f32 %v9465, %v9468
    %v9470 = vsel %vm762, %v8960, -inf
    %v9471 = vmax.f32 %v9467, %v9470
    %v9472 = vsel %vm762, %v8962, -inf
    %v9473 = vmax.f32 %v9469, %v9472
    %v9474 = vsel %vm762, %v8964, -inf
    %v9475 = vmax.f32 %v9471, %v9474
    %v9476 = vsel %vm762, %v8966, -inf
    %v9477 = vmax.f32 %v9473, %v9476
    %v9478 = vsel %vm762, %v8968, -inf
    %v9479 = vmax.f32 %v9475, %v9478
    %v9480 = vsel %vm762, %v8970, -inf
    %v9481 = vmax.f32 %v9477, %v9480
    %v9482 = vsel %vm762, %v8972, -inf
    %v9483 = vmax.f32 %v9479, %v9482
    %v9484 = vsel %vm762, %v8974, -inf
    %v9485 = vmax.f32 %v9481, %v9484
    %v9486 = vsel %vm762, %v8976, -inf
    %v9487 = vmax.f32 %v9483, %v9486
    %v9488 = vsel %vm762, %v8978, -inf
    %v9489 = vmax.f32 %v9485, %v9488
    %v9490 = vsel %vm762, %v8980, -inf
    %v9491 = vmax.f32 %v9487, %v9490
    %v9492 = vsel %vm762, %v8982, -inf
    %v9493 = vmax.f32 %v9489, %v9492
    %v9494 = vsel %vm762, %v8984, -inf
    %v9495 = vmax.f32 %v9491, %v9494
    %v9496 = vsel %vm762, %v8986, -inf
    %v9497 = vmax.f32 %v9493, %v9496
    %v9498 = vsel %vm762, %v8988, -inf
    %v9499 = vmax.f32 %v9495, %v9498
    %v9500 = vsel %vm762, %v8990, -inf
    %v9501 = vmax.f32 %v9497, %v9500
    %v9502 = vsel %vm762, %v8992, -inf
    %v9503 = vmax.f32 %v9499, %v9502
    %v9504 = vsel %vm762, %v8994, -inf
    %v9505 = vmax.f32 %v9501, %v9504
    %v9506 = vsel %vm762, %v8996, -inf
    %v9507 = vmax.f32 %v9503, %v9506
    %v9508 = vsel %vm762, %v8998, -inf
    %v9509 = vmax.f32 %v9505, %v9508
    %v9510 = vsel %vm762, %v9000, -inf
    %v9511 = vmax.f32 %v9507, %v9510
    %v9512 = vsel %vm762, %v9002, -inf
    %v9513 = vmax.f32 %v9509, %v9512
    %v9514 = vsel %vm762, %v9004, -inf
    %v9515 = vmax.f32 %v9511, %v9514
    %v9516 = vsel %vm762, %v9006, -inf
    %v9517 = vmax.f32 %v9513, %v9516
    %v9518 = vsel %vm762, %v9008, -inf
    %v9519 = vmax.f32 %v9515, %v9518
    %v9520 = vsel %vm762, %v9010, -inf
    %v9521 = vmax.f32 %v9517, %v9520
    %v9522 = vsel %vm762, %v9012, -inf
    %v9523 = vmax.f32 %v9519, %v9522
    %v9524 = vsel %vm762, %v9014, -inf
    %v9525 = vmax.f32 %v9521, %v9524
    %v9526 = vsel %vm762, %v9016, -inf
    %v9527 = vmax.f32 %v9523, %v9526
    %v9528 = vsel %vm762, %v9018, -inf
    %v9529 = vmax.f32 %v9525, %v9528
    %v9530 = vsel %vm762, %v9020, -inf
    %v9531 = vmax.f32 %v9527, %v9530
    %v9532 = vsel %vm762, %v9022, -inf
    %v9533 = vmax.f32 %v9529, %v9532
    %v9534 = vsel %vm762, %v9024, -inf
    %v9535 = vmax.f32 %v9531, %v9534
    %v9536 = vsel %vm762, %v9026, -inf
    %v9537 = vmax.f32 %v9533, %v9536
    %v9538 = vsel %vm762, %v9028, -inf
    %v9539 = vmax.f32 %v9535, %v9538
    %v9540 = vsel %vm762, %v9030, -inf
    %v9541 = vmax.f32 %v9537, %v9540
    %v9542 = vsel %vm762, %v9032, -inf
    %v9543 = vmax.f32 %v9539, %v9542
    %v9544 = vsel %vm762, %v9034, -inf
    %v9545 = vmax.f32 %v9541, %v9544
    %v9546 = vsel %vm762, %v9036, -inf
    %v9547 = vmax.f32 %v9543, %v9546
    %v9548 = vsel %vm762, %v9038, -inf
    %v9549 = vmax.f32 %v9545, %v9548
    %v9550 = vsel %vm762, %v9040, -inf
    %v9551 = vmax.f32 %v9547, %v9550
    %v9552 = vsel %vm762, %v9042, -inf
    %v9553 = vmax.f32 %v9549, %v9552
    %v9554 = vsel %vm762, %v9044, -inf
    %v9555 = vmax.f32 %v9551, %v9554
    %v9556 = vsel %vm762, %v9046, -inf
    %v9557 = vmax.f32 %v9553, %v9556
    %v9558 = vsel %vm762, %v9048, -inf
    %v9559 = vmax.f32 %v9555, %v9558
    %v9560 = vsel %vm762, %v9050, -inf
    %v9561 = vmax.f32 %v9557, %v9560
    %v9562 = vsel %vm762, %v9052, -inf
    %v9563 = vmax.f32 %v9559, %v9562
    %v9564 = vsel %vm762, %v9054, -inf
    %v9565 = vmax.f32 %v9561, %v9564
    %v9566 = vsel %vm762, %v9056, -inf
    %v9567 = vmax.f32 %v9563, %v9566
    %v9568 = vsel %vm762, %v9058, -inf
    %v9569 = vmax.f32 %v9565, %v9568
    %v9570 = vsel %vm762, %v9060, -inf
    %v9571 = vmax.f32 %v9567, %v9570
    %v9572 = vsel %vm762, %v9062, -inf
    %v9573 = vmax.f32 %v9569, %v9572
    %v9574 = vsel %vm762, %v9064, -inf
    %v9575 = vmax.f32 %v9571, %v9574
    %v9576 = vsel %vm762, %v9066, -inf
    %v9577 = vmax.f32 %v9573, %v9576
    %v9578 = vsel %vm762, %v9068, -inf
    %v9579 = vmax.f32 %v9575, %v9578
    %v9580 = vsel %vm762, %v9070, -inf
    %v9581 = vmax.f32 %v9577, %v9580
    %v9582 = vsel %vm762, %v9072, -inf
    %v9583 = vmax.f32 %v9579, %v9582
    %v9584 = vsel %vm762, %v9074, -inf
    %v9585 = vmax.f32 %v9581, %v9584
    %v9586 = vsel %vm762, %v9076, -inf
    %v9587 = vmax.f32 %v9583, %v9586
    %v9588 = vsel %vm762, %v9078, -inf
    %v9589 = vmax.f32 %v9585, %v9588
    %v9590 = vsel %vm762, %v9080, -inf
    %v9591 = vmax.f32 %v9587, %v9590
    %v9592 = vsel %vm762, %v9082, -inf
    %v9593 = vmax.f32 %v9589, %v9592
    %v9594 = vsel %vm762, %v9084, -inf
    %v9595 = vmax.f32 %v9591, %v9594
    %v9596 = vsel %vm762, %v9086, -inf
    %v9597 = vmax.f32 %v9593, %v9596
    %v9598 = vsel %vm762, %v9088, -inf
    %v9599 = vmax.f32 %v9595, %v9598
    %v9600 = vsel %vm762, %v9090, -inf
    %v9601 = vmax.f32 %v9597, %v9600
    %v9602 = vsel %vm762, %v9092, -inf
    %v9603 = vmax.f32 %v9599, %v9602
    %v9604 = vsel %vm762, %v9094, -inf
    %v9605 = vmax.f32 %v9601, %v9604
    %v9606 = vsel %vm762, %v9096, -inf
    %v9607 = vmax.f32 %v9603, %v9606
    %v9608 = vsel %vm762, %v9098, -inf
    %v9609 = vmax.f32 %v9605, %v9608
    %v9610 = vsel %vm762, %v9100, -inf
    %v9611 = vmax.f32 %v9607, %v9610
    %v9612 = vsel %vm762, %v9102, -inf
    %v9613 = vmax.f32 %v9609, %v9612
    %v9614 = vsel %vm762, %v9104, -inf
    %v9615 = vmax.f32 %v9611, %v9614
    %v9616 = vsel %vm762, %v9106, -inf
    %v9617 = vmax.f32 %v9613, %v9616
    %v9618 = vsel %vm762, %v9108, -inf
    %v9619 = vmax.f32 %v9615, %v9618
    %v9620 = vsel %vm762, %v9110, -inf
    %v9621 = vmax.f32 %v9617, %v9620
    %v9622 = vsel %vm762, %v9112, -inf
    %v9623 = vmax.f32 %v9619, %v9622
    %v9624 = vsel %vm762, %v9114, -inf
    %v9625 = vmax.f32 %v9621, %v9624
    %v9626 = vsel %vm762, %v9116, -inf
    %v9627 = vmax.f32 %v9623, %v9626
    %v9628 = vsel %vm762, %v9118, -inf
    %v9629 = vmax.f32 %v9625, %v9628
    %v9630 = vsel %vm762, %v9120, -inf
    %v9631 = vmax.f32 %v9627, %v9630
    %v9632 = vsel %vm762, %v9122, -inf
    %v9633 = vmax.f32 %v9629, %v9632
    %v9634 = vsel %vm762, %v9124, -inf
    %v9635 = vmax.f32 %v9631, %v9634
    %v9636 = vsel %vm762, %v9126, -inf
    %v9637 = vmax.f32 %v9633, %v9636
    %v9638 = vsel %vm762, %v9128, -inf
    %v9639 = vmax.f32 %v9635, %v9638
    %v9640 = vsel %vm762, %v9130, -inf
    %v9641 = vmax.f32 %v9637, %v9640
    %v9642 = vsel %vm762, %v9132, -inf
    %v9643 = vmax.f32 %v9639, %v9642
    %v9644 = vsel %vm762, %v9134, -inf
    %v9645 = vmax.f32 %v9641, %v9644
    %v9646 = vsel %vm762, %v9136, -inf
    %v9647 = vmax.f32 %v9643, %v9646
    %v9648 = vsel %vm762, %v9138, -inf
    %v9649 = vmax.f32 %v9645, %v9648
    %v9650 = vsel %vm762, %v9140, -inf
    %v9651 = vmax.f32 %v9647, %v9650
    %v9652 = vsel %vm762, %v9142, -inf
    %v9653 = vmax.f32 %v9649, %v9652
    %v9654 = vsel %vm762, %v9144, -inf
    %v9655 = vmax.f32 %v9651, %v9654
    %v9656 = vsel %vm762, %v9146, -inf
    %v9657 = vmax.f32 %v9653, %v9656
    %v9658 = vsel %vm762, %v9148, -inf
    %v9659 = vmax.f32 %v9655, %v9658
    %v9660 = vsel %vm762, %v9150, -inf
    %v9661 = vmax.f32 %v9657, %v9660
    %v9662 = vsel %vm762, %v9152, -inf
    %v9663 = vmax.f32 %v9659, %v9662
    %v9664 = vsel %vm762, %v9154, -inf
    %v9665 = vmax.f32 %v9661, %v9664
    %v9666 = vsel %vm762, %v9156, -inf
    %v9667 = vmax.f32 %v9663, %v9666
    %v9668 = vsel %vm762, %v9158, -inf
    %v9669 = vmax.f32 %v9665, %v9668
    %v9670 = vsel %vm762, %v9160, -inf
    %v9671 = vmax.f32 %v9667, %v9670
    %v9672 = vsel %vm762, %v9162, -inf
    %v9673 = vmax.f32 %v9669, %v9672
    %v9674 = vsel %vm762, %v9164, -inf
    %v9675 = vmax.f32 %v9671, %v9674
    %v9676 = vsel %vm762, %v9166, -inf
    %v9677 = vmax.f32 %v9673, %v9676
    %v9678 = vsel %vm762, %v9168, -inf
    %v9679 = vmax.f32 %v9675, %v9678
    %v9680 = vsel %vm762, %v9170, -inf
    %v9681 = vmax.f32 %v9677, %v9680
    %v9682 = vsel %vm762, %v9172, -inf
    %v9683 = vmax.f32 %v9679, %v9682
    %v9684 = vsel %vm762, %v9174, -inf
    %v9685 = vmax.f32 %v9681, %v9684
    %v9686 = vsel %vm762, %v9176, -inf
    %v9687 = vmax.f32 %v9683, %v9686
    %v9688 = vsel %vm762, %v9178, -inf
    %v9689 = vmax.f32 %v9685, %v9688
    %v9690 = vsel %vm762, %v9180, -inf
    %v9691 = vmax.f32 %v9687, %v9690
    %v9692 = vsel %vm762, %v9182, -inf
    %v9693 = vmax.f32 %v9689, %v9692
    %v9694 = vsel %vm762, %v9184, -inf
    %v9695 = vmax.f32 %v9691, %v9694
    %v9696 = vsel %vm762, %v9186, -inf
    %v9697 = vmax.f32 %v9693, %v9696
    %v9698 = vsel %vm762, %v9188, -inf
    %v9699 = vmax.f32 %v9695, %v9698
    %v9700 = vsel %vm762, %v9190, -inf
    %v9701 = vmax.f32 %v9697, %v9700
    %v9702 = vsel %vm762, %v9192, -inf
    %v9703 = vmax.f32 %v9699, %v9702
    %v9704 = vsel %vm762, %v9194, -inf
    %v9705 = vmax.f32 %v9701, %v9704
    %v9706 = vsel %vm762, %v9196, -inf
    %v9707 = vmax.f32 %v9703, %v9706
    %v9708 = vsel %vm762, %v9198, -inf
    %v9709 = vmax.f32 %v9705, %v9708
    %v9710 = vsel %vm762, %v9200, -inf
    %v9711 = vmax.f32 %v9707, %v9710
    %v9712 = vsel %vm762, %v9202, -inf
    %v9713 = vmax.f32 %v9709, %v9712
    %v9714 = vsel %vm762, %v9204, -inf
    %v9715 = vmax.f32 %v9711, %v9714
    %v9716 = vsel %vm762, %v9206, -inf
    %v9717 = vmax.f32 %v9713, %v9716
    %v9718 = vsel %vm762, %v9208, -inf
    %v9719 = vmax.f32 %v9715, %v9718
    %v9720 = vsel %vm762, %v9210, -inf
    %v9721 = vmax.f32 %v9717, %v9720
    %v9722 = vsel %vm762, %v9212, -inf
    %v9723 = vmax.f32 %v9719, %v9722
    %v9724 = vsel %vm762, %v9214, -inf
    %v9725 = vmax.f32 %v9721, %v9724
    %v9726 = vsel %vm762, %v9216, -inf
    %v9727 = vmax.f32 %v9723, %v9726
    %v9728 = vsel %vm762, %v9218, -inf
    %v9729 = vmax.f32 %v9725, %v9728
    %v9730 = vsel %vm762, %v9220, -inf
    %v9731 = vmax.f32 %v9727, %v9730
    %v9732 = vsel %vm762, %v9222, -inf
    %v9733 = vmax.f32 %v9729, %v9732
    %v9734 = vsel %vm762, %v9224, -inf
    %v9735 = vmax.f32 %v9731, %v9734
    %v9736 = vsel %vm762, %v9226, -inf
    %v9737 = vmax.f32 %v9733, %v9736
    %v9738 = vsel %vm762, %v9228, -inf
    %v9739 = vmax.f32 %v9735, %v9738
    %v9740 = vsel %vm762, %v9230, -inf
    %v9741 = vmax.f32 %v9737, %v9740
    %v9742 = vsel %vm762, %v9232, -inf
    %v9743 = vmax.f32 %v9739, %v9742
    %v9744 = vsel %vm762, %v9234, -inf
    %v9745 = vmax.f32 %v9741, %v9744
    %v9746 = vsel %vm762, %v9236, -inf
    %v9747 = vmax.f32 %v9743, %v9746
    %v9748 = vsel %vm762, %v9238, -inf
    %v9749 = vmax.f32 %v9745, %v9748
    %v9750 = vsel %vm762, %v9240, -inf
    %v9751 = vmax.f32 %v9747, %v9750
    %v9752 = vsel %vm762, %v9242, -inf
    %v9753 = vmax.f32 %v9749, %v9752
    %v9754 = vsel %vm762, %v9244, -inf
    %v9755 = vmax.f32 %v9751, %v9754
    %v9756 = vsel %vm762, %v9246, -inf
    %v9757 = vmax.f32 %v9753, %v9756
    %v9758 = vsel %vm762, %v9248, -inf
    %v9759 = vmax.f32 %v9755, %v9758
    %v9760 = vsel %vm762, %v9250, -inf
    %v9761 = vmax.f32 %v9757, %v9760
    %v9762 = vsel %vm762, %v9252, -inf
    %v9763 = vmax.f32 %v9759, %v9762
    %v9764 = vsel %vm762, %v9254, -inf
    %v9765 = vmax.f32 %v9761, %v9764
    %v9766 = vsel %vm762, %v9256, -inf
    %v9767 = vmax.f32 %v9763, %v9766
    %v9768 = vsel %vm762, %v9258, -inf
    %v9769 = vmax.f32 %v9765, %v9768
    %v9770 = vsel %vm762, %v9260, -inf
    %v9771 = vmax.f32 %v9767, %v9770
    %v9772 = vsel %vm762, %v9262, -inf
    %v9773 = vmax.f32 %v9769, %v9772
    %v9774 = vsel %vm762, %v9264, -inf
    %v9775 = vmax.f32 %v9771, %v9774
    %v9776 = vsel %vm762, %v9266, -inf
    %v9777 = vmax.f32 %v9773, %v9776
    %v9778 = vsel %vm762, %v9268, -inf
    %v9779 = vmax.f32 %v9775, %v9778
    %v9780 = vsel %vm762, %v9270, -inf
    %v9781 = vmax.f32 %v9777, %v9780
    %v9782 = vsel %vm762, %v9272, -inf
    %v9783 = vmax.f32 %v9779, %v9782
    %v9784 = vsel %vm762, %v9274, -inf
    %v9785 = vmax.f32 %v9781, %v9784
    %v9786 = vsel %vm762, %v9276, -inf
    %v9787 = vmax.f32 %v9783, %v9786
    %v9788 = vsel %vm762, %v9278, -inf
    %v9789 = vmax.f32 %v9785, %v9788
    %v9790 = vmax.f32 %v9787, %v9789
    %v9791 = vsel %vm762, %v8769, -inf
    %v9792 = vsel %vm762, %v8771, -inf
    %v9793 = vsel %vm762, %v8773, -inf
    %v9794 = vmax.f32 %v9791, %v9793
    %v9795 = vsel %vm762, %v8775, -inf
    %v9796 = vmax.f32 %v9792, %v9795
    %v9797 = vsel %vm762, %v8777, -inf
    %v9798 = vmax.f32 %v9794, %v9797
    %v9799 = vsel %vm762, %v8779, -inf
    %v9800 = vmax.f32 %v9796, %v9799
    %v9801 = vsel %vm762, %v8781, -inf
    %v9802 = vmax.f32 %v9798, %v9801
    %v9803 = vsel %vm762, %v8783, -inf
    %v9804 = vmax.f32 %v9800, %v9803
    %v9805 = vsel %vm762, %v8785, -inf
    %v9806 = vmax.f32 %v9802, %v9805
    %v9807 = vsel %vm762, %v8787, -inf
    %v9808 = vmax.f32 %v9804, %v9807
    %v9809 = vsel %vm762, %v8789, -inf
    %v9810 = vmax.f32 %v9806, %v9809
    %v9811 = vsel %vm762, %v8791, -inf
    %v9812 = vmax.f32 %v9808, %v9811
    %v9813 = vsel %vm762, %v8793, -inf
    %v9814 = vmax.f32 %v9810, %v9813
    %v9815 = vsel %vm762, %v8795, -inf
    %v9816 = vmax.f32 %v9812, %v9815
    %v9817 = vsel %vm762, %v8797, -inf
    %v9818 = vmax.f32 %v9814, %v9817
    %v9819 = vsel %vm762, %v8799, -inf
    %v9820 = vmax.f32 %v9816, %v9819
    %v9821 = vsel %vm762, %v8801, -inf
    %v9822 = vmax.f32 %v9818, %v9821
    %v9823 = vsel %vm762, %v8803, -inf
    %v9824 = vmax.f32 %v9820, %v9823
    %v9825 = vsel %vm762, %v8805, -inf
    %v9826 = vmax.f32 %v9822, %v9825
    %v9827 = vsel %vm762, %v8807, -inf
    %v9828 = vmax.f32 %v9824, %v9827
    %v9829 = vsel %vm762, %v8809, -inf
    %v9830 = vmax.f32 %v9826, %v9829
    %v9831 = vsel %vm762, %v8811, -inf
    %v9832 = vmax.f32 %v9828, %v9831
    %v9833 = vsel %vm762, %v8813, -inf
    %v9834 = vmax.f32 %v9830, %v9833
    %v9835 = vsel %vm762, %v8815, -inf
    %v9836 = vmax.f32 %v9832, %v9835
    %v9837 = vsel %vm762, %v8817, -inf
    %v9838 = vmax.f32 %v9834, %v9837
    %v9839 = vsel %vm762, %v8819, -inf
    %v9840 = vmax.f32 %v9836, %v9839
    %v9841 = vsel %vm762, %v8821, -inf
    %v9842 = vmax.f32 %v9838, %v9841
    %v9843 = vsel %vm762, %v8823, -inf
    %v9844 = vmax.f32 %v9840, %v9843
    %v9845 = vsel %vm762, %v8825, -inf
    %v9846 = vmax.f32 %v9842, %v9845
    %v9847 = vsel %vm762, %v8827, -inf
    %v9848 = vmax.f32 %v9844, %v9847
    %v9849 = vsel %vm762, %v8829, -inf
    %v9850 = vmax.f32 %v9846, %v9849
    %v9851 = vsel %vm762, %v8831, -inf
    %v9852 = vmax.f32 %v9848, %v9851
    %v9853 = vsel %vm762, %v8833, -inf
    %v9854 = vmax.f32 %v9850, %v9853
    %v9855 = vsel %vm762, %v8835, -inf
    %v9856 = vmax.f32 %v9852, %v9855
    %v9857 = vsel %vm762, %v8837, -inf
    %v9858 = vmax.f32 %v9854, %v9857
    %v9859 = vsel %vm762, %v8839, -inf
    %v9860 = vmax.f32 %v9856, %v9859
    %v9861 = vsel %vm762, %v8841, -inf
    %v9862 = vmax.f32 %v9858, %v9861
    %v9863 = vsel %vm762, %v8843, -inf
    %v9864 = vmax.f32 %v9860, %v9863
    %v9865 = vsel %vm762, %v8845, -inf
    %v9866 = vmax.f32 %v9862, %v9865
    %v9867 = vsel %vm762, %v8847, -inf
    %v9868 = vmax.f32 %v9864, %v9867
    %v9869 = vsel %vm762, %v8849, -inf
    %v9870 = vmax.f32 %v9866, %v9869
    %v9871 = vsel %vm762, %v8851, -inf
    %v9872 = vmax.f32 %v9868, %v9871
    %v9873 = vsel %vm762, %v8853, -inf
    %v9874 = vmax.f32 %v9870, %v9873
    %v9875 = vsel %vm762, %v8855, -inf
    %v9876 = vmax.f32 %v9872, %v9875
    %v9877 = vsel %vm762, %v8857, -inf
    %v9878 = vmax.f32 %v9874, %v9877
    %v9879 = vsel %vm762, %v8859, -inf
    %v9880 = vmax.f32 %v9876, %v9879
    %v9881 = vsel %vm762, %v8861, -inf
    %v9882 = vmax.f32 %v9878, %v9881
    %v9883 = vsel %vm762, %v8863, -inf
    %v9884 = vmax.f32 %v9880, %v9883
    %v9885 = vsel %vm762, %v8865, -inf
    %v9886 = vmax.f32 %v9882, %v9885
    %v9887 = vsel %vm762, %v8867, -inf
    %v9888 = vmax.f32 %v9884, %v9887
    %v9889 = vsel %vm762, %v8869, -inf
    %v9890 = vmax.f32 %v9886, %v9889
    %v9891 = vsel %vm762, %v8871, -inf
    %v9892 = vmax.f32 %v9888, %v9891
    %v9893 = vsel %vm762, %v8873, -inf
    %v9894 = vmax.f32 %v9890, %v9893
    %v9895 = vsel %vm762, %v8875, -inf
    %v9896 = vmax.f32 %v9892, %v9895
    %v9897 = vsel %vm762, %v8877, -inf
    %v9898 = vmax.f32 %v9894, %v9897
    %v9899 = vsel %vm762, %v8879, -inf
    %v9900 = vmax.f32 %v9896, %v9899
    %v9901 = vsel %vm762, %v8881, -inf
    %v9902 = vmax.f32 %v9898, %v9901
    %v9903 = vsel %vm762, %v8883, -inf
    %v9904 = vmax.f32 %v9900, %v9903
    %v9905 = vsel %vm762, %v8885, -inf
    %v9906 = vmax.f32 %v9902, %v9905
    %v9907 = vsel %vm762, %v8887, -inf
    %v9908 = vmax.f32 %v9904, %v9907
    %v9909 = vsel %vm762, %v8889, -inf
    %v9910 = vmax.f32 %v9906, %v9909
    %v9911 = vsel %vm762, %v8891, -inf
    %v9912 = vmax.f32 %v9908, %v9911
    %v9913 = vsel %vm762, %v8893, -inf
    %v9914 = vmax.f32 %v9910, %v9913
    %v9915 = vsel %vm762, %v8895, -inf
    %v9916 = vmax.f32 %v9912, %v9915
    %v9917 = vsel %vm762, %v8897, -inf
    %v9918 = vmax.f32 %v9914, %v9917
    %v9919 = vsel %vm762, %v8899, -inf
    %v9920 = vmax.f32 %v9916, %v9919
    %v9921 = vsel %vm762, %v8901, -inf
    %v9922 = vmax.f32 %v9918, %v9921
    %v9923 = vsel %vm762, %v8903, -inf
    %v9924 = vmax.f32 %v9920, %v9923
    %v9925 = vsel %vm762, %v8905, -inf
    %v9926 = vmax.f32 %v9922, %v9925
    %v9927 = vsel %vm762, %v8907, -inf
    %v9928 = vmax.f32 %v9924, %v9927
    %v9929 = vsel %vm762, %v8909, -inf
    %v9930 = vmax.f32 %v9926, %v9929
    %v9931 = vsel %vm762, %v8911, -inf
    %v9932 = vmax.f32 %v9928, %v9931
    %v9933 = vsel %vm762, %v8913, -inf
    %v9934 = vmax.f32 %v9930, %v9933
    %v9935 = vsel %vm762, %v8915, -inf
    %v9936 = vmax.f32 %v9932, %v9935
    %v9937 = vsel %vm762, %v8917, -inf
    %v9938 = vmax.f32 %v9934, %v9937
    %v9939 = vsel %vm762, %v8919, -inf
    %v9940 = vmax.f32 %v9936, %v9939
    %v9941 = vsel %vm762, %v8921, -inf
    %v9942 = vmax.f32 %v9938, %v9941
    %v9943 = vsel %vm762, %v8923, -inf
    %v9944 = vmax.f32 %v9940, %v9943
    %v9945 = vsel %vm762, %v8925, -inf
    %v9946 = vmax.f32 %v9942, %v9945
    %v9947 = vsel %vm762, %v8927, -inf
    %v9948 = vmax.f32 %v9944, %v9947
    %v9949 = vsel %vm762, %v8929, -inf
    %v9950 = vmax.f32 %v9946, %v9949
    %v9951 = vsel %vm762, %v8931, -inf
    %v9952 = vmax.f32 %v9948, %v9951
    %v9953 = vsel %vm762, %v8933, -inf
    %v9954 = vmax.f32 %v9950, %v9953
    %v9955 = vsel %vm762, %v8935, -inf
    %v9956 = vmax.f32 %v9952, %v9955
    %v9957 = vsel %vm762, %v8937, -inf
    %v9958 = vmax.f32 %v9954, %v9957
    %v9959 = vsel %vm762, %v8939, -inf
    %v9960 = vmax.f32 %v9956, %v9959
    %v9961 = vsel %vm762, %v8941, -inf
    %v9962 = vmax.f32 %v9958, %v9961
    %v9963 = vsel %vm762, %v8943, -inf
    %v9964 = vmax.f32 %v9960, %v9963
    %v9965 = vsel %vm762, %v8945, -inf
    %v9966 = vmax.f32 %v9962, %v9965
    %v9967 = vsel %vm762, %v8947, -inf
    %v9968 = vmax.f32 %v9964, %v9967
    %v9969 = vsel %vm762, %v8949, -inf
    %v9970 = vmax.f32 %v9966, %v9969
    %v9971 = vsel %vm762, %v8951, -inf
    %v9972 = vmax.f32 %v9968, %v9971
    %v9973 = vsel %vm762, %v8953, -inf
    %v9974 = vmax.f32 %v9970, %v9973
    %v9975 = vsel %vm762, %v8955, -inf
    %v9976 = vmax.f32 %v9972, %v9975
    %v9977 = vsel %vm762, %v8957, -inf
    %v9978 = vmax.f32 %v9974, %v9977
    %v9979 = vsel %vm762, %v8959, -inf
    %v9980 = vmax.f32 %v9976, %v9979
    %v9981 = vsel %vm762, %v8961, -inf
    %v9982 = vmax.f32 %v9978, %v9981
    %v9983 = vsel %vm762, %v8963, -inf
    %v9984 = vmax.f32 %v9980, %v9983
    %v9985 = vsel %vm762, %v8965, -inf
    %v9986 = vmax.f32 %v9982, %v9985
    %v9987 = vsel %vm762, %v8967, -inf
    %v9988 = vmax.f32 %v9984, %v9987
    %v9989 = vsel %vm762, %v8969, -inf
    %v9990 = vmax.f32 %v9986, %v9989
    %v9991 = vsel %vm762, %v8971, -inf
    %v9992 = vmax.f32 %v9988, %v9991
    %v9993 = vsel %vm762, %v8973, -inf
    %v9994 = vmax.f32 %v9990, %v9993
    %v9995 = vsel %vm762, %v8975, -inf
    %v9996 = vmax.f32 %v9992, %v9995
    %v9997 = vsel %vm762, %v8977, -inf
    %v9998 = vmax.f32 %v9994, %v9997
    %v9999 = vsel %vm762, %v8979, -inf
    %v10000 = vmax.f32 %v9996, %v9999
    %v10001 = vsel %vm762, %v8981, -inf
    %v10002 = vmax.f32 %v9998, %v10001
    %v10003 = vsel %vm762, %v8983, -inf
    %v10004 = vmax.f32 %v10000, %v10003
    %v10005 = vsel %vm762, %v8985, -inf
    %v10006 = vmax.f32 %v10002, %v10005
    %v10007 = vsel %vm762, %v8987, -inf
    %v10008 = vmax.f32 %v10004, %v10007
    %v10009 = vsel %vm762, %v8989, -inf
    %v10010 = vmax.f32 %v10006, %v10009
    %v10011 = vsel %vm762, %v8991, -inf
    %v10012 = vmax.f32 %v10008, %v10011
    %v10013 = vsel %vm762, %v8993, -inf
    %v10014 = vmax.f32 %v10010, %v10013
    %v10015 = vsel %vm762, %v8995, -inf
    %v10016 = vmax.f32 %v10012, %v10015
    %v10017 = vsel %vm762, %v8997, -inf
    %v10018 = vmax.f32 %v10014, %v10017
    %v10019 = vsel %vm762, %v8999, -inf
    %v10020 = vmax.f32 %v10016, %v10019
    %v10021 = vsel %vm762, %v9001, -inf
    %v10022 = vmax.f32 %v10018, %v10021
    %v10023 = vsel %vm762, %v9003, -inf
    %v10024 = vmax.f32 %v10020, %v10023
    %v10025 = vsel %vm762, %v9005, -inf
    %v10026 = vmax.f32 %v10022, %v10025
    %v10027 = vsel %vm762, %v9007, -inf
    %v10028 = vmax.f32 %v10024, %v10027
    %v10029 = vsel %vm762, %v9009, -inf
    %v10030 = vmax.f32 %v10026, %v10029
    %v10031 = vsel %vm762, %v9011, -inf
    %v10032 = vmax.f32 %v10028, %v10031
    %v10033 = vsel %vm762, %v9013, -inf
    %v10034 = vmax.f32 %v10030, %v10033
    %v10035 = vsel %vm762, %v9015, -inf
    %v10036 = vmax.f32 %v10032, %v10035
    %v10037 = vsel %vm762, %v9017, -inf
    %v10038 = vmax.f32 %v10034, %v10037
    %v10039 = vsel %vm762, %v9019, -inf
    %v10040 = vmax.f32 %v10036, %v10039
    %v10041 = vsel %vm762, %v9021, -inf
    %v10042 = vmax.f32 %v10038, %v10041
    %v10043 = vsel %vm762, %v9023, -inf
    %v10044 = vmax.f32 %v10040, %v10043
    %v10045 = vsel %vm762, %v9025, -inf
    %v10046 = vmax.f32 %v10042, %v10045
    %v10047 = vsel %vm762, %v9027, -inf
    %v10048 = vmax.f32 %v10044, %v10047
    %v10049 = vsel %vm762, %v9029, -inf
    %v10050 = vmax.f32 %v10046, %v10049
    %v10051 = vsel %vm762, %v9031, -inf
    %v10052 = vmax.f32 %v10048, %v10051
    %v10053 = vsel %vm762, %v9033, -inf
    %v10054 = vmax.f32 %v10050, %v10053
    %v10055 = vsel %vm762, %v9035, -inf
    %v10056 = vmax.f32 %v10052, %v10055
    %v10057 = vsel %vm762, %v9037, -inf
    %v10058 = vmax.f32 %v10054, %v10057
    %v10059 = vsel %vm762, %v9039, -inf
    %v10060 = vmax.f32 %v10056, %v10059
    %v10061 = vsel %vm762, %v9041, -inf
    %v10062 = vmax.f32 %v10058, %v10061
    %v10063 = vsel %vm762, %v9043, -inf
    %v10064 = vmax.f32 %v10060, %v10063
    %v10065 = vsel %vm762, %v9045, -inf
    %v10066 = vmax.f32 %v10062, %v10065
    %v10067 = vsel %vm762, %v9047, -inf
    %v10068 = vmax.f32 %v10064, %v10067
    %v10069 = vsel %vm762, %v9049, -inf
    %v10070 = vmax.f32 %v10066, %v10069
    %v10071 = vsel %vm762, %v9051, -inf
    %v10072 = vmax.f32 %v10068, %v10071
    %v10073 = vsel %vm762, %v9053, -inf
    %v10074 = vmax.f32 %v10070, %v10073
    %v10075 = vsel %vm762, %v9055, -inf
    %v10076 = vmax.f32 %v10072, %v10075
    %v10077 = vsel %vm762, %v9057, -inf
    %v10078 = vmax.f32 %v10074, %v10077
    %v10079 = vsel %vm762, %v9059, -inf
    %v10080 = vmax.f32 %v10076, %v10079
    %v10081 = vsel %vm762, %v9061, -inf
    %v10082 = vmax.f32 %v10078, %v10081
    %v10083 = vsel %vm762, %v9063, -inf
    %v10084 = vmax.f32 %v10080, %v10083
    %v10085 = vsel %vm762, %v9065, -inf
    %v10086 = vmax.f32 %v10082, %v10085
    %v10087 = vsel %vm762, %v9067, -inf
    %v10088 = vmax.f32 %v10084, %v10087
    %v10089 = vsel %vm762, %v9069, -inf
    %v10090 = vmax.f32 %v10086, %v10089
    %v10091 = vsel %vm762, %v9071, -inf
    %v10092 = vmax.f32 %v10088, %v10091
    %v10093 = vsel %vm762, %v9073, -inf
    %v10094 = vmax.f32 %v10090, %v10093
    %v10095 = vsel %vm762, %v9075, -inf
    %v10096 = vmax.f32 %v10092, %v10095
    %v10097 = vsel %vm762, %v9077, -inf
    %v10098 = vmax.f32 %v10094, %v10097
    %v10099 = vsel %vm762, %v9079, -inf
    %v10100 = vmax.f32 %v10096, %v10099
    %v10101 = vsel %vm762, %v9081, -inf
    %v10102 = vmax.f32 %v10098, %v10101
    %v10103 = vsel %vm762, %v9083, -inf
    %v10104 = vmax.f32 %v10100, %v10103
    %v10105 = vsel %vm762, %v9085, -inf
    %v10106 = vmax.f32 %v10102, %v10105
    %v10107 = vsel %vm762, %v9087, -inf
    %v10108 = vmax.f32 %v10104, %v10107
    %v10109 = vsel %vm762, %v9089, -inf
    %v10110 = vmax.f32 %v10106, %v10109
    %v10111 = vsel %vm762, %v9091, -inf
    %v10112 = vmax.f32 %v10108, %v10111
    %v10113 = vsel %vm762, %v9093, -inf
    %v10114 = vmax.f32 %v10110, %v10113
    %v10115 = vsel %vm762, %v9095, -inf
    %v10116 = vmax.f32 %v10112, %v10115
    %v10117 = vsel %vm762, %v9097, -inf
    %v10118 = vmax.f32 %v10114, %v10117
    %v10119 = vsel %vm762, %v9099, -inf
    %v10120 = vmax.f32 %v10116, %v10119
    %v10121 = vsel %vm762, %v9101, -inf
    %v10122 = vmax.f32 %v10118, %v10121
    %v10123 = vsel %vm762, %v9103, -inf
    %v10124 = vmax.f32 %v10120, %v10123
    %v10125 = vsel %vm762, %v9105, -inf
    %v10126 = vmax.f32 %v10122, %v10125
    %v10127 = vsel %vm762, %v9107, -inf
    %v10128 = vmax.f32 %v10124, %v10127
    %v10129 = vsel %vm762, %v9109, -inf
    %v10130 = vmax.f32 %v10126, %v10129
    %v10131 = vsel %vm762, %v9111, -inf
    %v10132 = vmax.f32 %v10128, %v10131
    %v10133 = vsel %vm762, %v9113, -inf
    %v10134 = vmax.f32 %v10130, %v10133
    %v10135 = vsel %vm762, %v9115, -inf
    %v10136 = vmax.f32 %v10132, %v10135
    %v10137 = vsel %vm762, %v9117, -inf
    %v10138 = vmax.f32 %v10134, %v10137
    %v10139 = vsel %vm762, %v9119, -inf
    %v10140 = vmax.f32 %v10136, %v10139
    %v10141 = vsel %vm762, %v9121, -inf
    %v10142 = vmax.f32 %v10138, %v10141
    %v10143 = vsel %vm762, %v9123, -inf
    %v10144 = vmax.f32 %v10140, %v10143
    %v10145 = vsel %vm762, %v9125, -inf
    %v10146 = vmax.f32 %v10142, %v10145
    %v10147 = vsel %vm762, %v9127, -inf
    %v10148 = vmax.f32 %v10144, %v10147
    %v10149 = vsel %vm762, %v9129, -inf
    %v10150 = vmax.f32 %v10146, %v10149
    %v10151 = vsel %vm762, %v9131, -inf
    %v10152 = vmax.f32 %v10148, %v10151
    %v10153 = vsel %vm762, %v9133, -inf
    %v10154 = vmax.f32 %v10150, %v10153
    %v10155 = vsel %vm762, %v9135, -inf
    %v10156 = vmax.f32 %v10152, %v10155
    %v10157 = vsel %vm762, %v9137, -inf
    %v10158 = vmax.f32 %v10154, %v10157
    %v10159 = vsel %vm762, %v9139, -inf
    %v10160 = vmax.f32 %v10156, %v10159
    %v10161 = vsel %vm762, %v9141, -inf
    %v10162 = vmax.f32 %v10158, %v10161
    %v10163 = vsel %vm762, %v9143, -inf
    %v10164 = vmax.f32 %v10160, %v10163
    %v10165 = vsel %vm762, %v9145, -inf
    %v10166 = vmax.f32 %v10162, %v10165
    %v10167 = vsel %vm762, %v9147, -inf
    %v10168 = vmax.f32 %v10164, %v10167
    %v10169 = vsel %vm762, %v9149, -inf
    %v10170 = vmax.f32 %v10166, %v10169
    %v10171 = vsel %vm762, %v9151, -inf
    %v10172 = vmax.f32 %v10168, %v10171
    %v10173 = vsel %vm762, %v9153, -inf
    %v10174 = vmax.f32 %v10170, %v10173
    %v10175 = vsel %vm762, %v9155, -inf
    %v10176 = vmax.f32 %v10172, %v10175
    %v10177 = vsel %vm762, %v9157, -inf
    %v10178 = vmax.f32 %v10174, %v10177
    %v10179 = vsel %vm762, %v9159, -inf
    %v10180 = vmax.f32 %v10176, %v10179
    %v10181 = vsel %vm762, %v9161, -inf
    %v10182 = vmax.f32 %v10178, %v10181
    %v10183 = vsel %vm762, %v9163, -inf
    %v10184 = vmax.f32 %v10180, %v10183
    %v10185 = vsel %vm762, %v9165, -inf
    %v10186 = vmax.f32 %v10182, %v10185
    %v10187 = vsel %vm762, %v9167, -inf
    %v10188 = vmax.f32 %v10184, %v10187
    %v10189 = vsel %vm762, %v9169, -inf
    %v10190 = vmax.f32 %v10186, %v10189
    %v10191 = vsel %vm762, %v9171, -inf
    %v10192 = vmax.f32 %v10188, %v10191
    %v10193 = vsel %vm762, %v9173, -inf
    %v10194 = vmax.f32 %v10190, %v10193
    %v10195 = vsel %vm762, %v9175, -inf
    %v10196 = vmax.f32 %v10192, %v10195
    %v10197 = vsel %vm762, %v9177, -inf
    %v10198 = vmax.f32 %v10194, %v10197
    %v10199 = vsel %vm762, %v9179, -inf
    %v10200 = vmax.f32 %v10196, %v10199
    %v10201 = vsel %vm762, %v9181, -inf
    %v10202 = vmax.f32 %v10198, %v10201
    %v10203 = vsel %vm762, %v9183, -inf
    %v10204 = vmax.f32 %v10200, %v10203
    %v10205 = vsel %vm762, %v9185, -inf
    %v10206 = vmax.f32 %v10202, %v10205
    %v10207 = vsel %vm762, %v9187, -inf
    %v10208 = vmax.f32 %v10204, %v10207
    %v10209 = vsel %vm762, %v9189, -inf
    %v10210 = vmax.f32 %v10206, %v10209
    %v10211 = vsel %vm762, %v9191, -inf
    %v10212 = vmax.f32 %v10208, %v10211
    %v10213 = vsel %vm762, %v9193, -inf
    %v10214 = vmax.f32 %v10210, %v10213
    %v10215 = vsel %vm762, %v9195, -inf
    %v10216 = vmax.f32 %v10212, %v10215
    %v10217 = vsel %vm762, %v9197, -inf
    %v10218 = vmax.f32 %v10214, %v10217
    %v10219 = vsel %vm762, %v9199, -inf
    %v10220 = vmax.f32 %v10216, %v10219
    %v10221 = vsel %vm762, %v9201, -inf
    %v10222 = vmax.f32 %v10218, %v10221
    %v10223 = vsel %vm762, %v9203, -inf
    %v10224 = vmax.f32 %v10220, %v10223
    %v10225 = vsel %vm762, %v9205, -inf
    %v10226 = vmax.f32 %v10222, %v10225
    %v10227 = vsel %vm762, %v9207, -inf
    %v10228 = vmax.f32 %v10224, %v10227
    %v10229 = vsel %vm762, %v9209, -inf
    %v10230 = vmax.f32 %v10226, %v10229
    %v10231 = vsel %vm762, %v9211, -inf
    %v10232 = vmax.f32 %v10228, %v10231
    %v10233 = vsel %vm762, %v9213, -inf
    %v10234 = vmax.f32 %v10230, %v10233
    %v10235 = vsel %vm762, %v9215, -inf
    %v10236 = vmax.f32 %v10232, %v10235
    %v10237 = vsel %vm762, %v9217, -inf
    %v10238 = vmax.f32 %v10234, %v10237
    %v10239 = vsel %vm762, %v9219, -inf
    %v10240 = vmax.f32 %v10236, %v10239
    %v10241 = vsel %vm762, %v9221, -inf
    %v10242 = vmax.f32 %v10238, %v10241
    %v10243 = vsel %vm762, %v9223, -inf
    %v10244 = vmax.f32 %v10240, %v10243
    %v10245 = vsel %vm762, %v9225, -inf
    %v10246 = vmax.f32 %v10242, %v10245
    %v10247 = vsel %vm762, %v9227, -inf
    %v10248 = vmax.f32 %v10244, %v10247
    %v10249 = vsel %vm762, %v9229, -inf
    %v10250 = vmax.f32 %v10246, %v10249
    %v10251 = vsel %vm762, %v9231, -inf
    %v10252 = vmax.f32 %v10248, %v10251
    %v10253 = vsel %vm762, %v9233, -inf
    %v10254 = vmax.f32 %v10250, %v10253
    %v10255 = vsel %vm762, %v9235, -inf
    %v10256 = vmax.f32 %v10252, %v10255
    %v10257 = vsel %vm762, %v9237, -inf
    %v10258 = vmax.f32 %v10254, %v10257
    %v10259 = vsel %vm762, %v9239, -inf
    %v10260 = vmax.f32 %v10256, %v10259
    %v10261 = vsel %vm762, %v9241, -inf
    %v10262 = vmax.f32 %v10258, %v10261
    %v10263 = vsel %vm762, %v9243, -inf
    %v10264 = vmax.f32 %v10260, %v10263
    %v10265 = vsel %vm762, %v9245, -inf
    %v10266 = vmax.f32 %v10262, %v10265
    %v10267 = vsel %vm762, %v9247, -inf
    %v10268 = vmax.f32 %v10264, %v10267
    %v10269 = vsel %vm762, %v9249, -inf
    %v10270 = vmax.f32 %v10266, %v10269
    %v10271 = vsel %vm762, %v9251, -inf
    %v10272 = vmax.f32 %v10268, %v10271
    %v10273 = vsel %vm762, %v9253, -inf
    %v10274 = vmax.f32 %v10270, %v10273
    %v10275 = vsel %vm762, %v9255, -inf
    %v10276 = vmax.f32 %v10272, %v10275
    %v10277 = vsel %vm762, %v9257, -inf
    %v10278 = vmax.f32 %v10274, %v10277
    %v10279 = vsel %vm762, %v9259, -inf
    %v10280 = vmax.f32 %v10276, %v10279
    %v10281 = vsel %vm762, %v9261, -inf
    %v10282 = vmax.f32 %v10278, %v10281
    %v10283 = vsel %vm762, %v9263, -inf
    %v10284 = vmax.f32 %v10280, %v10283
    %v10285 = vsel %vm762, %v9265, -inf
    %v10286 = vmax.f32 %v10282, %v10285
    %v10287 = vsel %vm762, %v9267, -inf
    %v10288 = vmax.f32 %v10284, %v10287
    %v10289 = vsel %vm762, %v9269, -inf
    %v10290 = vmax.f32 %v10286, %v10289
    %v10291 = vsel %vm762, %v9271, -inf
    %v10292 = vmax.f32 %v10288, %v10291
    %v10293 = vsel %vm762, %v9273, -inf
    %v10294 = vmax.f32 %v10290, %v10293
    %v10295 = vsel %vm762, %v9275, -inf
    %v10296 = vmax.f32 %v10292, %v10295
    %v10297 = vsel %vm762, %v9277, -inf
    %v10298 = vmax.f32 %v10294, %v10297
    %v10299 = vsel %vm762, %v9279, -inf
    %v10300 = vmax.f32 %v10296, %v10299
    %v10301 = vmax.f32 %v10298, %v10300
    %v10302 = vpack.c.bf16 %v10301, %v9790
    %v10303 = vld [vmem:[%s2 + $0x40] sm:$0xf]
    %v10304 = vld [vmem:[%s2 + $0x44] sm:$0xf]
    %v10305 = vld [vmem:[%s2 + $0x48] sm:$0xf]
    %v10306 = vld [vmem:[%s2 + $0x4c] sm:$0xf]
    %v10307 = vld [vmem:[%s2 + $0x50] sm:$0xf]
    %v10308 = vld [vmem:[%s2 + $0x54] sm:$0xf]
    %v10309 = vld [vmem:[%s2 + $0x58] sm:$0xf]
    %v10310 = vld [vmem:[%s2 + $0x5c] sm:$0xf]
    %v10311 = vlaneseq
    %v10312 = vshrl.u32 %v10311, 7
    %v10313 = vsub.s32 6, %v10312
    %v10314 = vrot.slane %v101, %v10313
    %v10323 = vunpack.c.l.b16 %v10303
    %v10324 = vunpack.c.l.b16 %v10304
    %v10325 = vunpack.c.l.b16 %v10305
    %v10326 = vunpack.c.l.b16 %v10306
    %v10327 = vunpack.c.l.b16 %v10307
    %v10328 = vunpack.c.l.b16 %v10308
    %v10329 = vunpack.c.l.b16 %v10309
    %v10330 = vunpack.c.l.b16 %v10310
    %v10331 = vpack.c.b16 %v10324, %v10323
    %v10332 = vpack.c.b16 %v10326, %v10325
    %v10333 = vpack.c.b16 %v10328, %v10327
    %v10334 = vpack.c.b16 %v10330, %v10329
    %v10340 = vsel %vm762, %v10302, 0
    %10342 = vmatprep.subr.bf16.mxu0 0
    %10343 = vmatpush1.bf16.msra.mxu0 %v10331
    %10344 = vmatprep.subr.bf16.mxu0 0
    %10345 = vmatpush1.bf16.msra.mxu0 %v10332
    %10346 = vmatprep.subr.bf16.mxu0 0
    %10347 = vmatpush1.bf16.msra.mxu0 %v10333
    %10348 = vmatprep.subr.bf16.mxu0 0
    %10349 = vmatpush1.bf16.msra.mxu0 %v10334
    %10350 = vmatprep.subr.bf16.mxu0 0
    %10351 = vmatpush1.bf16.msra.mxu0 0
    %10352 = vmatprep.subr.bf16.mxu0 0
    %10353 = vmatpush1.bf16.msra.mxu0 0
    %10354 = vmatprep.subr.bf16.mxu0 0
    %10355 = vmatpush1.bf16.msra.mxu0 0
    %10356 = vmatprep.subr.bf16.mxu0 0
    %10357 = vmatpush1.bf16.msra.mxu0 0
    %10358 = vmatprep.subr.bf16.mxu0 0
    %10359 = vmatpush1.bf16.msra.mxu0 0
    %10360 = vmatprep.subr.bf16.mxu0 0
    %10361 = vmatpush1.bf16.msra.mxu0 0
    %10362 = vmatprep.subr.bf16.mxu0 0
    %10363 = vmatpush1.bf16.msra.mxu0 0
    %10364 = vmatprep.subr.bf16.mxu0 0
    %10365 = vmatpush1.bf16.msra.mxu0 0
    %10366 = vmatprep.subr.bf16.mxu0 0
    %10367 = vmatpush1.bf16.msra.mxu0 0
    %10368 = vmatprep.subr.bf16.mxu0 0
    %10369 = vmatpush1.bf16.msra.mxu0 0
    %10370 = vmatprep.subr.bf16.mxu0 0
    %10371 = vmatpush1.bf16.msra.mxu0 0
    %10372 = vmatprep.subr.bf16.mxu0 0
    %10373 = vmatpush1.bf16.msra.mxu0 0
    %10374 = vmatprep.mubr.bf16.mxu0 0
    %10375 = vmatmul.mubr.bf16.gmra.mrb[0].mxu0 %v10340
    %v10376 = vpop.f32.mrb[0].mxu0
    %v10377 = vadd.f32 %v10314, %v10376
    %v10378 = vpop.f32.mrb[0].mxu0
    %v10379 = vpop.f32.mrb[0].mxu0
    %v10380 = vadd.f32 %v10314, %v10379
    %v10381 = vpop.f32.mrb[0].mxu0
    %10382 = vdwg.mxu0
    %v10383 = vsel %vm762, %v10377, 0.0
    %v10384 = vsel %vm762, %v10380, 0.0
    %v10385 = vadd.f32 %v10383, %v10384
    %v10386 = vrot.slane %v10385, 4
    %v10387 = vadd.f32 %v10385, %v10386
    %v10388 = vrot.slane %v10387, 2
    %v10389 = vadd.f32 %v10387, %v10388
    %v10390 = vrot.slane %v10389, 1
    %v10391 = vadd.f32 %v10389, %v10390
    %v10392 = vrcp.pop 16.0
    %v10393 = vmul.f32 %v10391, %v10392
    %v10394 = vsub.f32 %v10377, %v10393
    %v10395 = vsub.f32 %v10380, %v10393
    %v10396 = vmul.f32 %v10394, %v10394
    %v10397 = vmul.f32 %v10395, %v10395
    %v10398 = vsel %vm762, %v10396, 0.0
    %v10399 = vsel %vm762, %v10397, 0.0
    %v10400 = vadd.f32 %v10398, %v10399
    %v10401 = vrot.slane %v10400, 4
    %v10402 = vadd.f32 %v10400, %v10401
    %v10403 = vrot.slane %v10402, 2
    %v10404 = vadd.f32 %v10402, %v10403
    %v10405 = vrot.slane %v10404, 1
    %v10406 = vadd.f32 %v10404, %v10405
    %v10407 = vmul.f32 %v10406, %v10392
    %v10408 = vadd.f32 %v10407, 1e-05
    %v10409 = vrsqrt.pop %v10408
    %v10410 = vmul.f32 %v10394, %v10409
    %v10411 = vmul.f32 %v10395, %v10409
    %v10412 = vlaneseq
    %v10413 = vshrl.u32 %v10412, 7
    %v10414 = vsub.s32 7, %v10413
    %v10415 = vrot.slane %v101, %v10414
    %v10416 = vmul.f32 %v10410, %v10415
    %v10417 = vmul.f32 %v10411, %v10415
    %v10418 = vlaneseq
    %v10419 = vshrl.u32 %v10418, 7
    %v10420 = vsub.s32 0, %v10419
    %v10421 = vrot.slane %v102, %v10420
    %v10422 = vadd.f32 %v10416, %v10421
    %v10423 = vadd.f32 %v10417, %v10421
    %vm10424 = vcmp.ge.f32.partialorder %v10422, 0.0
    %vm10425 = vcmp.ge.f32.partialorder %v10423, 0.0
    %v10426 = vstv %s105
    %v10427 = vmul.f32 %v10426, %v10422
    %v10428 = vmul.f32 %v10426, %v10423
    %v10429 = vsel %vm10424, %v10422, %v10427
    %v10430 = vsel %vm10425, %v10423, %v10428
    %v10431 = vpack.c.bf16 %v10430, %v10429
    %v10432 = vld [vmem:[%s2 + $0x60] sm:$0xf]
    %v10433 = vld [vmem:[%s2 + $0x64] sm:$0xf]
    %v10434 = vld [vmem:[%s2 + $0x68] sm:$0xf]
    %v10435 = vld [vmem:[%s2 + $0x6c] sm:$0xf]
    %v10436 = vld [vmem:[%s2 + $0x70] sm:$0xf]
    %v10437 = vld [vmem:[%s2 + $0x74] sm:$0xf]
    %v10438 = vld [vmem:[%s2 + $0x78] sm:$0xf]
    %v10439 = vld [vmem:[%s2 + $0x7c] sm:$0xf]
    %v10448 = vunpack.c.l.b16 %v10432
    %v10449 = vunpack.c.l.b16 %v10433
    %v10450 = vunpack.c.l.b16 %v10434
    %v10451 = vunpack.c.l.b16 %v10435
    %v10452 = vunpack.c.l.b16 %v10436
    %v10453 = vunpack.c.l.b16 %v10437
    %v10454 = vunpack.c.l.b16 %v10438
    %v10455 = vunpack.c.l.b16 %v10439
    %v10456 = vpack.c.b16 %v10449, %v10448
    %v10457 = vpack.c.b16 %v10451, %v10450
    %v10458 = vpack.c.b16 %v10453, %v10452
    %v10459 = vpack.c.b16 %v10455, %v10454
    %v10465 = vsel %vm762, %v10431, 0
    %10467 = vmatprep.subr.bf16.mxu0 0
    %10468 = vmatpush1.bf16.msra.mxu0 %v10456
    %10469 = vmatprep.subr.bf16.mxu0 0
    %10470 = vmatpush1.bf16.msra.mxu0 %v10457
    %10471 = vmatprep.subr.bf16.mxu0 0
    %10472 = vmatpush1.bf16.msra.mxu0 %v10458
    %10473 = vmatprep.subr.bf16.mxu0 0
    %10474 = vmatpush1.bf16.msra.mxu0 %v10459
    %10475 = vmatprep.subr.bf16.mxu0 0
    %10476 = vmatpush1.bf16.msra.mxu0 0
    %10477 = vmatprep.subr.bf16.mxu0 0
    %10478 = vmatpush1.bf16.msra.mxu0 0
    %10479 = vmatprep.subr.bf16.mxu0 0
    %10480 = vmatpush1.bf16.msra.mxu0 0
    %10481 = vmatprep.subr.bf16.mxu0 0
    %10482 = vmatpush1.bf16.msra.mxu0 0
    %10483 = vmatprep.subr.bf16.mxu0 0
    %10484 = vmatpush1.bf16.msra.mxu0 0
    %10485 = vmatprep.subr.bf16.mxu0 0
    %10486 = vmatpush1.bf16.msra.mxu0 0
    %10487 = vmatprep.subr.bf16.mxu0 0
    %10488 = vmatpush1.bf16.msra.mxu0 0
    %10489 = vmatprep.subr.bf16.mxu0 0
    %10490 = vmatpush1.bf16.msra.mxu0 0
    %10491 = vmatprep.subr.bf16.mxu0 0
    %10492 = vmatpush1.bf16.msra.mxu0 0
    %10493 = vmatprep.subr.bf16.mxu0 0
    %10494 = vmatpush1.bf16.msra.mxu0 0
    %10495 = vmatprep.subr.bf16.mxu0 0
    %10496 = vmatpush1.bf16.msra.mxu0 0
    %10497 = vmatprep.subr.bf16.mxu0 0
    %10498 = vmatpush1.bf16.msra.mxu0 0
    %10499 = vmatprep.mubr.bf16.mxu0 0
    %10500 = vmatmul.mubr.bf16.gmra.mrb[0].mxu0 %v10465
    %v10501 = vpop.f32.mrb[0].mxu0
    %v10502 = vadd.f32 0.0, %v10501
    %v10503 = vpop.f32.mrb[0].mxu0
    %v10504 = vpop.f32.mrb[0].mxu0
    %v10505 = vadd.f32 0.0, %v10504
    %v10506 = vpop.f32.mrb[0].mxu0
    %10507 = vdwg.mxu0
    %v10508 = vlaneseq
    %v10509 = vshrl.u32 %v10508, 7
    %v10510 = vsub.s32 1, %v10509
    %v10511 = vrot.slane %v102, %v10510
    %v10512 = vadd.f32 %v10502, %v10511
    %v10513 = vadd.f32 %v10505, %v10511
    %vm10514 = vcmask 7168
    %v10515 = vsel %vm10514, %v10512, 0.0
    %v10516 = vsel %vm10514, %v10513, 0.0
    %v10517 = vadd.f32 %v10515, %v10516
    %v10518 = vrot.slane %v10517, 4
    %v10519 = vadd.f32 %v10517, %v10518
    %v10520 = vrot.slane %v10519, 2
    %v10521 = vadd.f32 %v10519, %v10520
    %v10522 = vrot.slane %v10521, 1
    %v10523 = vadd.f32 %v10521, %v10522
    %v10524 = vmul.f32 %v10523, %v10392
    %v10525 = vsub.f32 %v10512, %v10524
    %v10526 = vsub.f32 %v10513, %v10524
    %v10527 = vmul.f32 %v10525, %v10525
    %v10528 = vmul.f32 %v10526, %v10526
    %v10529 = vsel %vm10514, %v10527, 0.0
    %v10530 = vsel %vm10514, %v10528, 0.0
    %v10531 = vadd.f32 %v10529, %v10530
    %v10532 = vrot.slane %v10531, 4
    %v10533 = vadd.f32 %v10531, %v10532
    %v10534 = vrot.slane %v10533, 2
    %v10535 = vadd.f32 %v10533, %v10534
    %v10536 = vrot.slane %v10535, 1
    %v10537 = vadd.f32 %v10535, %v10536
    %v10538 = vmul.f32 %v10537, %v10392
    %v10539 = vadd.f32 %v10538, 1e-05
    %v10540 = vrsqrt.pop %v10539
    %v10541 = vmul.f32 %v10525, %v10540
    %v10542 = vmul.f32 %v10526, %v10540
    %v10543 = vlaneseq
    %v10544 = vshrl.u32 %v10543, 7
    %v10545 = vsub.s32 2, %v10544
    %v10546 = vrot.slane %v102, %v10545
    %v10547 = vmul.f32 %v10541, %v10546
    %v10548 = vmul.f32 %v10542, %v10546
    %v10549 = vlaneseq
    %v10550 = vshrl.u32 %v10549, 7
    %v10551 = vsub.s32 3, %v10550
    %v10552 = vrot.slane %v102, %v10551
    %v10553 = vadd.f32 %v10547, %v10552
    %v10554 = vadd.f32 %v10548, %v10552
    %vm10555 = vcmp.ge.f32.partialorder %v10553, 0.0
    %vm10556 = vcmp.ge.f32.partialorder %v10554, 0.0
    %v10557 = vstv %s106
    %v10558 = vmul.f32 %v10557, %v10553
    %v10559 = vmul.f32 %v10557, %v10554
    %v10560 = vsel %vm10555, %v10553, %v10558
    %v10561 = vsel %vm10556, %v10554, %v10559
    %10562 = vst.msk [vmem:[%s6] sm:$0xff] %vm10514, %v10560
    %10563 = vst.msk [vmem:[%s6 + $0x8] sm:$0xff] %vm10514, %v10561
    // Predicated region
    $region30: #{gcn_forward_pallas.1} parent=1 // pred_check
      _
    $region31: #{gcn_forward_pallas.1} parent=1 // pred_check_branch
      %10565 = sbr.rel (0) target = $region33
    $region32: #{gcn_forward_pallas.1} parent=1 // pred_region
      _
    $region33: #{gcn_forward_pallas.1} parent=1 // pred_fallthru
      _
    // Predicated region
    $region34: #{gcn_forward_pallas.1} parent=1 // pred_check
      _
    $region35: #{gcn_forward_pallas.1} parent=1 // pred_check_branch
      %10567 = sbr.rel (0) target = $region37
    $region36: #{gcn_forward_pallas.1} parent=1 // pred_region
      _
    $region37: #{gcn_forward_pallas.1} parent=1 // pred_fallthru
      _
    %10568 = vsyncpa [#allocation3], 1

</llo_original>
